<compile_context>
chip_gen: v7x
topology: tpu7x:2x2x1
jax: 0.10.0
libtpu: 0.0.40
codegen_flags: <defaults>
</compile_context>

<pallas_src>
import functools

import jax
import jax.numpy as jnp
from jax.experimental import pallas as pl
from jax.experimental.pallas import tpu as pltpu


def _round_up(x, m):
    return ((x + m - 1) // m) * m


def _corr_kernel(a_ref, p_ref, out_ref, *, nd, wp, inv_c):
    """Per-batch cost volume.

    a_ref:   (1, C, Lh)  in1, rows right-padded to stride Wp and flattened
                         (zeros in the pad lanes).
    p_ref:   (1, C, Lp)  in2 zero-padded by md on all spatial sides, flattened
                         with the same row stride Wp.
    out_ref: (1, D, Lh)  cost-volume rows; lane g = y*Wp + x.
    """
    lh = a_ref.shape[-1]
    lp = p_ref.shape[-1]

    # Hoisted 1/C: sum_c((in1 / C) * in2_shift) == mean_c(in1 * in2_shift).
    a = a_ref[0].astype(jnp.float32) * inv_c        # (C, Lh)
    p = p_ref[0].astype(jnp.float32)                # (C, Lp)

    for d in range(nd * nd):                        # static: 81 displacements
        dy, dx = d // nd, d % nd
        s = dy * wp + dx                            # flat shift for (dy, dx)
        shift = (-s) % lp                           # jnp.roll convention: out[i] = in[(i - shift) % lp]
        b_full = p if shift == 0 else pltpu.roll(p, shift, 1)   # XLU lane rotate
        b = b_full[:, :lh]                          # 128-aligned slice: free
        row = jnp.sum(a * b, axis=0, keepdims=True)  # (1, Lh) reduce over channels
        out_ref[0, d:d + 1, :] = row.astype(out_ref.dtype)


def correlation(in1, in2, max_displacement=4):
    """Equivalent of Correlation(pad_size=md, kernel_size=1, max_displacement=md,
    stride1=1, stride2=1, corr_multiply=1).forward(in1, in2)."""
    B, C, H, W = in1.shape
    assert in2.shape == (B, C, H, W)
    md = max_displacement
    nd = 2 * md + 1
    D = nd * nd
    Wp = W + 2 * md                      # per-row stride of the flat layout
    Hp = H + 2 * md
    Lh = _round_up(H * Wp, 128)          # lane-dense length of in1 / output rows
    Lp = _round_up(Hp * Wp, 128)         # lane-dense length of padded in2 rows

    # Layout prep (plain XLA glue, small vs. the 81*C elementwise work):
    #   a: each in1 row right-padded with 2*md zeros -> stride Wp, then flattened.
    a = jnp.pad(in1, ((0, 0), (0, 0), (0, 0), (0, Wp - W)))
    a = a.reshape(B, C, H * Wp)
    a = jnp.pad(a, ((0, 0), (0, 0), (0, Lh - H * Wp)))
    #   p: ConstantPad2d(md, 0) halo, flattened with the same row stride Wp.
    p = jnp.pad(in2, ((0, 0), (0, 0), (md, md), (md, md)))
    p = p.reshape(B, C, Hp * Wp)
    p = jnp.pad(p, ((0, 0), (0, 0), (0, Lp - Hp * Wp)))

    kernel = functools.partial(_corr_kernel, nd=nd, wp=Wp, inv_c=1.0 / C)

    out_flat = pl.pallas_call(
        kernel,
        out_shape=jax.ShapeDtypeStruct((B, D, Lh), in1.dtype),
        grid_spec=pltpu.PrefetchScalarGridSpec(
            num_scalar_prefetch=0,
            grid=(B,),
            in_specs=[
                pl.BlockSpec((1, C, Lh), lambda b: (b, 0, 0)),
                pl.BlockSpec((1, C, Lp), lambda b: (b, 0, 0)),
            ],
            out_specs=pl.BlockSpec((1, D, Lh), lambda b: (b, 0, 0)),
        ),
        compiler_params=pltpu.CompilerParams(
            dimension_semantics=("parallel",)),
    )(a, p)

    # Strip the lane-layout padding: (B, D, Lh) -> (B, D, H, W).
    return out_flat[..., :H * Wp].reshape(B, D, H, Wp)[..., :W]


def correlation_ref(in1, in2, max_displacement=4):
    """Pure-JAX reference mirroring the PyTorch forward exactly."""
    B, C, H, W = in1.shape
    md = max_displacement
    nd = 2 * md + 1
    p = jnp.pad(in2, ((0, 0), (0, 0), (md, md), (md, md)))
    outs = []
    for dy in range(nd):          # offsety varies slowest (meshgrid 'ij')
        for dx in range(nd):      # offsetx varies fastest
            outs.append(
                jnp.mean(in1 * p[:, :, dy:dy + H, dx:dx + W], axis=1,
                         keepdims=True))
    return jnp.concatenate(outs, axis=1)


if __name__ == "__main__":
    key = jax.random.PRNGKey(0)
    k1, k2 = jax.random.split(key)
    B, C, H, W = 2, 4, 16, 16
    in1 = jax.random.normal(k1, (B, C, H, W), dtype=jnp.float32)
    in2 = jax.random.normal(k2, (B, C, H, W), dtype=jnp.float32)

    out = correlation(in1, in2, max_displacement=4)
    out = jax.block_until_ready(out)

    ref = correlation_ref(in1, in2, max_displacement=4)
    assert out.shape == (B, 81, H, W), out.shape
    assert jnp.allclose(out, ref, atol=1e-5, rtol=1e-5), "mismatch vs reference"
    print("KERNEL_OK")
</pallas_src>

<mosaic_0001>
module attributes {stable_mosaic.version = 11 : i64} {
  func.func @_corr_kernel(%arg0: i32, %arg1: memref<1x4x384xf32, #tpu.memory_space<vmem>>, %arg2: memref<1x4x640xf32, #tpu.memory_space<vmem>>, %arg3: memref<1x81x384xf32, #tpu.memory_space<vmem>>) attributes {dimension_semantics = [#tpu.dimension_semantics<parallel>], iteration_bounds = array<i64: 2>, scalar_prefetch = 0 : i64, scratch_operands = 0 : i64, tpu.core_type = #tpu.core_type<tc>, window_params = [{transform_indices = @transform_0, window_bounds = array<i64: 1, 4, 384>}, {transform_indices = @transform_1, window_bounds = array<i64: 1, 4, 640>}, {transform_indices = @transform_2, window_bounds = array<i64: 1, 81, 384>}]} {
    %c0 = arith.constant 0 : index
    %c0_0 = arith.constant 0 : index
    %c0_1 = arith.constant 0 : index
    %0 = vector.load %arg1[%c0, %c0_0, %c0_1] : memref<1x4x384xf32, #tpu.memory_space<vmem>>, vector<1x4x384xf32>
    %1 = vector.shape_cast %0 : vector<1x4x384xf32> to vector<4x384xf32>
    %cst = arith.constant 2.500000e-01 : f32
    %2 = vector.broadcast %cst : f32 to vector<4x384xf32>
    %3 = arith.mulf %1, %2 : vector<4x384xf32>
    %c0_2 = arith.constant 0 : index
    %c0_3 = arith.constant 0 : index
    %c0_4 = arith.constant 0 : index
    %4 = vector.load %arg2[%c0_2, %c0_3, %c0_4] : memref<1x4x640xf32, #tpu.memory_space<vmem>>, vector<1x4x640xf32>
    %5 = vector.shape_cast %4 : vector<1x4x640xf32> to vector<4x640xf32>
    %6 = vector.extract_strided_slice %5 {offsets = [0, 0], sizes = [4, 384], strides = [1, 1]} : vector<4x640xf32> to vector<4x384xf32>
    %7 = arith.mulf %3, %6 : vector<4x384xf32>
    %cst_5 = arith.constant dense<0.000000e+00> : vector<384xf32>
    %8 = vector.multi_reduction <add>, %7, %cst_5 [0] : vector<4x384xf32> to vector<384xf32>
    %9 = vector.shape_cast %8 : vector<384xf32> to vector<1x384xf32>
    %c0_6 = arith.constant 0 : index
    %c0_7 = arith.constant 0 : index
    %c0_8 = arith.constant 0 : index
    %10 = vector.load %arg3[%c0_6, %c0_7, %c0_8] : memref<1x81x384xf32, #tpu.memory_space<vmem>>, vector<1x1x384xf32>
    %11 = vector.shape_cast %10 : vector<1x1x384xf32> to vector<1x384xf32>
    %12 = vector.shape_cast %9 : vector<1x384xf32> to vector<1x1x384xf32>
    tpu.vector_store %arg3[%c0_6, %c0_7, %c0_8], %12 {strides = array<i32>} : memref<1x81x384xf32, #tpu.memory_space<vmem>>, vector<1x1x384xf32>,
    %c639_i32 = arith.constant 639 : i32
    %13 = tpu.dynamic_rotate %5 by %c639_i32 dim 1 : vector<4x640xf32>, i32 -> vector<4x640xf32>
    %14 = vector.extract_strided_slice %13 {offsets = [0, 0], sizes = [4, 384], strides = [1, 1]} : vector<4x640xf32> to vector<4x384xf32>
    %15 = arith.mulf %3, %14 : vector<4x384xf32>
    %cst_9 = arith.constant dense<0.000000e+00> : vector<384xf32>
    %16 = vector.multi_reduction <add>, %15, %cst_9 [0] : vector<4x384xf32> to vector<384xf32>
    %17 = vector.shape_cast %16 : vector<384xf32> to vector<1x384xf32>
    %c0_10 = arith.constant 0 : index
    %c1 = arith.constant 1 : index
    %c0_11 = arith.constant 0 : index
    %18 = vector.load %arg3[%c0_10, %c1, %c0_11] : memref<1x81x384xf32, #tpu.memory_space<vmem>>, vector<1x1x384xf32>
    %19 = vector.shape_cast %18 : vector<1x1x384xf32> to vector<1x384xf32>
    %20 = vector.shape_cast %17 : vector<1x384xf32> to vector<1x1x384xf32>
    tpu.vector_store %arg3[%c0_10, %c1, %c0_11], %20 {strides = array<i32>} : memref<1x81x384xf32, #tpu.memory_space<vmem>>, vector<1x1x384xf32>,
    %c638_i32 = arith.constant 638 : i32
    %21 = tpu.dynamic_rotate %5 by %c638_i32 dim 1 : vector<4x640xf32>, i32 -> vector<4x640xf32>
    %22 = vector.extract_strided_slice %21 {offsets = [0, 0], sizes = [4, 384], strides = [1, 1]} : vector<4x640xf32> to vector<4x384xf32>
    %23 = arith.mulf %3, %22 : vector<4x384xf32>
    %cst_12 = arith.constant dense<0.000000e+00> : vector<384xf32>
    %24 = vector.multi_reduction <add>, %23, %cst_12 [0] : vector<4x384xf32> to vector<384xf32>
    %25 = vector.shape_cast %24 : vector<384xf32> to vector<1x384xf32>
    %c0_13 = arith.constant 0 : index
    %c2 = arith.constant 2 : index
    %c0_14 = arith.constant 0 : index
    %26 = vector.load %arg3[%c0_13, %c2, %c0_14] : memref<1x81x384xf32, #tpu.memory_space<vmem>>, vector<1x1x384xf32>
    %27 = vector.shape_cast %26 : vector<1x1x384xf32> to vector<1x384xf32>
    %28 = vector.shape_cast %25 : vector<1x384xf32> to vector<1x1x384xf32>
    tpu.vector_store %arg3[%c0_13, %c2, %c0_14], %28 {strides = array<i32>} : memref<1x81x384xf32, #tpu.memory_space<vmem>>, vector<1x1x384xf32>,
    %c637_i32 = arith.constant 637 : i32
    %29 = tpu.dynamic_rotate %5 by %c637_i32 dim 1 : vector<4x640xf32>, i32 -> vector<4x640xf32>
    %30 = vector.extract_strided_slice %29 {offsets = [0, 0], sizes = [4, 384], strides = [1, 1]} : vector<4x640xf32> to vector<4x384xf32>
    %31 = arith.mulf %3, %30 : vector<4x384xf32>
    %cst_15 = arith.constant dense<0.000000e+00> : vector<384xf32>
    %32 = vector.multi_reduction <add>, %31, %cst_15 [0] : vector<4x384xf32> to vector<384xf32>
    %33 = vector.shape_cast %32 : vector<384xf32> to vector<1x384xf32>
    %c0_16 = arith.constant 0 : index
    %c3 = arith.constant 3 : index
    %c0_17 = arith.constant 0 : index
    %34 = vector.load %arg3[%c0_16, %c3, %c0_17] : memref<1x81x384xf32, #tpu.memory_space<vmem>>, vector<1x1x384xf32>
    %35 = vector.shape_cast %34 : vector<1x1x384xf32> to vector<1x384xf32>
    %36 = vector.shape_cast %33 : vector<1x384xf32> to vector<1x1x384xf32>
    tpu.vector_store %arg3[%c0_16, %c3, %c0_17], %36 {strides = array<i32>} : memref<1x81x384xf32, #tpu.memory_space<vmem>>, vector<1x1x384xf32>,
    %c636_i32 = arith.constant 636 : i32
    %37 = tpu.dynamic_rotate %5 by %c636_i32 dim 1 : vector<4x640xf32>, i32 -> vector<4x640xf32>
    %38 = vector.extract_strided_slice %37 {offsets = [0, 0], sizes = [4, 384], strides = [1, 1]} : vector<4x640xf32> to vector<4x384xf32>
    %39 = arith.mulf %3, %38 : vector<4x384xf32>
    %cst_18 = arith.constant dense<0.000000e+00> : vector<384xf32>
    %40 = vector.multi_reduction <add>, %39, %cst_18 [0] : vector<4x384xf32> to vector<384xf32>
    %41 = vector.shape_cast %40 : vector<384xf32> to vector<1x384xf32>
    %c0_19 = arith.constant 0 : index
    %c4 = arith.constant 4 : index
    %c0_20 = arith.constant 0 : index
    %42 = vector.load %arg3[%c0_19, %c4, %c0_20] : memref<1x81x384xf32, #tpu.memory_space<vmem>>, vector<1x1x384xf32>
    %43 = vector.shape_cast %42 : vector<1x1x384xf32> to vector<1x384xf32>
    %44 = vector.shape_cast %41 : vector<1x384xf32> to vector<1x1x384xf32>
    tpu.vector_store %arg3[%c0_19, %c4, %c0_20], %44 {strides = array<i32>} : memref<1x81x384xf32, #tpu.memory_space<vmem>>, vector<1x1x384xf32>,
    %c635_i32 = arith.constant 635 : i32
    %45 = tpu.dynamic_rotate %5 by %c635_i32 dim 1 : vector<4x640xf32>, i32 -> vector<4x640xf32>
    %46 = vector.extract_strided_slice %45 {offsets = [0, 0], sizes = [4, 384], strides = [1, 1]} : vector<4x640xf32> to vector<4x384xf32>
    %47 = arith.mulf %3, %46 : vector<4x384xf32>
    %cst_21 = arith.constant dense<0.000000e+00> : vector<384xf32>
    %48 = vector.multi_reduction <add>, %47, %cst_21 [0] : vector<4x384xf32> to vector<384xf32>
    %49 = vector.shape_cast %48 : vector<384xf32> to vector<1x384xf32>
    %c0_22 = arith.constant 0 : index
    %c5 = arith.constant 5 : index
    %c0_23 = arith.constant 0 : index
    %50 = vector.load %arg3[%c0_22, %c5, %c0_23] : memref<1x81x384xf32, #tpu.memory_space<vmem>>, vector<1x1x384xf32>
    %51 = vector.shape_cast %50 : vector<1x1x384xf32> to vector<1x384xf32>
    %52 = vector.shape_cast %49 : vector<1x384xf32> to vector<1x1x384xf32>
    tpu.vector_store %arg3[%c0_22, %c5, %c0_23], %52 {strides = array<i32>} : memref<1x81x384xf32, #tpu.memory_space<vmem>>, vector<1x1x384xf32>,
    %c634_i32 = arith.constant 634 : i32
    %53 = tpu.dynamic_rotate %5 by %c634_i32 dim 1 : vector<4x640xf32>, i32 -> vector<4x640xf32>
    %54 = vector.extract_strided_slice %53 {offsets = [0, 0], sizes = [4, 384], strides = [1, 1]} : vector<4x640xf32> to vector<4x384xf32>
    %55 = arith.mulf %3, %54 : vector<4x384xf32>
    %cst_24 = arith.constant dense<0.000000e+00> : vector<384xf32>
    %56 = vector.multi_reduction <add>, %55, %cst_24 [0] : vector<4x384xf32> to vector<384xf32>
    %57 = vector.shape_cast %56 : vector<384xf32> to vector<1x384xf32>
    %c0_25 = arith.constant 0 : index
    %c6 = arith.constant 6 : index
    %c0_26 = arith.constant 0 : index
    %58 = vector.load %arg3[%c0_25, %c6, %c0_26] : memref<1x81x384xf32, #tpu.memory_space<vmem>>, vector<1x1x384xf32>
    %59 = vector.shape_cast %58 : vector<1x1x384xf32> to vector<1x384xf32>
    %60 = vector.shape_cast %57 : vector<1x384xf32> to vector<1x1x384xf32>
    tpu.vector_store %arg3[%c0_25, %c6, %c0_26], %60 {strides = array<i32>} : memref<1x81x384xf32, #tpu.memory_space<vmem>>, vector<1x1x384xf32>,
    %c633_i32 = arith.constant 633 : i32
    %61 = tpu.dynamic_rotate %5 by %c633_i32 dim 1 : vector<4x640xf32>, i32 -> vector<4x640xf32>
    %62 = vector.extract_strided_slice %61 {offsets = [0, 0], sizes = [4, 384], strides = [1, 1]} : vector<4x640xf32> to vector<4x384xf32>
    %63 = arith.mulf %3, %62 : vector<4x384xf32>
    %cst_27 = arith.constant dense<0.000000e+00> : vector<384xf32>
    %64 = vector.multi_reduction <add>, %63, %cst_27 [0] : vector<4x384xf32> to vector<384xf32>
    %65 = vector.shape_cast %64 : vector<384xf32> to vector<1x384xf32>
    %c0_28 = arith.constant 0 : index
    %c7 = arith.constant 7 : index
    %c0_29 = arith.constant 0 : index
    %66 = vector.load %arg3[%c0_28, %c7, %c0_29] : memref<1x81x384xf32, #tpu.memory_space<vmem>>, vector<1x1x384xf32>
    %67 = vector.shape_cast %66 : vector<1x1x384xf32> to vector<1x384xf32>
    %68 = vector.shape_cast %65 : vector<1x384xf32> to vector<1x1x384xf32>
    tpu.vector_store %arg3[%c0_28, %c7, %c0_29], %68 {strides = array<i32>} : memref<1x81x384xf32, #tpu.memory_space<vmem>>, vector<1x1x384xf32>,
    %c632_i32 = arith.constant 632 : i32
    %69 = tpu.dynamic_rotate %5 by %c632_i32 dim 1 : vector<4x640xf32>, i32 -> vector<4x640xf32>
    %70 = vector.extract_strided_slice %69 {offsets = [0, 0], sizes = [4, 384], strides = [1, 1]} : vector<4x640xf32> to vector<4x384xf32>
    %71 = arith.mulf %3, %70 : vector<4x384xf32>
    %cst_30 = arith.constant dense<0.000000e+00> : vector<384xf32>
    %72 = vector.multi_reduction <add>, %71, %cst_30 [0] : vector<4x384xf32> to vector<384xf32>
    %73 = vector.shape_cast %72 : vector<384xf32> to vector<1x384xf32>
    %c0_31 = arith.constant 0 : index
    %c8 = arith.constant 8 : index
    %c0_32 = arith.constant 0 : index
    %74 = vector.load %arg3[%c0_31, %c8, %c0_32] : memref<1x81x384xf32, #tpu.memory_space<vmem>>, vector<1x1x384xf32>
    %75 = vector.shape_cast %74 : vector<1x1x384xf32> to vector<1x384xf32>
    %76 = vector.shape_cast %73 : vector<1x384xf32> to vector<1x1x384xf32>
    tpu.vector_store %arg3[%c0_31, %c8, %c0_32], %76 {strides = array<i32>} : memref<1x81x384xf32, #tpu.memory_space<vmem>>, vector<1x1x384xf32>,
    %c616_i32 = arith.constant 616 : i32
    %77 = tpu.dynamic_rotate %5 by %c616_i32 dim 1 : vector<4x640xf32>, i32 -> vector<4x640xf32>
    %78 = vector.extract_strided_slice %77 {offsets = [0, 0], sizes = [4, 384], strides = [1, 1]} : vector<4x640xf32> to vector<4x384xf32>
    %79 = arith.mulf %3, %78 : vector<4x384xf32>
    %cst_33 = arith.constant dense<0.000000e+00> : vector<384xf32>
    %80 = vector.multi_reduction <add>, %79, %cst_33 [0] : vector<4x384xf32> to vector<384xf32>
    %81 = vector.shape_cast %80 : vector<384xf32> to vector<1x384xf32>
    %c0_34 = arith.constant 0 : index
    %c9 = arith.constant 9 : index
    %c0_35 = arith.constant 0 : index
    %82 = vector.load %arg3[%c0_34, %c9, %c0_35] : memref<1x81x384xf32, #tpu.memory_space<vmem>>, vector<1x1x384xf32>
    %83 = vector.shape_cast %82 : vector<1x1x384xf32> to vector<1x384xf32>
    %84 = vector.shape_cast %81 : vector<1x384xf32> to vector<1x1x384xf32>
    tpu.vector_store %arg3[%c0_34, %c9, %c0_35], %84 {strides = array<i32>} : memref<1x81x384xf32, #tpu.memory_space<vmem>>, vector<1x1x384xf32>,
    %c615_i32 = arith.constant 615 : i32
    %85 = tpu.dynamic_rotate %5 by %c615_i32 dim 1 : vector<4x640xf32>, i32 -> vector<4x640xf32>
    %86 = vector.extract_strided_slice %85 {offsets = [0, 0], sizes = [4, 384], strides = [1, 1]} : vector<4x640xf32> to vector<4x384xf32>
    %87 = arith.mulf %3, %86 : vector<4x384xf32>
    %cst_36 = arith.constant dense<0.000000e+00> : vector<384xf32>
    %88 = vector.multi_reduction <add>, %87, %cst_36 [0] : vector<4x384xf32> to vector<384xf32>
    %89 = vector.shape_cast %88 : vector<384xf32> to vector<1x384xf32>
    %c0_37 = arith.constant 0 : index
    %c10 = arith.constant 10 : index
    %c0_38 = arith.constant 0 : index
    %90 = vector.load %arg3[%c0_37, %c10, %c0_38] : memref<1x81x384xf32, #tpu.memory_space<vmem>>, vector<1x1x384xf32>
    %91 = vector.shape_cast %90 : vector<1x1x384xf32> to vector<1x384xf32>
    %92 = vector.shape_cast %89 : vector<1x384xf32> to vector<1x1x384xf32>
    tpu.vector_store %arg3[%c0_37, %c10, %c0_38], %92 {strides = array<i32>} : memref<1x81x384xf32, #tpu.memory_space<vmem>>, vector<1x1x384xf32>,
    %c614_i32 = arith.constant 614 : i32
    %93 = tpu.dynamic_rotate %5 by %c614_i32 dim 1 : vector<4x640xf32>, i32 -> vector<4x640xf32>
    %94 = vector.extract_strided_slice %93 {offsets = [0, 0], sizes = [4, 384], strides = [1, 1]} : vector<4x640xf32> to vector<4x384xf32>
    %95 = arith.mulf %3, %94 : vector<4x384xf32>
    %cst_39 = arith.constant dense<0.000000e+00> : vector<384xf32>
    %96 = vector.multi_reduction <add>, %95, %cst_39 [0] : vector<4x384xf32> to vector<384xf32>
    %97 = vector.shape_cast %96 : vector<384xf32> to vector<1x384xf32>
    %c0_40 = arith.constant 0 : index
    %c11 = arith.constant 11 : index
    %c0_41 = arith.constant 0 : index
    %98 = vector.load %arg3[%c0_40, %c11, %c0_41] : memref<1x81x384xf32, #tpu.memory_space<vmem>>, vector<1x1x384xf32>
    %99 = vector.shape_cast %98 : vector<1x1x384xf32> to vector<1x384xf32>
    %100 = vector.shape_cast %97 : vector<1x384xf32> to vector<1x1x384xf32>
    tpu.vector_store %arg3[%c0_40, %c11, %c0_41], %100 {strides = array<i32>} : memref<1x81x384xf32, #tpu.memory_space<vmem>>, vector<1x1x384xf32>,
    %c613_i32 = arith.constant 613 : i32
    %101 = tpu.dynamic_rotate %5 by %c613_i32 dim 1 : vector<4x640xf32>, i32 -> vector<4x640xf32>
    %102 = vector.extract_strided_slice %101 {offsets = [0, 0], sizes = [4, 384], strides = [1, 1]} : vector<4x640xf32> to vector<4x384xf32>
    %103 = arith.mulf %3, %102 : vector<4x384xf32>
    %cst_42 = arith.constant dense<0.000000e+00> : vector<384xf32>
    %104 = vector.multi_reduction <add>, %103, %cst_42 [0] : vector<4x384xf32> to vector<384xf32>
    %105 = vector.shape_cast %104 : vector<384xf32> to vector<1x384xf32>
    %c0_43 = arith.constant 0 : index
    %c12 = arith.constant 12 : index
    %c0_44 = arith.constant 0 : index
    %106 = vector.load %arg3[%c0_43, %c12, %c0_44] : memref<1x81x384xf32, #tpu.memory_space<vmem>>, vector<1x1x384xf32>
    %107 = vector.shape_cast %106 : vector<1x1x384xf32> to vector<1x384xf32>
    %108 = vector.shape_cast %105 : vector<1x384xf32> to vector<1x1x384xf32>
    tpu.vector_store %arg3[%c0_43, %c12, %c0_44], %108 {strides = array<i32>} : memref<1x81x384xf32, #tpu.memory_space<vmem>>, vector<1x1x384xf32>,
    %c612_i32 = arith.constant 612 : i32
    %109 = tpu.dynamic_rotate %5 by %c612_i32 dim 1 : vector<4x640xf32>, i32 -> vector<4x640xf32>
    %110 = vector.extract_strided_slice %109 {offsets = [0, 0], sizes = [4, 384], strides = [1, 1]} : vector<4x640xf32> to vector<4x384xf32>
    %111 = arith.mulf %3, %110 : vector<4x384xf32>
    %cst_45 = arith.constant dense<0.000000e+00> : vector<384xf32>
    %112 = vector.multi_reduction <add>, %111, %cst_45 [0] : vector<4x384xf32> to vector<384xf32>
    %113 = vector.shape_cast %112 : vector<384xf32> to vector<1x384xf32>
    %c0_46 = arith.constant 0 : index
    %c13 = arith.constant 13 : index
    %c0_47 = arith.constant 0 : index
    %114 = vector.load %arg3[%c0_46, %c13, %c0_47] : memref<1x81x384xf32, #tpu.memory_space<vmem>>, vector<1x1x384xf32>
    %115 = vector.shape_cast %114 : vector<1x1x384xf32> to vector<1x384xf32>
    %116 = vector.shape_cast %113 : vector<1x384xf32> to vector<1x1x384xf32>
    tpu.vector_store %arg3[%c0_46, %c13, %c0_47], %116 {strides = array<i32>} : memref<1x81x384xf32, #tpu.memory_space<vmem>>, vector<1x1x384xf32>,
    %c611_i32 = arith.constant 611 : i32
    %117 = tpu.dynamic_rotate %5 by %c611_i32 dim 1 : vector<4x640xf32>, i32 -> vector<4x640xf32>
    %118 = vector.extract_strided_slice %117 {offsets = [0, 0], sizes = [4, 384], strides = [1, 1]} : vector<4x640xf32> to vector<4x384xf32>
    %119 = arith.mulf %3, %118 : vector<4x384xf32>
    %cst_48 = arith.constant dense<0.000000e+00> : vector<384xf32>
    %120 = vector.multi_reduction <add>, %119, %cst_48 [0] : vector<4x384xf32> to vector<384xf32>
    %121 = vector.shape_cast %120 : vector<384xf32> to vector<1x384xf32>
    %c0_49 = arith.constant 0 : index
    %c14 = arith.constant 14 : index
    %c0_50 = arith.constant 0 : index
    %122 = vector.load %arg3[%c0_49, %c14, %c0_50] : memref<1x81x384xf32, #tpu.memory_space<vmem>>, vector<1x1x384xf32>
    %123 = vector.shape_cast %122 : vector<1x1x384xf32> to vector<1x384xf32>
    %124 = vector.shape_cast %121 : vector<1x384xf32> to vector<1x1x384xf32>
    tpu.vector_store %arg3[%c0_49, %c14, %c0_50], %124 {strides = array<i32>} : memref<1x81x384xf32, #tpu.memory_space<vmem>>, vector<1x1x384xf32>,
    %c610_i32 = arith.constant 610 : i32
    %125 = tpu.dynamic_rotate %5 by %c610_i32 dim 1 : vector<4x640xf32>, i32 -> vector<4x640xf32>
    %126 = vector.extract_strided_slice %125 {offsets = [0, 0], sizes = [4, 384], strides = [1, 1]} : vector<4x640xf32> to vector<4x384xf32>
    %127 = arith.mulf %3, %126 : vector<4x384xf32>
    %cst_51 = arith.constant dense<0.000000e+00> : vector<384xf32>
    %128 = vector.multi_reduction <add>, %127, %cst_51 [0] : vector<4x384xf32> to vector<384xf32>
    %129 = vector.shape_cast %128 : vector<384xf32> to vector<1x384xf32>
    %c0_52 = arith.constant 0 : index
    %c15 = arith.constant 15 : index
    %c0_53 = arith.constant 0 : index
    %130 = vector.load %arg3[%c0_52, %c15, %c0_53] : memref<1x81x384xf32, #tpu.memory_space<vmem>>, vector<1x1x384xf32>
    %131 = vector.shape_cast %130 : vector<1x1x384xf32> to vector<1x384xf32>
    %132 = vector.shape_cast %129 : vector<1x384xf32> to vector<1x1x384xf32>
    tpu.vector_store %arg3[%c0_52, %c15, %c0_53], %132 {strides = array<i32>} : memref<1x81x384xf32, #tpu.memory_space<vmem>>, vector<1x1x384xf32>,
    %c609_i32 = arith.constant 609 : i32
    %133 = tpu.dynamic_rotate %5 by %c609_i32 dim 1 : vector<4x640xf32>, i32 -> vector<4x640xf32>
    %134 = vector.extract_strided_slice %133 {offsets = [0, 0], sizes = [4, 384], strides = [1, 1]} : vector<4x640xf32> to vector<4x384xf32>
    %135 = arith.mulf %3, %134 : vector<4x384xf32>
    %cst_54 = arith.constant dense<0.000000e+00> : vector<384xf32>
    %136 = vector.multi_reduction <add>, %135, %cst_54 [0] : vector<4x384xf32> to vector<384xf32>
    %137 = vector.shape_cast %136 : vector<384xf32> to vector<1x384xf32>
    %c0_55 = arith.constant 0 : index
    %c16 = arith.constant 16 : index
    %c0_56 = arith.constant 0 : index
    %138 = vector.load %arg3[%c0_55, %c16, %c0_56] : memref<1x81x384xf32, #tpu.memory_space<vmem>>, vector<1x1x384xf32>
    %139 = vector.shape_cast %138 : vector<1x1x384xf32> to vector<1x384xf32>
    %140 = vector.shape_cast %137 : vector<1x384xf32> to vector<1x1x384xf32>
    tpu.vector_store %arg3[%c0_55, %c16, %c0_56], %140 {strides = array<i32>} : memref<1x81x384xf32, #tpu.memory_space<vmem>>, vector<1x1x384xf32>,
    %c608_i32 = arith.constant 608 : i32
    %141 = tpu.dynamic_rotate %5 by %c608_i32 dim 1 : vector<4x640xf32>, i32 -> vector<4x640xf32>
    %142 = vector.extract_strided_slice %141 {offsets = [0, 0], sizes = [4, 384], strides = [1, 1]} : vector<4x640xf32> to vector<4x384xf32>
    %143 = arith.mulf %3, %142 : vector<4x384xf32>
    %cst_57 = arith.constant dense<0.000000e+00> : vector<384xf32>
    %144 = vector.multi_reduction <add>, %143, %cst_57 [0] : vector<4x384xf32> to vector<384xf32>
    %145 = vector.shape_cast %144 : vector<384xf32> to vector<1x384xf32>
    %c0_58 = arith.constant 0 : index
    %c17 = arith.constant 17 : index
    %c0_59 = arith.constant 0 : index
    %146 = vector.load %arg3[%c0_58, %c17, %c0_59] : memref<1x81x384xf32, #tpu.memory_space<vmem>>, vector<1x1x384xf32>
    %147 = vector.shape_cast %146 : vector<1x1x384xf32> to vector<1x384xf32>
    %148 = vector.shape_cast %145 : vector<1x384xf32> to vector<1x1x384xf32>
    tpu.vector_store %arg3[%c0_58, %c17, %c0_59], %148 {strides = array<i32>} : memref<1x81x384xf32, #tpu.memory_space<vmem>>, vector<1x1x384xf32>,
    %c592_i32 = arith.constant 592 : i32
    %149 = tpu.dynamic_rotate %5 by %c592_i32 dim 1 : vector<4x640xf32>, i32 -> vector<4x640xf32>
    %150 = vector.extract_strided_slice %149 {offsets = [0, 0], sizes = [4, 384], strides = [1, 1]} : vector<4x640xf32> to vector<4x384xf32>
    %151 = arith.mulf %3, %150 : vector<4x384xf32>
    %cst_60 = arith.constant dense<0.000000e+00> : vector<384xf32>
    %152 = vector.multi_reduction <add>, %151, %cst_60 [0] : vector<4x384xf32> to vector<384xf32>
    %153 = vector.shape_cast %152 : vector<384xf32> to vector<1x384xf32>
    %c0_61 = arith.constant 0 : index
    %c18 = arith.constant 18 : index
    %c0_62 = arith.constant 0 : index
    %154 = vector.load %arg3[%c0_61, %c18, %c0_62] : memref<1x81x384xf32, #tpu.memory_space<vmem>>, vector<1x1x384xf32>
    %155 = vector.shape_cast %154 : vector<1x1x384xf32> to vector<1x384xf32>
    %156 = vector.shape_cast %153 : vector<1x384xf32> to vector<1x1x384xf32>
    tpu.vector_store %arg3[%c0_61, %c18, %c0_62], %156 {strides = array<i32>} : memref<1x81x384xf32, #tpu.memory_space<vmem>>, vector<1x1x384xf32>,
    %c591_i32 = arith.constant 591 : i32
    %157 = tpu.dynamic_rotate %5 by %c591_i32 dim 1 : vector<4x640xf32>, i32 -> vector<4x640xf32>
    %158 = vector.extract_strided_slice %157 {offsets = [0, 0], sizes = [4, 384], strides = [1, 1]} : vector<4x640xf32> to vector<4x384xf32>
    %159 = arith.mulf %3, %158 : vector<4x384xf32>
    %cst_63 = arith.constant dense<0.000000e+00> : vector<384xf32>
    %160 = vector.multi_reduction <add>, %159, %cst_63 [0] : vector<4x384xf32> to vector<384xf32>
    %161 = vector.shape_cast %160 : vector<384xf32> to vector<1x384xf32>
    %c0_64 = arith.constant 0 : index
    %c19 = arith.constant 19 : index
    %c0_65 = arith.constant 0 : index
    %162 = vector.load %arg3[%c0_64, %c19, %c0_65] : memref<1x81x384xf32, #tpu.memory_space<vmem>>, vector<1x1x384xf32>
    %163 = vector.shape_cast %162 : vector<1x1x384xf32> to vector<1x384xf32>
    %164 = vector.shape_cast %161 : vector<1x384xf32> to vector<1x1x384xf32>
    tpu.vector_store %arg3[%c0_64, %c19, %c0_65], %164 {strides = array<i32>} : memref<1x81x384xf32, #tpu.memory_space<vmem>>, vector<1x1x384xf32>,
    %c590_i32 = arith.constant 590 : i32
    %165 = tpu.dynamic_rotate %5 by %c590_i32 dim 1 : vector<4x640xf32>, i32 -> vector<4x640xf32>
    %166 = vector.extract_strided_slice %165 {offsets = [0, 0], sizes = [4, 384], strides = [1, 1]} : vector<4x640xf32> to vector<4x384xf32>
    %167 = arith.mulf %3, %166 : vector<4x384xf32>
    %cst_66 = arith.constant dense<0.000000e+00> : vector<384xf32>
    %168 = vector.multi_reduction <add>, %167, %cst_66 [0] : vector<4x384xf32> to vector<384xf32>
    %169 = vector.shape_cast %168 : vector<384xf32> to vector<1x384xf32>
    %c0_67 = arith.constant 0 : index
    %c20 = arith.constant 20 : index
    %c0_68 = arith.constant 0 : index
    %170 = vector.load %arg3[%c0_67, %c20, %c0_68] : memref<1x81x384xf32, #tpu.memory_space<vmem>>, vector<1x1x384xf32>
    %171 = vector.shape_cast %170 : vector<1x1x384xf32> to vector<1x384xf32>
    %172 = vector.shape_cast %169 : vector<1x384xf32> to vector<1x1x384xf32>
    tpu.vector_store %arg3[%c0_67, %c20, %c0_68], %172 {strides = array<i32>} : memref<1x81x384xf32, #tpu.memory_space<vmem>>, vector<1x1x384xf32>,
    %c589_i32 = arith.constant 589 : i32
    %173 = tpu.dynamic_rotate %5 by %c589_i32 dim 1 : vector<4x640xf32>, i32 -> vector<4x640xf32>
    %174 = vector.extract_strided_slice %173 {offsets = [0, 0], sizes = [4, 384], strides = [1, 1]} : vector<4x640xf32> to vector<4x384xf32>
    %175 = arith.mulf %3, %174 : vector<4x384xf32>
    %cst_69 = arith.constant dense<0.000000e+00> : vector<384xf32>
    %176 = vector.multi_reduction <add>, %175, %cst_69 [0] : vector<4x384xf32> to vector<384xf32>
    %177 = vector.shape_cast %176 : vector<384xf32> to vector<1x384xf32>
    %c0_70 = arith.constant 0 : index
    %c21 = arith.constant 21 : index
    %c0_71 = arith.constant 0 : index
    %178 = vector.load %arg3[%c0_70, %c21, %c0_71] : memref<1x81x384xf32, #tpu.memory_space<vmem>>, vector<1x1x384xf32>
    %179 = vector.shape_cast %178 : vector<1x1x384xf32> to vector<1x384xf32>
    %180 = vector.shape_cast %177 : vector<1x384xf32> to vector<1x1x384xf32>
    tpu.vector_store %arg3[%c0_70, %c21, %c0_71], %180 {strides = array<i32>} : memref<1x81x384xf32, #tpu.memory_space<vmem>>, vector<1x1x384xf32>,
    %c588_i32 = arith.constant 588 : i32
    %181 = tpu.dynamic_rotate %5 by %c588_i32 dim 1 : vector<4x640xf32>, i32 -> vector<4x640xf32>
    %182 = vector.extract_strided_slice %181 {offsets = [0, 0], sizes = [4, 384], strides = [1, 1]} : vector<4x640xf32> to vector<4x384xf32>
    %183 = arith.mulf %3, %182 : vector<4x384xf32>
    %cst_72 = arith.constant dense<0.000000e+00> : vector<384xf32>
    %184 = vector.multi_reduction <add>, %183, %cst_72 [0] : vector<4x384xf32> to vector<384xf32>
    %185 = vector.shape_cast %184 : vector<384xf32> to vector<1x384xf32>
    %c0_73 = arith.constant 0 : index
    %c22 = arith.constant 22 : index
    %c0_74 = arith.constant 0 : index
    %186 = vector.load %arg3[%c0_73, %c22, %c0_74] : memref<1x81x384xf32, #tpu.memory_space<vmem>>, vector<1x1x384xf32>
    %187 = vector.shape_cast %186 : vector<1x1x384xf32> to vector<1x384xf32>
    %188 = vector.shape_cast %185 : vector<1x384xf32> to vector<1x1x384xf32>
    tpu.vector_store %arg3[%c0_73, %c22, %c0_74], %188 {strides = array<i32>} : memref<1x81x384xf32, #tpu.memory_space<vmem>>, vector<1x1x384xf32>,
    %c587_i32 = arith.constant 587 : i32
    %189 = tpu.dynamic_rotate %5 by %c587_i32 dim 1 : vector<4x640xf32>, i32 -> vector<4x640xf32>
    %190 = vector.extract_strided_slice %189 {offsets = [0, 0], sizes = [4, 384], strides = [1, 1]} : vector<4x640xf32> to vector<4x384xf32>
    %191 = arith.mulf %3, %190 : vector<4x384xf32>
    %cst_75 = arith.constant dense<0.000000e+00> : vector<384xf32>
    %192 = vector.multi_reduction <add>, %191, %cst_75 [0] : vector<4x384xf32> to vector<384xf32>
    %193 = vector.shape_cast %192 : vector<384xf32> to vector<1x384xf32>
    %c0_76 = arith.constant 0 : index
    %c23 = arith.constant 23 : index
    %c0_77 = arith.constant 0 : index
    %194 = vector.load %arg3[%c0_76, %c23, %c0_77] : memref<1x81x384xf32, #tpu.memory_space<vmem>>, vector<1x1x384xf32>
    %195 = vector.shape_cast %194 : vector<1x1x384xf32> to vector<1x384xf32>
    %196 = vector.shape_cast %193 : vector<1x384xf32> to vector<1x1x384xf32>
    tpu.vector_store %arg3[%c0_76, %c23, %c0_77], %196 {strides = array<i32>} : memref<1x81x384xf32, #tpu.memory_space<vmem>>, vector<1x1x384xf32>,
    %c586_i32 = arith.constant 586 : i32
    %197 = tpu.dynamic_rotate %5 by %c586_i32 dim 1 : vector<4x640xf32>, i32 -> vector<4x640xf32>
    %198 = vector.extract_strided_slice %197 {offsets = [0, 0], sizes = [4, 384], strides = [1, 1]} : vector<4x640xf32> to vector<4x384xf32>
    %199 = arith.mulf %3, %198 : vector<4x384xf32>
    %cst_78 = arith.constant dense<0.000000e+00> : vector<384xf32>
    %200 = vector.multi_reduction <add>, %199, %cst_78 [0] : vector<4x384xf32> to vector<384xf32>
    %201 = vector.shape_cast %200 : vector<384xf32> to vector<1x384xf32>
    %c0_79 = arith.constant 0 : index
    %c24 = arith.constant 24 : index
    %c0_80 = arith.constant 0 : index
    %202 = vector.load %arg3[%c0_79, %c24, %c0_80] : memref<1x81x384xf32, #tpu.memory_space<vmem>>, vector<1x1x384xf32>
    %203 = vector.shape_cast %202 : vector<1x1x384xf32> to vector<1x384xf32>
    %204 = vector.shape_cast %201 : vector<1x384xf32> to vector<1x1x384xf32>
    tpu.vector_store %arg3[%c0_79, %c24, %c0_80], %204 {strides = array<i32>} : memref<1x81x384xf32, #tpu.memory_space<vmem>>, vector<1x1x384xf32>,
    %c585_i32 = arith.constant 585 : i32
    %205 = tpu.dynamic_rotate %5 by %c585_i32 dim 1 : vector<4x640xf32>, i32 -> vector<4x640xf32>
    %206 = vector.extract_strided_slice %205 {offsets = [0, 0], sizes = [4, 384], strides = [1, 1]} : vector<4x640xf32> to vector<4x384xf32>
    %207 = arith.mulf %3, %206 : vector<4x384xf32>
    %cst_81 = arith.constant dense<0.000000e+00> : vector<384xf32>
    %208 = vector.multi_reduction <add>, %207, %cst_81 [0] : vector<4x384xf32> to vector<384xf32>
    %209 = vector.shape_cast %208 : vector<384xf32> to vector<1x384xf32>
    %c0_82 = arith.constant 0 : index
    %c25 = arith.constant 25 : index
    %c0_83 = arith.constant 0 : index
    %210 = vector.load %arg3[%c0_82, %c25, %c0_83] : memref<1x81x384xf32, #tpu.memory_space<vmem>>, vector<1x1x384xf32>
    %211 = vector.shape_cast %210 : vector<1x1x384xf32> to vector<1x384xf32>
    %212 = vector.shape_cast %209 : vector<1x384xf32> to vector<1x1x384xf32>
    tpu.vector_store %arg3[%c0_82, %c25, %c0_83], %212 {strides = array<i32>} : memref<1x81x384xf32, #tpu.memory_space<vmem>>, vector<1x1x384xf32>,
    %c584_i32 = arith.constant 584 : i32
    %213 = tpu.dynamic_rotate %5 by %c584_i32 dim 1 : vector<4x640xf32>, i32 -> vector<4x640xf32>
    %214 = vector.extract_strided_slice %213 {offsets = [0, 0], sizes = [4, 384], strides = [1, 1]} : vector<4x640xf32> to vector<4x384xf32>
    %215 = arith.mulf %3, %214 : vector<4x384xf32>
    %cst_84 = arith.constant dense<0.000000e+00> : vector<384xf32>
    %216 = vector.multi_reduction <add>, %215, %cst_84 [0] : vector<4x384xf32> to vector<384xf32>
    %217 = vector.shape_cast %216 : vector<384xf32> to vector<1x384xf32>
    %c0_85 = arith.constant 0 : index
    %c26 = arith.constant 26 : index
    %c0_86 = arith.constant 0 : index
    %218 = vector.load %arg3[%c0_85, %c26, %c0_86] : memref<1x81x384xf32, #tpu.memory_space<vmem>>, vector<1x1x384xf32>
    %219 = vector.shape_cast %218 : vector<1x1x384xf32> to vector<1x384xf32>
    %220 = vector.shape_cast %217 : vector<1x384xf32> to vector<1x1x384xf32>
    tpu.vector_store %arg3[%c0_85, %c26, %c0_86], %220 {strides = array<i32>} : memref<1x81x384xf32, #tpu.memory_space<vmem>>, vector<1x1x384xf32>,
    %c568_i32 = arith.constant 568 : i32
    %221 = tpu.dynamic_rotate %5 by %c568_i32 dim 1 : vector<4x640xf32>, i32 -> vector<4x640xf32>
    %222 = vector.extract_strided_slice %221 {offsets = [0, 0], sizes = [4, 384], strides = [1, 1]} : vector<4x640xf32> to vector<4x384xf32>
    %223 = arith.mulf %3, %222 : vector<4x384xf32>
    %cst_87 = arith.constant dense<0.000000e+00> : vector<384xf32>
    %224 = vector.multi_reduction <add>, %223, %cst_87 [0] : vector<4x384xf32> to vector<384xf32>
    %225 = vector.shape_cast %224 : vector<384xf32> to vector<1x384xf32>
    %c0_88 = arith.constant 0 : index
    %c27 = arith.constant 27 : index
    %c0_89 = arith.constant 0 : index
    %226 = vector.load %arg3[%c0_88, %c27, %c0_89] : memref<1x81x384xf32, #tpu.memory_space<vmem>>, vector<1x1x384xf32>
    %227 = vector.shape_cast %226 : vector<1x1x384xf32> to vector<1x384xf32>
    %228 = vector.shape_cast %225 : vector<1x384xf32> to vector<1x1x384xf32>
    tpu.vector_store %arg3[%c0_88, %c27, %c0_89], %228 {strides = array<i32>} : memref<1x81x384xf32, #tpu.memory_space<vmem>>, vector<1x1x384xf32>,
    %c567_i32 = arith.constant 567 : i32
    %229 = tpu.dynamic_rotate %5 by %c567_i32 dim 1 : vector<4x640xf32>, i32 -> vector<4x640xf32>
    %230 = vector.extract_strided_slice %229 {offsets = [0, 0], sizes = [4, 384], strides = [1, 1]} : vector<4x640xf32> to vector<4x384xf32>
    %231 = arith.mulf %3, %230 : vector<4x384xf32>
    %cst_90 = arith.constant dense<0.000000e+00> : vector<384xf32>
    %232 = vector.multi_reduction <add>, %231, %cst_90 [0] : vector<4x384xf32> to vector<384xf32>
    %233 = vector.shape_cast %232 : vector<384xf32> to vector<1x384xf32>
    %c0_91 = arith.constant 0 : index
    %c28 = arith.constant 28 : index
    %c0_92 = arith.constant 0 : index
    %234 = vector.load %arg3[%c0_91, %c28, %c0_92] : memref<1x81x384xf32, #tpu.memory_space<vmem>>, vector<1x1x384xf32>
    %235 = vector.shape_cast %234 : vector<1x1x384xf32> to vector<1x384xf32>
    %236 = vector.shape_cast %233 : vector<1x384xf32> to vector<1x1x384xf32>
    tpu.vector_store %arg3[%c0_91, %c28, %c0_92], %236 {strides = array<i32>} : memref<1x81x384xf32, #tpu.memory_space<vmem>>, vector<1x1x384xf32>,
    %c566_i32 = arith.constant 566 : i32
    %237 = tpu.dynamic_rotate %5 by %c566_i32 dim 1 : vector<4x640xf32>, i32 -> vector<4x640xf32>
    %238 = vector.extract_strided_slice %237 {offsets = [0, 0], sizes = [4, 384], strides = [1, 1]} : vector<4x640xf32> to vector<4x384xf32>
    %239 = arith.mulf %3, %238 : vector<4x384xf32>
    %cst_93 = arith.constant dense<0.000000e+00> : vector<384xf32>
    %240 = vector.multi_reduction <add>, %239, %cst_93 [0] : vector<4x384xf32> to vector<384xf32>
    %241 = vector.shape_cast %240 : vector<384xf32> to vector<1x384xf32>
    %c0_94 = arith.constant 0 : index
    %c29 = arith.constant 29 : index
    %c0_95 = arith.constant 0 : index
    %242 = vector.load %arg3[%c0_94, %c29, %c0_95] : memref<1x81x384xf32, #tpu.memory_space<vmem>>, vector<1x1x384xf32>
    %243 = vector.shape_cast %242 : vector<1x1x384xf32> to vector<1x384xf32>
    %244 = vector.shape_cast %241 : vector<1x384xf32> to vector<1x1x384xf32>
    tpu.vector_store %arg3[%c0_94, %c29, %c0_95], %244 {strides = array<i32>} : memref<1x81x384xf32, #tpu.memory_space<vmem>>, vector<1x1x384xf32>,
    %c565_i32 = arith.constant 565 : i32
    %245 = tpu.dynamic_rotate %5 by %c565_i32 dim 1 : vector<4x640xf32>, i32 -> vector<4x640xf32>
    %246 = vector.extract_strided_slice %245 {offsets = [0, 0], sizes = [4, 384], strides = [1, 1]} : vector<4x640xf32> to vector<4x384xf32>
    %247 = arith.mulf %3, %246 : vector<4x384xf32>
    %cst_96 = arith.constant dense<0.000000e+00> : vector<384xf32>
    %248 = vector.multi_reduction <add>, %247, %cst_96 [0] : vector<4x384xf32> to vector<384xf32>
    %249 = vector.shape_cast %248 : vector<384xf32> to vector<1x384xf32>
    %c0_97 = arith.constant 0 : index
    %c30 = arith.constant 30 : index
    %c0_98 = arith.constant 0 : index
    %250 = vector.load %arg3[%c0_97, %c30, %c0_98] : memref<1x81x384xf32, #tpu.memory_space<vmem>>, vector<1x1x384xf32>
    %251 = vector.shape_cast %250 : vector<1x1x384xf32> to vector<1x384xf32>
    %252 = vector.shape_cast %249 : vector<1x384xf32> to vector<1x1x384xf32>
    tpu.vector_store %arg3[%c0_97, %c30, %c0_98], %252 {strides = array<i32>} : memref<1x81x384xf32, #tpu.memory_space<vmem>>, vector<1x1x384xf32>,
    %c564_i32 = arith.constant 564 : i32
    %253 = tpu.dynamic_rotate %5 by %c564_i32 dim 1 : vector<4x640xf32>, i32 -> vector<4x640xf32>
    %254 = vector.extract_strided_slice %253 {offsets = [0, 0], sizes = [4, 384], strides = [1, 1]} : vector<4x640xf32> to vector<4x384xf32>
    %255 = arith.mulf %3, %254 : vector<4x384xf32>
    %cst_99 = arith.constant dense<0.000000e+00> : vector<384xf32>
    %256 = vector.multi_reduction <add>, %255, %cst_99 [0] : vector<4x384xf32> to vector<384xf32>
    %257 = vector.shape_cast %256 : vector<384xf32> to vector<1x384xf32>
    %c0_100 = arith.constant 0 : index
    %c31 = arith.constant 31 : index
    %c0_101 = arith.constant 0 : index
    %258 = vector.load %arg3[%c0_100, %c31, %c0_101] : memref<1x81x384xf32, #tpu.memory_space<vmem>>, vector<1x1x384xf32>
    %259 = vector.shape_cast %258 : vector<1x1x384xf32> to vector<1x384xf32>
    %260 = vector.shape_cast %257 : vector<1x384xf32> to vector<1x1x384xf32>
    tpu.vector_store %arg3[%c0_100, %c31, %c0_101], %260 {strides = array<i32>} : memref<1x81x384xf32, #tpu.memory_space<vmem>>, vector<1x1x384xf32>,
    %c563_i32 = arith.constant 563 : i32
    %261 = tpu.dynamic_rotate %5 by %c563_i32 dim 1 : vector<4x640xf32>, i32 -> vector<4x640xf32>
    %262 = vector.extract_strided_slice %261 {offsets = [0, 0], sizes = [4, 384], strides = [1, 1]} : vector<4x640xf32> to vector<4x384xf32>
    %263 = arith.mulf %3, %262 : vector<4x384xf32>
    %cst_102 = arith.constant dense<0.000000e+00> : vector<384xf32>
    %264 = vector.multi_reduction <add>, %263, %cst_102 [0] : vector<4x384xf32> to vector<384xf32>
    %265 = vector.shape_cast %264 : vector<384xf32> to vector<1x384xf32>
    %c0_103 = arith.constant 0 : index
    %c32 = arith.constant 32 : index
    %c0_104 = arith.constant 0 : index
    %266 = vector.load %arg3[%c0_103, %c32, %c0_104] : memref<1x81x384xf32, #tpu.memory_space<vmem>>, vector<1x1x384xf32>
    %267 = vector.shape_cast %266 : vector<1x1x384xf32> to vector<1x384xf32>
    %268 = vector.shape_cast %265 : vector<1x384xf32> to vector<1x1x384xf32>
    tpu.vector_store %arg3[%c0_103, %c32, %c0_104], %268 {strides = array<i32>} : memref<1x81x384xf32, #tpu.memory_space<vmem>>, vector<1x1x384xf32>,
    %c562_i32 = arith.constant 562 : i32
    %269 = tpu.dynamic_rotate %5 by %c562_i32 dim 1 : vector<4x640xf32>, i32 -> vector<4x640xf32>
    %270 = vector.extract_strided_slice %269 {offsets = [0, 0], sizes = [4, 384], strides = [1, 1]} : vector<4x640xf32> to vector<4x384xf32>
    %271 = arith.mulf %3, %270 : vector<4x384xf32>
    %cst_105 = arith.constant dense<0.000000e+00> : vector<384xf32>
    %272 = vector.multi_reduction <add>, %271, %cst_105 [0] : vector<4x384xf32> to vector<384xf32>
    %273 = vector.shape_cast %272 : vector<384xf32> to vector<1x384xf32>
    %c0_106 = arith.constant 0 : index
    %c33 = arith.constant 33 : index
    %c0_107 = arith.constant 0 : index
    %274 = vector.load %arg3[%c0_106, %c33, %c0_107] : memref<1x81x384xf32, #tpu.memory_space<vmem>>, vector<1x1x384xf32>
    %275 = vector.shape_cast %274 : vector<1x1x384xf32> to vector<1x384xf32>
    %276 = vector.shape_cast %273 : vector<1x384xf32> to vector<1x1x384xf32>
    tpu.vector_store %arg3[%c0_106, %c33, %c0_107], %276 {strides = array<i32>} : memref<1x81x384xf32, #tpu.memory_space<vmem>>, vector<1x1x384xf32>,
    %c561_i32 = arith.constant 561 : i32
    %277 = tpu.dynamic_rotate %5 by %c561_i32 dim 1 : vector<4x640xf32>, i32 -> vector<4x640xf32>
    %278 = vector.extract_strided_slice %277 {offsets = [0, 0], sizes = [4, 384], strides = [1, 1]} : vector<4x640xf32> to vector<4x384xf32>
    %279 = arith.mulf %3, %278 : vector<4x384xf32>
    %cst_108 = arith.constant dense<0.000000e+00> : vector<384xf32>
    %280 = vector.multi_reduction <add>, %279, %cst_108 [0] : vector<4x384xf32> to vector<384xf32>
    %281 = vector.shape_cast %280 : vector<384xf32> to vector<1x384xf32>
    %c0_109 = arith.constant 0 : index
    %c34 = arith.constant 34 : index
    %c0_110 = arith.constant 0 : index
    %282 = vector.load %arg3[%c0_109, %c34, %c0_110] : memref<1x81x384xf32, #tpu.memory_space<vmem>>, vector<1x1x384xf32>
    %283 = vector.shape_cast %282 : vector<1x1x384xf32> to vector<1x384xf32>
    %284 = vector.shape_cast %281 : vector<1x384xf32> to vector<1x1x384xf32>
    tpu.vector_store %arg3[%c0_109, %c34, %c0_110], %284 {strides = array<i32>} : memref<1x81x384xf32, #tpu.memory_space<vmem>>, vector<1x1x384xf32>,
    %c560_i32 = arith.constant 560 : i32
    %285 = tpu.dynamic_rotate %5 by %c560_i32 dim 1 : vector<4x640xf32>, i32 -> vector<4x640xf32>
    %286 = vector.extract_strided_slice %285 {offsets = [0, 0], sizes = [4, 384], strides = [1, 1]} : vector<4x640xf32> to vector<4x384xf32>
    %287 = arith.mulf %3, %286 : vector<4x384xf32>
    %cst_111 = arith.constant dense<0.000000e+00> : vector<384xf32>
    %288 = vector.multi_reduction <add>, %287, %cst_111 [0] : vector<4x384xf32> to vector<384xf32>
    %289 = vector.shape_cast %288 : vector<384xf32> to vector<1x384xf32>
    %c0_112 = arith.constant 0 : index
    %c35 = arith.constant 35 : index
    %c0_113 = arith.constant 0 : index
    %290 = vector.load %arg3[%c0_112, %c35, %c0_113] : memref<1x81x384xf32, #tpu.memory_space<vmem>>, vector<1x1x384xf32>
    %291 = vector.shape_cast %290 : vector<1x1x384xf32> to vector<1x384xf32>
    %292 = vector.shape_cast %289 : vector<1x384xf32> to vector<1x1x384xf32>
    tpu.vector_store %arg3[%c0_112, %c35, %c0_113], %292 {strides = array<i32>} : memref<1x81x384xf32, #tpu.memory_space<vmem>>, vector<1x1x384xf32>,
    %c544_i32 = arith.constant 544 : i32
    %293 = tpu.dynamic_rotate %5 by %c544_i32 dim 1 : vector<4x640xf32>, i32 -> vector<4x640xf32>
    %294 = vector.extract_strided_slice %293 {offsets = [0, 0], sizes = [4, 384], strides = [1, 1]} : vector<4x640xf32> to vector<4x384xf32>
    %295 = arith.mulf %3, %294 : vector<4x384xf32>
    %cst_114 = arith.constant dense<0.000000e+00> : vector<384xf32>
    %296 = vector.multi_reduction <add>, %295, %cst_114 [0] : vector<4x384xf32> to vector<384xf32>
    %297 = vector.shape_cast %296 : vector<384xf32> to vector<1x384xf32>
    %c0_115 = arith.constant 0 : index
    %c36 = arith.constant 36 : index
    %c0_116 = arith.constant 0 : index
    %298 = vector.load %arg3[%c0_115, %c36, %c0_116] : memref<1x81x384xf32, #tpu.memory_space<vmem>>, vector<1x1x384xf32>
    %299 = vector.shape_cast %298 : vector<1x1x384xf32> to vector<1x384xf32>
    %300 = vector.shape_cast %297 : vector<1x384xf32> to vector<1x1x384xf32>
    tpu.vector_store %arg3[%c0_115, %c36, %c0_116], %300 {strides = array<i32>} : memref<1x81x384xf32, #tpu.memory_space<vmem>>, vector<1x1x384xf32>,
    %c543_i32 = arith.constant 543 : i32
    %301 = tpu.dynamic_rotate %5 by %c543_i32 dim 1 : vector<4x640xf32>, i32 -> vector<4x640xf32>
    %302 = vector.extract_strided_slice %301 {offsets = [0, 0], sizes = [4, 384], strides = [1, 1]} : vector<4x640xf32> to vector<4x384xf32>
    %303 = arith.mulf %3, %302 : vector<4x384xf32>
    %cst_117 = arith.constant dense<0.000000e+00> : vector<384xf32>
    %304 = vector.multi_reduction <add>, %303, %cst_117 [0] : vector<4x384xf32> to vector<384xf32>
    %305 = vector.shape_cast %304 : vector<384xf32> to vector<1x384xf32>
    %c0_118 = arith.constant 0 : index
    %c37 = arith.constant 37 : index
    %c0_119 = arith.constant 0 : index
    %306 = vector.load %arg3[%c0_118, %c37, %c0_119] : memref<1x81x384xf32, #tpu.memory_space<vmem>>, vector<1x1x384xf32>
    %307 = vector.shape_cast %306 : vector<1x1x384xf32> to vector<1x384xf32>
    %308 = vector.shape_cast %305 : vector<1x384xf32> to vector<1x1x384xf32>
    tpu.vector_store %arg3[%c0_118, %c37, %c0_119], %308 {strides = array<i32>} : memref<1x81x384xf32, #tpu.memory_space<vmem>>, vector<1x1x384xf32>,
    %c542_i32 = arith.constant 542 : i32
    %309 = tpu.dynamic_rotate %5 by %c542_i32 dim 1 : vector<4x640xf32>, i32 -> vector<4x640xf32>
    %310 = vector.extract_strided_slice %309 {offsets = [0, 0], sizes = [4, 384], strides = [1, 1]} : vector<4x640xf32> to vector<4x384xf32>
    %311 = arith.mulf %3, %310 : vector<4x384xf32>
    %cst_120 = arith.constant dense<0.000000e+00> : vector<384xf32>
    %312 = vector.multi_reduction <add>, %311, %cst_120 [0] : vector<4x384xf32> to vector<384xf32>
    %313 = vector.shape_cast %312 : vector<384xf32> to vector<1x384xf32>
    %c0_121 = arith.constant 0 : index
    %c38 = arith.constant 38 : index
    %c0_122 = arith.constant 0 : index
    %314 = vector.load %arg3[%c0_121, %c38, %c0_122] : memref<1x81x384xf32, #tpu.memory_space<vmem>>, vector<1x1x384xf32>
    %315 = vector.shape_cast %314 : vector<1x1x384xf32> to vector<1x384xf32>
    %316 = vector.shape_cast %313 : vector<1x384xf32> to vector<1x1x384xf32>
    tpu.vector_store %arg3[%c0_121, %c38, %c0_122], %316 {strides = array<i32>} : memref<1x81x384xf32, #tpu.memory_space<vmem>>, vector<1x1x384xf32>,
    %c541_i32 = arith.constant 541 : i32
    %317 = tpu.dynamic_rotate %5 by %c541_i32 dim 1 : vector<4x640xf32>, i32 -> vector<4x640xf32>
    %318 = vector.extract_strided_slice %317 {offsets = [0, 0], sizes = [4, 384], strides = [1, 1]} : vector<4x640xf32> to vector<4x384xf32>
    %319 = arith.mulf %3, %318 : vector<4x384xf32>
    %cst_123 = arith.constant dense<0.000000e+00> : vector<384xf32>
    %320 = vector.multi_reduction <add>, %319, %cst_123 [0] : vector<4x384xf32> to vector<384xf32>
    %321 = vector.shape_cast %320 : vector<384xf32> to vector<1x384xf32>
    %c0_124 = arith.constant 0 : index
    %c39 = arith.constant 39 : index
    %c0_125 = arith.constant 0 : index
    %322 = vector.load %arg3[%c0_124, %c39, %c0_125] : memref<1x81x384xf32, #tpu.memory_space<vmem>>, vector<1x1x384xf32>
    %323 = vector.shape_cast %322 : vector<1x1x384xf32> to vector<1x384xf32>
    %324 = vector.shape_cast %321 : vector<1x384xf32> to vector<1x1x384xf32>
    tpu.vector_store %arg3[%c0_124, %c39, %c0_125], %324 {strides = array<i32>} : memref<1x81x384xf32, #tpu.memory_space<vmem>>, vector<1x1x384xf32>,
    %c540_i32 = arith.constant 540 : i32
    %325 = tpu.dynamic_rotate %5 by %c540_i32 dim 1 : vector<4x640xf32>, i32 -> vector<4x640xf32>
    %326 = vector.extract_strided_slice %325 {offsets = [0, 0], sizes = [4, 384], strides = [1, 1]} : vector<4x640xf32> to vector<4x384xf32>
    %327 = arith.mulf %3, %326 : vector<4x384xf32>
    %cst_126 = arith.constant dense<0.000000e+00> : vector<384xf32>
    %328 = vector.multi_reduction <add>, %327, %cst_126 [0] : vector<4x384xf32> to vector<384xf32>
    %329 = vector.shape_cast %328 : vector<384xf32> to vector<1x384xf32>
    %c0_127 = arith.constant 0 : index
    %c40 = arith.constant 40 : index
    %c0_128 = arith.constant 0 : index
    %330 = vector.load %arg3[%c0_127, %c40, %c0_128] : memref<1x81x384xf32, #tpu.memory_space<vmem>>, vector<1x1x384xf32>
    %331 = vector.shape_cast %330 : vector<1x1x384xf32> to vector<1x384xf32>
    %332 = vector.shape_cast %329 : vector<1x384xf32> to vector<1x1x384xf32>
    tpu.vector_store %arg3[%c0_127, %c40, %c0_128], %332 {strides = array<i32>} : memref<1x81x384xf32, #tpu.memory_space<vmem>>, vector<1x1x384xf32>,
    %c539_i32 = arith.constant 539 : i32
    %333 = tpu.dynamic_rotate %5 by %c539_i32 dim 1 : vector<4x640xf32>, i32 -> vector<4x640xf32>
    %334 = vector.extract_strided_slice %333 {offsets = [0, 0], sizes = [4, 384], strides = [1, 1]} : vector<4x640xf32> to vector<4x384xf32>
    %335 = arith.mulf %3, %334 : vector<4x384xf32>
    %cst_129 = arith.constant dense<0.000000e+00> : vector<384xf32>
    %336 = vector.multi_reduction <add>, %335, %cst_129 [0] : vector<4x384xf32> to vector<384xf32>
    %337 = vector.shape_cast %336 : vector<384xf32> to vector<1x384xf32>
    %c0_130 = arith.constant 0 : index
    %c41 = arith.constant 41 : index
    %c0_131 = arith.constant 0 : index
    %338 = vector.load %arg3[%c0_130, %c41, %c0_131] : memref<1x81x384xf32, #tpu.memory_space<vmem>>, vector<1x1x384xf32>
    %339 = vector.shape_cast %338 : vector<1x1x384xf32> to vector<1x384xf32>
    %340 = vector.shape_cast %337 : vector<1x384xf32> to vector<1x1x384xf32>
    tpu.vector_store %arg3[%c0_130, %c41, %c0_131], %340 {strides = array<i32>} : memref<1x81x384xf32, #tpu.memory_space<vmem>>, vector<1x1x384xf32>,
    %c538_i32 = arith.constant 538 : i32
    %341 = tpu.dynamic_rotate %5 by %c538_i32 dim 1 : vector<4x640xf32>, i32 -> vector<4x640xf32>
    %342 = vector.extract_strided_slice %341 {offsets = [0, 0], sizes = [4, 384], strides = [1, 1]} : vector<4x640xf32> to vector<4x384xf32>
    %343 = arith.mulf %3, %342 : vector<4x384xf32>
    %cst_132 = arith.constant dense<0.000000e+00> : vector<384xf32>
    %344 = vector.multi_reduction <add>, %343, %cst_132 [0] : vector<4x384xf32> to vector<384xf32>
    %345 = vector.shape_cast %344 : vector<384xf32> to vector<1x384xf32>
    %c0_133 = arith.constant 0 : index
    %c42 = arith.constant 42 : index
    %c0_134 = arith.constant 0 : index
    %346 = vector.load %arg3[%c0_133, %c42, %c0_134] : memref<1x81x384xf32, #tpu.memory_space<vmem>>, vector<1x1x384xf32>
    %347 = vector.shape_cast %346 : vector<1x1x384xf32> to vector<1x384xf32>
    %348 = vector.shape_cast %345 : vector<1x384xf32> to vector<1x1x384xf32>
    tpu.vector_store %arg3[%c0_133, %c42, %c0_134], %348 {strides = array<i32>} : memref<1x81x384xf32, #tpu.memory_space<vmem>>, vector<1x1x384xf32>,
    %c537_i32 = arith.constant 537 : i32
    %349 = tpu.dynamic_rotate %5 by %c537_i32 dim 1 : vector<4x640xf32>, i32 -> vector<4x640xf32>
    %350 = vector.extract_strided_slice %349 {offsets = [0, 0], sizes = [4, 384], strides = [1, 1]} : vector<4x640xf32> to vector<4x384xf32>
    %351 = arith.mulf %3, %350 : vector<4x384xf32>
    %cst_135 = arith.constant dense<0.000000e+00> : vector<384xf32>
    %352 = vector.multi_reduction <add>, %351, %cst_135 [0] : vector<4x384xf32> to vector<384xf32>
    %353 = vector.shape_cast %352 : vector<384xf32> to vector<1x384xf32>
    %c0_136 = arith.constant 0 : index
    %c43 = arith.constant 43 : index
    %c0_137 = arith.constant 0 : index
    %354 = vector.load %arg3[%c0_136, %c43, %c0_137] : memref<1x81x384xf32, #tpu.memory_space<vmem>>, vector<1x1x384xf32>
    %355 = vector.shape_cast %354 : vector<1x1x384xf32> to vector<1x384xf32>
    %356 = vector.shape_cast %353 : vector<1x384xf32> to vector<1x1x384xf32>
    tpu.vector_store %arg3[%c0_136, %c43, %c0_137], %356 {strides = array<i32>} : memref<1x81x384xf32, #tpu.memory_space<vmem>>, vector<1x1x384xf32>,
    %c536_i32 = arith.constant 536 : i32
    %357 = tpu.dynamic_rotate %5 by %c536_i32 dim 1 : vector<4x640xf32>, i32 -> vector<4x640xf32>
    %358 = vector.extract_strided_slice %357 {offsets = [0, 0], sizes = [4, 384], strides = [1, 1]} : vector<4x640xf32> to vector<4x384xf32>
    %359 = arith.mulf %3, %358 : vector<4x384xf32>
    %cst_138 = arith.constant dense<0.000000e+00> : vector<384xf32>
    %360 = vector.multi_reduction <add>, %359, %cst_138 [0] : vector<4x384xf32> to vector<384xf32>
    %361 = vector.shape_cast %360 : vector<384xf32> to vector<1x384xf32>
    %c0_139 = arith.constant 0 : index
    %c44 = arith.constant 44 : index
    %c0_140 = arith.constant 0 : index
    %362 = vector.load %arg3[%c0_139, %c44, %c0_140] : memref<1x81x384xf32, #tpu.memory_space<vmem>>, vector<1x1x384xf32>
    %363 = vector.shape_cast %362 : vector<1x1x384xf32> to vector<1x384xf32>
    %364 = vector.shape_cast %361 : vector<1x384xf32> to vector<1x1x384xf32>
    tpu.vector_store %arg3[%c0_139, %c44, %c0_140], %364 {strides = array<i32>} : memref<1x81x384xf32, #tpu.memory_space<vmem>>, vector<1x1x384xf32>,
    %c520_i32 = arith.constant 520 : i32
    %365 = tpu.dynamic_rotate %5 by %c520_i32 dim 1 : vector<4x640xf32>, i32 -> vector<4x640xf32>
    %366 = vector.extract_strided_slice %365 {offsets = [0, 0], sizes = [4, 384], strides = [1, 1]} : vector<4x640xf32> to vector<4x384xf32>
    %367 = arith.mulf %3, %366 : vector<4x384xf32>
    %cst_141 = arith.constant dense<0.000000e+00> : vector<384xf32>
    %368 = vector.multi_reduction <add>, %367, %cst_141 [0] : vector<4x384xf32> to vector<384xf32>
    %369 = vector.shape_cast %368 : vector<384xf32> to vector<1x384xf32>
    %c0_142 = arith.constant 0 : index
    %c45 = arith.constant 45 : index
    %c0_143 = arith.constant 0 : index
    %370 = vector.load %arg3[%c0_142, %c45, %c0_143] : memref<1x81x384xf32, #tpu.memory_space<vmem>>, vector<1x1x384xf32>
    %371 = vector.shape_cast %370 : vector<1x1x384xf32> to vector<1x384xf32>
    %372 = vector.shape_cast %369 : vector<1x384xf32> to vector<1x1x384xf32>
    tpu.vector_store %arg3[%c0_142, %c45, %c0_143], %372 {strides = array<i32>} : memref<1x81x384xf32, #tpu.memory_space<vmem>>, vector<1x1x384xf32>,
    %c519_i32 = arith.constant 519 : i32
    %373 = tpu.dynamic_rotate %5 by %c519_i32 dim 1 : vector<4x640xf32>, i32 -> vector<4x640xf32>
    %374 = vector.extract_strided_slice %373 {offsets = [0, 0], sizes = [4, 384], strides = [1, 1]} : vector<4x640xf32> to vector<4x384xf32>
    %375 = arith.mulf %3, %374 : vector<4x384xf32>
    %cst_144 = arith.constant dense<0.000000e+00> : vector<384xf32>
    %376 = vector.multi_reduction <add>, %375, %cst_144 [0] : vector<4x384xf32> to vector<384xf32>
    %377 = vector.shape_cast %376 : vector<384xf32> to vector<1x384xf32>
    %c0_145 = arith.constant 0 : index
    %c46 = arith.constant 46 : index
    %c0_146 = arith.constant 0 : index
    %378 = vector.load %arg3[%c0_145, %c46, %c0_146] : memref<1x81x384xf32, #tpu.memory_space<vmem>>, vector<1x1x384xf32>
    %379 = vector.shape_cast %378 : vector<1x1x384xf32> to vector<1x384xf32>
    %380 = vector.shape_cast %377 : vector<1x384xf32> to vector<1x1x384xf32>
    tpu.vector_store %arg3[%c0_145, %c46, %c0_146], %380 {strides = array<i32>} : memref<1x81x384xf32, #tpu.memory_space<vmem>>, vector<1x1x384xf32>,
    %c518_i32 = arith.constant 518 : i32
    %381 = tpu.dynamic_rotate %5 by %c518_i32 dim 1 : vector<4x640xf32>, i32 -> vector<4x640xf32>
    %382 = vector.extract_strided_slice %381 {offsets = [0, 0], sizes = [4, 384], strides = [1, 1]} : vector<4x640xf32> to vector<4x384xf32>
    %383 = arith.mulf %3, %382 : vector<4x384xf32>
    %cst_147 = arith.constant dense<0.000000e+00> : vector<384xf32>
    %384 = vector.multi_reduction <add>, %383, %cst_147 [0] : vector<4x384xf32> to vector<384xf32>
    %385 = vector.shape_cast %384 : vector<384xf32> to vector<1x384xf32>
    %c0_148 = arith.constant 0 : index
    %c47 = arith.constant 47 : index
    %c0_149 = arith.constant 0 : index
    %386 = vector.load %arg3[%c0_148, %c47, %c0_149] : memref<1x81x384xf32, #tpu.memory_space<vmem>>, vector<1x1x384xf32>
    %387 = vector.shape_cast %386 : vector<1x1x384xf32> to vector<1x384xf32>
    %388 = vector.shape_cast %385 : vector<1x384xf32> to vector<1x1x384xf32>
    tpu.vector_store %arg3[%c0_148, %c47, %c0_149], %388 {strides = array<i32>} : memref<1x81x384xf32, #tpu.memory_space<vmem>>, vector<1x1x384xf32>,
    %c517_i32 = arith.constant 517 : i32
    %389 = tpu.dynamic_rotate %5 by %c517_i32 dim 1 : vector<4x640xf32>, i32 -> vector<4x640xf32>
    %390 = vector.extract_strided_slice %389 {offsets = [0, 0], sizes = [4, 384], strides = [1, 1]} : vector<4x640xf32> to vector<4x384xf32>
    %391 = arith.mulf %3, %390 : vector<4x384xf32>
    %cst_150 = arith.constant dense<0.000000e+00> : vector<384xf32>
    %392 = vector.multi_reduction <add>, %391, %cst_150 [0] : vector<4x384xf32> to vector<384xf32>
    %393 = vector.shape_cast %392 : vector<384xf32> to vector<1x384xf32>
    %c0_151 = arith.constant 0 : index
    %c48 = arith.constant 48 : index
    %c0_152 = arith.constant 0 : index
    %394 = vector.load %arg3[%c0_151, %c48, %c0_152] : memref<1x81x384xf32, #tpu.memory_space<vmem>>, vector<1x1x384xf32>
    %395 = vector.shape_cast %394 : vector<1x1x384xf32> to vector<1x384xf32>
    %396 = vector.shape_cast %393 : vector<1x384xf32> to vector<1x1x384xf32>
    tpu.vector_store %arg3[%c0_151, %c48, %c0_152], %396 {strides = array<i32>} : memref<1x81x384xf32, #tpu.memory_space<vmem>>, vector<1x1x384xf32>,
    %c516_i32 = arith.constant 516 : i32
    %397 = tpu.dynamic_rotate %5 by %c516_i32 dim 1 : vector<4x640xf32>, i32 -> vector<4x640xf32>
    %398 = vector.extract_strided_slice %397 {offsets = [0, 0], sizes = [4, 384], strides = [1, 1]} : vector<4x640xf32> to vector<4x384xf32>
    %399 = arith.mulf %3, %398 : vector<4x384xf32>
    %cst_153 = arith.constant dense<0.000000e+00> : vector<384xf32>
    %400 = vector.multi_reduction <add>, %399, %cst_153 [0] : vector<4x384xf32> to vector<384xf32>
    %401 = vector.shape_cast %400 : vector<384xf32> to vector<1x384xf32>
    %c0_154 = arith.constant 0 : index
    %c49 = arith.constant 49 : index
    %c0_155 = arith.constant 0 : index
    %402 = vector.load %arg3[%c0_154, %c49, %c0_155] : memref<1x81x384xf32, #tpu.memory_space<vmem>>, vector<1x1x384xf32>
    %403 = vector.shape_cast %402 : vector<1x1x384xf32> to vector<1x384xf32>
    %404 = vector.shape_cast %401 : vector<1x384xf32> to vector<1x1x384xf32>
    tpu.vector_store %arg3[%c0_154, %c49, %c0_155], %404 {strides = array<i32>} : memref<1x81x384xf32, #tpu.memory_space<vmem>>, vector<1x1x384xf32>,
    %c515_i32 = arith.constant 515 : i32
    %405 = tpu.dynamic_rotate %5 by %c515_i32 dim 1 : vector<4x640xf32>, i32 -> vector<4x640xf32>
    %406 = vector.extract_strided_slice %405 {offsets = [0, 0], sizes = [4, 384], strides = [1, 1]} : vector<4x640xf32> to vector<4x384xf32>
    %407 = arith.mulf %3, %406 : vector<4x384xf32>
    %cst_156 = arith.constant dense<0.000000e+00> : vector<384xf32>
    %408 = vector.multi_reduction <add>, %407, %cst_156 [0] : vector<4x384xf32> to vector<384xf32>
    %409 = vector.shape_cast %408 : vector<384xf32> to vector<1x384xf32>
    %c0_157 = arith.constant 0 : index
    %c50 = arith.constant 50 : index
    %c0_158 = arith.constant 0 : index
    %410 = vector.load %arg3[%c0_157, %c50, %c0_158] : memref<1x81x384xf32, #tpu.memory_space<vmem>>, vector<1x1x384xf32>
    %411 = vector.shape_cast %410 : vector<1x1x384xf32> to vector<1x384xf32>
    %412 = vector.shape_cast %409 : vector<1x384xf32> to vector<1x1x384xf32>
    tpu.vector_store %arg3[%c0_157, %c50, %c0_158], %412 {strides = array<i32>} : memref<1x81x384xf32, #tpu.memory_space<vmem>>, vector<1x1x384xf32>,
    %c514_i32 = arith.constant 514 : i32
    %413 = tpu.dynamic_rotate %5 by %c514_i32 dim 1 : vector<4x640xf32>, i32 -> vector<4x640xf32>
    %414 = vector.extract_strided_slice %413 {offsets = [0, 0], sizes = [4, 384], strides = [1, 1]} : vector<4x640xf32> to vector<4x384xf32>
    %415 = arith.mulf %3, %414 : vector<4x384xf32>
    %cst_159 = arith.constant dense<0.000000e+00> : vector<384xf32>
    %416 = vector.multi_reduction <add>, %415, %cst_159 [0] : vector<4x384xf32> to vector<384xf32>
    %417 = vector.shape_cast %416 : vector<384xf32> to vector<1x384xf32>
    %c0_160 = arith.constant 0 : index
    %c51 = arith.constant 51 : index
    %c0_161 = arith.constant 0 : index
    %418 = vector.load %arg3[%c0_160, %c51, %c0_161] : memref<1x81x384xf32, #tpu.memory_space<vmem>>, vector<1x1x384xf32>
    %419 = vector.shape_cast %418 : vector<1x1x384xf32> to vector<1x384xf32>
    %420 = vector.shape_cast %417 : vector<1x384xf32> to vector<1x1x384xf32>
    tpu.vector_store %arg3[%c0_160, %c51, %c0_161], %420 {strides = array<i32>} : memref<1x81x384xf32, #tpu.memory_space<vmem>>, vector<1x1x384xf32>,
    %c513_i32 = arith.constant 513 : i32
    %421 = tpu.dynamic_rotate %5 by %c513_i32 dim 1 : vector<4x640xf32>, i32 -> vector<4x640xf32>
    %422 = vector.extract_strided_slice %421 {offsets = [0, 0], sizes = [4, 384], strides = [1, 1]} : vector<4x640xf32> to vector<4x384xf32>
    %423 = arith.mulf %3, %422 : vector<4x384xf32>
    %cst_162 = arith.constant dense<0.000000e+00> : vector<384xf32>
    %424 = vector.multi_reduction <add>, %423, %cst_162 [0] : vector<4x384xf32> to vector<384xf32>
    %425 = vector.shape_cast %424 : vector<384xf32> to vector<1x384xf32>
    %c0_163 = arith.constant 0 : index
    %c52 = arith.constant 52 : index
    %c0_164 = arith.constant 0 : index
    %426 = vector.load %arg3[%c0_163, %c52, %c0_164] : memref<1x81x384xf32, #tpu.memory_space<vmem>>, vector<1x1x384xf32>
    %427 = vector.shape_cast %426 : vector<1x1x384xf32> to vector<1x384xf32>
    %428 = vector.shape_cast %425 : vector<1x384xf32> to vector<1x1x384xf32>
    tpu.vector_store %arg3[%c0_163, %c52, %c0_164], %428 {strides = array<i32>} : memref<1x81x384xf32, #tpu.memory_space<vmem>>, vector<1x1x384xf32>,
    %c512_i32 = arith.constant 512 : i32
    %429 = tpu.dynamic_rotate %5 by %c512_i32 dim 1 : vector<4x640xf32>, i32 -> vector<4x640xf32>
    %430 = vector.extract_strided_slice %429 {offsets = [0, 0], sizes = [4, 384], strides = [1, 1]} : vector<4x640xf32> to vector<4x384xf32>
    %431 = arith.mulf %3, %430 : vector<4x384xf32>
    %cst_165 = arith.constant dense<0.000000e+00> : vector<384xf32>
    %432 = vector.multi_reduction <add>, %431, %cst_165 [0] : vector<4x384xf32> to vector<384xf32>
    %433 = vector.shape_cast %432 : vector<384xf32> to vector<1x384xf32>
    %c0_166 = arith.constant 0 : index
    %c53 = arith.constant 53 : index
    %c0_167 = arith.constant 0 : index
    %434 = vector.load %arg3[%c0_166, %c53, %c0_167] : memref<1x81x384xf32, #tpu.memory_space<vmem>>, vector<1x1x384xf32>
    %435 = vector.shape_cast %434 : vector<1x1x384xf32> to vector<1x384xf32>
    %436 = vector.shape_cast %433 : vector<1x384xf32> to vector<1x1x384xf32>
    tpu.vector_store %arg3[%c0_166, %c53, %c0_167], %436 {strides = array<i32>} : memref<1x81x384xf32, #tpu.memory_space<vmem>>, vector<1x1x384xf32>,
    %c496_i32 = arith.constant 496 : i32
    %437 = tpu.dynamic_rotate %5 by %c496_i32 dim 1 : vector<4x640xf32>, i32 -> vector<4x640xf32>
    %438 = vector.extract_strided_slice %437 {offsets = [0, 0], sizes = [4, 384], strides = [1, 1]} : vector<4x640xf32> to vector<4x384xf32>
    %439 = arith.mulf %3, %438 : vector<4x384xf32>
    %cst_168 = arith.constant dense<0.000000e+00> : vector<384xf32>
    %440 = vector.multi_reduction <add>, %439, %cst_168 [0] : vector<4x384xf32> to vector<384xf32>
    %441 = vector.shape_cast %440 : vector<384xf32> to vector<1x384xf32>
    %c0_169 = arith.constant 0 : index
    %c54 = arith.constant 54 : index
    %c0_170 = arith.constant 0 : index
    %442 = vector.load %arg3[%c0_169, %c54, %c0_170] : memref<1x81x384xf32, #tpu.memory_space<vmem>>, vector<1x1x384xf32>
    %443 = vector.shape_cast %442 : vector<1x1x384xf32> to vector<1x384xf32>
    %444 = vector.shape_cast %441 : vector<1x384xf32> to vector<1x1x384xf32>
    tpu.vector_store %arg3[%c0_169, %c54, %c0_170], %444 {strides = array<i32>} : memref<1x81x384xf32, #tpu.memory_space<vmem>>, vector<1x1x384xf32>,
    %c495_i32 = arith.constant 495 : i32
    %445 = tpu.dynamic_rotate %5 by %c495_i32 dim 1 : vector<4x640xf32>, i32 -> vector<4x640xf32>
    %446 = vector.extract_strided_slice %445 {offsets = [0, 0], sizes = [4, 384], strides = [1, 1]} : vector<4x640xf32> to vector<4x384xf32>
    %447 = arith.mulf %3, %446 : vector<4x384xf32>
    %cst_171 = arith.constant dense<0.000000e+00> : vector<384xf32>
    %448 = vector.multi_reduction <add>, %447, %cst_171 [0] : vector<4x384xf32> to vector<384xf32>
    %449 = vector.shape_cast %448 : vector<384xf32> to vector<1x384xf32>
    %c0_172 = arith.constant 0 : index
    %c55 = arith.constant 55 : index
    %c0_173 = arith.constant 0 : index
    %450 = vector.load %arg3[%c0_172, %c55, %c0_173] : memref<1x81x384xf32, #tpu.memory_space<vmem>>, vector<1x1x384xf32>
    %451 = vector.shape_cast %450 : vector<1x1x384xf32> to vector<1x384xf32>
    %452 = vector.shape_cast %449 : vector<1x384xf32> to vector<1x1x384xf32>
    tpu.vector_store %arg3[%c0_172, %c55, %c0_173], %452 {strides = array<i32>} : memref<1x81x384xf32, #tpu.memory_space<vmem>>, vector<1x1x384xf32>,
    %c494_i32 = arith.constant 494 : i32
    %453 = tpu.dynamic_rotate %5 by %c494_i32 dim 1 : vector<4x640xf32>, i32 -> vector<4x640xf32>
    %454 = vector.extract_strided_slice %453 {offsets = [0, 0], sizes = [4, 384], strides = [1, 1]} : vector<4x640xf32> to vector<4x384xf32>
    %455 = arith.mulf %3, %454 : vector<4x384xf32>
    %cst_174 = arith.constant dense<0.000000e+00> : vector<384xf32>
    %456 = vector.multi_reduction <add>, %455, %cst_174 [0] : vector<4x384xf32> to vector<384xf32>
    %457 = vector.shape_cast %456 : vector<384xf32> to vector<1x384xf32>
    %c0_175 = arith.constant 0 : index
    %c56 = arith.constant 56 : index
    %c0_176 = arith.constant 0 : index
    %458 = vector.load %arg3[%c0_175, %c56, %c0_176] : memref<1x81x384xf32, #tpu.memory_space<vmem>>, vector<1x1x384xf32>
    %459 = vector.shape_cast %458 : vector<1x1x384xf32> to vector<1x384xf32>
    %460 = vector.shape_cast %457 : vector<1x384xf32> to vector<1x1x384xf32>
    tpu.vector_store %arg3[%c0_175, %c56, %c0_176], %460 {strides = array<i32>} : memref<1x81x384xf32, #tpu.memory_space<vmem>>, vector<1x1x384xf32>,
    %c493_i32 = arith.constant 493 : i32
    %461 = tpu.dynamic_rotate %5 by %c493_i32 dim 1 : vector<4x640xf32>, i32 -> vector<4x640xf32>
    %462 = vector.extract_strided_slice %461 {offsets = [0, 0], sizes = [4, 384], strides = [1, 1]} : vector<4x640xf32> to vector<4x384xf32>
    %463 = arith.mulf %3, %462 : vector<4x384xf32>
    %cst_177 = arith.constant dense<0.000000e+00> : vector<384xf32>
    %464 = vector.multi_reduction <add>, %463, %cst_177 [0] : vector<4x384xf32> to vector<384xf32>
    %465 = vector.shape_cast %464 : vector<384xf32> to vector<1x384xf32>
    %c0_178 = arith.constant 0 : index
    %c57 = arith.constant 57 : index
    %c0_179 = arith.constant 0 : index
    %466 = vector.load %arg3[%c0_178, %c57, %c0_179] : memref<1x81x384xf32, #tpu.memory_space<vmem>>, vector<1x1x384xf32>
    %467 = vector.shape_cast %466 : vector<1x1x384xf32> to vector<1x384xf32>
    %468 = vector.shape_cast %465 : vector<1x384xf32> to vector<1x1x384xf32>
    tpu.vector_store %arg3[%c0_178, %c57, %c0_179], %468 {strides = array<i32>} : memref<1x81x384xf32, #tpu.memory_space<vmem>>, vector<1x1x384xf32>,
    %c492_i32 = arith.constant 492 : i32
    %469 = tpu.dynamic_rotate %5 by %c492_i32 dim 1 : vector<4x640xf32>, i32 -> vector<4x640xf32>
    %470 = vector.extract_strided_slice %469 {offsets = [0, 0], sizes = [4, 384], strides = [1, 1]} : vector<4x640xf32> to vector<4x384xf32>
    %471 = arith.mulf %3, %470 : vector<4x384xf32>
    %cst_180 = arith.constant dense<0.000000e+00> : vector<384xf32>
    %472 = vector.multi_reduction <add>, %471, %cst_180 [0] : vector<4x384xf32> to vector<384xf32>
    %473 = vector.shape_cast %472 : vector<384xf32> to vector<1x384xf32>
    %c0_181 = arith.constant 0 : index
    %c58 = arith.constant 58 : index
    %c0_182 = arith.constant 0 : index
    %474 = vector.load %arg3[%c0_181, %c58, %c0_182] : memref<1x81x384xf32, #tpu.memory_space<vmem>>, vector<1x1x384xf32>
    %475 = vector.shape_cast %474 : vector<1x1x384xf32> to vector<1x384xf32>
    %476 = vector.shape_cast %473 : vector<1x384xf32> to vector<1x1x384xf32>
    tpu.vector_store %arg3[%c0_181, %c58, %c0_182], %476 {strides = array<i32>} : memref<1x81x384xf32, #tpu.memory_space<vmem>>, vector<1x1x384xf32>,
    %c491_i32 = arith.constant 491 : i32
    %477 = tpu.dynamic_rotate %5 by %c491_i32 dim 1 : vector<4x640xf32>, i32 -> vector<4x640xf32>
    %478 = vector.extract_strided_slice %477 {offsets = [0, 0], sizes = [4, 384], strides = [1, 1]} : vector<4x640xf32> to vector<4x384xf32>
    %479 = arith.mulf %3, %478 : vector<4x384xf32>
    %cst_183 = arith.constant dense<0.000000e+00> : vector<384xf32>
    %480 = vector.multi_reduction <add>, %479, %cst_183 [0] : vector<4x384xf32> to vector<384xf32>
    %481 = vector.shape_cast %480 : vector<384xf32> to vector<1x384xf32>
    %c0_184 = arith.constant 0 : index
    %c59 = arith.constant 59 : index
    %c0_185 = arith.constant 0 : index
    %482 = vector.load %arg3[%c0_184, %c59, %c0_185] : memref<1x81x384xf32, #tpu.memory_space<vmem>>, vector<1x1x384xf32>
    %483 = vector.shape_cast %482 : vector<1x1x384xf32> to vector<1x384xf32>
    %484 = vector.shape_cast %481 : vector<1x384xf32> to vector<1x1x384xf32>
    tpu.vector_store %arg3[%c0_184, %c59, %c0_185], %484 {strides = array<i32>} : memref<1x81x384xf32, #tpu.memory_space<vmem>>, vector<1x1x384xf32>,
    %c490_i32 = arith.constant 490 : i32
    %485 = tpu.dynamic_rotate %5 by %c490_i32 dim 1 : vector<4x640xf32>, i32 -> vector<4x640xf32>
    %486 = vector.extract_strided_slice %485 {offsets = [0, 0], sizes = [4, 384], strides = [1, 1]} : vector<4x640xf32> to vector<4x384xf32>
    %487 = arith.mulf %3, %486 : vector<4x384xf32>
    %cst_186 = arith.constant dense<0.000000e+00> : vector<384xf32>
    %488 = vector.multi_reduction <add>, %487, %cst_186 [0] : vector<4x384xf32> to vector<384xf32>
    %489 = vector.shape_cast %488 : vector<384xf32> to vector<1x384xf32>
    %c0_187 = arith.constant 0 : index
    %c60 = arith.constant 60 : index
    %c0_188 = arith.constant 0 : index
    %490 = vector.load %arg3[%c0_187, %c60, %c0_188] : memref<1x81x384xf32, #tpu.memory_space<vmem>>, vector<1x1x384xf32>
    %491 = vector.shape_cast %490 : vector<1x1x384xf32> to vector<1x384xf32>
    %492 = vector.shape_cast %489 : vector<1x384xf32> to vector<1x1x384xf32>
    tpu.vector_store %arg3[%c0_187, %c60, %c0_188], %492 {strides = array<i32>} : memref<1x81x384xf32, #tpu.memory_space<vmem>>, vector<1x1x384xf32>,
    %c489_i32 = arith.constant 489 : i32
    %493 = tpu.dynamic_rotate %5 by %c489_i32 dim 1 : vector<4x640xf32>, i32 -> vector<4x640xf32>
    %494 = vector.extract_strided_slice %493 {offsets = [0, 0], sizes = [4, 384], strides = [1, 1]} : vector<4x640xf32> to vector<4x384xf32>
    %495 = arith.mulf %3, %494 : vector<4x384xf32>
    %cst_189 = arith.constant dense<0.000000e+00> : vector<384xf32>
    %496 = vector.multi_reduction <add>, %495, %cst_189 [0] : vector<4x384xf32> to vector<384xf32>
    %497 = vector.shape_cast %496 : vector<384xf32> to vector<1x384xf32>
    %c0_190 = arith.constant 0 : index
    %c61 = arith.constant 61 : index
    %c0_191 = arith.constant 0 : index
    %498 = vector.load %arg3[%c0_190, %c61, %c0_191] : memref<1x81x384xf32, #tpu.memory_space<vmem>>, vector<1x1x384xf32>
    %499 = vector.shape_cast %498 : vector<1x1x384xf32> to vector<1x384xf32>
    %500 = vector.shape_cast %497 : vector<1x384xf32> to vector<1x1x384xf32>
    tpu.vector_store %arg3[%c0_190, %c61, %c0_191], %500 {strides = array<i32>} : memref<1x81x384xf32, #tpu.memory_space<vmem>>, vector<1x1x384xf32>,
    %c488_i32 = arith.constant 488 : i32
    %501 = tpu.dynamic_rotate %5 by %c488_i32 dim 1 : vector<4x640xf32>, i32 -> vector<4x640xf32>
    %502 = vector.extract_strided_slice %501 {offsets = [0, 0], sizes = [4, 384], strides = [1, 1]} : vector<4x640xf32> to vector<4x384xf32>
    %503 = arith.mulf %3, %502 : vector<4x384xf32>
    %cst_192 = arith.constant dense<0.000000e+00> : vector<384xf32>
    %504 = vector.multi_reduction <add>, %503, %cst_192 [0] : vector<4x384xf32> to vector<384xf32>
    %505 = vector.shape_cast %504 : vector<384xf32> to vector<1x384xf32>
    %c0_193 = arith.constant 0 : index
    %c62 = arith.constant 62 : index
    %c0_194 = arith.constant 0 : index
    %506 = vector.load %arg3[%c0_193, %c62, %c0_194] : memref<1x81x384xf32, #tpu.memory_space<vmem>>, vector<1x1x384xf32>
    %507 = vector.shape_cast %506 : vector<1x1x384xf32> to vector<1x384xf32>
    %508 = vector.shape_cast %505 : vector<1x384xf32> to vector<1x1x384xf32>
    tpu.vector_store %arg3[%c0_193, %c62, %c0_194], %508 {strides = array<i32>} : memref<1x81x384xf32, #tpu.memory_space<vmem>>, vector<1x1x384xf32>,
    %c472_i32 = arith.constant 472 : i32
    %509 = tpu.dynamic_rotate %5 by %c472_i32 dim 1 : vector<4x640xf32>, i32 -> vector<4x640xf32>
    %510 = vector.extract_strided_slice %509 {offsets = [0, 0], sizes = [4, 384], strides = [1, 1]} : vector<4x640xf32> to vector<4x384xf32>
    %511 = arith.mulf %3, %510 : vector<4x384xf32>
    %cst_195 = arith.constant dense<0.000000e+00> : vector<384xf32>
    %512 = vector.multi_reduction <add>, %511, %cst_195 [0] : vector<4x384xf32> to vector<384xf32>
    %513 = vector.shape_cast %512 : vector<384xf32> to vector<1x384xf32>
    %c0_196 = arith.constant 0 : index
    %c63 = arith.constant 63 : index
    %c0_197 = arith.constant 0 : index
    %514 = vector.load %arg3[%c0_196, %c63, %c0_197] : memref<1x81x384xf32, #tpu.memory_space<vmem>>, vector<1x1x384xf32>
    %515 = vector.shape_cast %514 : vector<1x1x384xf32> to vector<1x384xf32>
    %516 = vector.shape_cast %513 : vector<1x384xf32> to vector<1x1x384xf32>
    tpu.vector_store %arg3[%c0_196, %c63, %c0_197], %516 {strides = array<i32>} : memref<1x81x384xf32, #tpu.memory_space<vmem>>, vector<1x1x384xf32>,
    %c471_i32 = arith.constant 471 : i32
    %517 = tpu.dynamic_rotate %5 by %c471_i32 dim 1 : vector<4x640xf32>, i32 -> vector<4x640xf32>
    %518 = vector.extract_strided_slice %517 {offsets = [0, 0], sizes = [4, 384], strides = [1, 1]} : vector<4x640xf32> to vector<4x384xf32>
    %519 = arith.mulf %3, %518 : vector<4x384xf32>
    %cst_198 = arith.constant dense<0.000000e+00> : vector<384xf32>
    %520 = vector.multi_reduction <add>, %519, %cst_198 [0] : vector<4x384xf32> to vector<384xf32>
    %521 = vector.shape_cast %520 : vector<384xf32> to vector<1x384xf32>
    %c0_199 = arith.constant 0 : index
    %c64 = arith.constant 64 : index
    %c0_200 = arith.constant 0 : index
    %522 = vector.load %arg3[%c0_199, %c64, %c0_200] : memref<1x81x384xf32, #tpu.memory_space<vmem>>, vector<1x1x384xf32>
    %523 = vector.shape_cast %522 : vector<1x1x384xf32> to vector<1x384xf32>
    %524 = vector.shape_cast %521 : vector<1x384xf32> to vector<1x1x384xf32>
    tpu.vector_store %arg3[%c0_199, %c64, %c0_200], %524 {strides = array<i32>} : memref<1x81x384xf32, #tpu.memory_space<vmem>>, vector<1x1x384xf32>,
    %c470_i32 = arith.constant 470 : i32
    %525 = tpu.dynamic_rotate %5 by %c470_i32 dim 1 : vector<4x640xf32>, i32 -> vector<4x640xf32>
    %526 = vector.extract_strided_slice %525 {offsets = [0, 0], sizes = [4, 384], strides = [1, 1]} : vector<4x640xf32> to vector<4x384xf32>
    %527 = arith.mulf %3, %526 : vector<4x384xf32>
    %cst_201 = arith.constant dense<0.000000e+00> : vector<384xf32>
    %528 = vector.multi_reduction <add>, %527, %cst_201 [0] : vector<4x384xf32> to vector<384xf32>
    %529 = vector.shape_cast %528 : vector<384xf32> to vector<1x384xf32>
    %c0_202 = arith.constant 0 : index
    %c65 = arith.constant 65 : index
    %c0_203 = arith.constant 0 : index
    %530 = vector.load %arg3[%c0_202, %c65, %c0_203] : memref<1x81x384xf32, #tpu.memory_space<vmem>>, vector<1x1x384xf32>
    %531 = vector.shape_cast %530 : vector<1x1x384xf32> to vector<1x384xf32>
    %532 = vector.shape_cast %529 : vector<1x384xf32> to vector<1x1x384xf32>
    tpu.vector_store %arg3[%c0_202, %c65, %c0_203], %532 {strides = array<i32>} : memref<1x81x384xf32, #tpu.memory_space<vmem>>, vector<1x1x384xf32>,
    %c469_i32 = arith.constant 469 : i32
    %533 = tpu.dynamic_rotate %5 by %c469_i32 dim 1 : vector<4x640xf32>, i32 -> vector<4x640xf32>
    %534 = vector.extract_strided_slice %533 {offsets = [0, 0], sizes = [4, 384], strides = [1, 1]} : vector<4x640xf32> to vector<4x384xf32>
    %535 = arith.mulf %3, %534 : vector<4x384xf32>
    %cst_204 = arith.constant dense<0.000000e+00> : vector<384xf32>
    %536 = vector.multi_reduction <add>, %535, %cst_204 [0] : vector<4x384xf32> to vector<384xf32>
    %537 = vector.shape_cast %536 : vector<384xf32> to vector<1x384xf32>
    %c0_205 = arith.constant 0 : index
    %c66 = arith.constant 66 : index
    %c0_206 = arith.constant 0 : index
    %538 = vector.load %arg3[%c0_205, %c66, %c0_206] : memref<1x81x384xf32, #tpu.memory_space<vmem>>, vector<1x1x384xf32>
    %539 = vector.shape_cast %538 : vector<1x1x384xf32> to vector<1x384xf32>
    %540 = vector.shape_cast %537 : vector<1x384xf32> to vector<1x1x384xf32>
    tpu.vector_store %arg3[%c0_205, %c66, %c0_206], %540 {strides = array<i32>} : memref<1x81x384xf32, #tpu.memory_space<vmem>>, vector<1x1x384xf32>,
    %c468_i32 = arith.constant 468 : i32
    %541 = tpu.dynamic_rotate %5 by %c468_i32 dim 1 : vector<4x640xf32>, i32 -> vector<4x640xf32>
    %542 = vector.extract_strided_slice %541 {offsets = [0, 0], sizes = [4, 384], strides = [1, 1]} : vector<4x640xf32> to vector<4x384xf32>
    %543 = arith.mulf %3, %542 : vector<4x384xf32>
    %cst_207 = arith.constant dense<0.000000e+00> : vector<384xf32>
    %544 = vector.multi_reduction <add>, %543, %cst_207 [0] : vector<4x384xf32> to vector<384xf32>
    %545 = vector.shape_cast %544 : vector<384xf32> to vector<1x384xf32>
    %c0_208 = arith.constant 0 : index
    %c67 = arith.constant 67 : index
    %c0_209 = arith.constant 0 : index
    %546 = vector.load %arg3[%c0_208, %c67, %c0_209] : memref<1x81x384xf32, #tpu.memory_space<vmem>>, vector<1x1x384xf32>
    %547 = vector.shape_cast %546 : vector<1x1x384xf32> to vector<1x384xf32>
    %548 = vector.shape_cast %545 : vector<1x384xf32> to vector<1x1x384xf32>
    tpu.vector_store %arg3[%c0_208, %c67, %c0_209], %548 {strides = array<i32>} : memref<1x81x384xf32, #tpu.memory_space<vmem>>, vector<1x1x384xf32>,
    %c467_i32 = arith.constant 467 : i32
    %549 = tpu.dynamic_rotate %5 by %c467_i32 dim 1 : vector<4x640xf32>, i32 -> vector<4x640xf32>
    %550 = vector.extract_strided_slice %549 {offsets = [0, 0], sizes = [4, 384], strides = [1, 1]} : vector<4x640xf32> to vector<4x384xf32>
    %551 = arith.mulf %3, %550 : vector<4x384xf32>
    %cst_210 = arith.constant dense<0.000000e+00> : vector<384xf32>
    %552 = vector.multi_reduction <add>, %551, %cst_210 [0] : vector<4x384xf32> to vector<384xf32>
    %553 = vector.shape_cast %552 : vector<384xf32> to vector<1x384xf32>
    %c0_211 = arith.constant 0 : index
    %c68 = arith.constant 68 : index
    %c0_212 = arith.constant 0 : index
    %554 = vector.load %arg3[%c0_211, %c68, %c0_212] : memref<1x81x384xf32, #tpu.memory_space<vmem>>, vector<1x1x384xf32>
    %555 = vector.shape_cast %554 : vector<1x1x384xf32> to vector<1x384xf32>
    %556 = vector.shape_cast %553 : vector<1x384xf32> to vector<1x1x384xf32>
    tpu.vector_store %arg3[%c0_211, %c68, %c0_212], %556 {strides = array<i32>} : memref<1x81x384xf32, #tpu.memory_space<vmem>>, vector<1x1x384xf32>,
    %c466_i32 = arith.constant 466 : i32
    %557 = tpu.dynamic_rotate %5 by %c466_i32 dim 1 : vector<4x640xf32>, i32 -> vector<4x640xf32>
    %558 = vector.extract_strided_slice %557 {offsets = [0, 0], sizes = [4, 384], strides = [1, 1]} : vector<4x640xf32> to vector<4x384xf32>
    %559 = arith.mulf %3, %558 : vector<4x384xf32>
    %cst_213 = arith.constant dense<0.000000e+00> : vector<384xf32>
    %560 = vector.multi_reduction <add>, %559, %cst_213 [0] : vector<4x384xf32> to vector<384xf32>
    %561 = vector.shape_cast %560 : vector<384xf32> to vector<1x384xf32>
    %c0_214 = arith.constant 0 : index
    %c69 = arith.constant 69 : index
    %c0_215 = arith.constant 0 : index
    %562 = vector.load %arg3[%c0_214, %c69, %c0_215] : memref<1x81x384xf32, #tpu.memory_space<vmem>>, vector<1x1x384xf32>
    %563 = vector.shape_cast %562 : vector<1x1x384xf32> to vector<1x384xf32>
    %564 = vector.shape_cast %561 : vector<1x384xf32> to vector<1x1x384xf32>
    tpu.vector_store %arg3[%c0_214, %c69, %c0_215], %564 {strides = array<i32>} : memref<1x81x384xf32, #tpu.memory_space<vmem>>, vector<1x1x384xf32>,
    %c465_i32 = arith.constant 465 : i32
    %565 = tpu.dynamic_rotate %5 by %c465_i32 dim 1 : vector<4x640xf32>, i32 -> vector<4x640xf32>
    %566 = vector.extract_strided_slice %565 {offsets = [0, 0], sizes = [4, 384], strides = [1, 1]} : vector<4x640xf32> to vector<4x384xf32>
    %567 = arith.mulf %3, %566 : vector<4x384xf32>
    %cst_216 = arith.constant dense<0.000000e+00> : vector<384xf32>
    %568 = vector.multi_reduction <add>, %567, %cst_216 [0] : vector<4x384xf32> to vector<384xf32>
    %569 = vector.shape_cast %568 : vector<384xf32> to vector<1x384xf32>
    %c0_217 = arith.constant 0 : index
    %c70 = arith.constant 70 : index
    %c0_218 = arith.constant 0 : index
    %570 = vector.load %arg3[%c0_217, %c70, %c0_218] : memref<1x81x384xf32, #tpu.memory_space<vmem>>, vector<1x1x384xf32>
    %571 = vector.shape_cast %570 : vector<1x1x384xf32> to vector<1x384xf32>
    %572 = vector.shape_cast %569 : vector<1x384xf32> to vector<1x1x384xf32>
    tpu.vector_store %arg3[%c0_217, %c70, %c0_218], %572 {strides = array<i32>} : memref<1x81x384xf32, #tpu.memory_space<vmem>>, vector<1x1x384xf32>,
    %c464_i32 = arith.constant 464 : i32
    %573 = tpu.dynamic_rotate %5 by %c464_i32 dim 1 : vector<4x640xf32>, i32 -> vector<4x640xf32>
    %574 = vector.extract_strided_slice %573 {offsets = [0, 0], sizes = [4, 384], strides = [1, 1]} : vector<4x640xf32> to vector<4x384xf32>
    %575 = arith.mulf %3, %574 : vector<4x384xf32>
    %cst_219 = arith.constant dense<0.000000e+00> : vector<384xf32>
    %576 = vector.multi_reduction <add>, %575, %cst_219 [0] : vector<4x384xf32> to vector<384xf32>
    %577 = vector.shape_cast %576 : vector<384xf32> to vector<1x384xf32>
    %c0_220 = arith.constant 0 : index
    %c71 = arith.constant 71 : index
    %c0_221 = arith.constant 0 : index
    %578 = vector.load %arg3[%c0_220, %c71, %c0_221] : memref<1x81x384xf32, #tpu.memory_space<vmem>>, vector<1x1x384xf32>
    %579 = vector.shape_cast %578 : vector<1x1x384xf32> to vector<1x384xf32>
    %580 = vector.shape_cast %577 : vector<1x384xf32> to vector<1x1x384xf32>
    tpu.vector_store %arg3[%c0_220, %c71, %c0_221], %580 {strides = array<i32>} : memref<1x81x384xf32, #tpu.memory_space<vmem>>, vector<1x1x384xf32>,
    %c448_i32 = arith.constant 448 : i32
    %581 = tpu.dynamic_rotate %5 by %c448_i32 dim 1 : vector<4x640xf32>, i32 -> vector<4x640xf32>
    %582 = vector.extract_strided_slice %581 {offsets = [0, 0], sizes = [4, 384], strides = [1, 1]} : vector<4x640xf32> to vector<4x384xf32>
    %583 = arith.mulf %3, %582 : vector<4x384xf32>
    %cst_222 = arith.constant dense<0.000000e+00> : vector<384xf32>
    %584 = vector.multi_reduction <add>, %583, %cst_222 [0] : vector<4x384xf32> to vector<384xf32>
    %585 = vector.shape_cast %584 : vector<384xf32> to vector<1x384xf32>
    %c0_223 = arith.constant 0 : index
    %c72 = arith.constant 72 : index
    %c0_224 = arith.constant 0 : index
    %586 = vector.load %arg3[%c0_223, %c72, %c0_224] : memref<1x81x384xf32, #tpu.memory_space<vmem>>, vector<1x1x384xf32>
    %587 = vector.shape_cast %586 : vector<1x1x384xf32> to vector<1x384xf32>
    %588 = vector.shape_cast %585 : vector<1x384xf32> to vector<1x1x384xf32>
    tpu.vector_store %arg3[%c0_223, %c72, %c0_224], %588 {strides = array<i32>} : memref<1x81x384xf32, #tpu.memory_space<vmem>>, vector<1x1x384xf32>,
    %c447_i32 = arith.constant 447 : i32
    %589 = tpu.dynamic_rotate %5 by %c447_i32 dim 1 : vector<4x640xf32>, i32 -> vector<4x640xf32>
    %590 = vector.extract_strided_slice %589 {offsets = [0, 0], sizes = [4, 384], strides = [1, 1]} : vector<4x640xf32> to vector<4x384xf32>
    %591 = arith.mulf %3, %590 : vector<4x384xf32>
    %cst_225 = arith.constant dense<0.000000e+00> : vector<384xf32>
    %592 = vector.multi_reduction <add>, %591, %cst_225 [0] : vector<4x384xf32> to vector<384xf32>
    %593 = vector.shape_cast %592 : vector<384xf32> to vector<1x384xf32>
    %c0_226 = arith.constant 0 : index
    %c73 = arith.constant 73 : index
    %c0_227 = arith.constant 0 : index
    %594 = vector.load %arg3[%c0_226, %c73, %c0_227] : memref<1x81x384xf32, #tpu.memory_space<vmem>>, vector<1x1x384xf32>
    %595 = vector.shape_cast %594 : vector<1x1x384xf32> to vector<1x384xf32>
    %596 = vector.shape_cast %593 : vector<1x384xf32> to vector<1x1x384xf32>
    tpu.vector_store %arg3[%c0_226, %c73, %c0_227], %596 {strides = array<i32>} : memref<1x81x384xf32, #tpu.memory_space<vmem>>, vector<1x1x384xf32>,
    %c446_i32 = arith.constant 446 : i32
    %597 = tpu.dynamic_rotate %5 by %c446_i32 dim 1 : vector<4x640xf32>, i32 -> vector<4x640xf32>
    %598 = vector.extract_strided_slice %597 {offsets = [0, 0], sizes = [4, 384], strides = [1, 1]} : vector<4x640xf32> to vector<4x384xf32>
    %599 = arith.mulf %3, %598 : vector<4x384xf32>
    %cst_228 = arith.constant dense<0.000000e+00> : vector<384xf32>
    %600 = vector.multi_reduction <add>, %599, %cst_228 [0] : vector<4x384xf32> to vector<384xf32>
    %601 = vector.shape_cast %600 : vector<384xf32> to vector<1x384xf32>
    %c0_229 = arith.constant 0 : index
    %c74 = arith.constant 74 : index
    %c0_230 = arith.constant 0 : index
    %602 = vector.load %arg3[%c0_229, %c74, %c0_230] : memref<1x81x384xf32, #tpu.memory_space<vmem>>, vector<1x1x384xf32>
    %603 = vector.shape_cast %602 : vector<1x1x384xf32> to vector<1x384xf32>
    %604 = vector.shape_cast %601 : vector<1x384xf32> to vector<1x1x384xf32>
    tpu.vector_store %arg3[%c0_229, %c74, %c0_230], %604 {strides = array<i32>} : memref<1x81x384xf32, #tpu.memory_space<vmem>>, vector<1x1x384xf32>,
    %c445_i32 = arith.constant 445 : i32
    %605 = tpu.dynamic_rotate %5 by %c445_i32 dim 1 : vector<4x640xf32>, i32 -> vector<4x640xf32>
    %606 = vector.extract_strided_slice %605 {offsets = [0, 0], sizes = [4, 384], strides = [1, 1]} : vector<4x640xf32> to vector<4x384xf32>
    %607 = arith.mulf %3, %606 : vector<4x384xf32>
    %cst_231 = arith.constant dense<0.000000e+00> : vector<384xf32>
    %608 = vector.multi_reduction <add>, %607, %cst_231 [0] : vector<4x384xf32> to vector<384xf32>
    %609 = vector.shape_cast %608 : vector<384xf32> to vector<1x384xf32>
    %c0_232 = arith.constant 0 : index
    %c75 = arith.constant 75 : index
    %c0_233 = arith.constant 0 : index
    %610 = vector.load %arg3[%c0_232, %c75, %c0_233] : memref<1x81x384xf32, #tpu.memory_space<vmem>>, vector<1x1x384xf32>
    %611 = vector.shape_cast %610 : vector<1x1x384xf32> to vector<1x384xf32>
    %612 = vector.shape_cast %609 : vector<1x384xf32> to vector<1x1x384xf32>
    tpu.vector_store %arg3[%c0_232, %c75, %c0_233], %612 {strides = array<i32>} : memref<1x81x384xf32, #tpu.memory_space<vmem>>, vector<1x1x384xf32>,
    %c444_i32 = arith.constant 444 : i32
    %613 = tpu.dynamic_rotate %5 by %c444_i32 dim 1 : vector<4x640xf32>, i32 -> vector<4x640xf32>
    %614 = vector.extract_strided_slice %613 {offsets = [0, 0], sizes = [4, 384], strides = [1, 1]} : vector<4x640xf32> to vector<4x384xf32>
    %615 = arith.mulf %3, %614 : vector<4x384xf32>
    %cst_234 = arith.constant dense<0.000000e+00> : vector<384xf32>
    %616 = vector.multi_reduction <add>, %615, %cst_234 [0] : vector<4x384xf32> to vector<384xf32>
    %617 = vector.shape_cast %616 : vector<384xf32> to vector<1x384xf32>
    %c0_235 = arith.constant 0 : index
    %c76 = arith.constant 76 : index
    %c0_236 = arith.constant 0 : index
    %618 = vector.load %arg3[%c0_235, %c76, %c0_236] : memref<1x81x384xf32, #tpu.memory_space<vmem>>, vector<1x1x384xf32>
    %619 = vector.shape_cast %618 : vector<1x1x384xf32> to vector<1x384xf32>
    %620 = vector.shape_cast %617 : vector<1x384xf32> to vector<1x1x384xf32>
    tpu.vector_store %arg3[%c0_235, %c76, %c0_236], %620 {strides = array<i32>} : memref<1x81x384xf32, #tpu.memory_space<vmem>>, vector<1x1x384xf32>,
    %c443_i32 = arith.constant 443 : i32
    %621 = tpu.dynamic_rotate %5 by %c443_i32 dim 1 : vector<4x640xf32>, i32 -> vector<4x640xf32>
    %622 = vector.extract_strided_slice %621 {offsets = [0, 0], sizes = [4, 384], strides = [1, 1]} : vector<4x640xf32> to vector<4x384xf32>
    %623 = arith.mulf %3, %622 : vector<4x384xf32>
    %cst_237 = arith.constant dense<0.000000e+00> : vector<384xf32>
    %624 = vector.multi_reduction <add>, %623, %cst_237 [0] : vector<4x384xf32> to vector<384xf32>
    %625 = vector.shape_cast %624 : vector<384xf32> to vector<1x384xf32>
    %c0_238 = arith.constant 0 : index
    %c77 = arith.constant 77 : index
    %c0_239 = arith.constant 0 : index
    %626 = vector.load %arg3[%c0_238, %c77, %c0_239] : memref<1x81x384xf32, #tpu.memory_space<vmem>>, vector<1x1x384xf32>
    %627 = vector.shape_cast %626 : vector<1x1x384xf32> to vector<1x384xf32>
    %628 = vector.shape_cast %625 : vector<1x384xf32> to vector<1x1x384xf32>
    tpu.vector_store %arg3[%c0_238, %c77, %c0_239], %628 {strides = array<i32>} : memref<1x81x384xf32, #tpu.memory_space<vmem>>, vector<1x1x384xf32>,
    %c442_i32 = arith.constant 442 : i32
    %629 = tpu.dynamic_rotate %5 by %c442_i32 dim 1 : vector<4x640xf32>, i32 -> vector<4x640xf32>
    %630 = vector.extract_strided_slice %629 {offsets = [0, 0], sizes = [4, 384], strides = [1, 1]} : vector<4x640xf32> to vector<4x384xf32>
    %631 = arith.mulf %3, %630 : vector<4x384xf32>
    %cst_240 = arith.constant dense<0.000000e+00> : vector<384xf32>
    %632 = vector.multi_reduction <add>, %631, %cst_240 [0] : vector<4x384xf32> to vector<384xf32>
    %633 = vector.shape_cast %632 : vector<384xf32> to vector<1x384xf32>
    %c0_241 = arith.constant 0 : index
    %c78 = arith.constant 78 : index
    %c0_242 = arith.constant 0 : index
    %634 = vector.load %arg3[%c0_241, %c78, %c0_242] : memref<1x81x384xf32, #tpu.memory_space<vmem>>, vector<1x1x384xf32>
    %635 = vector.shape_cast %634 : vector<1x1x384xf32> to vector<1x384xf32>
    %636 = vector.shape_cast %633 : vector<1x384xf32> to vector<1x1x384xf32>
    tpu.vector_store %arg3[%c0_241, %c78, %c0_242], %636 {strides = array<i32>} : memref<1x81x384xf32, #tpu.memory_space<vmem>>, vector<1x1x384xf32>,
    %c441_i32 = arith.constant 441 : i32
    %637 = tpu.dynamic_rotate %5 by %c441_i32 dim 1 : vector<4x640xf32>, i32 -> vector<4x640xf32>
    %638 = vector.extract_strided_slice %637 {offsets = [0, 0], sizes = [4, 384], strides = [1, 1]} : vector<4x640xf32> to vector<4x384xf32>
    %639 = arith.mulf %3, %638 : vector<4x384xf32>
    %cst_243 = arith.constant dense<0.000000e+00> : vector<384xf32>
    %640 = vector.multi_reduction <add>, %639, %cst_243 [0] : vector<4x384xf32> to vector<384xf32>
    %641 = vector.shape_cast %640 : vector<384xf32> to vector<1x384xf32>
    %c0_244 = arith.constant 0 : index
    %c79 = arith.constant 79 : index
    %c0_245 = arith.constant 0 : index
    %642 = vector.load %arg3[%c0_244, %c79, %c0_245] : memref<1x81x384xf32, #tpu.memory_space<vmem>>, vector<1x1x384xf32>
    %643 = vector.shape_cast %642 : vector<1x1x384xf32> to vector<1x384xf32>
    %644 = vector.shape_cast %641 : vector<1x384xf32> to vector<1x1x384xf32>
    tpu.vector_store %arg3[%c0_244, %c79, %c0_245], %644 {strides = array<i32>} : memref<1x81x384xf32, #tpu.memory_space<vmem>>, vector<1x1x384xf32>,
    %c440_i32 = arith.constant 440 : i32
    %645 = tpu.dynamic_rotate %5 by %c440_i32 dim 1 : vector<4x640xf32>, i32 -> vector<4x640xf32>
    %646 = vector.extract_strided_slice %645 {offsets = [0, 0], sizes = [4, 384], strides = [1, 1]} : vector<4x640xf32> to vector<4x384xf32>
    %647 = arith.mulf %3, %646 : vector<4x384xf32>
    %cst_246 = arith.constant dense<0.000000e+00> : vector<384xf32>
    %648 = vector.multi_reduction <add>, %647, %cst_246 [0] : vector<4x384xf32> to vector<384xf32>
    %649 = vector.shape_cast %648 : vector<384xf32> to vector<1x384xf32>
    %c0_247 = arith.constant 0 : index
    %c80 = arith.constant 80 : index
    %c0_248 = arith.constant 0 : index
    %650 = vector.load %arg3[%c0_247, %c80, %c0_248] : memref<1x81x384xf32, #tpu.memory_space<vmem>>, vector<1x1x384xf32>
    %651 = vector.shape_cast %650 : vector<1x1x384xf32> to vector<1x384xf32>
    %652 = vector.shape_cast %649 : vector<1x384xf32> to vector<1x1x384xf32>
    tpu.vector_store %arg3[%c0_247, %c80, %c0_248], %652 {strides = array<i32>} : memref<1x81x384xf32, #tpu.memory_space<vmem>>, vector<1x1x384xf32>,
    return
  }
  func.func @transform_0(%arg0: i32) -> (i32, i32, i32) {
    %c0_i32 = arith.constant 0 : i32
    %c0_i32_0 = arith.constant 0 : i32
    %c0_i32_1 = arith.constant 0 : i32
    return %arg0, %c0_i32, %c0_i32_0 : i32, i32, i32
  }
  func.func @transform_1(%arg0: i32) -> (i32, i32, i32) {
    %c0_i32 = arith.constant 0 : i32
    %c0_i32_0 = arith.constant 0 : i32
    %c0_i32_1 = arith.constant 0 : i32
    return %arg0, %c0_i32, %c0_i32_0 : i32, i32, i32
  }
  func.func @transform_2(%arg0: i32) -> (i32, i32, i32) {
    %c0_i32 = arith.constant 0 : i32
    %c0_i32_0 = arith.constant 0 : i32
    %c0_i32_1 = arith.constant 0 : i32
    return %arg0, %c0_i32, %c0_i32_0 : i32, i32, i32
  }
}

</mosaic_0001>

<llo_original>
// kernel: tpu_custom_call.1
$region0: #{tpu_custom_call.1}
  #allocation0 [shape = 'u32[]', space=smem, size = 0x4, offset = 0x4, fixed_abs, tag = 'smem constant byte address 0x4 - core index']
  #allocation1 [shape = 'u32[144,128]{1,0:T(1,128)}', space=vmem, size = 0x12000, scoped, tag = 'internal scratch']
  %s0 = inlined_call_operand.hbm [shape: f32[2,4,384], index: 0, kind: input, shape index: {}]
  %s1 = inlined_call_operand.hbm [shape: f32[2,4,640], index: 1, kind: input, shape index: {}]
  %s2 = inlined_call_operand.vmem [shape: f32[2,81,384], index: 2, kind: output, shape index: {}]
  %s3 = sld [smem:[#allocation0]]
  $region49: #{tpu_custom_call.1} parent=0
    _
  %s5 = ssub.s32 1, %s3
  %s6 = scalar_select 0, %s5, %s3
  $region1: #{tpu_custom_call.1} parent=0
    #allocation2 [shape = 'u8[12288]{0}', space=vmem, size = 0x3000, scoped, tag = 'input window, operand 0']
    #allocation3 [shape = 's32[2]{0}', space=sflag, size = 0x8, scoped, tag = 'scoped memory for tpu_custom_call.1']
    #allocation4 [shape = 'u8[20480]{0}', space=vmem, size = 0x5000, scoped, tag = 'input window, operand 1']
    #allocation5 [shape = 's32[2]{0}', space=sflag, size = 0x8, scoped, tag = 'scoped memory for tpu_custom_call.1']
    %7 = vsyncpa [#allocation3], 0
    %s8 = scalar_lea.sflag [#allocation3], 1
    %9 = vsyncpa %s8, 0
    %10 = vsyncpa [#allocation5], 0
    %s11 = scalar_lea.sflag [#allocation5], 1
    %12 = vsyncpa %s11, 0
    loop: start=0, step=1, limit=4
    $region2: #{tpu_custom_call.1} parent=1 // loop_pre_header
      _
    $region3: #{tpu_custom_call.1} parent=1 // loop_header
      %s14 = sphi 0, %s18
      %p15 = scmp.ge.s32.totalorder %s14, 4
      %s24 = sphi 0, %s26
      %s27 = sphi 0, %s24
      %s28 = sphi 0, %s27
      %s44 = sphi 0, %s28
      %s50 = sphi 0, %s52
      %s53 = sphi 0, %s50
      %s54 = sphi 0, %s53
      %s70 = sphi 0, %s54
      %s76 = sphi 0, %s78
      %s79 = sphi 0, %s76
      %s80 = sphi 0, %s79
      %s96 = sphi 0, %s80
    $region4: #{tpu_custom_call.1} parent=1 // loop_header_branch
      %17 = sbr.rel (%p15) target = $region8
    $region5: #{tpu_custom_call.1} parent=1 // loop_body
      %s19 = ssub.s32 %s14, 1
      %s20 = ssub.s32 %s14, 2
      %s21 = sadd.s32 %s14, 1
      %s22 = ssub.s32 %s14, %s21
      %p23 = scmp.eq.s32.totalorder %s22, 0
      %s25 = sadd.s32 %s24, 1
      %s26 = scalar_select %p23, %s24, %s25
      %p29 = pneg %p23
      %p30 = scmp.eq.s32.totalorder %s14, 1
      %p31 = por %p29, %p30
      %p32 = scmp.ne.s32.totalorder %s24, %s27
      %p33 = scmp.eq.s32.totalorder %s14, 0
      %p34 = por %p32, %p33
      %p35 = scmp.ne.s32.totalorder %s24, %s27
      %p36 = scmp.eq.s32.totalorder %s19, 1
      %p37 = por %p35, %p36
      %p38 = scmp.ne.s32.totalorder %s27, %s28
      %p39 = scmp.eq.s32.totalorder %s19, 0
      %p40 = por %p38, %p39
      %p41 = scmp.ne.s32.totalorder %s27, %s28
      %p42 = scmp.eq.s32.totalorder %s20, 1
      %p43 = por %p41, %p42
      %p45 = scmp.ne.s32.totalorder %s28, %s44
      %p46 = scmp.eq.s32.totalorder %s20, 0
      %p47 = por %p45, %p46
      %s48 = ssub.s32 %s14, %s21
      %p49 = scmp.eq.s32.totalorder %s48, 0
      %s51 = sadd.s32 %s50, 1
      %s52 = scalar_select %p49, %s50, %s51
      %p55 = pneg %p49
      %p56 = scmp.eq.s32.totalorder %s14, 1
      %p57 = por %p55, %p56
      %p58 = scmp.ne.s32.totalorder %s50, %s53
      %p59 = scmp.eq.s32.totalorder %s14, 0
      %p60 = por %p58, %p59
      %p61 = scmp.ne.s32.totalorder %s50, %s53
      %p62 = scmp.eq.s32.totalorder %s19, 1
      %p63 = por %p61, %p62
      %p64 = scmp.ne.s32.totalorder %s53, %s54
      %p65 = scmp.eq.s32.totalorder %s19, 0
      %p66 = por %p64, %p65
      %p67 = scmp.ne.s32.totalorder %s53, %s54
      %p68 = scmp.eq.s32.totalorder %s20, 1
      %p69 = por %p67, %p68
      %p71 = scmp.ne.s32.totalorder %s54, %s70
      %p72 = scmp.eq.s32.totalorder %s20, 0
      %p73 = por %p71, %p72
      %s74 = ssub.s32 %s14, %s21
      %p75 = scmp.eq.s32.totalorder %s74, 0
      %s77 = sadd.s32 %s76, 1
      %s78 = scalar_select %p75, %s76, %s77
      %p81 = pneg %p75
      %p82 = scmp.eq.s32.totalorder %s14, 1
      %p83 = por %p81, %p82
      %p84 = scmp.ne.s32.totalorder %s76, %s79
      %p85 = scmp.eq.s32.totalorder %s14, 0
      %p86 = por %p84, %p85
      %p87 = scmp.ne.s32.totalorder %s76, %s79
      %p88 = scmp.eq.s32.totalorder %s19, 1
      %p89 = por %p87, %p88
      %p90 = scmp.ne.s32.totalorder %s79, %s80
      %p91 = scmp.eq.s32.totalorder %s19, 0
      %p92 = por %p90, %p91
      %p93 = scmp.ne.s32.totalorder %s79, %s80
      %p94 = scmp.eq.s32.totalorder %s20, 1
      %p95 = por %p93, %p94
      %p97 = scmp.ne.s32.totalorder %s80, %s96
      %p98 = scmp.eq.s32.totalorder %s20, 0
      %p99 = por %p97, %p98
      %p100 = scmp.le.s32.totalorder 1, %s14
      %p101 = scmp.lt.s32.totalorder %s14, 3
      %p102 = pnand %p100, %p101
      %p103 = pneg %p102
      // Predicated region
      $region9: #{tpu_custom_call.1} parent=5 // pred_check
        _
      $region10: #{tpu_custom_call.1} parent=5 // pred_check_branch
        %105 = sbr.rel (%p102) target = $region12
      $region11: #{tpu_custom_call.1} parent=5 // pred_region
        %s106 = ssub.s32 %s14, 1
      $region12: #{tpu_custom_call.1} parent=5 // pred_fallthru
        _
      %p107 = scmp.lt.s32.totalorder %s14, 2
      // Predicated region
      $region13: #{tpu_custom_call.1} parent=5 // pred_check
        %p108 = pneg %p107
      $region14: #{tpu_custom_call.1} parent=5 // pred_check_branch
        %110 = sbr.rel (%p108) target = $region16
      $region15: #{tpu_custom_call.1} parent=5 // pred_region
        // Predicated region
        $region17: #{tpu_custom_call.1} parent=15 // pred_check
          %p111 = pneg %p34
        $region18: #{tpu_custom_call.1} parent=15 // pred_check_branch
          %113 = sbr.rel (%p111) target = $region20
        $region19: #{tpu_custom_call.1} parent=15 // pred_region
          %s114 = sand.u32 %s24, 1
          %s115 = scalar_lea.sflag [#allocation3], %s114
          %s116 = sand.u32 %s24, 1
          %s117 = smul.addr %s116, 12
          %s118 = scalar_lea.vmem [#allocation2], %s117
          %s120 = ssub.s32 192, 192
          %121 = vsyncadd %s115, %s120
          %s122 = smul.addr %s14, 3
          %s123 = smul.addr %s122, 64
          %s124 = scalar_lea.hbm %s0, %s123
          %s126 = sshll.u32 %s118, 4
          %s127 = int_to_ptr.vmem [resolvable:$true] %s126
          %129 = dma.hbm_to_vmem [thread:$0]  %s124, 192, %s127, %s115
        $region20: #{tpu_custom_call.1} parent=15 // pred_fallthru
          _
        // Predicated region
        $region21: #{tpu_custom_call.1} parent=15 // pred_check
          %p130 = pneg %p60
        $region22: #{tpu_custom_call.1} parent=15 // pred_check_branch
          %132 = sbr.rel (%p130) target = $region24
        $region23: #{tpu_custom_call.1} parent=15 // pred_region
          %s133 = sand.u32 %s50, 1
          %s134 = scalar_lea.sflag [#allocation5], %s133
          %s135 = sand.u32 %s50, 1
          %s136 = smul.addr %s135, 20
          %s137 = scalar_lea.vmem [#allocation4], %s136
          %s139 = ssub.s32 320, 320
          %140 = vsyncadd %s134, %s139
          %s141 = smul.addr %s14, 5
          %s142 = smul.addr %s141, 64
          %s143 = scalar_lea.hbm %s1, %s142
          %s145 = sshll.u32 %s137, 4
          %s146 = int_to_ptr.vmem [resolvable:$true] %s145
          %148 = dma.hbm_to_vmem [thread:$0]  %s143, 320, %s146, %s134
        $region24: #{tpu_custom_call.1} parent=15 // pred_fallthru
          _
      $region16: #{tpu_custom_call.1} parent=5 // pred_fallthru
        _
      %p149 = scmp.le.s32.totalorder 1, %s14
      %p150 = scmp.lt.s32.totalorder %s14, 3
      %p151 = pnand %p149, %p150
      %p152 = pneg %p151
      // Predicated region
      $region25: #{tpu_custom_call.1} parent=5 // pred_check
        _
      $region26: #{tpu_custom_call.1} parent=5 // pred_check_branch
        %154 = sbr.rel (%p151) target = $region28
      $region27: #{tpu_custom_call.1} parent=5 // pred_region
        %s155 = ssub.s32 %s14, 1
        %s156 = sand.u32 %s27, 1
        %s157 = scalar_lea.sflag [#allocation3], %s156
        %s158 = sand.u32 %s27, 1
        %s159 = smul.addr %s158, 12
        %s160 = scalar_lea.vmem [#allocation2], %s159
        // Predicated region
        $region29: #{tpu_custom_call.1} parent=27 // pred_check
          %p161 = pneg %p40
        $region30: #{tpu_custom_call.1} parent=27 // pred_check_branch
          %163 = sbr.rel (%p161) target = $region32
        $region31: #{tpu_custom_call.1} parent=27 // pred_region
          %164 = dma.done %s157, 192
        $region32: #{tpu_custom_call.1} parent=27 // pred_fallthru
          _
        %s165 = sand.u32 %s53, 1
        %s166 = scalar_lea.sflag [#allocation5], %s165
        %s167 = sand.u32 %s53, 1
        %s168 = smul.addr %s167, 20
        %s169 = scalar_lea.vmem [#allocation4], %s168
        // Predicated region
        $region33: #{tpu_custom_call.1} parent=27 // pred_check
          %p170 = pneg %p66
        $region34: #{tpu_custom_call.1} parent=27 // pred_check_branch
          %172 = sbr.rel (%p170) target = $region36
        $region35: #{tpu_custom_call.1} parent=27 // pred_region
          %173 = dma.done %s166, 320
        $region36: #{tpu_custom_call.1} parent=27 // pred_fallthru
          _
        %s174 = sand.u32 %s27, 1
        %s175 = scalar_lea.sflag [#allocation3], %s174
        %s176 = sand.u32 %s27, 1
        %s177 = smul.addr %s176, 12
        %s178 = scalar_lea.vmem [#allocation2], %s177
        %p179 = pneg %p40
        %p180 = pneg %p37
        %s181 = sand.u32 %s53, 1
        %s182 = scalar_lea.sflag [#allocation5], %s181
        %s183 = sand.u32 %s53, 1
        %s184 = smul.addr %s183, 20
        %s185 = scalar_lea.vmem [#allocation4], %s184
        %p186 = pneg %p66
        %p187 = pneg %p63
        %p188 = pneg %p92
        %p189 = pneg %p89
        %p190 = scmp.lt.s32.totalorder %s19, 1
        %s191 = scalar_select %p190, %s19, 1
        %s192 = smul.addr %s191, 33
        %s193 = smul.addr %s192, 8
        %s194 = scalar_lea.vmem %s2, %s193
        %p195 = scmp.lt.s32.totalorder %s19, 1
        %s196 = scalar_select %p195, %s19, 1
        %s197 = smul.addr %s196, 33
        %s198 = smul.addr %s197, 8
        %s199 = scalar_lea.vmem %s2, %s198
        %v200 = vld [vmem:[%s160] sm:$0xff]
        %v201 = vld [vmem:[%s160 + $0x8] sm:$0xf]
        %v202 = vmul.f32 %v200, 0.25
        %v203 = vmul.f32 %v201, 0.25
        %v204 = vld [vmem:[%s169] sm:$0xff]
        %v205 = vld [vmem:[%s169 + $0x8] sm:$0xff]
        %v206 = vld [vmem:[%s169 + $0x10] sm:$0xf]
        %v207 = vmul.f32 %v202, %v204
        %v208 = vmul.f32 %v203, %v205
        %v210 = vcombine.high %v207, %v207
        %vm212 = vcmask 1043456
        %v213 = vsel %vm212, %v207, 0.0
        %v214 = vrot.slane %v213, 4
        %v215 = vadd.f32 %v213, %v214
        %v216 = vrot.slane %v215, 2
        %v217 = vadd.f32 %v215, %v216
        %v218 = vrot.slane %v217, 1
        %v219 = vadd.f32 %v217, %v218
        %v220 = vsel %vm212, %v210, 0.0
        %v221 = vrot.slane %v220, 4
        %v222 = vadd.f32 %v220, %v221
        %v223 = vrot.slane %v222, 2
        %v224 = vadd.f32 %v222, %v223
        %v225 = vrot.slane %v224, 1
        %v226 = vadd.f32 %v224, %v225
        %v227 = vsel %vm212, %v208, 0.0
        %v228 = vrot.slane %v227, 4
        %v229 = vadd.f32 %v227, %v228
        %v230 = vrot.slane %v229, 2
        %v231 = vadd.f32 %v229, %v230
        %v232 = vrot.slane %v231, 1
        %v233 = vadd.f32 %v231, %v232
        %v237 = vcombine.low %v219, %v226
        %v239 = vunpack.c.l.s4 1966171168
        %v240 = vunpack.c.0.s8 %v239
        %v241 = vlaneseq
        %v242 = vshrl.u32 %v241, 7
        %v243 = vsub.s32 %v240, %v242
        %v244 = vrot.slane %v237, %v243
        %v246 = vunpack.c.l.s4 1966171168
        %v247 = vunpack.c.0.s8 %v246
        %v248 = vlaneseq
        %v249 = vshrl.u32 %v248, 7
        %v250 = vsub.s32 %v247, %v249
        %v251 = vrot.slane %v233, %v250
        %v252 = vcombine.low %v244, %v251
        %v254 = vunpack.c.l.s4 1966171168
        %v255 = vunpack.c.0.s8 %v254
        %v256 = vlaneseq
        %v257 = vshrl.u32 %v256, 7
        %v258 = vsub.s32 %v255, %v257
        %v259 = vrot.slane %v252, %v258
        %v261 = vlaneseq
        %vm262 = vcmp.ge.s32.totalorder %v261, 0
        %vm263 = vcmp.lt.s32.totalorder %v261, 384
        %vm264 = vmand %vm262, %vm263
        %265 = vst.msk [vmem:[%s199] ss:$8 sm:$0x7] %vm264, %v259
        %266 = vst.msk [vmem:[%s199] ss:$8 sm:$0x0] %vm264, %v259
        %v269 = vcombine.high %v204, %v204
        %v270 = vcombine.high %v205, %v205
        %273 = vrot.lane.b32.xlu0 %v204, 127
        %v274 = vpop.permute.xlu0 %273
        %275 = vrot.lane.b32.xlu0 %v269, 127
        %v276 = vpop.permute.xlu0 %275
        %277 = vrot.lane.b32.xlu0 %v205, 127
        %v278 = vpop.permute.xlu0 %277
        %279 = vrot.lane.b32.xlu0 %v270, 127
        %v280 = vpop.permute.xlu0 %279
        %v281 = vlaneseq
        %v282 = vand.u32 %v281, 127
        %vm283 = vcmp.lt.s32.totalorder %v282, 127
        %v284 = vsel %vm283, %v278, %v280
        %v285 = vsel %vm283, %v276, %v278
        %v286 = vsel %vm283, %v274, %v276
        %v289 = vcombine.low %v286, %v285
        %v291 = vmul.f32 %v202, %v289
        %v292 = vmul.f32 %v203, %v284
        %v294 = vcombine.high %v291, %v291
        %v296 = vsel %vm212, %v291, 0.0
        %v297 = vrot.slane %v296, 4
        %v298 = vadd.f32 %v296, %v297
        %v299 = vrot.slane %v298, 2
        %v300 = vadd.f32 %v298, %v299
        %v301 = vrot.slane %v300, 1
        %v302 = vadd.f32 %v300, %v301
        %v303 = vsel %vm212, %v294, 0.0
        %v304 = vrot.slane %v303, 4
        %v305 = vadd.f32 %v303, %v304
        %v306 = vrot.slane %v305, 2
        %v307 = vadd.f32 %v305, %v306
        %v308 = vrot.slane %v307, 1
        %v309 = vadd.f32 %v307, %v308
        %v310 = vsel %vm212, %v292, 0.0
        %v311 = vrot.slane %v310, 4
        %v312 = vadd.f32 %v310, %v311
        %v313 = vrot.slane %v312, 2
        %v314 = vadd.f32 %v312, %v313
        %v315 = vrot.slane %v314, 1
        %v316 = vadd.f32 %v314, %v315
        %v320 = vcombine.low %v302, %v309
        %v322 = vunpack.c.l.s4 1966171168
        %v323 = vunpack.c.0.s8 %v322
        %v324 = vlaneseq
        %v325 = vshrl.u32 %v324, 7
        %v326 = vsub.s32 %v323, %v325
        %v327 = vrot.slane %v320, %v326
        %v329 = vunpack.c.l.s4 1966171168
        %v330 = vunpack.c.0.s8 %v329
        %v331 = vlaneseq
        %v332 = vshrl.u32 %v331, 7
        %v333 = vsub.s32 %v330, %v332
        %v334 = vrot.slane %v316, %v333
        %v335 = vcombine.low %v327, %v334
        %v337 = vunpack.c.l.s4 1966171168
        %v338 = vunpack.c.0.s8 %v337
        %v339 = vlaneseq
        %v340 = vshrl.u32 %v339, 7
        %v341 = vsub.s32 %v338, %v340
        %v342 = vrot.slane %v335, %v341
        %s344 = scalar_lea.vmem %s199, 1
        %345 = vst.msk [vmem:[%s344] ss:$8 sm:$0x7] %vm264, %v342
        %346 = vst.msk [vmem:[%s344] ss:$8 sm:$0x0] %vm264, %v342
        %347 = vrot.lane.b32.xlu0 %v204, 126
        %v348 = vpop.permute.xlu0 %347
        %349 = vrot.lane.b32.xlu0 %v269, 126
        %v350 = vpop.permute.xlu0 %349
        %351 = vrot.lane.b32.xlu0 %v205, 126
        %v352 = vpop.permute.xlu0 %351
        %353 = vrot.lane.b32.xlu0 %v270, 126
        %v354 = vpop.permute.xlu0 %353
        %vm355 = vcmp.lt.s32.totalorder %v282, 126
        %v356 = vsel %vm355, %v352, %v354
        %v357 = vsel %vm355, %v350, %v352
        %v358 = vsel %vm355, %v348, %v350
        %v361 = vcombine.low %v358, %v357
        %v363 = vmul.f32 %v202, %v361
        %v364 = vmul.f32 %v203, %v356
        %v366 = vcombine.high %v363, %v363
        %v368 = vsel %vm212, %v363, 0.0
        %v369 = vrot.slane %v368, 4
        %v370 = vadd.f32 %v368, %v369
        %v371 = vrot.slane %v370, 2
        %v372 = vadd.f32 %v370, %v371
        %v373 = vrot.slane %v372, 1
        %v374 = vadd.f32 %v372, %v373
        %v375 = vsel %vm212, %v366, 0.0
        %v376 = vrot.slane %v375, 4
        %v377 = vadd.f32 %v375, %v376
        %v378 = vrot.slane %v377, 2
        %v379 = vadd.f32 %v377, %v378
        %v380 = vrot.slane %v379, 1
        %v381 = vadd.f32 %v379, %v380
        %v382 = vsel %vm212, %v364, 0.0
        %v383 = vrot.slane %v382, 4
        %v384 = vadd.f32 %v382, %v383
        %v385 = vrot.slane %v384, 2
        %v386 = vadd.f32 %v384, %v385
        %v387 = vrot.slane %v386, 1
        %v388 = vadd.f32 %v386, %v387
        %v392 = vcombine.low %v374, %v381
        %v394 = vunpack.c.l.s4 1966171168
        %v395 = vunpack.c.0.s8 %v394
        %v396 = vlaneseq
        %v397 = vshrl.u32 %v396, 7
        %v398 = vsub.s32 %v395, %v397
        %v399 = vrot.slane %v392, %v398
        %v401 = vunpack.c.l.s4 1966171168
        %v402 = vunpack.c.0.s8 %v401
        %v403 = vlaneseq
        %v404 = vshrl.u32 %v403, 7
        %v405 = vsub.s32 %v402, %v404
        %v406 = vrot.slane %v388, %v405
        %v407 = vcombine.low %v399, %v406
        %v409 = vunpack.c.l.s4 1966171168
        %v410 = vunpack.c.0.s8 %v409
        %v411 = vlaneseq
        %v412 = vshrl.u32 %v411, 7
        %v413 = vsub.s32 %v410, %v412
        %v414 = vrot.slane %v407, %v413
        %s416 = scalar_lea.vmem %s199, 2
        %417 = vst.msk [vmem:[%s416] ss:$8 sm:$0x7] %vm264, %v414
        %418 = vst.msk [vmem:[%s416] ss:$8 sm:$0x0] %vm264, %v414
        %419 = vrot.lane.b32.xlu0 %v204, 125
        %v420 = vpop.permute.xlu0 %419
        %421 = vrot.lane.b32.xlu0 %v269, 125
        %v422 = vpop.permute.xlu0 %421
        %423 = vrot.lane.b32.xlu0 %v205, 125
        %v424 = vpop.permute.xlu0 %423
        %425 = vrot.lane.b32.xlu0 %v270, 125
        %v426 = vpop.permute.xlu0 %425
        %vm427 = vcmp.lt.s32.totalorder %v282, 125
        %v428 = vsel %vm427, %v424, %v426
        %v429 = vsel %vm427, %v422, %v424
        %v430 = vsel %vm427, %v420, %v422
        %v433 = vcombine.low %v430, %v429
        %v435 = vmul.f32 %v202, %v433
        %v436 = vmul.f32 %v203, %v428
        %v438 = vcombine.high %v435, %v435
        %v440 = vsel %vm212, %v435, 0.0
        %v441 = vrot.slane %v440, 4
        %v442 = vadd.f32 %v440, %v441
        %v443 = vrot.slane %v442, 2
        %v444 = vadd.f32 %v442, %v443
        %v445 = vrot.slane %v444, 1
        %v446 = vadd.f32 %v444, %v445
        %v447 = vsel %vm212, %v438, 0.0
        %v448 = vrot.slane %v447, 4
        %v449 = vadd.f32 %v447, %v448
        %v450 = vrot.slane %v449, 2
        %v451 = vadd.f32 %v449, %v450
        %v452 = vrot.slane %v451, 1
        %v453 = vadd.f32 %v451, %v452
        %v454 = vsel %vm212, %v436, 0.0
        %v455 = vrot.slane %v454, 4
        %v456 = vadd.f32 %v454, %v455
        %v457 = vrot.slane %v456, 2
        %v458 = vadd.f32 %v456, %v457
        %v459 = vrot.slane %v458, 1
        %v460 = vadd.f32 %v458, %v459
        %v464 = vcombine.low %v446, %v453
        %v466 = vunpack.c.l.s4 1966171168
        %v467 = vunpack.c.0.s8 %v466
        %v468 = vlaneseq
        %v469 = vshrl.u32 %v468, 7
        %v470 = vsub.s32 %v467, %v469
        %v471 = vrot.slane %v464, %v470
        %v473 = vunpack.c.l.s4 1966171168
        %v474 = vunpack.c.0.s8 %v473
        %v475 = vlaneseq
        %v476 = vshrl.u32 %v475, 7
        %v477 = vsub.s32 %v474, %v476
        %v478 = vrot.slane %v460, %v477
        %v479 = vcombine.low %v471, %v478
        %v481 = vunpack.c.l.s4 1966171168
        %v482 = vunpack.c.0.s8 %v481
        %v483 = vlaneseq
        %v484 = vshrl.u32 %v483, 7
        %v485 = vsub.s32 %v482, %v484
        %v486 = vrot.slane %v479, %v485
        %s488 = scalar_lea.vmem %s199, 3
        %489 = vst.msk [vmem:[%s488] ss:$8 sm:$0x7] %vm264, %v486
        %490 = vst.msk [vmem:[%s488] ss:$8 sm:$0x0] %vm264, %v486
        %491 = vrot.lane.b32.xlu0 %v204, 124
        %v492 = vpop.permute.xlu0 %491
        %493 = vrot.lane.b32.xlu0 %v269, 124
        %v494 = vpop.permute.xlu0 %493
        %495 = vrot.lane.b32.xlu0 %v205, 124
        %v496 = vpop.permute.xlu0 %495
        %497 = vrot.lane.b32.xlu0 %v270, 124
        %v498 = vpop.permute.xlu0 %497
        %vm499 = vcmp.lt.s32.totalorder %v282, 124
        %v500 = vsel %vm499, %v496, %v498
        %v501 = vsel %vm499, %v494, %v496
        %v502 = vsel %vm499, %v492, %v494
        %v505 = vcombine.low %v502, %v501
        %v507 = vmul.f32 %v202, %v505
        %v508 = vmul.f32 %v203, %v500
        %v510 = vcombine.high %v507, %v507
        %v512 = vsel %vm212, %v507, 0.0
        %v513 = vrot.slane %v512, 4
        %v514 = vadd.f32 %v512, %v513
        %v515 = vrot.slane %v514, 2
        %v516 = vadd.f32 %v514, %v515
        %v517 = vrot.slane %v516, 1
        %v518 = vadd.f32 %v516, %v517
        %v519 = vsel %vm212, %v510, 0.0
        %v520 = vrot.slane %v519, 4
        %v521 = vadd.f32 %v519, %v520
        %v522 = vrot.slane %v521, 2
        %v523 = vadd.f32 %v521, %v522
        %v524 = vrot.slane %v523, 1
        %v525 = vadd.f32 %v523, %v524
        %v526 = vsel %vm212, %v508, 0.0
        %v527 = vrot.slane %v526, 4
        %v528 = vadd.f32 %v526, %v527
        %v529 = vrot.slane %v528, 2
        %v530 = vadd.f32 %v528, %v529
        %v531 = vrot.slane %v530, 1
        %v532 = vadd.f32 %v530, %v531
        %v536 = vcombine.low %v518, %v525
        %v538 = vunpack.c.l.s4 1966171168
        %v539 = vunpack.c.0.s8 %v538
        %v540 = vlaneseq
        %v541 = vshrl.u32 %v540, 7
        %v542 = vsub.s32 %v539, %v541
        %v543 = vrot.slane %v536, %v542
        %v545 = vunpack.c.l.s4 1966171168
        %v546 = vunpack.c.0.s8 %v545
        %v547 = vlaneseq
        %v548 = vshrl.u32 %v547, 7
        %v549 = vsub.s32 %v546, %v548
        %v550 = vrot.slane %v532, %v549
        %v551 = vcombine.low %v543, %v550
        %v553 = vunpack.c.l.s4 1966171168
        %v554 = vunpack.c.0.s8 %v553
        %v555 = vlaneseq
        %v556 = vshrl.u32 %v555, 7
        %v557 = vsub.s32 %v554, %v556
        %v558 = vrot.slane %v551, %v557
        %s560 = scalar_lea.vmem %s199, 4
        %561 = vst.msk [vmem:[%s560] ss:$8 sm:$0x7] %vm264, %v558
        %562 = vst.msk [vmem:[%s560] ss:$8 sm:$0x0] %vm264, %v558
        %563 = vrot.lane.b32.xlu0 %v204, 123
        %v564 = vpop.permute.xlu0 %563
        %565 = vrot.lane.b32.xlu0 %v269, 123
        %v566 = vpop.permute.xlu0 %565
        %567 = vrot.lane.b32.xlu0 %v205, 123
        %v568 = vpop.permute.xlu0 %567
        %569 = vrot.lane.b32.xlu0 %v270, 123
        %v570 = vpop.permute.xlu0 %569
        %vm571 = vcmp.lt.s32.totalorder %v282, 123
        %v572 = vsel %vm571, %v568, %v570
        %v573 = vsel %vm571, %v566, %v568
        %v574 = vsel %vm571, %v564, %v566
        %v577 = vcombine.low %v574, %v573
        %v579 = vmul.f32 %v202, %v577
        %v580 = vmul.f32 %v203, %v572
        %v582 = vcombine.high %v579, %v579
        %v584 = vsel %vm212, %v579, 0.0
        %v585 = vrot.slane %v584, 4
        %v586 = vadd.f32 %v584, %v585
        %v587 = vrot.slane %v586, 2
        %v588 = vadd.f32 %v586, %v587
        %v589 = vrot.slane %v588, 1
        %v590 = vadd.f32 %v588, %v589
        %v591 = vsel %vm212, %v582, 0.0
        %v592 = vrot.slane %v591, 4
        %v593 = vadd.f32 %v591, %v592
        %v594 = vrot.slane %v593, 2
        %v595 = vadd.f32 %v593, %v594
        %v596 = vrot.slane %v595, 1
        %v597 = vadd.f32 %v595, %v596
        %v598 = vsel %vm212, %v580, 0.0
        %v599 = vrot.slane %v598, 4
        %v600 = vadd.f32 %v598, %v599
        %v601 = vrot.slane %v600, 2
        %v602 = vadd.f32 %v600, %v601
        %v603 = vrot.slane %v602, 1
        %v604 = vadd.f32 %v602, %v603
        %v608 = vcombine.low %v590, %v597
        %v610 = vunpack.c.l.s4 1966171168
        %v611 = vunpack.c.0.s8 %v610
        %v612 = vlaneseq
        %v613 = vshrl.u32 %v612, 7
        %v614 = vsub.s32 %v611, %v613
        %v615 = vrot.slane %v608, %v614
        %v617 = vunpack.c.l.s4 1966171168
        %v618 = vunpack.c.0.s8 %v617
        %v619 = vlaneseq
        %v620 = vshrl.u32 %v619, 7
        %v621 = vsub.s32 %v618, %v620
        %v622 = vrot.slane %v604, %v621
        %v623 = vcombine.low %v615, %v622
        %v625 = vunpack.c.l.s4 1966171168
        %v626 = vunpack.c.0.s8 %v625
        %v627 = vlaneseq
        %v628 = vshrl.u32 %v627, 7
        %v629 = vsub.s32 %v626, %v628
        %v630 = vrot.slane %v623, %v629
        %s632 = scalar_lea.vmem %s199, 5
        %633 = vst.msk [vmem:[%s632] ss:$8 sm:$0x7] %vm264, %v630
        %634 = vst.msk [vmem:[%s632] ss:$8 sm:$0x0] %vm264, %v630
        %635 = vrot.lane.b32.xlu0 %v204, 122
        %v636 = vpop.permute.xlu0 %635
        %637 = vrot.lane.b32.xlu0 %v269, 122
        %v638 = vpop.permute.xlu0 %637
        %639 = vrot.lane.b32.xlu0 %v205, 122
        %v640 = vpop.permute.xlu0 %639
        %641 = vrot.lane.b32.xlu0 %v270, 122
        %v642 = vpop.permute.xlu0 %641
        %vm643 = vcmp.lt.s32.totalorder %v282, 122
        %v644 = vsel %vm643, %v640, %v642
        %v645 = vsel %vm643, %v638, %v640
        %v646 = vsel %vm643, %v636, %v638
        %v649 = vcombine.low %v646, %v645
        %v651 = vmul.f32 %v202, %v649
        %v652 = vmul.f32 %v203, %v644
        %v654 = vcombine.high %v651, %v651
        %v656 = vsel %vm212, %v651, 0.0
        %v657 = vrot.slane %v656, 4
        %v658 = vadd.f32 %v656, %v657
        %v659 = vrot.slane %v658, 2
        %v660 = vadd.f32 %v658, %v659
        %v661 = vrot.slane %v660, 1
        %v662 = vadd.f32 %v660, %v661
        %v663 = vsel %vm212, %v654, 0.0
        %v664 = vrot.slane %v663, 4
        %v665 = vadd.f32 %v663, %v664
        %v666 = vrot.slane %v665, 2
        %v667 = vadd.f32 %v665, %v666
        %v668 = vrot.slane %v667, 1
        %v669 = vadd.f32 %v667, %v668
        %v670 = vsel %vm212, %v652, 0.0
        %v671 = vrot.slane %v670, 4
        %v672 = vadd.f32 %v670, %v671
        %v673 = vrot.slane %v672, 2
        %v674 = vadd.f32 %v672, %v673
        %v675 = vrot.slane %v674, 1
        %v676 = vadd.f32 %v674, %v675
        %v680 = vcombine.low %v662, %v669
        %v682 = vunpack.c.l.s4 1966171168
        %v683 = vunpack.c.0.s8 %v682
        %v684 = vlaneseq
        %v685 = vshrl.u32 %v684, 7
        %v686 = vsub.s32 %v683, %v685
        %v687 = vrot.slane %v680, %v686
        %v689 = vunpack.c.l.s4 1966171168
        %v690 = vunpack.c.0.s8 %v689
        %v691 = vlaneseq
        %v692 = vshrl.u32 %v691, 7
        %v693 = vsub.s32 %v690, %v692
        %v694 = vrot.slane %v676, %v693
        %v695 = vcombine.low %v687, %v694
        %v697 = vunpack.c.l.s4 1966171168
        %v698 = vunpack.c.0.s8 %v697
        %v699 = vlaneseq
        %v700 = vshrl.u32 %v699, 7
        %v701 = vsub.s32 %v698, %v700
        %v702 = vrot.slane %v695, %v701
        %s704 = scalar_lea.vmem %s199, 6
        %705 = vst.msk [vmem:[%s704] ss:$8 sm:$0x7] %vm264, %v702
        %706 = vst.msk [vmem:[%s704] ss:$8 sm:$0x0] %vm264, %v702
        %707 = vrot.lane.b32.xlu0 %v204, 121
        %v708 = vpop.permute.xlu0 %707
        %709 = vrot.lane.b32.xlu0 %v269, 121
        %v710 = vpop.permute.xlu0 %709
        %711 = vrot.lane.b32.xlu0 %v205, 121
        %v712 = vpop.permute.xlu0 %711
        %713 = vrot.lane.b32.xlu0 %v270, 121
        %v714 = vpop.permute.xlu0 %713
        %vm715 = vcmp.lt.s32.totalorder %v282, 121
        %v716 = vsel %vm715, %v712, %v714
        %v717 = vsel %vm715, %v710, %v712
        %v718 = vsel %vm715, %v708, %v710
        %v721 = vcombine.low %v718, %v717
        %v723 = vmul.f32 %v202, %v721
        %v724 = vmul.f32 %v203, %v716
        %v726 = vcombine.high %v723, %v723
        %v728 = vsel %vm212, %v723, 0.0
        %v729 = vrot.slane %v728, 4
        %v730 = vadd.f32 %v728, %v729
        %v731 = vrot.slane %v730, 2
        %v732 = vadd.f32 %v730, %v731
        %v733 = vrot.slane %v732, 1
        %v734 = vadd.f32 %v732, %v733
        %v735 = vsel %vm212, %v726, 0.0
        %v736 = vrot.slane %v735, 4
        %v737 = vadd.f32 %v735, %v736
        %v738 = vrot.slane %v737, 2
        %v739 = vadd.f32 %v737, %v738
        %v740 = vrot.slane %v739, 1
        %v741 = vadd.f32 %v739, %v740
        %v742 = vsel %vm212, %v724, 0.0
        %v743 = vrot.slane %v742, 4
        %v744 = vadd.f32 %v742, %v743
        %v745 = vrot.slane %v744, 2
        %v746 = vadd.f32 %v744, %v745
        %v747 = vrot.slane %v746, 1
        %v748 = vadd.f32 %v746, %v747
        %v752 = vcombine.low %v734, %v741
        %v754 = vunpack.c.l.s4 1966171168
        %v755 = vunpack.c.0.s8 %v754
        %v756 = vlaneseq
        %v757 = vshrl.u32 %v756, 7
        %v758 = vsub.s32 %v755, %v757
        %v759 = vrot.slane %v752, %v758
        %v761 = vunpack.c.l.s4 1966171168
        %v762 = vunpack.c.0.s8 %v761
        %v763 = vlaneseq
        %v764 = vshrl.u32 %v763, 7
        %v765 = vsub.s32 %v762, %v764
        %v766 = vrot.slane %v748, %v765
        %v767 = vcombine.low %v759, %v766
        %v769 = vunpack.c.l.s4 1966171168
        %v770 = vunpack.c.0.s8 %v769
        %v771 = vlaneseq
        %v772 = vshrl.u32 %v771, 7
        %v773 = vsub.s32 %v770, %v772
        %v774 = vrot.slane %v767, %v773
        %s776 = scalar_lea.vmem %s199, 7
        %777 = vst.msk [vmem:[%s776] ss:$8 sm:$0x7] %vm264, %v774
        %778 = vst.msk [vmem:[%s776] ss:$8 sm:$0x0] %vm264, %v774
        %779 = vrot.lane.b32.xlu0 %v204, 120
        %v780 = vpop.permute.xlu0 %779
        %781 = vrot.lane.b32.xlu0 %v269, 120
        %v782 = vpop.permute.xlu0 %781
        %783 = vrot.lane.b32.xlu0 %v205, 120
        %v784 = vpop.permute.xlu0 %783
        %785 = vrot.lane.b32.xlu0 %v270, 120
        %v786 = vpop.permute.xlu0 %785
        %vm787 = vcmp.lt.s32.totalorder %v282, 120
        %v788 = vsel %vm787, %v784, %v786
        %v789 = vsel %vm787, %v782, %v784
        %v790 = vsel %vm787, %v780, %v782
        %v793 = vcombine.low %v790, %v789
        %v795 = vmul.f32 %v202, %v793
        %v796 = vmul.f32 %v203, %v788
        %v798 = vcombine.high %v795, %v795
        %v800 = vsel %vm212, %v795, 0.0
        %v801 = vrot.slane %v800, 4
        %v802 = vadd.f32 %v800, %v801
        %v803 = vrot.slane %v802, 2
        %v804 = vadd.f32 %v802, %v803
        %v805 = vrot.slane %v804, 1
        %v806 = vadd.f32 %v804, %v805
        %v807 = vsel %vm212, %v798, 0.0
        %v808 = vrot.slane %v807, 4
        %v809 = vadd.f32 %v807, %v808
        %v810 = vrot.slane %v809, 2
        %v811 = vadd.f32 %v809, %v810
        %v812 = vrot.slane %v811, 1
        %v813 = vadd.f32 %v811, %v812
        %v814 = vsel %vm212, %v796, 0.0
        %v815 = vrot.slane %v814, 4
        %v816 = vadd.f32 %v814, %v815
        %v817 = vrot.slane %v816, 2
        %v818 = vadd.f32 %v816, %v817
        %v819 = vrot.slane %v818, 1
        %v820 = vadd.f32 %v818, %v819
        %v824 = vcombine.low %v806, %v813
        %v826 = vunpack.c.l.s4 1966171168
        %v827 = vunpack.c.0.s8 %v826
        %v828 = vlaneseq
        %v829 = vshrl.u32 %v828, 7
        %v830 = vsub.s32 %v827, %v829
        %v831 = vrot.slane %v824, %v830
        %v833 = vunpack.c.l.s4 1966171168
        %v834 = vunpack.c.0.s8 %v833
        %v835 = vlaneseq
        %v836 = vshrl.u32 %v835, 7
        %v837 = vsub.s32 %v834, %v836
        %v838 = vrot.slane %v820, %v837
        %v839 = vcombine.low %v831, %v838
        %v841 = vunpack.c.l.s4 1966171168
        %v842 = vunpack.c.0.s8 %v841
        %v843 = vlaneseq
        %v844 = vshrl.u32 %v843, 7
        %v845 = vsub.s32 %v842, %v844
        %v846 = vrot.slane %v839, %v845
        %s848 = scalar_lea.vmem %s199, 24
        %849 = vst.msk [vmem:[%s848] ss:$8 sm:$0x7] %vm264, %v846
        %850 = vst.msk [vmem:[%s848] ss:$8 sm:$0x0] %vm264, %v846
        %851 = vrot.lane.b32.xlu0 %v204, 104
        %v852 = vpop.permute.xlu0 %851
        %853 = vrot.lane.b32.xlu0 %v269, 104
        %v854 = vpop.permute.xlu0 %853
        %855 = vrot.lane.b32.xlu0 %v205, 104
        %v856 = vpop.permute.xlu0 %855
        %857 = vrot.lane.b32.xlu0 %v270, 104
        %v858 = vpop.permute.xlu0 %857
        %vm859 = vcmp.lt.s32.totalorder %v282, 104
        %v860 = vsel %vm859, %v856, %v858
        %v861 = vsel %vm859, %v854, %v856
        %v862 = vsel %vm859, %v852, %v854
        %v865 = vcombine.low %v862, %v861
        %v867 = vmul.f32 %v202, %v865
        %v868 = vmul.f32 %v203, %v860
        %v870 = vcombine.high %v867, %v867
        %v872 = vsel %vm212, %v867, 0.0
        %v873 = vrot.slane %v872, 4
        %v874 = vadd.f32 %v872, %v873
        %v875 = vrot.slane %v874, 2
        %v876 = vadd.f32 %v874, %v875
        %v877 = vrot.slane %v876, 1
        %v878 = vadd.f32 %v876, %v877
        %v879 = vsel %vm212, %v870, 0.0
        %v880 = vrot.slane %v879, 4
        %v881 = vadd.f32 %v879, %v880
        %v882 = vrot.slane %v881, 2
        %v883 = vadd.f32 %v881, %v882
        %v884 = vrot.slane %v883, 1
        %v885 = vadd.f32 %v883, %v884
        %v886 = vsel %vm212, %v868, 0.0
        %v887 = vrot.slane %v886, 4
        %v888 = vadd.f32 %v886, %v887
        %v889 = vrot.slane %v888, 2
        %v890 = vadd.f32 %v888, %v889
        %v891 = vrot.slane %v890, 1
        %v892 = vadd.f32 %v890, %v891
        %v896 = vcombine.low %v878, %v885
        %v898 = vunpack.c.l.s4 1966171168
        %v899 = vunpack.c.0.s8 %v898
        %v900 = vlaneseq
        %v901 = vshrl.u32 %v900, 7
        %v902 = vsub.s32 %v899, %v901
        %v903 = vrot.slane %v896, %v902
        %v905 = vunpack.c.l.s4 1966171168
        %v906 = vunpack.c.0.s8 %v905
        %v907 = vlaneseq
        %v908 = vshrl.u32 %v907, 7
        %v909 = vsub.s32 %v906, %v908
        %v910 = vrot.slane %v892, %v909
        %v911 = vcombine.low %v903, %v910
        %v913 = vunpack.c.l.s4 1966171168
        %v914 = vunpack.c.0.s8 %v913
        %v915 = vlaneseq
        %v916 = vshrl.u32 %v915, 7
        %v917 = vsub.s32 %v914, %v916
        %v918 = vrot.slane %v911, %v917
        %s920 = scalar_lea.vmem %s199, 25
        %921 = vst.msk [vmem:[%s920] ss:$8 sm:$0x7] %vm264, %v918
        %922 = vst.msk [vmem:[%s920] ss:$8 sm:$0x0] %vm264, %v918
        %923 = vrot.lane.b32.xlu0 %v204, 103
        %v924 = vpop.permute.xlu0 %923
        %925 = vrot.lane.b32.xlu0 %v269, 103
        %v926 = vpop.permute.xlu0 %925
        %927 = vrot.lane.b32.xlu0 %v205, 103
        %v928 = vpop.permute.xlu0 %927
        %929 = vrot.lane.b32.xlu0 %v270, 103
        %v930 = vpop.permute.xlu0 %929
        %vm931 = vcmp.lt.s32.totalorder %v282, 103
        %v932 = vsel %vm931, %v928, %v930
        %v933 = vsel %vm931, %v926, %v928
        %v934 = vsel %vm931, %v924, %v926
        %v937 = vcombine.low %v934, %v933
        %v939 = vmul.f32 %v202, %v937
        %v940 = vmul.f32 %v203, %v932
        %v942 = vcombine.high %v939, %v939
        %v944 = vsel %vm212, %v939, 0.0
        %v945 = vrot.slane %v944, 4
        %v946 = vadd.f32 %v944, %v945
        %v947 = vrot.slane %v946, 2
        %v948 = vadd.f32 %v946, %v947
        %v949 = vrot.slane %v948, 1
        %v950 = vadd.f32 %v948, %v949
        %v951 = vsel %vm212, %v942, 0.0
        %v952 = vrot.slane %v951, 4
        %v953 = vadd.f32 %v951, %v952
        %v954 = vrot.slane %v953, 2
        %v955 = vadd.f32 %v953, %v954
        %v956 = vrot.slane %v955, 1
        %v957 = vadd.f32 %v955, %v956
        %v958 = vsel %vm212, %v940, 0.0
        %v959 = vrot.slane %v958, 4
        %v960 = vadd.f32 %v958, %v959
        %v961 = vrot.slane %v960, 2
        %v962 = vadd.f32 %v960, %v961
        %v963 = vrot.slane %v962, 1
        %v964 = vadd.f32 %v962, %v963
        %v968 = vcombine.low %v950, %v957
        %v970 = vunpack.c.l.s4 1966171168
        %v971 = vunpack.c.0.s8 %v970
        %v972 = vlaneseq
        %v973 = vshrl.u32 %v972, 7
        %v974 = vsub.s32 %v971, %v973
        %v975 = vrot.slane %v968, %v974
        %v977 = vunpack.c.l.s4 1966171168
        %v978 = vunpack.c.0.s8 %v977
        %v979 = vlaneseq
        %v980 = vshrl.u32 %v979, 7
        %v981 = vsub.s32 %v978, %v980
        %v982 = vrot.slane %v964, %v981
        %v983 = vcombine.low %v975, %v982
        %v985 = vunpack.c.l.s4 1966171168
        %v986 = vunpack.c.0.s8 %v985
        %v987 = vlaneseq
        %v988 = vshrl.u32 %v987, 7
        %v989 = vsub.s32 %v986, %v988
        %v990 = vrot.slane %v983, %v989
        %s992 = scalar_lea.vmem %s199, 26
        %993 = vst.msk [vmem:[%s992] ss:$8 sm:$0x7] %vm264, %v990
        %994 = vst.msk [vmem:[%s992] ss:$8 sm:$0x0] %vm264, %v990
        %995 = vrot.lane.b32.xlu0 %v204, 102
        %v996 = vpop.permute.xlu0 %995
        %997 = vrot.lane.b32.xlu0 %v269, 102
        %v998 = vpop.permute.xlu0 %997
        %999 = vrot.lane.b32.xlu0 %v205, 102
        %v1000 = vpop.permute.xlu0 %999
        %1001 = vrot.lane.b32.xlu0 %v270, 102
        %v1002 = vpop.permute.xlu0 %1001
        %vm1003 = vcmp.lt.s32.totalorder %v282, 102
        %v1004 = vsel %vm1003, %v1000, %v1002
        %v1005 = vsel %vm1003, %v998, %v1000
        %v1006 = vsel %vm1003, %v996, %v998
        %v1009 = vcombine.low %v1006, %v1005
        %v1011 = vmul.f32 %v202, %v1009
        %v1012 = vmul.f32 %v203, %v1004
        %v1014 = vcombine.high %v1011, %v1011
        %v1016 = vsel %vm212, %v1011, 0.0
        %v1017 = vrot.slane %v1016, 4
        %v1018 = vadd.f32 %v1016, %v1017
        %v1019 = vrot.slane %v1018, 2
        %v1020 = vadd.f32 %v1018, %v1019
        %v1021 = vrot.slane %v1020, 1
        %v1022 = vadd.f32 %v1020, %v1021
        %v1023 = vsel %vm212, %v1014, 0.0
        %v1024 = vrot.slane %v1023, 4
        %v1025 = vadd.f32 %v1023, %v1024
        %v1026 = vrot.slane %v1025, 2
        %v1027 = vadd.f32 %v1025, %v1026
        %v1028 = vrot.slane %v1027, 1
        %v1029 = vadd.f32 %v1027, %v1028
        %v1030 = vsel %vm212, %v1012, 0.0
        %v1031 = vrot.slane %v1030, 4
        %v1032 = vadd.f32 %v1030, %v1031
        %v1033 = vrot.slane %v1032, 2
        %v1034 = vadd.f32 %v1032, %v1033
        %v1035 = vrot.slane %v1034, 1
        %v1036 = vadd.f32 %v1034, %v1035
        %v1040 = vcombine.low %v1022, %v1029
        %v1042 = vunpack.c.l.s4 1966171168
        %v1043 = vunpack.c.0.s8 %v1042
        %v1044 = vlaneseq
        %v1045 = vshrl.u32 %v1044, 7
        %v1046 = vsub.s32 %v1043, %v1045
        %v1047 = vrot.slane %v1040, %v1046
        %v1049 = vunpack.c.l.s4 1966171168
        %v1050 = vunpack.c.0.s8 %v1049
        %v1051 = vlaneseq
        %v1052 = vshrl.u32 %v1051, 7
        %v1053 = vsub.s32 %v1050, %v1052
        %v1054 = vrot.slane %v1036, %v1053
        %v1055 = vcombine.low %v1047, %v1054
        %v1057 = vunpack.c.l.s4 1966171168
        %v1058 = vunpack.c.0.s8 %v1057
        %v1059 = vlaneseq
        %v1060 = vshrl.u32 %v1059, 7
        %v1061 = vsub.s32 %v1058, %v1060
        %v1062 = vrot.slane %v1055, %v1061
        %s1064 = scalar_lea.vmem %s199, 27
        %1065 = vst.msk [vmem:[%s1064] ss:$8 sm:$0x7] %vm264, %v1062
        %1066 = vst.msk [vmem:[%s1064] ss:$8 sm:$0x0] %vm264, %v1062
        %1067 = vrot.lane.b32.xlu0 %v204, 101
        %v1068 = vpop.permute.xlu0 %1067
        %1069 = vrot.lane.b32.xlu0 %v269, 101
        %v1070 = vpop.permute.xlu0 %1069
        %1071 = vrot.lane.b32.xlu0 %v205, 101
        %v1072 = vpop.permute.xlu0 %1071
        %1073 = vrot.lane.b32.xlu0 %v270, 101
        %v1074 = vpop.permute.xlu0 %1073
        %vm1075 = vcmp.lt.s32.totalorder %v282, 101
        %v1076 = vsel %vm1075, %v1072, %v1074
        %v1077 = vsel %vm1075, %v1070, %v1072
        %v1078 = vsel %vm1075, %v1068, %v1070
        %v1081 = vcombine.low %v1078, %v1077
        %v1083 = vmul.f32 %v202, %v1081
        %v1084 = vmul.f32 %v203, %v1076
        %v1086 = vcombine.high %v1083, %v1083
        %v1088 = vsel %vm212, %v1083, 0.0
        %v1089 = vrot.slane %v1088, 4
        %v1090 = vadd.f32 %v1088, %v1089
        %v1091 = vrot.slane %v1090, 2
        %v1092 = vadd.f32 %v1090, %v1091
        %v1093 = vrot.slane %v1092, 1
        %v1094 = vadd.f32 %v1092, %v1093
        %v1095 = vsel %vm212, %v1086, 0.0
        %v1096 = vrot.slane %v1095, 4
        %v1097 = vadd.f32 %v1095, %v1096
        %v1098 = vrot.slane %v1097, 2
        %v1099 = vadd.f32 %v1097, %v1098
        %v1100 = vrot.slane %v1099, 1
        %v1101 = vadd.f32 %v1099, %v1100
        %v1102 = vsel %vm212, %v1084, 0.0
        %v1103 = vrot.slane %v1102, 4
        %v1104 = vadd.f32 %v1102, %v1103
        %v1105 = vrot.slane %v1104, 2
        %v1106 = vadd.f32 %v1104, %v1105
        %v1107 = vrot.slane %v1106, 1
        %v1108 = vadd.f32 %v1106, %v1107
        %v1112 = vcombine.low %v1094, %v1101
        %v1114 = vunpack.c.l.s4 1966171168
        %v1115 = vunpack.c.0.s8 %v1114
        %v1116 = vlaneseq
        %v1117 = vshrl.u32 %v1116, 7
        %v1118 = vsub.s32 %v1115, %v1117
        %v1119 = vrot.slane %v1112, %v1118
        %v1121 = vunpack.c.l.s4 1966171168
        %v1122 = vunpack.c.0.s8 %v1121
        %v1123 = vlaneseq
        %v1124 = vshrl.u32 %v1123, 7
        %v1125 = vsub.s32 %v1122, %v1124
        %v1126 = vrot.slane %v1108, %v1125
        %v1127 = vcombine.low %v1119, %v1126
        %v1129 = vunpack.c.l.s4 1966171168
        %v1130 = vunpack.c.0.s8 %v1129
        %v1131 = vlaneseq
        %v1132 = vshrl.u32 %v1131, 7
        %v1133 = vsub.s32 %v1130, %v1132
        %v1134 = vrot.slane %v1127, %v1133
        %s1136 = scalar_lea.vmem %s199, 28
        %1137 = vst.msk [vmem:[%s1136] ss:$8 sm:$0x7] %vm264, %v1134
        %1138 = vst.msk [vmem:[%s1136] ss:$8 sm:$0x0] %vm264, %v1134
        %1139 = vrot.lane.b32.xlu0 %v204, 100
        %v1140 = vpop.permute.xlu0 %1139
        %1141 = vrot.lane.b32.xlu0 %v269, 100
        %v1142 = vpop.permute.xlu0 %1141
        %1143 = vrot.lane.b32.xlu0 %v205, 100
        %v1144 = vpop.permute.xlu0 %1143
        %1145 = vrot.lane.b32.xlu0 %v270, 100
        %v1146 = vpop.permute.xlu0 %1145
        %vm1147 = vcmp.lt.s32.totalorder %v282, 100
        %v1148 = vsel %vm1147, %v1144, %v1146
        %v1149 = vsel %vm1147, %v1142, %v1144
        %v1150 = vsel %vm1147, %v1140, %v1142
        %v1153 = vcombine.low %v1150, %v1149
        %v1155 = vmul.f32 %v202, %v1153
        %v1156 = vmul.f32 %v203, %v1148
        %v1158 = vcombine.high %v1155, %v1155
        %v1160 = vsel %vm212, %v1155, 0.0
        %v1161 = vrot.slane %v1160, 4
        %v1162 = vadd.f32 %v1160, %v1161
        %v1163 = vrot.slane %v1162, 2
        %v1164 = vadd.f32 %v1162, %v1163
        %v1165 = vrot.slane %v1164, 1
        %v1166 = vadd.f32 %v1164, %v1165
        %v1167 = vsel %vm212, %v1158, 0.0
        %v1168 = vrot.slane %v1167, 4
        %v1169 = vadd.f32 %v1167, %v1168
        %v1170 = vrot.slane %v1169, 2
        %v1171 = vadd.f32 %v1169, %v1170
        %v1172 = vrot.slane %v1171, 1
        %v1173 = vadd.f32 %v1171, %v1172
        %v1174 = vsel %vm212, %v1156, 0.0
        %v1175 = vrot.slane %v1174, 4
        %v1176 = vadd.f32 %v1174, %v1175
        %v1177 = vrot.slane %v1176, 2
        %v1178 = vadd.f32 %v1176, %v1177
        %v1179 = vrot.slane %v1178, 1
        %v1180 = vadd.f32 %v1178, %v1179
        %v1184 = vcombine.low %v1166, %v1173
        %v1186 = vunpack.c.l.s4 1966171168
        %v1187 = vunpack.c.0.s8 %v1186
        %v1188 = vlaneseq
        %v1189 = vshrl.u32 %v1188, 7
        %v1190 = vsub.s32 %v1187, %v1189
        %v1191 = vrot.slane %v1184, %v1190
        %v1193 = vunpack.c.l.s4 1966171168
        %v1194 = vunpack.c.0.s8 %v1193
        %v1195 = vlaneseq
        %v1196 = vshrl.u32 %v1195, 7
        %v1197 = vsub.s32 %v1194, %v1196
        %v1198 = vrot.slane %v1180, %v1197
        %v1199 = vcombine.low %v1191, %v1198
        %v1201 = vunpack.c.l.s4 1966171168
        %v1202 = vunpack.c.0.s8 %v1201
        %v1203 = vlaneseq
        %v1204 = vshrl.u32 %v1203, 7
        %v1205 = vsub.s32 %v1202, %v1204
        %v1206 = vrot.slane %v1199, %v1205
        %s1208 = scalar_lea.vmem %s199, 29
        %1209 = vst.msk [vmem:[%s1208] ss:$8 sm:$0x7] %vm264, %v1206
        %1210 = vst.msk [vmem:[%s1208] ss:$8 sm:$0x0] %vm264, %v1206
        %1211 = vrot.lane.b32.xlu0 %v204, 99
        %v1212 = vpop.permute.xlu0 %1211
        %1213 = vrot.lane.b32.xlu0 %v269, 99
        %v1214 = vpop.permute.xlu0 %1213
        %1215 = vrot.lane.b32.xlu0 %v205, 99
        %v1216 = vpop.permute.xlu0 %1215
        %1217 = vrot.lane.b32.xlu0 %v270, 99
        %v1218 = vpop.permute.xlu0 %1217
        %vm1219 = vcmp.lt.s32.totalorder %v282, 99
        %v1220 = vsel %vm1219, %v1216, %v1218
        %v1221 = vsel %vm1219, %v1214, %v1216
        %v1222 = vsel %vm1219, %v1212, %v1214
        %v1225 = vcombine.low %v1222, %v1221
        %v1227 = vmul.f32 %v202, %v1225
        %v1228 = vmul.f32 %v203, %v1220
        %v1230 = vcombine.high %v1227, %v1227
        %v1232 = vsel %vm212, %v1227, 0.0
        %v1233 = vrot.slane %v1232, 4
        %v1234 = vadd.f32 %v1232, %v1233
        %v1235 = vrot.slane %v1234, 2
        %v1236 = vadd.f32 %v1234, %v1235
        %v1237 = vrot.slane %v1236, 1
        %v1238 = vadd.f32 %v1236, %v1237
        %v1239 = vsel %vm212, %v1230, 0.0
        %v1240 = vrot.slane %v1239, 4
        %v1241 = vadd.f32 %v1239, %v1240
        %v1242 = vrot.slane %v1241, 2
        %v1243 = vadd.f32 %v1241, %v1242
        %v1244 = vrot.slane %v1243, 1
        %v1245 = vadd.f32 %v1243, %v1244
        %v1246 = vsel %vm212, %v1228, 0.0
        %v1247 = vrot.slane %v1246, 4
        %v1248 = vadd.f32 %v1246, %v1247
        %v1249 = vrot.slane %v1248, 2
        %v1250 = vadd.f32 %v1248, %v1249
        %v1251 = vrot.slane %v1250, 1
        %v1252 = vadd.f32 %v1250, %v1251
        %v1256 = vcombine.low %v1238, %v1245
        %v1258 = vunpack.c.l.s4 1966171168
        %v1259 = vunpack.c.0.s8 %v1258
        %v1260 = vlaneseq
        %v1261 = vshrl.u32 %v1260, 7
        %v1262 = vsub.s32 %v1259, %v1261
        %v1263 = vrot.slane %v1256, %v1262
        %v1265 = vunpack.c.l.s4 1966171168
        %v1266 = vunpack.c.0.s8 %v1265
        %v1267 = vlaneseq
        %v1268 = vshrl.u32 %v1267, 7
        %v1269 = vsub.s32 %v1266, %v1268
        %v1270 = vrot.slane %v1252, %v1269
        %v1271 = vcombine.low %v1263, %v1270
        %v1273 = vunpack.c.l.s4 1966171168
        %v1274 = vunpack.c.0.s8 %v1273
        %v1275 = vlaneseq
        %v1276 = vshrl.u32 %v1275, 7
        %v1277 = vsub.s32 %v1274, %v1276
        %v1278 = vrot.slane %v1271, %v1277
        %s1280 = scalar_lea.vmem %s199, 30
        %1281 = vst.msk [vmem:[%s1280] ss:$8 sm:$0x7] %vm264, %v1278
        %1282 = vst.msk [vmem:[%s1280] ss:$8 sm:$0x0] %vm264, %v1278
        %1283 = vrot.lane.b32.xlu0 %v204, 98
        %v1284 = vpop.permute.xlu0 %1283
        %1285 = vrot.lane.b32.xlu0 %v269, 98
        %v1286 = vpop.permute.xlu0 %1285
        %1287 = vrot.lane.b32.xlu0 %v205, 98
        %v1288 = vpop.permute.xlu0 %1287
        %1289 = vrot.lane.b32.xlu0 %v270, 98
        %v1290 = vpop.permute.xlu0 %1289
        %vm1291 = vcmp.lt.s32.totalorder %v282, 98
        %v1292 = vsel %vm1291, %v1288, %v1290
        %v1293 = vsel %vm1291, %v1286, %v1288
        %v1294 = vsel %vm1291, %v1284, %v1286
        %v1297 = vcombine.low %v1294, %v1293
        %v1299 = vmul.f32 %v202, %v1297
        %v1300 = vmul.f32 %v203, %v1292
        %v1302 = vcombine.high %v1299, %v1299
        %v1304 = vsel %vm212, %v1299, 0.0
        %v1305 = vrot.slane %v1304, 4
        %v1306 = vadd.f32 %v1304, %v1305
        %v1307 = vrot.slane %v1306, 2
        %v1308 = vadd.f32 %v1306, %v1307
        %v1309 = vrot.slane %v1308, 1
        %v1310 = vadd.f32 %v1308, %v1309
        %v1311 = vsel %vm212, %v1302, 0.0
        %v1312 = vrot.slane %v1311, 4
        %v1313 = vadd.f32 %v1311, %v1312
        %v1314 = vrot.slane %v1313, 2
        %v1315 = vadd.f32 %v1313, %v1314
        %v1316 = vrot.slane %v1315, 1
        %v1317 = vadd.f32 %v1315, %v1316
        %v1318 = vsel %vm212, %v1300, 0.0
        %v1319 = vrot.slane %v1318, 4
        %v1320 = vadd.f32 %v1318, %v1319
        %v1321 = vrot.slane %v1320, 2
        %v1322 = vadd.f32 %v1320, %v1321
        %v1323 = vrot.slane %v1322, 1
        %v1324 = vadd.f32 %v1322, %v1323
        %v1328 = vcombine.low %v1310, %v1317
        %v1330 = vunpack.c.l.s4 1966171168
        %v1331 = vunpack.c.0.s8 %v1330
        %v1332 = vlaneseq
        %v1333 = vshrl.u32 %v1332, 7
        %v1334 = vsub.s32 %v1331, %v1333
        %v1335 = vrot.slane %v1328, %v1334
        %v1337 = vunpack.c.l.s4 1966171168
        %v1338 = vunpack.c.0.s8 %v1337
        %v1339 = vlaneseq
        %v1340 = vshrl.u32 %v1339, 7
        %v1341 = vsub.s32 %v1338, %v1340
        %v1342 = vrot.slane %v1324, %v1341
        %v1343 = vcombine.low %v1335, %v1342
        %v1345 = vunpack.c.l.s4 1966171168
        %v1346 = vunpack.c.0.s8 %v1345
        %v1347 = vlaneseq
        %v1348 = vshrl.u32 %v1347, 7
        %v1349 = vsub.s32 %v1346, %v1348
        %v1350 = vrot.slane %v1343, %v1349
        %s1352 = scalar_lea.vmem %s199, 31
        %1353 = vst.msk [vmem:[%s1352] ss:$8 sm:$0x7] %vm264, %v1350
        %1354 = vst.msk [vmem:[%s1352] ss:$8 sm:$0x0] %vm264, %v1350
        %1355 = vrot.lane.b32.xlu0 %v204, 97
        %v1356 = vpop.permute.xlu0 %1355
        %1357 = vrot.lane.b32.xlu0 %v269, 97
        %v1358 = vpop.permute.xlu0 %1357
        %1359 = vrot.lane.b32.xlu0 %v205, 97
        %v1360 = vpop.permute.xlu0 %1359
        %1361 = vrot.lane.b32.xlu0 %v270, 97
        %v1362 = vpop.permute.xlu0 %1361
        %vm1363 = vcmp.lt.s32.totalorder %v282, 97
        %v1364 = vsel %vm1363, %v1360, %v1362
        %v1365 = vsel %vm1363, %v1358, %v1360
        %v1366 = vsel %vm1363, %v1356, %v1358
        %v1369 = vcombine.low %v1366, %v1365
        %v1371 = vmul.f32 %v202, %v1369
        %v1372 = vmul.f32 %v203, %v1364
        %v1374 = vcombine.high %v1371, %v1371
        %v1376 = vsel %vm212, %v1371, 0.0
        %v1377 = vrot.slane %v1376, 4
        %v1378 = vadd.f32 %v1376, %v1377
        %v1379 = vrot.slane %v1378, 2
        %v1380 = vadd.f32 %v1378, %v1379
        %v1381 = vrot.slane %v1380, 1
        %v1382 = vadd.f32 %v1380, %v1381
        %v1383 = vsel %vm212, %v1374, 0.0
        %v1384 = vrot.slane %v1383, 4
        %v1385 = vadd.f32 %v1383, %v1384
        %v1386 = vrot.slane %v1385, 2
        %v1387 = vadd.f32 %v1385, %v1386
        %v1388 = vrot.slane %v1387, 1
        %v1389 = vadd.f32 %v1387, %v1388
        %v1390 = vsel %vm212, %v1372, 0.0
        %v1391 = vrot.slane %v1390, 4
        %v1392 = vadd.f32 %v1390, %v1391
        %v1393 = vrot.slane %v1392, 2
        %v1394 = vadd.f32 %v1392, %v1393
        %v1395 = vrot.slane %v1394, 1
        %v1396 = vadd.f32 %v1394, %v1395
        %v1400 = vcombine.low %v1382, %v1389
        %v1402 = vunpack.c.l.s4 1966171168
        %v1403 = vunpack.c.0.s8 %v1402
        %v1404 = vlaneseq
        %v1405 = vshrl.u32 %v1404, 7
        %v1406 = vsub.s32 %v1403, %v1405
        %v1407 = vrot.slane %v1400, %v1406
        %v1409 = vunpack.c.l.s4 1966171168
        %v1410 = vunpack.c.0.s8 %v1409
        %v1411 = vlaneseq
        %v1412 = vshrl.u32 %v1411, 7
        %v1413 = vsub.s32 %v1410, %v1412
        %v1414 = vrot.slane %v1396, %v1413
        %v1415 = vcombine.low %v1407, %v1414
        %v1417 = vunpack.c.l.s4 1966171168
        %v1418 = vunpack.c.0.s8 %v1417
        %v1419 = vlaneseq
        %v1420 = vshrl.u32 %v1419, 7
        %v1421 = vsub.s32 %v1418, %v1420
        %v1422 = vrot.slane %v1415, %v1421
        %s1424 = scalar_lea.vmem %s199, 48
        %1425 = vst.msk [vmem:[%s1424] ss:$8 sm:$0x7] %vm264, %v1422
        %1426 = vst.msk [vmem:[%s1424] ss:$8 sm:$0x0] %vm264, %v1422
        %1427 = vrot.lane.b32.xlu0 %v204, 96
        %v1428 = vpop.permute.xlu0 %1427
        %1429 = vrot.lane.b32.xlu0 %v269, 96
        %v1430 = vpop.permute.xlu0 %1429
        %1431 = vrot.lane.b32.xlu0 %v205, 96
        %v1432 = vpop.permute.xlu0 %1431
        %1433 = vrot.lane.b32.xlu0 %v270, 96
        %v1434 = vpop.permute.xlu0 %1433
        %vm1435 = vcmp.lt.s32.totalorder %v282, 96
        %v1436 = vsel %vm1435, %v1432, %v1434
        %v1437 = vsel %vm1435, %v1430, %v1432
        %v1438 = vsel %vm1435, %v1428, %v1430
        %v1441 = vcombine.low %v1438, %v1437
        %v1443 = vmul.f32 %v202, %v1441
        %v1444 = vmul.f32 %v203, %v1436
        %v1446 = vcombine.high %v1443, %v1443
        %v1448 = vsel %vm212, %v1443, 0.0
        %v1449 = vrot.slane %v1448, 4
        %v1450 = vadd.f32 %v1448, %v1449
        %v1451 = vrot.slane %v1450, 2
        %v1452 = vadd.f32 %v1450, %v1451
        %v1453 = vrot.slane %v1452, 1
        %v1454 = vadd.f32 %v1452, %v1453
        %v1455 = vsel %vm212, %v1446, 0.0
        %v1456 = vrot.slane %v1455, 4
        %v1457 = vadd.f32 %v1455, %v1456
        %v1458 = vrot.slane %v1457, 2
        %v1459 = vadd.f32 %v1457, %v1458
        %v1460 = vrot.slane %v1459, 1
        %v1461 = vadd.f32 %v1459, %v1460
        %v1462 = vsel %vm212, %v1444, 0.0
        %v1463 = vrot.slane %v1462, 4
        %v1464 = vadd.f32 %v1462, %v1463
        %v1465 = vrot.slane %v1464, 2
        %v1466 = vadd.f32 %v1464, %v1465
        %v1467 = vrot.slane %v1466, 1
        %v1468 = vadd.f32 %v1466, %v1467
        %v1472 = vcombine.low %v1454, %v1461
        %v1474 = vunpack.c.l.s4 1966171168
        %v1475 = vunpack.c.0.s8 %v1474
        %v1476 = vlaneseq
        %v1477 = vshrl.u32 %v1476, 7
        %v1478 = vsub.s32 %v1475, %v1477
        %v1479 = vrot.slane %v1472, %v1478
        %v1481 = vunpack.c.l.s4 1966171168
        %v1482 = vunpack.c.0.s8 %v1481
        %v1483 = vlaneseq
        %v1484 = vshrl.u32 %v1483, 7
        %v1485 = vsub.s32 %v1482, %v1484
        %v1486 = vrot.slane %v1468, %v1485
        %v1487 = vcombine.low %v1479, %v1486
        %v1489 = vunpack.c.l.s4 1966171168
        %v1490 = vunpack.c.0.s8 %v1489
        %v1491 = vlaneseq
        %v1492 = vshrl.u32 %v1491, 7
        %v1493 = vsub.s32 %v1490, %v1492
        %v1494 = vrot.slane %v1487, %v1493
        %s1496 = scalar_lea.vmem %s199, 49
        %1497 = vst.msk [vmem:[%s1496] ss:$8 sm:$0x7] %vm264, %v1494
        %1498 = vst.msk [vmem:[%s1496] ss:$8 sm:$0x0] %vm264, %v1494
        %1499 = vrot.lane.b32.xlu0 %v204, 80
        %v1500 = vpop.permute.xlu0 %1499
        %1501 = vrot.lane.b32.xlu0 %v269, 80
        %v1502 = vpop.permute.xlu0 %1501
        %1503 = vrot.lane.b32.xlu0 %v205, 80
        %v1504 = vpop.permute.xlu0 %1503
        %1505 = vrot.lane.b32.xlu0 %v270, 80
        %v1506 = vpop.permute.xlu0 %1505
        %vm1507 = vcmp.lt.s32.totalorder %v282, 80
        %v1508 = vsel %vm1507, %v1504, %v1506
        %v1509 = vsel %vm1507, %v1502, %v1504
        %v1510 = vsel %vm1507, %v1500, %v1502
        %v1513 = vcombine.low %v1510, %v1509
        %v1515 = vmul.f32 %v202, %v1513
        %v1516 = vmul.f32 %v203, %v1508
        %v1518 = vcombine.high %v1515, %v1515
        %v1520 = vsel %vm212, %v1515, 0.0
        %v1521 = vrot.slane %v1520, 4
        %v1522 = vadd.f32 %v1520, %v1521
        %v1523 = vrot.slane %v1522, 2
        %v1524 = vadd.f32 %v1522, %v1523
        %v1525 = vrot.slane %v1524, 1
        %v1526 = vadd.f32 %v1524, %v1525
        %v1527 = vsel %vm212, %v1518, 0.0
        %v1528 = vrot.slane %v1527, 4
        %v1529 = vadd.f32 %v1527, %v1528
        %v1530 = vrot.slane %v1529, 2
        %v1531 = vadd.f32 %v1529, %v1530
        %v1532 = vrot.slane %v1531, 1
        %v1533 = vadd.f32 %v1531, %v1532
        %v1534 = vsel %vm212, %v1516, 0.0
        %v1535 = vrot.slane %v1534, 4
        %v1536 = vadd.f32 %v1534, %v1535
        %v1537 = vrot.slane %v1536, 2
        %v1538 = vadd.f32 %v1536, %v1537
        %v1539 = vrot.slane %v1538, 1
        %v1540 = vadd.f32 %v1538, %v1539
        %v1544 = vcombine.low %v1526, %v1533
        %v1546 = vunpack.c.l.s4 1966171168
        %v1547 = vunpack.c.0.s8 %v1546
        %v1548 = vlaneseq
        %v1549 = vshrl.u32 %v1548, 7
        %v1550 = vsub.s32 %v1547, %v1549
        %v1551 = vrot.slane %v1544, %v1550
        %v1553 = vunpack.c.l.s4 1966171168
        %v1554 = vunpack.c.0.s8 %v1553
        %v1555 = vlaneseq
        %v1556 = vshrl.u32 %v1555, 7
        %v1557 = vsub.s32 %v1554, %v1556
        %v1558 = vrot.slane %v1540, %v1557
        %v1559 = vcombine.low %v1551, %v1558
        %v1561 = vunpack.c.l.s4 1966171168
        %v1562 = vunpack.c.0.s8 %v1561
        %v1563 = vlaneseq
        %v1564 = vshrl.u32 %v1563, 7
        %v1565 = vsub.s32 %v1562, %v1564
        %v1566 = vrot.slane %v1559, %v1565
        %s1568 = scalar_lea.vmem %s199, 50
        %1569 = vst.msk [vmem:[%s1568] ss:$8 sm:$0x7] %vm264, %v1566
        %1570 = vst.msk [vmem:[%s1568] ss:$8 sm:$0x0] %vm264, %v1566
        %1571 = vrot.lane.b32.xlu0 %v204, 79
        %v1572 = vpop.permute.xlu0 %1571
        %1573 = vrot.lane.b32.xlu0 %v269, 79
        %v1574 = vpop.permute.xlu0 %1573
        %1575 = vrot.lane.b32.xlu0 %v205, 79
        %v1576 = vpop.permute.xlu0 %1575
        %1577 = vrot.lane.b32.xlu0 %v270, 79
        %v1578 = vpop.permute.xlu0 %1577
        %vm1579 = vcmp.lt.s32.totalorder %v282, 79
        %v1580 = vsel %vm1579, %v1576, %v1578
        %v1581 = vsel %vm1579, %v1574, %v1576
        %v1582 = vsel %vm1579, %v1572, %v1574
        %v1585 = vcombine.low %v1582, %v1581
        %v1587 = vmul.f32 %v202, %v1585
        %v1588 = vmul.f32 %v203, %v1580
        %v1590 = vcombine.high %v1587, %v1587
        %v1592 = vsel %vm212, %v1587, 0.0
        %v1593 = vrot.slane %v1592, 4
        %v1594 = vadd.f32 %v1592, %v1593
        %v1595 = vrot.slane %v1594, 2
        %v1596 = vadd.f32 %v1594, %v1595
        %v1597 = vrot.slane %v1596, 1
        %v1598 = vadd.f32 %v1596, %v1597
        %v1599 = vsel %vm212, %v1590, 0.0
        %v1600 = vrot.slane %v1599, 4
        %v1601 = vadd.f32 %v1599, %v1600
        %v1602 = vrot.slane %v1601, 2
        %v1603 = vadd.f32 %v1601, %v1602
        %v1604 = vrot.slane %v1603, 1
        %v1605 = vadd.f32 %v1603, %v1604
        %v1606 = vsel %vm212, %v1588, 0.0
        %v1607 = vrot.slane %v1606, 4
        %v1608 = vadd.f32 %v1606, %v1607
        %v1609 = vrot.slane %v1608, 2
        %v1610 = vadd.f32 %v1608, %v1609
        %v1611 = vrot.slane %v1610, 1
        %v1612 = vadd.f32 %v1610, %v1611
        %v1616 = vcombine.low %v1598, %v1605
        %v1618 = vunpack.c.l.s4 1966171168
        %v1619 = vunpack.c.0.s8 %v1618
        %v1620 = vlaneseq
        %v1621 = vshrl.u32 %v1620, 7
        %v1622 = vsub.s32 %v1619, %v1621
        %v1623 = vrot.slane %v1616, %v1622
        %v1625 = vunpack.c.l.s4 1966171168
        %v1626 = vunpack.c.0.s8 %v1625
        %v1627 = vlaneseq
        %v1628 = vshrl.u32 %v1627, 7
        %v1629 = vsub.s32 %v1626, %v1628
        %v1630 = vrot.slane %v1612, %v1629
        %v1631 = vcombine.low %v1623, %v1630
        %v1633 = vunpack.c.l.s4 1966171168
        %v1634 = vunpack.c.0.s8 %v1633
        %v1635 = vlaneseq
        %v1636 = vshrl.u32 %v1635, 7
        %v1637 = vsub.s32 %v1634, %v1636
        %v1638 = vrot.slane %v1631, %v1637
        %s1640 = scalar_lea.vmem %s199, 51
        %1641 = vst.msk [vmem:[%s1640] ss:$8 sm:$0x7] %vm264, %v1638
        %1642 = vst.msk [vmem:[%s1640] ss:$8 sm:$0x0] %vm264, %v1638
        %1643 = vrot.lane.b32.xlu0 %v204, 78
        %v1644 = vpop.permute.xlu0 %1643
        %1645 = vrot.lane.b32.xlu0 %v269, 78
        %v1646 = vpop.permute.xlu0 %1645
        %1647 = vrot.lane.b32.xlu0 %v205, 78
        %v1648 = vpop.permute.xlu0 %1647
        %1649 = vrot.lane.b32.xlu0 %v270, 78
        %v1650 = vpop.permute.xlu0 %1649
        %vm1651 = vcmp.lt.s32.totalorder %v282, 78
        %v1652 = vsel %vm1651, %v1648, %v1650
        %v1653 = vsel %vm1651, %v1646, %v1648
        %v1654 = vsel %vm1651, %v1644, %v1646
        %v1657 = vcombine.low %v1654, %v1653
        %v1659 = vmul.f32 %v202, %v1657
        %v1660 = vmul.f32 %v203, %v1652
        %v1662 = vcombine.high %v1659, %v1659
        %v1664 = vsel %vm212, %v1659, 0.0
        %v1665 = vrot.slane %v1664, 4
        %v1666 = vadd.f32 %v1664, %v1665
        %v1667 = vrot.slane %v1666, 2
        %v1668 = vadd.f32 %v1666, %v1667
        %v1669 = vrot.slane %v1668, 1
        %v1670 = vadd.f32 %v1668, %v1669
        %v1671 = vsel %vm212, %v1662, 0.0
        %v1672 = vrot.slane %v1671, 4
        %v1673 = vadd.f32 %v1671, %v1672
        %v1674 = vrot.slane %v1673, 2
        %v1675 = vadd.f32 %v1673, %v1674
        %v1676 = vrot.slane %v1675, 1
        %v1677 = vadd.f32 %v1675, %v1676
        %v1678 = vsel %vm212, %v1660, 0.0
        %v1679 = vrot.slane %v1678, 4
        %v1680 = vadd.f32 %v1678, %v1679
        %v1681 = vrot.slane %v1680, 2
        %v1682 = vadd.f32 %v1680, %v1681
        %v1683 = vrot.slane %v1682, 1
        %v1684 = vadd.f32 %v1682, %v1683
        %v1688 = vcombine.low %v1670, %v1677
        %v1690 = vunpack.c.l.s4 1966171168
        %v1691 = vunpack.c.0.s8 %v1690
        %v1692 = vlaneseq
        %v1693 = vshrl.u32 %v1692, 7
        %v1694 = vsub.s32 %v1691, %v1693
        %v1695 = vrot.slane %v1688, %v1694
        %v1697 = vunpack.c.l.s4 1966171168
        %v1698 = vunpack.c.0.s8 %v1697
        %v1699 = vlaneseq
        %v1700 = vshrl.u32 %v1699, 7
        %v1701 = vsub.s32 %v1698, %v1700
        %v1702 = vrot.slane %v1684, %v1701
        %v1703 = vcombine.low %v1695, %v1702
        %v1705 = vunpack.c.l.s4 1966171168
        %v1706 = vunpack.c.0.s8 %v1705
        %v1707 = vlaneseq
        %v1708 = vshrl.u32 %v1707, 7
        %v1709 = vsub.s32 %v1706, %v1708
        %v1710 = vrot.slane %v1703, %v1709
        %s1712 = scalar_lea.vmem %s199, 52
        %1713 = vst.msk [vmem:[%s1712] ss:$8 sm:$0x7] %vm264, %v1710
        %1714 = vst.msk [vmem:[%s1712] ss:$8 sm:$0x0] %vm264, %v1710
        %1715 = vrot.lane.b32.xlu0 %v204, 77
        %v1716 = vpop.permute.xlu0 %1715
        %1717 = vrot.lane.b32.xlu0 %v269, 77
        %v1718 = vpop.permute.xlu0 %1717
        %1719 = vrot.lane.b32.xlu0 %v205, 77
        %v1720 = vpop.permute.xlu0 %1719
        %1721 = vrot.lane.b32.xlu0 %v270, 77
        %v1722 = vpop.permute.xlu0 %1721
        %vm1723 = vcmp.lt.s32.totalorder %v282, 77
        %v1724 = vsel %vm1723, %v1720, %v1722
        %v1725 = vsel %vm1723, %v1718, %v1720
        %v1726 = vsel %vm1723, %v1716, %v1718
        %v1729 = vcombine.low %v1726, %v1725
        %v1731 = vmul.f32 %v202, %v1729
        %v1732 = vmul.f32 %v203, %v1724
        %v1734 = vcombine.high %v1731, %v1731
        %v1736 = vsel %vm212, %v1731, 0.0
        %v1737 = vrot.slane %v1736, 4
        %v1738 = vadd.f32 %v1736, %v1737
        %v1739 = vrot.slane %v1738, 2
        %v1740 = vadd.f32 %v1738, %v1739
        %v1741 = vrot.slane %v1740, 1
        %v1742 = vadd.f32 %v1740, %v1741
        %v1743 = vsel %vm212, %v1734, 0.0
        %v1744 = vrot.slane %v1743, 4
        %v1745 = vadd.f32 %v1743, %v1744
        %v1746 = vrot.slane %v1745, 2
        %v1747 = vadd.f32 %v1745, %v1746
        %v1748 = vrot.slane %v1747, 1
        %v1749 = vadd.f32 %v1747, %v1748
        %v1750 = vsel %vm212, %v1732, 0.0
        %v1751 = vrot.slane %v1750, 4
        %v1752 = vadd.f32 %v1750, %v1751
        %v1753 = vrot.slane %v1752, 2
        %v1754 = vadd.f32 %v1752, %v1753
        %v1755 = vrot.slane %v1754, 1
        %v1756 = vadd.f32 %v1754, %v1755
        %v1760 = vcombine.low %v1742, %v1749
        %v1762 = vunpack.c.l.s4 1966171168
        %v1763 = vunpack.c.0.s8 %v1762
        %v1764 = vlaneseq
        %v1765 = vshrl.u32 %v1764, 7
        %v1766 = vsub.s32 %v1763, %v1765
        %v1767 = vrot.slane %v1760, %v1766
        %v1769 = vunpack.c.l.s4 1966171168
        %v1770 = vunpack.c.0.s8 %v1769
        %v1771 = vlaneseq
        %v1772 = vshrl.u32 %v1771, 7
        %v1773 = vsub.s32 %v1770, %v1772
        %v1774 = vrot.slane %v1756, %v1773
        %v1775 = vcombine.low %v1767, %v1774
        %v1777 = vunpack.c.l.s4 1966171168
        %v1778 = vunpack.c.0.s8 %v1777
        %v1779 = vlaneseq
        %v1780 = vshrl.u32 %v1779, 7
        %v1781 = vsub.s32 %v1778, %v1780
        %v1782 = vrot.slane %v1775, %v1781
        %s1784 = scalar_lea.vmem %s199, 53
        %1785 = vst.msk [vmem:[%s1784] ss:$8 sm:$0x7] %vm264, %v1782
        %1786 = vst.msk [vmem:[%s1784] ss:$8 sm:$0x0] %vm264, %v1782
        %1787 = vrot.lane.b32.xlu0 %v204, 76
        %v1788 = vpop.permute.xlu0 %1787
        %1789 = vrot.lane.b32.xlu0 %v269, 76
        %v1790 = vpop.permute.xlu0 %1789
        %1791 = vrot.lane.b32.xlu0 %v205, 76
        %v1792 = vpop.permute.xlu0 %1791
        %1793 = vrot.lane.b32.xlu0 %v270, 76
        %v1794 = vpop.permute.xlu0 %1793
        %vm1795 = vcmp.lt.s32.totalorder %v282, 76
        %v1796 = vsel %vm1795, %v1792, %v1794
        %v1797 = vsel %vm1795, %v1790, %v1792
        %v1798 = vsel %vm1795, %v1788, %v1790
        %v1801 = vcombine.low %v1798, %v1797
        %v1803 = vmul.f32 %v202, %v1801
        %v1804 = vmul.f32 %v203, %v1796
        %v1806 = vcombine.high %v1803, %v1803
        %v1808 = vsel %vm212, %v1803, 0.0
        %v1809 = vrot.slane %v1808, 4
        %v1810 = vadd.f32 %v1808, %v1809
        %v1811 = vrot.slane %v1810, 2
        %v1812 = vadd.f32 %v1810, %v1811
        %v1813 = vrot.slane %v1812, 1
        %v1814 = vadd.f32 %v1812, %v1813
        %v1815 = vsel %vm212, %v1806, 0.0
        %v1816 = vrot.slane %v1815, 4
        %v1817 = vadd.f32 %v1815, %v1816
        %v1818 = vrot.slane %v1817, 2
        %v1819 = vadd.f32 %v1817, %v1818
        %v1820 = vrot.slane %v1819, 1
        %v1821 = vadd.f32 %v1819, %v1820
        %v1822 = vsel %vm212, %v1804, 0.0
        %v1823 = vrot.slane %v1822, 4
        %v1824 = vadd.f32 %v1822, %v1823
        %v1825 = vrot.slane %v1824, 2
        %v1826 = vadd.f32 %v1824, %v1825
        %v1827 = vrot.slane %v1826, 1
        %v1828 = vadd.f32 %v1826, %v1827
        %v1832 = vcombine.low %v1814, %v1821
        %v1834 = vunpack.c.l.s4 1966171168
        %v1835 = vunpack.c.0.s8 %v1834
        %v1836 = vlaneseq
        %v1837 = vshrl.u32 %v1836, 7
        %v1838 = vsub.s32 %v1835, %v1837
        %v1839 = vrot.slane %v1832, %v1838
        %v1841 = vunpack.c.l.s4 1966171168
        %v1842 = vunpack.c.0.s8 %v1841
        %v1843 = vlaneseq
        %v1844 = vshrl.u32 %v1843, 7
        %v1845 = vsub.s32 %v1842, %v1844
        %v1846 = vrot.slane %v1828, %v1845
        %v1847 = vcombine.low %v1839, %v1846
        %v1849 = vunpack.c.l.s4 1966171168
        %v1850 = vunpack.c.0.s8 %v1849
        %v1851 = vlaneseq
        %v1852 = vshrl.u32 %v1851, 7
        %v1853 = vsub.s32 %v1850, %v1852
        %v1854 = vrot.slane %v1847, %v1853
        %s1856 = scalar_lea.vmem %s199, 54
        %1857 = vst.msk [vmem:[%s1856] ss:$8 sm:$0x7] %vm264, %v1854
        %1858 = vst.msk [vmem:[%s1856] ss:$8 sm:$0x0] %vm264, %v1854
        %1859 = vrot.lane.b32.xlu0 %v204, 75
        %v1860 = vpop.permute.xlu0 %1859
        %1861 = vrot.lane.b32.xlu0 %v269, 75
        %v1862 = vpop.permute.xlu0 %1861
        %1863 = vrot.lane.b32.xlu0 %v205, 75
        %v1864 = vpop.permute.xlu0 %1863
        %1865 = vrot.lane.b32.xlu0 %v270, 75
        %v1866 = vpop.permute.xlu0 %1865
        %vm1867 = vcmp.lt.s32.totalorder %v282, 75
        %v1868 = vsel %vm1867, %v1864, %v1866
        %v1869 = vsel %vm1867, %v1862, %v1864
        %v1870 = vsel %vm1867, %v1860, %v1862
        %v1873 = vcombine.low %v1870, %v1869
        %v1875 = vmul.f32 %v202, %v1873
        %v1876 = vmul.f32 %v203, %v1868
        %v1878 = vcombine.high %v1875, %v1875
        %v1880 = vsel %vm212, %v1875, 0.0
        %v1881 = vrot.slane %v1880, 4
        %v1882 = vadd.f32 %v1880, %v1881
        %v1883 = vrot.slane %v1882, 2
        %v1884 = vadd.f32 %v1882, %v1883
        %v1885 = vrot.slane %v1884, 1
        %v1886 = vadd.f32 %v1884, %v1885
        %v1887 = vsel %vm212, %v1878, 0.0
        %v1888 = vrot.slane %v1887, 4
        %v1889 = vadd.f32 %v1887, %v1888
        %v1890 = vrot.slane %v1889, 2
        %v1891 = vadd.f32 %v1889, %v1890
        %v1892 = vrot.slane %v1891, 1
        %v1893 = vadd.f32 %v1891, %v1892
        %v1894 = vsel %vm212, %v1876, 0.0
        %v1895 = vrot.slane %v1894, 4
        %v1896 = vadd.f32 %v1894, %v1895
        %v1897 = vrot.slane %v1896, 2
        %v1898 = vadd.f32 %v1896, %v1897
        %v1899 = vrot.slane %v1898, 1
        %v1900 = vadd.f32 %v1898, %v1899
        %v1904 = vcombine.low %v1886, %v1893
        %v1906 = vunpack.c.l.s4 1966171168
        %v1907 = vunpack.c.0.s8 %v1906
        %v1908 = vlaneseq
        %v1909 = vshrl.u32 %v1908, 7
        %v1910 = vsub.s32 %v1907, %v1909
        %v1911 = vrot.slane %v1904, %v1910
        %v1913 = vunpack.c.l.s4 1966171168
        %v1914 = vunpack.c.0.s8 %v1913
        %v1915 = vlaneseq
        %v1916 = vshrl.u32 %v1915, 7
        %v1917 = vsub.s32 %v1914, %v1916
        %v1918 = vrot.slane %v1900, %v1917
        %v1919 = vcombine.low %v1911, %v1918
        %v1921 = vunpack.c.l.s4 1966171168
        %v1922 = vunpack.c.0.s8 %v1921
        %v1923 = vlaneseq
        %v1924 = vshrl.u32 %v1923, 7
        %v1925 = vsub.s32 %v1922, %v1924
        %v1926 = vrot.slane %v1919, %v1925
        %s1928 = scalar_lea.vmem %s199, 55
        %1929 = vst.msk [vmem:[%s1928] ss:$8 sm:$0x7] %vm264, %v1926
        %1930 = vst.msk [vmem:[%s1928] ss:$8 sm:$0x0] %vm264, %v1926
        %1931 = vrot.lane.b32.xlu0 %v204, 74
        %v1932 = vpop.permute.xlu0 %1931
        %1933 = vrot.lane.b32.xlu0 %v269, 74
        %v1934 = vpop.permute.xlu0 %1933
        %1935 = vrot.lane.b32.xlu0 %v205, 74
        %v1936 = vpop.permute.xlu0 %1935
        %1937 = vrot.lane.b32.xlu0 %v270, 74
        %v1938 = vpop.permute.xlu0 %1937
        %vm1939 = vcmp.lt.s32.totalorder %v282, 74
        %v1940 = vsel %vm1939, %v1936, %v1938
        %v1941 = vsel %vm1939, %v1934, %v1936
        %v1942 = vsel %vm1939, %v1932, %v1934
        %v1945 = vcombine.low %v1942, %v1941
        %v1947 = vmul.f32 %v202, %v1945
        %v1948 = vmul.f32 %v203, %v1940
        %v1950 = vcombine.high %v1947, %v1947
        %v1952 = vsel %vm212, %v1947, 0.0
        %v1953 = vrot.slane %v1952, 4
        %v1954 = vadd.f32 %v1952, %v1953
        %v1955 = vrot.slane %v1954, 2
        %v1956 = vadd.f32 %v1954, %v1955
        %v1957 = vrot.slane %v1956, 1
        %v1958 = vadd.f32 %v1956, %v1957
        %v1959 = vsel %vm212, %v1950, 0.0
        %v1960 = vrot.slane %v1959, 4
        %v1961 = vadd.f32 %v1959, %v1960
        %v1962 = vrot.slane %v1961, 2
        %v1963 = vadd.f32 %v1961, %v1962
        %v1964 = vrot.slane %v1963, 1
        %v1965 = vadd.f32 %v1963, %v1964
        %v1966 = vsel %vm212, %v1948, 0.0
        %v1967 = vrot.slane %v1966, 4
        %v1968 = vadd.f32 %v1966, %v1967
        %v1969 = vrot.slane %v1968, 2
        %v1970 = vadd.f32 %v1968, %v1969
        %v1971 = vrot.slane %v1970, 1
        %v1972 = vadd.f32 %v1970, %v1971
        %v1976 = vcombine.low %v1958, %v1965
        %v1978 = vunpack.c.l.s4 1966171168
        %v1979 = vunpack.c.0.s8 %v1978
        %v1980 = vlaneseq
        %v1981 = vshrl.u32 %v1980, 7
        %v1982 = vsub.s32 %v1979, %v1981
        %v1983 = vrot.slane %v1976, %v1982
        %v1985 = vunpack.c.l.s4 1966171168
        %v1986 = vunpack.c.0.s8 %v1985
        %v1987 = vlaneseq
        %v1988 = vshrl.u32 %v1987, 7
        %v1989 = vsub.s32 %v1986, %v1988
        %v1990 = vrot.slane %v1972, %v1989
        %v1991 = vcombine.low %v1983, %v1990
        %v1993 = vunpack.c.l.s4 1966171168
        %v1994 = vunpack.c.0.s8 %v1993
        %v1995 = vlaneseq
        %v1996 = vshrl.u32 %v1995, 7
        %v1997 = vsub.s32 %v1994, %v1996
        %v1998 = vrot.slane %v1991, %v1997
        %s2000 = scalar_lea.vmem %s199, 72
        %2001 = vst.msk [vmem:[%s2000] ss:$8 sm:$0x7] %vm264, %v1998
        %2002 = vst.msk [vmem:[%s2000] ss:$8 sm:$0x0] %vm264, %v1998
        %2003 = vrot.lane.b32.xlu0 %v204, 73
        %v2004 = vpop.permute.xlu0 %2003
        %2005 = vrot.lane.b32.xlu0 %v269, 73
        %v2006 = vpop.permute.xlu0 %2005
        %2007 = vrot.lane.b32.xlu0 %v205, 73
        %v2008 = vpop.permute.xlu0 %2007
        %2009 = vrot.lane.b32.xlu0 %v270, 73
        %v2010 = vpop.permute.xlu0 %2009
        %vm2011 = vcmp.lt.s32.totalorder %v282, 73
        %v2012 = vsel %vm2011, %v2008, %v2010
        %v2013 = vsel %vm2011, %v2006, %v2008
        %v2014 = vsel %vm2011, %v2004, %v2006
        %v2017 = vcombine.low %v2014, %v2013
        %v2019 = vmul.f32 %v202, %v2017
        %v2020 = vmul.f32 %v203, %v2012
        %v2022 = vcombine.high %v2019, %v2019
        %v2024 = vsel %vm212, %v2019, 0.0
        %v2025 = vrot.slane %v2024, 4
        %v2026 = vadd.f32 %v2024, %v2025
        %v2027 = vrot.slane %v2026, 2
        %v2028 = vadd.f32 %v2026, %v2027
        %v2029 = vrot.slane %v2028, 1
        %v2030 = vadd.f32 %v2028, %v2029
        %v2031 = vsel %vm212, %v2022, 0.0
        %v2032 = vrot.slane %v2031, 4
        %v2033 = vadd.f32 %v2031, %v2032
        %v2034 = vrot.slane %v2033, 2
        %v2035 = vadd.f32 %v2033, %v2034
        %v2036 = vrot.slane %v2035, 1
        %v2037 = vadd.f32 %v2035, %v2036
        %v2038 = vsel %vm212, %v2020, 0.0
        %v2039 = vrot.slane %v2038, 4
        %v2040 = vadd.f32 %v2038, %v2039
        %v2041 = vrot.slane %v2040, 2
        %v2042 = vadd.f32 %v2040, %v2041
        %v2043 = vrot.slane %v2042, 1
        %v2044 = vadd.f32 %v2042, %v2043
        %v2048 = vcombine.low %v2030, %v2037
        %v2050 = vunpack.c.l.s4 1966171168
        %v2051 = vunpack.c.0.s8 %v2050
        %v2052 = vlaneseq
        %v2053 = vshrl.u32 %v2052, 7
        %v2054 = vsub.s32 %v2051, %v2053
        %v2055 = vrot.slane %v2048, %v2054
        %v2057 = vunpack.c.l.s4 1966171168
        %v2058 = vunpack.c.0.s8 %v2057
        %v2059 = vlaneseq
        %v2060 = vshrl.u32 %v2059, 7
        %v2061 = vsub.s32 %v2058, %v2060
        %v2062 = vrot.slane %v2044, %v2061
        %v2063 = vcombine.low %v2055, %v2062
        %v2065 = vunpack.c.l.s4 1966171168
        %v2066 = vunpack.c.0.s8 %v2065
        %v2067 = vlaneseq
        %v2068 = vshrl.u32 %v2067, 7
        %v2069 = vsub.s32 %v2066, %v2068
        %v2070 = vrot.slane %v2063, %v2069
        %s2072 = scalar_lea.vmem %s199, 73
        %2073 = vst.msk [vmem:[%s2072] ss:$8 sm:$0x7] %vm264, %v2070
        %2074 = vst.msk [vmem:[%s2072] ss:$8 sm:$0x0] %vm264, %v2070
        %2075 = vrot.lane.b32.xlu0 %v204, 72
        %v2076 = vpop.permute.xlu0 %2075
        %2077 = vrot.lane.b32.xlu0 %v269, 72
        %v2078 = vpop.permute.xlu0 %2077
        %2079 = vrot.lane.b32.xlu0 %v205, 72
        %v2080 = vpop.permute.xlu0 %2079
        %2081 = vrot.lane.b32.xlu0 %v270, 72
        %v2082 = vpop.permute.xlu0 %2081
        %vm2083 = vcmp.lt.s32.totalorder %v282, 72
        %v2084 = vsel %vm2083, %v2080, %v2082
        %v2085 = vsel %vm2083, %v2078, %v2080
        %v2086 = vsel %vm2083, %v2076, %v2078
        %v2089 = vcombine.low %v2086, %v2085
        %v2091 = vmul.f32 %v202, %v2089
        %v2092 = vmul.f32 %v203, %v2084
        %v2094 = vcombine.high %v2091, %v2091
        %v2096 = vsel %vm212, %v2091, 0.0
        %v2097 = vrot.slane %v2096, 4
        %v2098 = vadd.f32 %v2096, %v2097
        %v2099 = vrot.slane %v2098, 2
        %v2100 = vadd.f32 %v2098, %v2099
        %v2101 = vrot.slane %v2100, 1
        %v2102 = vadd.f32 %v2100, %v2101
        %v2103 = vsel %vm212, %v2094, 0.0
        %v2104 = vrot.slane %v2103, 4
        %v2105 = vadd.f32 %v2103, %v2104
        %v2106 = vrot.slane %v2105, 2
        %v2107 = vadd.f32 %v2105, %v2106
        %v2108 = vrot.slane %v2107, 1
        %v2109 = vadd.f32 %v2107, %v2108
        %v2110 = vsel %vm212, %v2092, 0.0
        %v2111 = vrot.slane %v2110, 4
        %v2112 = vadd.f32 %v2110, %v2111
        %v2113 = vrot.slane %v2112, 2
        %v2114 = vadd.f32 %v2112, %v2113
        %v2115 = vrot.slane %v2114, 1
        %v2116 = vadd.f32 %v2114, %v2115
        %v2120 = vcombine.low %v2102, %v2109
        %v2122 = vunpack.c.l.s4 1966171168
        %v2123 = vunpack.c.0.s8 %v2122
        %v2124 = vlaneseq
        %v2125 = vshrl.u32 %v2124, 7
        %v2126 = vsub.s32 %v2123, %v2125
        %v2127 = vrot.slane %v2120, %v2126
        %v2129 = vunpack.c.l.s4 1966171168
        %v2130 = vunpack.c.0.s8 %v2129
        %v2131 = vlaneseq
        %v2132 = vshrl.u32 %v2131, 7
        %v2133 = vsub.s32 %v2130, %v2132
        %v2134 = vrot.slane %v2116, %v2133
        %v2135 = vcombine.low %v2127, %v2134
        %v2137 = vunpack.c.l.s4 1966171168
        %v2138 = vunpack.c.0.s8 %v2137
        %v2139 = vlaneseq
        %v2140 = vshrl.u32 %v2139, 7
        %v2141 = vsub.s32 %v2138, %v2140
        %v2142 = vrot.slane %v2135, %v2141
        %s2144 = scalar_lea.vmem %s199, 74
        %2145 = vst.msk [vmem:[%s2144] ss:$8 sm:$0x7] %vm264, %v2142
        %2146 = vst.msk [vmem:[%s2144] ss:$8 sm:$0x0] %vm264, %v2142
        %2147 = vrot.lane.b32.xlu0 %v204, 56
        %v2148 = vpop.permute.xlu0 %2147
        %2149 = vrot.lane.b32.xlu0 %v269, 56
        %v2150 = vpop.permute.xlu0 %2149
        %2151 = vrot.lane.b32.xlu0 %v205, 56
        %v2152 = vpop.permute.xlu0 %2151
        %2153 = vrot.lane.b32.xlu0 %v270, 56
        %v2154 = vpop.permute.xlu0 %2153
        %vm2155 = vcmp.lt.s32.totalorder %v282, 56
        %v2156 = vsel %vm2155, %v2152, %v2154
        %v2157 = vsel %vm2155, %v2150, %v2152
        %v2158 = vsel %vm2155, %v2148, %v2150
        %v2161 = vcombine.low %v2158, %v2157
        %v2163 = vmul.f32 %v202, %v2161
        %v2164 = vmul.f32 %v203, %v2156
        %v2166 = vcombine.high %v2163, %v2163
        %v2168 = vsel %vm212, %v2163, 0.0
        %v2169 = vrot.slane %v2168, 4
        %v2170 = vadd.f32 %v2168, %v2169
        %v2171 = vrot.slane %v2170, 2
        %v2172 = vadd.f32 %v2170, %v2171
        %v2173 = vrot.slane %v2172, 1
        %v2174 = vadd.f32 %v2172, %v2173
        %v2175 = vsel %vm212, %v2166, 0.0
        %v2176 = vrot.slane %v2175, 4
        %v2177 = vadd.f32 %v2175, %v2176
        %v2178 = vrot.slane %v2177, 2
        %v2179 = vadd.f32 %v2177, %v2178
        %v2180 = vrot.slane %v2179, 1
        %v2181 = vadd.f32 %v2179, %v2180
        %v2182 = vsel %vm212, %v2164, 0.0
        %v2183 = vrot.slane %v2182, 4
        %v2184 = vadd.f32 %v2182, %v2183
        %v2185 = vrot.slane %v2184, 2
        %v2186 = vadd.f32 %v2184, %v2185
        %v2187 = vrot.slane %v2186, 1
        %v2188 = vadd.f32 %v2186, %v2187
        %v2192 = vcombine.low %v2174, %v2181
        %v2194 = vunpack.c.l.s4 1966171168
        %v2195 = vunpack.c.0.s8 %v2194
        %v2196 = vlaneseq
        %v2197 = vshrl.u32 %v2196, 7
        %v2198 = vsub.s32 %v2195, %v2197
        %v2199 = vrot.slane %v2192, %v2198
        %v2201 = vunpack.c.l.s4 1966171168
        %v2202 = vunpack.c.0.s8 %v2201
        %v2203 = vlaneseq
        %v2204 = vshrl.u32 %v2203, 7
        %v2205 = vsub.s32 %v2202, %v2204
        %v2206 = vrot.slane %v2188, %v2205
        %v2207 = vcombine.low %v2199, %v2206
        %v2209 = vunpack.c.l.s4 1966171168
        %v2210 = vunpack.c.0.s8 %v2209
        %v2211 = vlaneseq
        %v2212 = vshrl.u32 %v2211, 7
        %v2213 = vsub.s32 %v2210, %v2212
        %v2214 = vrot.slane %v2207, %v2213
        %s2216 = scalar_lea.vmem %s199, 75
        %2217 = vst.msk [vmem:[%s2216] ss:$8 sm:$0x7] %vm264, %v2214
        %2218 = vst.msk [vmem:[%s2216] ss:$8 sm:$0x0] %vm264, %v2214
        %2219 = vrot.lane.b32.xlu0 %v204, 55
        %v2220 = vpop.permute.xlu0 %2219
        %2221 = vrot.lane.b32.xlu0 %v269, 55
        %v2222 = vpop.permute.xlu0 %2221
        %2223 = vrot.lane.b32.xlu0 %v205, 55
        %v2224 = vpop.permute.xlu0 %2223
        %2225 = vrot.lane.b32.xlu0 %v270, 55
        %v2226 = vpop.permute.xlu0 %2225
        %vm2227 = vcmp.lt.s32.totalorder %v282, 55
        %v2228 = vsel %vm2227, %v2224, %v2226
        %v2229 = vsel %vm2227, %v2222, %v2224
        %v2230 = vsel %vm2227, %v2220, %v2222
        %v2233 = vcombine.low %v2230, %v2229
        %v2235 = vmul.f32 %v202, %v2233
        %v2236 = vmul.f32 %v203, %v2228
        %v2238 = vcombine.high %v2235, %v2235
        %v2240 = vsel %vm212, %v2235, 0.0
        %v2241 = vrot.slane %v2240, 4
        %v2242 = vadd.f32 %v2240, %v2241
        %v2243 = vrot.slane %v2242, 2
        %v2244 = vadd.f32 %v2242, %v2243
        %v2245 = vrot.slane %v2244, 1
        %v2246 = vadd.f32 %v2244, %v2245
        %v2247 = vsel %vm212, %v2238, 0.0
        %v2248 = vrot.slane %v2247, 4
        %v2249 = vadd.f32 %v2247, %v2248
        %v2250 = vrot.slane %v2249, 2
        %v2251 = vadd.f32 %v2249, %v2250
        %v2252 = vrot.slane %v2251, 1
        %v2253 = vadd.f32 %v2251, %v2252
        %v2254 = vsel %vm212, %v2236, 0.0
        %v2255 = vrot.slane %v2254, 4
        %v2256 = vadd.f32 %v2254, %v2255
        %v2257 = vrot.slane %v2256, 2
        %v2258 = vadd.f32 %v2256, %v2257
        %v2259 = vrot.slane %v2258, 1
        %v2260 = vadd.f32 %v2258, %v2259
        %v2264 = vcombine.low %v2246, %v2253
        %v2266 = vunpack.c.l.s4 1966171168
        %v2267 = vunpack.c.0.s8 %v2266
        %v2268 = vlaneseq
        %v2269 = vshrl.u32 %v2268, 7
        %v2270 = vsub.s32 %v2267, %v2269
        %v2271 = vrot.slane %v2264, %v2270
        %v2273 = vunpack.c.l.s4 1966171168
        %v2274 = vunpack.c.0.s8 %v2273
        %v2275 = vlaneseq
        %v2276 = vshrl.u32 %v2275, 7
        %v2277 = vsub.s32 %v2274, %v2276
        %v2278 = vrot.slane %v2260, %v2277
        %v2279 = vcombine.low %v2271, %v2278
        %v2281 = vunpack.c.l.s4 1966171168
        %v2282 = vunpack.c.0.s8 %v2281
        %v2283 = vlaneseq
        %v2284 = vshrl.u32 %v2283, 7
        %v2285 = vsub.s32 %v2282, %v2284
        %v2286 = vrot.slane %v2279, %v2285
        %s2288 = scalar_lea.vmem %s199, 76
        %2289 = vst.msk [vmem:[%s2288] ss:$8 sm:$0x7] %vm264, %v2286
        %2290 = vst.msk [vmem:[%s2288] ss:$8 sm:$0x0] %vm264, %v2286
        %2291 = vrot.lane.b32.xlu0 %v204, 54
        %v2292 = vpop.permute.xlu0 %2291
        %2293 = vrot.lane.b32.xlu0 %v269, 54
        %v2294 = vpop.permute.xlu0 %2293
        %2295 = vrot.lane.b32.xlu0 %v205, 54
        %v2296 = vpop.permute.xlu0 %2295
        %2297 = vrot.lane.b32.xlu0 %v270, 54
        %v2298 = vpop.permute.xlu0 %2297
        %vm2299 = vcmp.lt.s32.totalorder %v282, 54
        %v2300 = vsel %vm2299, %v2296, %v2298
        %v2301 = vsel %vm2299, %v2294, %v2296
        %v2302 = vsel %vm2299, %v2292, %v2294
        %v2305 = vcombine.low %v2302, %v2301
        %v2307 = vmul.f32 %v202, %v2305
        %v2308 = vmul.f32 %v203, %v2300
        %v2310 = vcombine.high %v2307, %v2307
        %v2312 = vsel %vm212, %v2307, 0.0
        %v2313 = vrot.slane %v2312, 4
        %v2314 = vadd.f32 %v2312, %v2313
        %v2315 = vrot.slane %v2314, 2
        %v2316 = vadd.f32 %v2314, %v2315
        %v2317 = vrot.slane %v2316, 1
        %v2318 = vadd.f32 %v2316, %v2317
        %v2319 = vsel %vm212, %v2310, 0.0
        %v2320 = vrot.slane %v2319, 4
        %v2321 = vadd.f32 %v2319, %v2320
        %v2322 = vrot.slane %v2321, 2
        %v2323 = vadd.f32 %v2321, %v2322
        %v2324 = vrot.slane %v2323, 1
        %v2325 = vadd.f32 %v2323, %v2324
        %v2326 = vsel %vm212, %v2308, 0.0
        %v2327 = vrot.slane %v2326, 4
        %v2328 = vadd.f32 %v2326, %v2327
        %v2329 = vrot.slane %v2328, 2
        %v2330 = vadd.f32 %v2328, %v2329
        %v2331 = vrot.slane %v2330, 1
        %v2332 = vadd.f32 %v2330, %v2331
        %v2336 = vcombine.low %v2318, %v2325
        %v2338 = vunpack.c.l.s4 1966171168
        %v2339 = vunpack.c.0.s8 %v2338
        %v2340 = vlaneseq
        %v2341 = vshrl.u32 %v2340, 7
        %v2342 = vsub.s32 %v2339, %v2341
        %v2343 = vrot.slane %v2336, %v2342
        %v2345 = vunpack.c.l.s4 1966171168
        %v2346 = vunpack.c.0.s8 %v2345
        %v2347 = vlaneseq
        %v2348 = vshrl.u32 %v2347, 7
        %v2349 = vsub.s32 %v2346, %v2348
        %v2350 = vrot.slane %v2332, %v2349
        %v2351 = vcombine.low %v2343, %v2350
        %v2353 = vunpack.c.l.s4 1966171168
        %v2354 = vunpack.c.0.s8 %v2353
        %v2355 = vlaneseq
        %v2356 = vshrl.u32 %v2355, 7
        %v2357 = vsub.s32 %v2354, %v2356
        %v2358 = vrot.slane %v2351, %v2357
        %s2360 = scalar_lea.vmem %s199, 77
        %2361 = vst.msk [vmem:[%s2360] ss:$8 sm:$0x7] %vm264, %v2358
        %2362 = vst.msk [vmem:[%s2360] ss:$8 sm:$0x0] %vm264, %v2358
        %2363 = vrot.lane.b32.xlu0 %v204, 53
        %v2364 = vpop.permute.xlu0 %2363
        %2365 = vrot.lane.b32.xlu0 %v269, 53
        %v2366 = vpop.permute.xlu0 %2365
        %2367 = vrot.lane.b32.xlu0 %v205, 53
        %v2368 = vpop.permute.xlu0 %2367
        %2369 = vrot.lane.b32.xlu0 %v270, 53
        %v2370 = vpop.permute.xlu0 %2369
        %vm2371 = vcmp.lt.s32.totalorder %v282, 53
        %v2372 = vsel %vm2371, %v2368, %v2370
        %v2373 = vsel %vm2371, %v2366, %v2368
        %v2374 = vsel %vm2371, %v2364, %v2366
        %v2377 = vcombine.low %v2374, %v2373
        %v2379 = vmul.f32 %v202, %v2377
        %v2380 = vmul.f32 %v203, %v2372
        %v2382 = vcombine.high %v2379, %v2379
        %v2384 = vsel %vm212, %v2379, 0.0
        %v2385 = vrot.slane %v2384, 4
        %v2386 = vadd.f32 %v2384, %v2385
        %v2387 = vrot.slane %v2386, 2
        %v2388 = vadd.f32 %v2386, %v2387
        %v2389 = vrot.slane %v2388, 1
        %v2390 = vadd.f32 %v2388, %v2389
        %v2391 = vsel %vm212, %v2382, 0.0
        %v2392 = vrot.slane %v2391, 4
        %v2393 = vadd.f32 %v2391, %v2392
        %v2394 = vrot.slane %v2393, 2
        %v2395 = vadd.f32 %v2393, %v2394
        %v2396 = vrot.slane %v2395, 1
        %v2397 = vadd.f32 %v2395, %v2396
        %v2398 = vsel %vm212, %v2380, 0.0
        %v2399 = vrot.slane %v2398, 4
        %v2400 = vadd.f32 %v2398, %v2399
        %v2401 = vrot.slane %v2400, 2
        %v2402 = vadd.f32 %v2400, %v2401
        %v2403 = vrot.slane %v2402, 1
        %v2404 = vadd.f32 %v2402, %v2403
        %v2408 = vcombine.low %v2390, %v2397
        %v2410 = vunpack.c.l.s4 1966171168
        %v2411 = vunpack.c.0.s8 %v2410
        %v2412 = vlaneseq
        %v2413 = vshrl.u32 %v2412, 7
        %v2414 = vsub.s32 %v2411, %v2413
        %v2415 = vrot.slane %v2408, %v2414
        %v2417 = vunpack.c.l.s4 1966171168
        %v2418 = vunpack.c.0.s8 %v2417
        %v2419 = vlaneseq
        %v2420 = vshrl.u32 %v2419, 7
        %v2421 = vsub.s32 %v2418, %v2420
        %v2422 = vrot.slane %v2404, %v2421
        %v2423 = vcombine.low %v2415, %v2422
        %v2425 = vunpack.c.l.s4 1966171168
        %v2426 = vunpack.c.0.s8 %v2425
        %v2427 = vlaneseq
        %v2428 = vshrl.u32 %v2427, 7
        %v2429 = vsub.s32 %v2426, %v2428
        %v2430 = vrot.slane %v2423, %v2429
        %s2432 = scalar_lea.vmem %s199, 78
        %2433 = vst.msk [vmem:[%s2432] ss:$8 sm:$0x7] %vm264, %v2430
        %2434 = vst.msk [vmem:[%s2432] ss:$8 sm:$0x0] %vm264, %v2430
        %2435 = vrot.lane.b32.xlu0 %v204, 52
        %v2436 = vpop.permute.xlu0 %2435
        %2437 = vrot.lane.b32.xlu0 %v269, 52
        %v2438 = vpop.permute.xlu0 %2437
        %2439 = vrot.lane.b32.xlu0 %v205, 52
        %v2440 = vpop.permute.xlu0 %2439
        %2441 = vrot.lane.b32.xlu0 %v270, 52
        %v2442 = vpop.permute.xlu0 %2441
        %vm2443 = vcmp.lt.s32.totalorder %v282, 52
        %v2444 = vsel %vm2443, %v2440, %v2442
        %v2445 = vsel %vm2443, %v2438, %v2440
        %v2446 = vsel %vm2443, %v2436, %v2438
        %v2449 = vcombine.low %v2446, %v2445
        %v2451 = vmul.f32 %v202, %v2449
        %v2452 = vmul.f32 %v203, %v2444
        %v2454 = vcombine.high %v2451, %v2451
        %v2456 = vsel %vm212, %v2451, 0.0
        %v2457 = vrot.slane %v2456, 4
        %v2458 = vadd.f32 %v2456, %v2457
        %v2459 = vrot.slane %v2458, 2
        %v2460 = vadd.f32 %v2458, %v2459
        %v2461 = vrot.slane %v2460, 1
        %v2462 = vadd.f32 %v2460, %v2461
        %v2463 = vsel %vm212, %v2454, 0.0
        %v2464 = vrot.slane %v2463, 4
        %v2465 = vadd.f32 %v2463, %v2464
        %v2466 = vrot.slane %v2465, 2
        %v2467 = vadd.f32 %v2465, %v2466
        %v2468 = vrot.slane %v2467, 1
        %v2469 = vadd.f32 %v2467, %v2468
        %v2470 = vsel %vm212, %v2452, 0.0
        %v2471 = vrot.slane %v2470, 4
        %v2472 = vadd.f32 %v2470, %v2471
        %v2473 = vrot.slane %v2472, 2
        %v2474 = vadd.f32 %v2472, %v2473
        %v2475 = vrot.slane %v2474, 1
        %v2476 = vadd.f32 %v2474, %v2475
        %v2480 = vcombine.low %v2462, %v2469
        %v2482 = vunpack.c.l.s4 1966171168
        %v2483 = vunpack.c.0.s8 %v2482
        %v2484 = vlaneseq
        %v2485 = vshrl.u32 %v2484, 7
        %v2486 = vsub.s32 %v2483, %v2485
        %v2487 = vrot.slane %v2480, %v2486
        %v2489 = vunpack.c.l.s4 1966171168
        %v2490 = vunpack.c.0.s8 %v2489
        %v2491 = vlaneseq
        %v2492 = vshrl.u32 %v2491, 7
        %v2493 = vsub.s32 %v2490, %v2492
        %v2494 = vrot.slane %v2476, %v2493
        %v2495 = vcombine.low %v2487, %v2494
        %v2497 = vunpack.c.l.s4 1966171168
        %v2498 = vunpack.c.0.s8 %v2497
        %v2499 = vlaneseq
        %v2500 = vshrl.u32 %v2499, 7
        %v2501 = vsub.s32 %v2498, %v2500
        %v2502 = vrot.slane %v2495, %v2501
        %s2504 = scalar_lea.vmem %s199, 79
        %2505 = vst.msk [vmem:[%s2504] ss:$8 sm:$0x7] %vm264, %v2502
        %2506 = vst.msk [vmem:[%s2504] ss:$8 sm:$0x0] %vm264, %v2502
        %2507 = vrot.lane.b32.xlu0 %v204, 51
        %v2508 = vpop.permute.xlu0 %2507
        %2509 = vrot.lane.b32.xlu0 %v269, 51
        %v2510 = vpop.permute.xlu0 %2509
        %2511 = vrot.lane.b32.xlu0 %v205, 51
        %v2512 = vpop.permute.xlu0 %2511
        %2513 = vrot.lane.b32.xlu0 %v270, 51
        %v2514 = vpop.permute.xlu0 %2513
        %vm2515 = vcmp.lt.s32.totalorder %v282, 51
        %v2516 = vsel %vm2515, %v2512, %v2514
        %v2517 = vsel %vm2515, %v2510, %v2512
        %v2518 = vsel %vm2515, %v2508, %v2510
        %v2521 = vcombine.low %v2518, %v2517
        %v2523 = vmul.f32 %v202, %v2521
        %v2524 = vmul.f32 %v203, %v2516
        %v2526 = vcombine.high %v2523, %v2523
        %v2528 = vsel %vm212, %v2523, 0.0
        %v2529 = vrot.slane %v2528, 4
        %v2530 = vadd.f32 %v2528, %v2529
        %v2531 = vrot.slane %v2530, 2
        %v2532 = vadd.f32 %v2530, %v2531
        %v2533 = vrot.slane %v2532, 1
        %v2534 = vadd.f32 %v2532, %v2533
        %v2535 = vsel %vm212, %v2526, 0.0
        %v2536 = vrot.slane %v2535, 4
        %v2537 = vadd.f32 %v2535, %v2536
        %v2538 = vrot.slane %v2537, 2
        %v2539 = vadd.f32 %v2537, %v2538
        %v2540 = vrot.slane %v2539, 1
        %v2541 = vadd.f32 %v2539, %v2540
        %v2542 = vsel %vm212, %v2524, 0.0
        %v2543 = vrot.slane %v2542, 4
        %v2544 = vadd.f32 %v2542, %v2543
        %v2545 = vrot.slane %v2544, 2
        %v2546 = vadd.f32 %v2544, %v2545
        %v2547 = vrot.slane %v2546, 1
        %v2548 = vadd.f32 %v2546, %v2547
        %v2552 = vcombine.low %v2534, %v2541
        %v2554 = vunpack.c.l.s4 1966171168
        %v2555 = vunpack.c.0.s8 %v2554
        %v2556 = vlaneseq
        %v2557 = vshrl.u32 %v2556, 7
        %v2558 = vsub.s32 %v2555, %v2557
        %v2559 = vrot.slane %v2552, %v2558
        %v2561 = vunpack.c.l.s4 1966171168
        %v2562 = vunpack.c.0.s8 %v2561
        %v2563 = vlaneseq
        %v2564 = vshrl.u32 %v2563, 7
        %v2565 = vsub.s32 %v2562, %v2564
        %v2566 = vrot.slane %v2548, %v2565
        %v2567 = vcombine.low %v2559, %v2566
        %v2569 = vunpack.c.l.s4 1966171168
        %v2570 = vunpack.c.0.s8 %v2569
        %v2571 = vlaneseq
        %v2572 = vshrl.u32 %v2571, 7
        %v2573 = vsub.s32 %v2570, %v2572
        %v2574 = vrot.slane %v2567, %v2573
        %s2576 = scalar_lea.vmem %s199, 96
        %2577 = vst.msk [vmem:[%s2576] ss:$8 sm:$0x7] %vm264, %v2574
        %2578 = vst.msk [vmem:[%s2576] ss:$8 sm:$0x0] %vm264, %v2574
        %2579 = vrot.lane.b32.xlu0 %v204, 50
        %v2580 = vpop.permute.xlu0 %2579
        %2581 = vrot.lane.b32.xlu0 %v269, 50
        %v2582 = vpop.permute.xlu0 %2581
        %2583 = vrot.lane.b32.xlu0 %v205, 50
        %v2584 = vpop.permute.xlu0 %2583
        %2585 = vrot.lane.b32.xlu0 %v270, 50
        %v2586 = vpop.permute.xlu0 %2585
        %vm2587 = vcmp.lt.s32.totalorder %v282, 50
        %v2588 = vsel %vm2587, %v2584, %v2586
        %v2589 = vsel %vm2587, %v2582, %v2584
        %v2590 = vsel %vm2587, %v2580, %v2582
        %v2593 = vcombine.low %v2590, %v2589
        %v2595 = vmul.f32 %v202, %v2593
        %v2596 = vmul.f32 %v203, %v2588
        %v2598 = vcombine.high %v2595, %v2595
        %v2600 = vsel %vm212, %v2595, 0.0
        %v2601 = vrot.slane %v2600, 4
        %v2602 = vadd.f32 %v2600, %v2601
        %v2603 = vrot.slane %v2602, 2
        %v2604 = vadd.f32 %v2602, %v2603
        %v2605 = vrot.slane %v2604, 1
        %v2606 = vadd.f32 %v2604, %v2605
        %v2607 = vsel %vm212, %v2598, 0.0
        %v2608 = vrot.slane %v2607, 4
        %v2609 = vadd.f32 %v2607, %v2608
        %v2610 = vrot.slane %v2609, 2
        %v2611 = vadd.f32 %v2609, %v2610
        %v2612 = vrot.slane %v2611, 1
        %v2613 = vadd.f32 %v2611, %v2612
        %v2614 = vsel %vm212, %v2596, 0.0
        %v2615 = vrot.slane %v2614, 4
        %v2616 = vadd.f32 %v2614, %v2615
        %v2617 = vrot.slane %v2616, 2
        %v2618 = vadd.f32 %v2616, %v2617
        %v2619 = vrot.slane %v2618, 1
        %v2620 = vadd.f32 %v2618, %v2619
        %v2624 = vcombine.low %v2606, %v2613
        %v2626 = vunpack.c.l.s4 1966171168
        %v2627 = vunpack.c.0.s8 %v2626
        %v2628 = vlaneseq
        %v2629 = vshrl.u32 %v2628, 7
        %v2630 = vsub.s32 %v2627, %v2629
        %v2631 = vrot.slane %v2624, %v2630
        %v2633 = vunpack.c.l.s4 1966171168
        %v2634 = vunpack.c.0.s8 %v2633
        %v2635 = vlaneseq
        %v2636 = vshrl.u32 %v2635, 7
        %v2637 = vsub.s32 %v2634, %v2636
        %v2638 = vrot.slane %v2620, %v2637
        %v2639 = vcombine.low %v2631, %v2638
        %v2641 = vunpack.c.l.s4 1966171168
        %v2642 = vunpack.c.0.s8 %v2641
        %v2643 = vlaneseq
        %v2644 = vshrl.u32 %v2643, 7
        %v2645 = vsub.s32 %v2642, %v2644
        %v2646 = vrot.slane %v2639, %v2645
        %s2648 = scalar_lea.vmem %s199, 97
        %2649 = vst.msk [vmem:[%s2648] ss:$8 sm:$0x7] %vm264, %v2646
        %2650 = vst.msk [vmem:[%s2648] ss:$8 sm:$0x0] %vm264, %v2646
        %2651 = vrot.lane.b32.xlu0 %v204, 49
        %v2652 = vpop.permute.xlu0 %2651
        %2653 = vrot.lane.b32.xlu0 %v269, 49
        %v2654 = vpop.permute.xlu0 %2653
        %2655 = vrot.lane.b32.xlu0 %v205, 49
        %v2656 = vpop.permute.xlu0 %2655
        %2657 = vrot.lane.b32.xlu0 %v270, 49
        %v2658 = vpop.permute.xlu0 %2657
        %vm2659 = vcmp.lt.s32.totalorder %v282, 49
        %v2660 = vsel %vm2659, %v2656, %v2658
        %v2661 = vsel %vm2659, %v2654, %v2656
        %v2662 = vsel %vm2659, %v2652, %v2654
        %v2665 = vcombine.low %v2662, %v2661
        %v2667 = vmul.f32 %v202, %v2665
        %v2668 = vmul.f32 %v203, %v2660
        %v2670 = vcombine.high %v2667, %v2667
        %v2672 = vsel %vm212, %v2667, 0.0
        %v2673 = vrot.slane %v2672, 4
        %v2674 = vadd.f32 %v2672, %v2673
        %v2675 = vrot.slane %v2674, 2
        %v2676 = vadd.f32 %v2674, %v2675
        %v2677 = vrot.slane %v2676, 1
        %v2678 = vadd.f32 %v2676, %v2677
        %v2679 = vsel %vm212, %v2670, 0.0
        %v2680 = vrot.slane %v2679, 4
        %v2681 = vadd.f32 %v2679, %v2680
        %v2682 = vrot.slane %v2681, 2
        %v2683 = vadd.f32 %v2681, %v2682
        %v2684 = vrot.slane %v2683, 1
        %v2685 = vadd.f32 %v2683, %v2684
        %v2686 = vsel %vm212, %v2668, 0.0
        %v2687 = vrot.slane %v2686, 4
        %v2688 = vadd.f32 %v2686, %v2687
        %v2689 = vrot.slane %v2688, 2
        %v2690 = vadd.f32 %v2688, %v2689
        %v2691 = vrot.slane %v2690, 1
        %v2692 = vadd.f32 %v2690, %v2691
        %v2696 = vcombine.low %v2678, %v2685
        %v2698 = vunpack.c.l.s4 1966171168
        %v2699 = vunpack.c.0.s8 %v2698
        %v2700 = vlaneseq
        %v2701 = vshrl.u32 %v2700, 7
        %v2702 = vsub.s32 %v2699, %v2701
        %v2703 = vrot.slane %v2696, %v2702
        %v2705 = vunpack.c.l.s4 1966171168
        %v2706 = vunpack.c.0.s8 %v2705
        %v2707 = vlaneseq
        %v2708 = vshrl.u32 %v2707, 7
        %v2709 = vsub.s32 %v2706, %v2708
        %v2710 = vrot.slane %v2692, %v2709
        %v2711 = vcombine.low %v2703, %v2710
        %v2713 = vunpack.c.l.s4 1966171168
        %v2714 = vunpack.c.0.s8 %v2713
        %v2715 = vlaneseq
        %v2716 = vshrl.u32 %v2715, 7
        %v2717 = vsub.s32 %v2714, %v2716
        %v2718 = vrot.slane %v2711, %v2717
        %s2720 = scalar_lea.vmem %s199, 98
        %2721 = vst.msk [vmem:[%s2720] ss:$8 sm:$0x7] %vm264, %v2718
        %2722 = vst.msk [vmem:[%s2720] ss:$8 sm:$0x0] %vm264, %v2718
        %2723 = vrot.lane.b32.xlu0 %v204, 48
        %v2724 = vpop.permute.xlu0 %2723
        %2725 = vrot.lane.b32.xlu0 %v269, 48
        %v2726 = vpop.permute.xlu0 %2725
        %2727 = vrot.lane.b32.xlu0 %v205, 48
        %v2728 = vpop.permute.xlu0 %2727
        %2729 = vrot.lane.b32.xlu0 %v270, 48
        %v2730 = vpop.permute.xlu0 %2729
        %vm2731 = vcmp.lt.s32.totalorder %v282, 48
        %v2732 = vsel %vm2731, %v2728, %v2730
        %v2733 = vsel %vm2731, %v2726, %v2728
        %v2734 = vsel %vm2731, %v2724, %v2726
        %v2737 = vcombine.low %v2734, %v2733
        %v2739 = vmul.f32 %v202, %v2737
        %v2740 = vmul.f32 %v203, %v2732
        %v2742 = vcombine.high %v2739, %v2739
        %v2744 = vsel %vm212, %v2739, 0.0
        %v2745 = vrot.slane %v2744, 4
        %v2746 = vadd.f32 %v2744, %v2745
        %v2747 = vrot.slane %v2746, 2
        %v2748 = vadd.f32 %v2746, %v2747
        %v2749 = vrot.slane %v2748, 1
        %v2750 = vadd.f32 %v2748, %v2749
        %v2751 = vsel %vm212, %v2742, 0.0
        %v2752 = vrot.slane %v2751, 4
        %v2753 = vadd.f32 %v2751, %v2752
        %v2754 = vrot.slane %v2753, 2
        %v2755 = vadd.f32 %v2753, %v2754
        %v2756 = vrot.slane %v2755, 1
        %v2757 = vadd.f32 %v2755, %v2756
        %v2758 = vsel %vm212, %v2740, 0.0
        %v2759 = vrot.slane %v2758, 4
        %v2760 = vadd.f32 %v2758, %v2759
        %v2761 = vrot.slane %v2760, 2
        %v2762 = vadd.f32 %v2760, %v2761
        %v2763 = vrot.slane %v2762, 1
        %v2764 = vadd.f32 %v2762, %v2763
        %v2768 = vcombine.low %v2750, %v2757
        %v2770 = vunpack.c.l.s4 1966171168
        %v2771 = vunpack.c.0.s8 %v2770
        %v2772 = vlaneseq
        %v2773 = vshrl.u32 %v2772, 7
        %v2774 = vsub.s32 %v2771, %v2773
        %v2775 = vrot.slane %v2768, %v2774
        %v2777 = vunpack.c.l.s4 1966171168
        %v2778 = vunpack.c.0.s8 %v2777
        %v2779 = vlaneseq
        %v2780 = vshrl.u32 %v2779, 7
        %v2781 = vsub.s32 %v2778, %v2780
        %v2782 = vrot.slane %v2764, %v2781
        %v2783 = vcombine.low %v2775, %v2782
        %v2785 = vunpack.c.l.s4 1966171168
        %v2786 = vunpack.c.0.s8 %v2785
        %v2787 = vlaneseq
        %v2788 = vshrl.u32 %v2787, 7
        %v2789 = vsub.s32 %v2786, %v2788
        %v2790 = vrot.slane %v2783, %v2789
        %s2792 = scalar_lea.vmem %s199, 99
        %2793 = vst.msk [vmem:[%s2792] ss:$8 sm:$0x7] %vm264, %v2790
        %2794 = vst.msk [vmem:[%s2792] ss:$8 sm:$0x0] %vm264, %v2790
        %2795 = vrot.lane.b32.xlu0 %v204, 32
        %v2796 = vpop.permute.xlu0 %2795
        %2797 = vrot.lane.b32.xlu0 %v269, 32
        %v2798 = vpop.permute.xlu0 %2797
        %2799 = vrot.lane.b32.xlu0 %v205, 32
        %v2800 = vpop.permute.xlu0 %2799
        %2801 = vrot.lane.b32.xlu0 %v270, 32
        %v2802 = vpop.permute.xlu0 %2801
        %vm2803 = vcmp.lt.s32.totalorder %v282, 32
        %v2804 = vsel %vm2803, %v2800, %v2802
        %v2805 = vsel %vm2803, %v2798, %v2800
        %v2806 = vsel %vm2803, %v2796, %v2798
        %v2809 = vcombine.low %v2806, %v2805
        %v2811 = vmul.f32 %v202, %v2809
        %v2812 = vmul.f32 %v203, %v2804
        %v2814 = vcombine.high %v2811, %v2811
        %v2816 = vsel %vm212, %v2811, 0.0
        %v2817 = vrot.slane %v2816, 4
        %v2818 = vadd.f32 %v2816, %v2817
        %v2819 = vrot.slane %v2818, 2
        %v2820 = vadd.f32 %v2818, %v2819
        %v2821 = vrot.slane %v2820, 1
        %v2822 = vadd.f32 %v2820, %v2821
        %v2823 = vsel %vm212, %v2814, 0.0
        %v2824 = vrot.slane %v2823, 4
        %v2825 = vadd.f32 %v2823, %v2824
        %v2826 = vrot.slane %v2825, 2
        %v2827 = vadd.f32 %v2825, %v2826
        %v2828 = vrot.slane %v2827, 1
        %v2829 = vadd.f32 %v2827, %v2828
        %v2830 = vsel %vm212, %v2812, 0.0
        %v2831 = vrot.slane %v2830, 4
        %v2832 = vadd.f32 %v2830, %v2831
        %v2833 = vrot.slane %v2832, 2
        %v2834 = vadd.f32 %v2832, %v2833
        %v2835 = vrot.slane %v2834, 1
        %v2836 = vadd.f32 %v2834, %v2835
        %v2840 = vcombine.low %v2822, %v2829
        %v2842 = vunpack.c.l.s4 1966171168
        %v2843 = vunpack.c.0.s8 %v2842
        %v2844 = vlaneseq
        %v2845 = vshrl.u32 %v2844, 7
        %v2846 = vsub.s32 %v2843, %v2845
        %v2847 = vrot.slane %v2840, %v2846
        %v2849 = vunpack.c.l.s4 1966171168
        %v2850 = vunpack.c.0.s8 %v2849
        %v2851 = vlaneseq
        %v2852 = vshrl.u32 %v2851, 7
        %v2853 = vsub.s32 %v2850, %v2852
        %v2854 = vrot.slane %v2836, %v2853
        %v2855 = vcombine.low %v2847, %v2854
        %v2857 = vunpack.c.l.s4 1966171168
        %v2858 = vunpack.c.0.s8 %v2857
        %v2859 = vlaneseq
        %v2860 = vshrl.u32 %v2859, 7
        %v2861 = vsub.s32 %v2858, %v2860
        %v2862 = vrot.slane %v2855, %v2861
        %s2864 = scalar_lea.vmem %s199, 100
        %2865 = vst.msk [vmem:[%s2864] ss:$8 sm:$0x7] %vm264, %v2862
        %2866 = vst.msk [vmem:[%s2864] ss:$8 sm:$0x0] %vm264, %v2862
        %2867 = vrot.lane.b32.xlu0 %v204, 31
        %v2868 = vpop.permute.xlu0 %2867
        %2869 = vrot.lane.b32.xlu0 %v269, 31
        %v2870 = vpop.permute.xlu0 %2869
        %2871 = vrot.lane.b32.xlu0 %v205, 31
        %v2872 = vpop.permute.xlu0 %2871
        %2873 = vrot.lane.b32.xlu0 %v270, 31
        %v2874 = vpop.permute.xlu0 %2873
        %vm2875 = vcmp.lt.s32.totalorder %v282, 31
        %v2876 = vsel %vm2875, %v2872, %v2874
        %v2877 = vsel %vm2875, %v2870, %v2872
        %v2878 = vsel %vm2875, %v2868, %v2870
        %v2881 = vcombine.low %v2878, %v2877
        %v2883 = vmul.f32 %v202, %v2881
        %v2884 = vmul.f32 %v203, %v2876
        %v2886 = vcombine.high %v2883, %v2883
        %v2888 = vsel %vm212, %v2883, 0.0
        %v2889 = vrot.slane %v2888, 4
        %v2890 = vadd.f32 %v2888, %v2889
        %v2891 = vrot.slane %v2890, 2
        %v2892 = vadd.f32 %v2890, %v2891
        %v2893 = vrot.slane %v2892, 1
        %v2894 = vadd.f32 %v2892, %v2893
        %v2895 = vsel %vm212, %v2886, 0.0
        %v2896 = vrot.slane %v2895, 4
        %v2897 = vadd.f32 %v2895, %v2896
        %v2898 = vrot.slane %v2897, 2
        %v2899 = vadd.f32 %v2897, %v2898
        %v2900 = vrot.slane %v2899, 1
        %v2901 = vadd.f32 %v2899, %v2900
        %v2902 = vsel %vm212, %v2884, 0.0
        %v2903 = vrot.slane %v2902, 4
        %v2904 = vadd.f32 %v2902, %v2903
        %v2905 = vrot.slane %v2904, 2
        %v2906 = vadd.f32 %v2904, %v2905
        %v2907 = vrot.slane %v2906, 1
        %v2908 = vadd.f32 %v2906, %v2907
        %v2912 = vcombine.low %v2894, %v2901
        %v2914 = vunpack.c.l.s4 1966171168
        %v2915 = vunpack.c.0.s8 %v2914
        %v2916 = vlaneseq
        %v2917 = vshrl.u32 %v2916, 7
        %v2918 = vsub.s32 %v2915, %v2917
        %v2919 = vrot.slane %v2912, %v2918
        %v2921 = vunpack.c.l.s4 1966171168
        %v2922 = vunpack.c.0.s8 %v2921
        %v2923 = vlaneseq
        %v2924 = vshrl.u32 %v2923, 7
        %v2925 = vsub.s32 %v2922, %v2924
        %v2926 = vrot.slane %v2908, %v2925
        %v2927 = vcombine.low %v2919, %v2926
        %v2929 = vunpack.c.l.s4 1966171168
        %v2930 = vunpack.c.0.s8 %v2929
        %v2931 = vlaneseq
        %v2932 = vshrl.u32 %v2931, 7
        %v2933 = vsub.s32 %v2930, %v2932
        %v2934 = vrot.slane %v2927, %v2933
        %s2936 = scalar_lea.vmem %s199, 101
        %2937 = vst.msk [vmem:[%s2936] ss:$8 sm:$0x7] %vm264, %v2934
        %2938 = vst.msk [vmem:[%s2936] ss:$8 sm:$0x0] %vm264, %v2934
        %2939 = vrot.lane.b32.xlu0 %v204, 30
        %v2940 = vpop.permute.xlu0 %2939
        %2941 = vrot.lane.b32.xlu0 %v269, 30
        %v2942 = vpop.permute.xlu0 %2941
        %2943 = vrot.lane.b32.xlu0 %v205, 30
        %v2944 = vpop.permute.xlu0 %2943
        %2945 = vrot.lane.b32.xlu0 %v270, 30
        %v2946 = vpop.permute.xlu0 %2945
        %vm2947 = vcmp.lt.s32.totalorder %v282, 30
        %v2948 = vsel %vm2947, %v2944, %v2946
        %v2949 = vsel %vm2947, %v2942, %v2944
        %v2950 = vsel %vm2947, %v2940, %v2942
        %v2953 = vcombine.low %v2950, %v2949
        %v2955 = vmul.f32 %v202, %v2953
        %v2956 = vmul.f32 %v203, %v2948
        %v2958 = vcombine.high %v2955, %v2955
        %v2960 = vsel %vm212, %v2955, 0.0
        %v2961 = vrot.slane %v2960, 4
        %v2962 = vadd.f32 %v2960, %v2961
        %v2963 = vrot.slane %v2962, 2
        %v2964 = vadd.f32 %v2962, %v2963
        %v2965 = vrot.slane %v2964, 1
        %v2966 = vadd.f32 %v2964, %v2965
        %v2967 = vsel %vm212, %v2958, 0.0
        %v2968 = vrot.slane %v2967, 4
        %v2969 = vadd.f32 %v2967, %v2968
        %v2970 = vrot.slane %v2969, 2
        %v2971 = vadd.f32 %v2969, %v2970
        %v2972 = vrot.slane %v2971, 1
        %v2973 = vadd.f32 %v2971, %v2972
        %v2974 = vsel %vm212, %v2956, 0.0
        %v2975 = vrot.slane %v2974, 4
        %v2976 = vadd.f32 %v2974, %v2975
        %v2977 = vrot.slane %v2976, 2
        %v2978 = vadd.f32 %v2976, %v2977
        %v2979 = vrot.slane %v2978, 1
        %v2980 = vadd.f32 %v2978, %v2979
        %v2984 = vcombine.low %v2966, %v2973
        %v2986 = vunpack.c.l.s4 1966171168
        %v2987 = vunpack.c.0.s8 %v2986
        %v2988 = vlaneseq
        %v2989 = vshrl.u32 %v2988, 7
        %v2990 = vsub.s32 %v2987, %v2989
        %v2991 = vrot.slane %v2984, %v2990
        %v2993 = vunpack.c.l.s4 1966171168
        %v2994 = vunpack.c.0.s8 %v2993
        %v2995 = vlaneseq
        %v2996 = vshrl.u32 %v2995, 7
        %v2997 = vsub.s32 %v2994, %v2996
        %v2998 = vrot.slane %v2980, %v2997
        %v2999 = vcombine.low %v2991, %v2998
        %v3001 = vunpack.c.l.s4 1966171168
        %v3002 = vunpack.c.0.s8 %v3001
        %v3003 = vlaneseq
        %v3004 = vshrl.u32 %v3003, 7
        %v3005 = vsub.s32 %v3002, %v3004
        %v3006 = vrot.slane %v2999, %v3005
        %s3008 = scalar_lea.vmem %s199, 102
        %3009 = vst.msk [vmem:[%s3008] ss:$8 sm:$0x7] %vm264, %v3006
        %3010 = vst.msk [vmem:[%s3008] ss:$8 sm:$0x0] %vm264, %v3006
        %3011 = vrot.lane.b32.xlu0 %v204, 29
        %v3012 = vpop.permute.xlu0 %3011
        %3013 = vrot.lane.b32.xlu0 %v269, 29
        %v3014 = vpop.permute.xlu0 %3013
        %3015 = vrot.lane.b32.xlu0 %v205, 29
        %v3016 = vpop.permute.xlu0 %3015
        %3017 = vrot.lane.b32.xlu0 %v270, 29
        %v3018 = vpop.permute.xlu0 %3017
        %vm3019 = vcmp.lt.s32.totalorder %v282, 29
        %v3020 = vsel %vm3019, %v3016, %v3018
        %v3021 = vsel %vm3019, %v3014, %v3016
        %v3022 = vsel %vm3019, %v3012, %v3014
        %v3025 = vcombine.low %v3022, %v3021
        %v3027 = vmul.f32 %v202, %v3025
        %v3028 = vmul.f32 %v203, %v3020
        %v3030 = vcombine.high %v3027, %v3027
        %v3032 = vsel %vm212, %v3027, 0.0
        %v3033 = vrot.slane %v3032, 4
        %v3034 = vadd.f32 %v3032, %v3033
        %v3035 = vrot.slane %v3034, 2
        %v3036 = vadd.f32 %v3034, %v3035
        %v3037 = vrot.slane %v3036, 1
        %v3038 = vadd.f32 %v3036, %v3037
        %v3039 = vsel %vm212, %v3030, 0.0
        %v3040 = vrot.slane %v3039, 4
        %v3041 = vadd.f32 %v3039, %v3040
        %v3042 = vrot.slane %v3041, 2
        %v3043 = vadd.f32 %v3041, %v3042
        %v3044 = vrot.slane %v3043, 1
        %v3045 = vadd.f32 %v3043, %v3044
        %v3046 = vsel %vm212, %v3028, 0.0
        %v3047 = vrot.slane %v3046, 4
        %v3048 = vadd.f32 %v3046, %v3047
        %v3049 = vrot.slane %v3048, 2
        %v3050 = vadd.f32 %v3048, %v3049
        %v3051 = vrot.slane %v3050, 1
        %v3052 = vadd.f32 %v3050, %v3051
        %v3056 = vcombine.low %v3038, %v3045
        %v3058 = vunpack.c.l.s4 1966171168
        %v3059 = vunpack.c.0.s8 %v3058
        %v3060 = vlaneseq
        %v3061 = vshrl.u32 %v3060, 7
        %v3062 = vsub.s32 %v3059, %v3061
        %v3063 = vrot.slane %v3056, %v3062
        %v3065 = vunpack.c.l.s4 1966171168
        %v3066 = vunpack.c.0.s8 %v3065
        %v3067 = vlaneseq
        %v3068 = vshrl.u32 %v3067, 7
        %v3069 = vsub.s32 %v3066, %v3068
        %v3070 = vrot.slane %v3052, %v3069
        %v3071 = vcombine.low %v3063, %v3070
        %v3073 = vunpack.c.l.s4 1966171168
        %v3074 = vunpack.c.0.s8 %v3073
        %v3075 = vlaneseq
        %v3076 = vshrl.u32 %v3075, 7
        %v3077 = vsub.s32 %v3074, %v3076
        %v3078 = vrot.slane %v3071, %v3077
        %s3080 = scalar_lea.vmem %s199, 103
        %3081 = vst.msk [vmem:[%s3080] ss:$8 sm:$0x7] %vm264, %v3078
        %3082 = vst.msk [vmem:[%s3080] ss:$8 sm:$0x0] %vm264, %v3078
        %3083 = vrot.lane.b32.xlu0 %v204, 28
        %v3084 = vpop.permute.xlu0 %3083
        %3085 = vrot.lane.b32.xlu0 %v269, 28
        %v3086 = vpop.permute.xlu0 %3085
        %3087 = vrot.lane.b32.xlu0 %v205, 28
        %v3088 = vpop.permute.xlu0 %3087
        %3089 = vrot.lane.b32.xlu0 %v270, 28
        %v3090 = vpop.permute.xlu0 %3089
        %vm3091 = vcmp.lt.s32.totalorder %v282, 28
        %v3092 = vsel %vm3091, %v3088, %v3090
        %v3093 = vsel %vm3091, %v3086, %v3088
        %v3094 = vsel %vm3091, %v3084, %v3086
        %v3097 = vcombine.low %v3094, %v3093
        %v3099 = vmul.f32 %v202, %v3097
        %v3100 = vmul.f32 %v203, %v3092
        %v3102 = vcombine.high %v3099, %v3099
        %v3104 = vsel %vm212, %v3099, 0.0
        %v3105 = vrot.slane %v3104, 4
        %v3106 = vadd.f32 %v3104, %v3105
        %v3107 = vrot.slane %v3106, 2
        %v3108 = vadd.f32 %v3106, %v3107
        %v3109 = vrot.slane %v3108, 1
        %v3110 = vadd.f32 %v3108, %v3109
        %v3111 = vsel %vm212, %v3102, 0.0
        %v3112 = vrot.slane %v3111, 4
        %v3113 = vadd.f32 %v3111, %v3112
        %v3114 = vrot.slane %v3113, 2
        %v3115 = vadd.f32 %v3113, %v3114
        %v3116 = vrot.slane %v3115, 1
        %v3117 = vadd.f32 %v3115, %v3116
        %v3118 = vsel %vm212, %v3100, 0.0
        %v3119 = vrot.slane %v3118, 4
        %v3120 = vadd.f32 %v3118, %v3119
        %v3121 = vrot.slane %v3120, 2
        %v3122 = vadd.f32 %v3120, %v3121
        %v3123 = vrot.slane %v3122, 1
        %v3124 = vadd.f32 %v3122, %v3123
        %v3128 = vcombine.low %v3110, %v3117
        %v3130 = vunpack.c.l.s4 1966171168
        %v3131 = vunpack.c.0.s8 %v3130
        %v3132 = vlaneseq
        %v3133 = vshrl.u32 %v3132, 7
        %v3134 = vsub.s32 %v3131, %v3133
        %v3135 = vrot.slane %v3128, %v3134
        %v3137 = vunpack.c.l.s4 1966171168
        %v3138 = vunpack.c.0.s8 %v3137
        %v3139 = vlaneseq
        %v3140 = vshrl.u32 %v3139, 7
        %v3141 = vsub.s32 %v3138, %v3140
        %v3142 = vrot.slane %v3124, %v3141
        %v3143 = vcombine.low %v3135, %v3142
        %v3145 = vunpack.c.l.s4 1966171168
        %v3146 = vunpack.c.0.s8 %v3145
        %v3147 = vlaneseq
        %v3148 = vshrl.u32 %v3147, 7
        %v3149 = vsub.s32 %v3146, %v3148
        %v3150 = vrot.slane %v3143, %v3149
        %s3152 = scalar_lea.vmem %s199, 120
        %3153 = vst.msk [vmem:[%s3152] ss:$8 sm:$0x7] %vm264, %v3150
        %3154 = vst.msk [vmem:[%s3152] ss:$8 sm:$0x0] %vm264, %v3150
        %3155 = vrot.lane.b32.xlu0 %v204, 27
        %v3156 = vpop.permute.xlu0 %3155
        %3157 = vrot.lane.b32.xlu0 %v269, 27
        %v3158 = vpop.permute.xlu0 %3157
        %3159 = vrot.lane.b32.xlu0 %v205, 27
        %v3160 = vpop.permute.xlu0 %3159
        %3161 = vrot.lane.b32.xlu0 %v270, 27
        %v3162 = vpop.permute.xlu0 %3161
        %vm3163 = vcmp.lt.s32.totalorder %v282, 27
        %v3164 = vsel %vm3163, %v3160, %v3162
        %v3165 = vsel %vm3163, %v3158, %v3160
        %v3166 = vsel %vm3163, %v3156, %v3158
        %v3169 = vcombine.low %v3166, %v3165
        %v3171 = vmul.f32 %v202, %v3169
        %v3172 = vmul.f32 %v203, %v3164
        %v3174 = vcombine.high %v3171, %v3171
        %v3176 = vsel %vm212, %v3171, 0.0
        %v3177 = vrot.slane %v3176, 4
        %v3178 = vadd.f32 %v3176, %v3177
        %v3179 = vrot.slane %v3178, 2
        %v3180 = vadd.f32 %v3178, %v3179
        %v3181 = vrot.slane %v3180, 1
        %v3182 = vadd.f32 %v3180, %v3181
        %v3183 = vsel %vm212, %v3174, 0.0
        %v3184 = vrot.slane %v3183, 4
        %v3185 = vadd.f32 %v3183, %v3184
        %v3186 = vrot.slane %v3185, 2
        %v3187 = vadd.f32 %v3185, %v3186
        %v3188 = vrot.slane %v3187, 1
        %v3189 = vadd.f32 %v3187, %v3188
        %v3190 = vsel %vm212, %v3172, 0.0
        %v3191 = vrot.slane %v3190, 4
        %v3192 = vadd.f32 %v3190, %v3191
        %v3193 = vrot.slane %v3192, 2
        %v3194 = vadd.f32 %v3192, %v3193
        %v3195 = vrot.slane %v3194, 1
        %v3196 = vadd.f32 %v3194, %v3195
        %v3200 = vcombine.low %v3182, %v3189
        %v3202 = vunpack.c.l.s4 1966171168
        %v3203 = vunpack.c.0.s8 %v3202
        %v3204 = vlaneseq
        %v3205 = vshrl.u32 %v3204, 7
        %v3206 = vsub.s32 %v3203, %v3205
        %v3207 = vrot.slane %v3200, %v3206
        %v3209 = vunpack.c.l.s4 1966171168
        %v3210 = vunpack.c.0.s8 %v3209
        %v3211 = vlaneseq
        %v3212 = vshrl.u32 %v3211, 7
        %v3213 = vsub.s32 %v3210, %v3212
        %v3214 = vrot.slane %v3196, %v3213
        %v3215 = vcombine.low %v3207, %v3214
        %v3217 = vunpack.c.l.s4 1966171168
        %v3218 = vunpack.c.0.s8 %v3217
        %v3219 = vlaneseq
        %v3220 = vshrl.u32 %v3219, 7
        %v3221 = vsub.s32 %v3218, %v3220
        %v3222 = vrot.slane %v3215, %v3221
        %s3224 = scalar_lea.vmem %s199, 121
        %3225 = vst.msk [vmem:[%s3224] ss:$8 sm:$0x7] %vm264, %v3222
        %3226 = vst.msk [vmem:[%s3224] ss:$8 sm:$0x0] %vm264, %v3222
        %3227 = vrot.lane.b32.xlu0 %v204, 26
        %v3228 = vpop.permute.xlu0 %3227
        %3229 = vrot.lane.b32.xlu0 %v269, 26
        %v3230 = vpop.permute.xlu0 %3229
        %3231 = vrot.lane.b32.xlu0 %v205, 26
        %v3232 = vpop.permute.xlu0 %3231
        %3233 = vrot.lane.b32.xlu0 %v270, 26
        %v3234 = vpop.permute.xlu0 %3233
        %vm3235 = vcmp.lt.s32.totalorder %v282, 26
        %v3236 = vsel %vm3235, %v3232, %v3234
        %v3237 = vsel %vm3235, %v3230, %v3232
        %v3238 = vsel %vm3235, %v3228, %v3230
        %v3241 = vcombine.low %v3238, %v3237
        %v3243 = vmul.f32 %v202, %v3241
        %v3244 = vmul.f32 %v203, %v3236
        %v3246 = vcombine.high %v3243, %v3243
        %v3248 = vsel %vm212, %v3243, 0.0
        %v3249 = vrot.slane %v3248, 4
        %v3250 = vadd.f32 %v3248, %v3249
        %v3251 = vrot.slane %v3250, 2
        %v3252 = vadd.f32 %v3250, %v3251
        %v3253 = vrot.slane %v3252, 1
        %v3254 = vadd.f32 %v3252, %v3253
        %v3255 = vsel %vm212, %v3246, 0.0
        %v3256 = vrot.slane %v3255, 4
        %v3257 = vadd.f32 %v3255, %v3256
        %v3258 = vrot.slane %v3257, 2
        %v3259 = vadd.f32 %v3257, %v3258
        %v3260 = vrot.slane %v3259, 1
        %v3261 = vadd.f32 %v3259, %v3260
        %v3262 = vsel %vm212, %v3244, 0.0
        %v3263 = vrot.slane %v3262, 4
        %v3264 = vadd.f32 %v3262, %v3263
        %v3265 = vrot.slane %v3264, 2
        %v3266 = vadd.f32 %v3264, %v3265
        %v3267 = vrot.slane %v3266, 1
        %v3268 = vadd.f32 %v3266, %v3267
        %v3272 = vcombine.low %v3254, %v3261
        %v3274 = vunpack.c.l.s4 1966171168
        %v3275 = vunpack.c.0.s8 %v3274
        %v3276 = vlaneseq
        %v3277 = vshrl.u32 %v3276, 7
        %v3278 = vsub.s32 %v3275, %v3277
        %v3279 = vrot.slane %v3272, %v3278
        %v3281 = vunpack.c.l.s4 1966171168
        %v3282 = vunpack.c.0.s8 %v3281
        %v3283 = vlaneseq
        %v3284 = vshrl.u32 %v3283, 7
        %v3285 = vsub.s32 %v3282, %v3284
        %v3286 = vrot.slane %v3268, %v3285
        %v3287 = vcombine.low %v3279, %v3286
        %v3289 = vunpack.c.l.s4 1966171168
        %v3290 = vunpack.c.0.s8 %v3289
        %v3291 = vlaneseq
        %v3292 = vshrl.u32 %v3291, 7
        %v3293 = vsub.s32 %v3290, %v3292
        %v3294 = vrot.slane %v3287, %v3293
        %s3296 = scalar_lea.vmem %s199, 122
        %3297 = vst.msk [vmem:[%s3296] ss:$8 sm:$0x7] %vm264, %v3294
        %3298 = vst.msk [vmem:[%s3296] ss:$8 sm:$0x0] %vm264, %v3294
        %3299 = vrot.lane.b32.xlu0 %v204, 25
        %v3300 = vpop.permute.xlu0 %3299
        %3301 = vrot.lane.b32.xlu0 %v269, 25
        %v3302 = vpop.permute.xlu0 %3301
        %3303 = vrot.lane.b32.xlu0 %v205, 25
        %v3304 = vpop.permute.xlu0 %3303
        %3305 = vrot.lane.b32.xlu0 %v270, 25
        %v3306 = vpop.permute.xlu0 %3305
        %vm3307 = vcmp.lt.s32.totalorder %v282, 25
        %v3308 = vsel %vm3307, %v3304, %v3306
        %v3309 = vsel %vm3307, %v3302, %v3304
        %v3310 = vsel %vm3307, %v3300, %v3302
        %v3313 = vcombine.low %v3310, %v3309
        %v3315 = vmul.f32 %v202, %v3313
        %v3316 = vmul.f32 %v203, %v3308
        %v3318 = vcombine.high %v3315, %v3315
        %v3320 = vsel %vm212, %v3315, 0.0
        %v3321 = vrot.slane %v3320, 4
        %v3322 = vadd.f32 %v3320, %v3321
        %v3323 = vrot.slane %v3322, 2
        %v3324 = vadd.f32 %v3322, %v3323
        %v3325 = vrot.slane %v3324, 1
        %v3326 = vadd.f32 %v3324, %v3325
        %v3327 = vsel %vm212, %v3318, 0.0
        %v3328 = vrot.slane %v3327, 4
        %v3329 = vadd.f32 %v3327, %v3328
        %v3330 = vrot.slane %v3329, 2
        %v3331 = vadd.f32 %v3329, %v3330
        %v3332 = vrot.slane %v3331, 1
        %v3333 = vadd.f32 %v3331, %v3332
        %v3334 = vsel %vm212, %v3316, 0.0
        %v3335 = vrot.slane %v3334, 4
        %v3336 = vadd.f32 %v3334, %v3335
        %v3337 = vrot.slane %v3336, 2
        %v3338 = vadd.f32 %v3336, %v3337
        %v3339 = vrot.slane %v3338, 1
        %v3340 = vadd.f32 %v3338, %v3339
        %v3344 = vcombine.low %v3326, %v3333
        %v3346 = vunpack.c.l.s4 1966171168
        %v3347 = vunpack.c.0.s8 %v3346
        %v3348 = vlaneseq
        %v3349 = vshrl.u32 %v3348, 7
        %v3350 = vsub.s32 %v3347, %v3349
        %v3351 = vrot.slane %v3344, %v3350
        %v3353 = vunpack.c.l.s4 1966171168
        %v3354 = vunpack.c.0.s8 %v3353
        %v3355 = vlaneseq
        %v3356 = vshrl.u32 %v3355, 7
        %v3357 = vsub.s32 %v3354, %v3356
        %v3358 = vrot.slane %v3340, %v3357
        %v3359 = vcombine.low %v3351, %v3358
        %v3361 = vunpack.c.l.s4 1966171168
        %v3362 = vunpack.c.0.s8 %v3361
        %v3363 = vlaneseq
        %v3364 = vshrl.u32 %v3363, 7
        %v3365 = vsub.s32 %v3362, %v3364
        %v3366 = vrot.slane %v3359, %v3365
        %s3368 = scalar_lea.vmem %s199, 123
        %3369 = vst.msk [vmem:[%s3368] ss:$8 sm:$0x7] %vm264, %v3366
        %3370 = vst.msk [vmem:[%s3368] ss:$8 sm:$0x0] %vm264, %v3366
        %3371 = vrot.lane.b32.xlu0 %v204, 24
        %v3372 = vpop.permute.xlu0 %3371
        %3373 = vrot.lane.b32.xlu0 %v269, 24
        %v3374 = vpop.permute.xlu0 %3373
        %3375 = vrot.lane.b32.xlu0 %v205, 24
        %v3376 = vpop.permute.xlu0 %3375
        %3377 = vrot.lane.b32.xlu0 %v270, 24
        %v3378 = vpop.permute.xlu0 %3377
        %vm3379 = vcmp.lt.s32.totalorder %v282, 24
        %v3380 = vsel %vm3379, %v3376, %v3378
        %v3381 = vsel %vm3379, %v3374, %v3376
        %v3382 = vsel %vm3379, %v3372, %v3374
        %v3385 = vcombine.low %v3382, %v3381
        %v3387 = vmul.f32 %v202, %v3385
        %v3388 = vmul.f32 %v203, %v3380
        %v3390 = vcombine.high %v3387, %v3387
        %v3392 = vsel %vm212, %v3387, 0.0
        %v3393 = vrot.slane %v3392, 4
        %v3394 = vadd.f32 %v3392, %v3393
        %v3395 = vrot.slane %v3394, 2
        %v3396 = vadd.f32 %v3394, %v3395
        %v3397 = vrot.slane %v3396, 1
        %v3398 = vadd.f32 %v3396, %v3397
        %v3399 = vsel %vm212, %v3390, 0.0
        %v3400 = vrot.slane %v3399, 4
        %v3401 = vadd.f32 %v3399, %v3400
        %v3402 = vrot.slane %v3401, 2
        %v3403 = vadd.f32 %v3401, %v3402
        %v3404 = vrot.slane %v3403, 1
        %v3405 = vadd.f32 %v3403, %v3404
        %v3406 = vsel %vm212, %v3388, 0.0
        %v3407 = vrot.slane %v3406, 4
        %v3408 = vadd.f32 %v3406, %v3407
        %v3409 = vrot.slane %v3408, 2
        %v3410 = vadd.f32 %v3408, %v3409
        %v3411 = vrot.slane %v3410, 1
        %v3412 = vadd.f32 %v3410, %v3411
        %v3416 = vcombine.low %v3398, %v3405
        %v3418 = vunpack.c.l.s4 1966171168
        %v3419 = vunpack.c.0.s8 %v3418
        %v3420 = vlaneseq
        %v3421 = vshrl.u32 %v3420, 7
        %v3422 = vsub.s32 %v3419, %v3421
        %v3423 = vrot.slane %v3416, %v3422
        %v3425 = vunpack.c.l.s4 1966171168
        %v3426 = vunpack.c.0.s8 %v3425
        %v3427 = vlaneseq
        %v3428 = vshrl.u32 %v3427, 7
        %v3429 = vsub.s32 %v3426, %v3428
        %v3430 = vrot.slane %v3412, %v3429
        %v3431 = vcombine.low %v3423, %v3430
        %v3433 = vunpack.c.l.s4 1966171168
        %v3434 = vunpack.c.0.s8 %v3433
        %v3435 = vlaneseq
        %v3436 = vshrl.u32 %v3435, 7
        %v3437 = vsub.s32 %v3434, %v3436
        %v3438 = vrot.slane %v3431, %v3437
        %s3440 = scalar_lea.vmem %s199, 124
        %3441 = vst.msk [vmem:[%s3440] ss:$8 sm:$0x7] %vm264, %v3438
        %3442 = vst.msk [vmem:[%s3440] ss:$8 sm:$0x0] %vm264, %v3438
        %3443 = vrot.lane.b32.xlu0 %v204, 8
        %v3444 = vpop.permute.xlu0 %3443
        %3445 = vrot.lane.b32.xlu0 %v269, 8
        %v3446 = vpop.permute.xlu0 %3445
        %3447 = vrot.lane.b32.xlu0 %v205, 8
        %v3448 = vpop.permute.xlu0 %3447
        %3449 = vrot.lane.b32.xlu0 %v270, 8
        %v3450 = vpop.permute.xlu0 %3449
        %vm3451 = vcmp.lt.s32.totalorder %v282, 8
        %v3452 = vsel %vm3451, %v3448, %v3450
        %v3453 = vsel %vm3451, %v3446, %v3448
        %v3454 = vsel %vm3451, %v3444, %v3446
        %v3457 = vcombine.low %v3454, %v3453
        %v3459 = vmul.f32 %v202, %v3457
        %v3460 = vmul.f32 %v203, %v3452
        %v3462 = vcombine.high %v3459, %v3459
        %v3464 = vsel %vm212, %v3459, 0.0
        %v3465 = vrot.slane %v3464, 4
        %v3466 = vadd.f32 %v3464, %v3465
        %v3467 = vrot.slane %v3466, 2
        %v3468 = vadd.f32 %v3466, %v3467
        %v3469 = vrot.slane %v3468, 1
        %v3470 = vadd.f32 %v3468, %v3469
        %v3471 = vsel %vm212, %v3462, 0.0
        %v3472 = vrot.slane %v3471, 4
        %v3473 = vadd.f32 %v3471, %v3472
        %v3474 = vrot.slane %v3473, 2
        %v3475 = vadd.f32 %v3473, %v3474
        %v3476 = vrot.slane %v3475, 1
        %v3477 = vadd.f32 %v3475, %v3476
        %v3478 = vsel %vm212, %v3460, 0.0
        %v3479 = vrot.slane %v3478, 4
        %v3480 = vadd.f32 %v3478, %v3479
        %v3481 = vrot.slane %v3480, 2
        %v3482 = vadd.f32 %v3480, %v3481
        %v3483 = vrot.slane %v3482, 1
        %v3484 = vadd.f32 %v3482, %v3483
        %v3488 = vcombine.low %v3470, %v3477
        %v3490 = vunpack.c.l.s4 1966171168
        %v3491 = vunpack.c.0.s8 %v3490
        %v3492 = vlaneseq
        %v3493 = vshrl.u32 %v3492, 7
        %v3494 = vsub.s32 %v3491, %v3493
        %v3495 = vrot.slane %v3488, %v3494
        %v3497 = vunpack.c.l.s4 1966171168
        %v3498 = vunpack.c.0.s8 %v3497
        %v3499 = vlaneseq
        %v3500 = vshrl.u32 %v3499, 7
        %v3501 = vsub.s32 %v3498, %v3500
        %v3502 = vrot.slane %v3484, %v3501
        %v3503 = vcombine.low %v3495, %v3502
        %v3505 = vunpack.c.l.s4 1966171168
        %v3506 = vunpack.c.0.s8 %v3505
        %v3507 = vlaneseq
        %v3508 = vshrl.u32 %v3507, 7
        %v3509 = vsub.s32 %v3506, %v3508
        %v3510 = vrot.slane %v3503, %v3509
        %s3512 = scalar_lea.vmem %s199, 125
        %3513 = vst.msk [vmem:[%s3512] ss:$8 sm:$0x7] %vm264, %v3510
        %3514 = vst.msk [vmem:[%s3512] ss:$8 sm:$0x0] %vm264, %v3510
        %3515 = vrot.lane.b32.xlu0 %v204, 7
        %v3516 = vpop.permute.xlu0 %3515
        %3517 = vrot.lane.b32.xlu0 %v269, 7
        %v3518 = vpop.permute.xlu0 %3517
        %3519 = vrot.lane.b32.xlu0 %v205, 7
        %v3520 = vpop.permute.xlu0 %3519
        %3521 = vrot.lane.b32.xlu0 %v270, 7
        %v3522 = vpop.permute.xlu0 %3521
        %vm3523 = vcmp.lt.s32.totalorder %v282, 7
        %v3524 = vsel %vm3523, %v3520, %v3522
        %v3525 = vsel %vm3523, %v3518, %v3520
        %v3526 = vsel %vm3523, %v3516, %v3518
        %v3529 = vcombine.low %v3526, %v3525
        %v3531 = vmul.f32 %v202, %v3529
        %v3532 = vmul.f32 %v203, %v3524
        %v3534 = vcombine.high %v3531, %v3531
        %v3536 = vsel %vm212, %v3531, 0.0
        %v3537 = vrot.slane %v3536, 4
        %v3538 = vadd.f32 %v3536, %v3537
        %v3539 = vrot.slane %v3538, 2
        %v3540 = vadd.f32 %v3538, %v3539
        %v3541 = vrot.slane %v3540, 1
        %v3542 = vadd.f32 %v3540, %v3541
        %v3543 = vsel %vm212, %v3534, 0.0
        %v3544 = vrot.slane %v3543, 4
        %v3545 = vadd.f32 %v3543, %v3544
        %v3546 = vrot.slane %v3545, 2
        %v3547 = vadd.f32 %v3545, %v3546
        %v3548 = vrot.slane %v3547, 1
        %v3549 = vadd.f32 %v3547, %v3548
        %v3550 = vsel %vm212, %v3532, 0.0
        %v3551 = vrot.slane %v3550, 4
        %v3552 = vadd.f32 %v3550, %v3551
        %v3553 = vrot.slane %v3552, 2
        %v3554 = vadd.f32 %v3552, %v3553
        %v3555 = vrot.slane %v3554, 1
        %v3556 = vadd.f32 %v3554, %v3555
        %v3560 = vcombine.low %v3542, %v3549
        %v3562 = vunpack.c.l.s4 1966171168
        %v3563 = vunpack.c.0.s8 %v3562
        %v3564 = vlaneseq
        %v3565 = vshrl.u32 %v3564, 7
        %v3566 = vsub.s32 %v3563, %v3565
        %v3567 = vrot.slane %v3560, %v3566
        %v3569 = vunpack.c.l.s4 1966171168
        %v3570 = vunpack.c.0.s8 %v3569
        %v3571 = vlaneseq
        %v3572 = vshrl.u32 %v3571, 7
        %v3573 = vsub.s32 %v3570, %v3572
        %v3574 = vrot.slane %v3556, %v3573
        %v3575 = vcombine.low %v3567, %v3574
        %v3577 = vunpack.c.l.s4 1966171168
        %v3578 = vunpack.c.0.s8 %v3577
        %v3579 = vlaneseq
        %v3580 = vshrl.u32 %v3579, 7
        %v3581 = vsub.s32 %v3578, %v3580
        %v3582 = vrot.slane %v3575, %v3581
        %s3584 = scalar_lea.vmem %s199, 126
        %3585 = vst.msk [vmem:[%s3584] ss:$8 sm:$0x7] %vm264, %v3582
        %3586 = vst.msk [vmem:[%s3584] ss:$8 sm:$0x0] %vm264, %v3582
        %3587 = vrot.lane.b32.xlu0 %v204, 6
        %v3588 = vpop.permute.xlu0 %3587
        %3589 = vrot.lane.b32.xlu0 %v269, 6
        %v3590 = vpop.permute.xlu0 %3589
        %3591 = vrot.lane.b32.xlu0 %v205, 6
        %v3592 = vpop.permute.xlu0 %3591
        %3593 = vrot.lane.b32.xlu0 %v270, 6
        %v3594 = vpop.permute.xlu0 %3593
        %vm3595 = vcmp.lt.s32.totalorder %v282, 6
        %v3596 = vsel %vm3595, %v3592, %v3594
        %v3597 = vsel %vm3595, %v3590, %v3592
        %v3598 = vsel %vm3595, %v3588, %v3590
        %v3601 = vcombine.low %v3598, %v3597
        %v3603 = vmul.f32 %v202, %v3601
        %v3604 = vmul.f32 %v203, %v3596
        %v3606 = vcombine.high %v3603, %v3603
        %v3608 = vsel %vm212, %v3603, 0.0
        %v3609 = vrot.slane %v3608, 4
        %v3610 = vadd.f32 %v3608, %v3609
        %v3611 = vrot.slane %v3610, 2
        %v3612 = vadd.f32 %v3610, %v3611
        %v3613 = vrot.slane %v3612, 1
        %v3614 = vadd.f32 %v3612, %v3613
        %v3615 = vsel %vm212, %v3606, 0.0
        %v3616 = vrot.slane %v3615, 4
        %v3617 = vadd.f32 %v3615, %v3616
        %v3618 = vrot.slane %v3617, 2
        %v3619 = vadd.f32 %v3617, %v3618
        %v3620 = vrot.slane %v3619, 1
        %v3621 = vadd.f32 %v3619, %v3620
        %v3622 = vsel %vm212, %v3604, 0.0
        %v3623 = vrot.slane %v3622, 4
        %v3624 = vadd.f32 %v3622, %v3623
        %v3625 = vrot.slane %v3624, 2
        %v3626 = vadd.f32 %v3624, %v3625
        %v3627 = vrot.slane %v3626, 1
        %v3628 = vadd.f32 %v3626, %v3627
        %v3632 = vcombine.low %v3614, %v3621
        %v3634 = vunpack.c.l.s4 1966171168
        %v3635 = vunpack.c.0.s8 %v3634
        %v3636 = vlaneseq
        %v3637 = vshrl.u32 %v3636, 7
        %v3638 = vsub.s32 %v3635, %v3637
        %v3639 = vrot.slane %v3632, %v3638
        %v3641 = vunpack.c.l.s4 1966171168
        %v3642 = vunpack.c.0.s8 %v3641
        %v3643 = vlaneseq
        %v3644 = vshrl.u32 %v3643, 7
        %v3645 = vsub.s32 %v3642, %v3644
        %v3646 = vrot.slane %v3628, %v3645
        %v3647 = vcombine.low %v3639, %v3646
        %v3649 = vunpack.c.l.s4 1966171168
        %v3650 = vunpack.c.0.s8 %v3649
        %v3651 = vlaneseq
        %v3652 = vshrl.u32 %v3651, 7
        %v3653 = vsub.s32 %v3650, %v3652
        %v3654 = vrot.slane %v3647, %v3653
        %s3656 = scalar_lea.vmem %s199, 127
        %3657 = vst.msk [vmem:[%s3656] ss:$8 sm:$0x7] %vm264, %v3654
        %3658 = vst.msk [vmem:[%s3656] ss:$8 sm:$0x0] %vm264, %v3654
        %3659 = vrot.lane.b32.xlu0 %v204, 5
        %v3660 = vpop.permute.xlu0 %3659
        %3661 = vrot.lane.b32.xlu0 %v269, 5
        %v3662 = vpop.permute.xlu0 %3661
        %3663 = vrot.lane.b32.xlu0 %v205, 5
        %v3664 = vpop.permute.xlu0 %3663
        %3665 = vrot.lane.b32.xlu0 %v270, 5
        %v3666 = vpop.permute.xlu0 %3665
        %vm3667 = vcmp.lt.s32.totalorder %v282, 5
        %v3668 = vsel %vm3667, %v3664, %v3666
        %v3669 = vsel %vm3667, %v3662, %v3664
        %v3670 = vsel %vm3667, %v3660, %v3662
        %v3673 = vcombine.low %v3670, %v3669
        %v3675 = vmul.f32 %v202, %v3673
        %v3676 = vmul.f32 %v203, %v3668
        %v3678 = vcombine.high %v3675, %v3675
        %v3680 = vsel %vm212, %v3675, 0.0
        %v3681 = vrot.slane %v3680, 4
        %v3682 = vadd.f32 %v3680, %v3681
        %v3683 = vrot.slane %v3682, 2
        %v3684 = vadd.f32 %v3682, %v3683
        %v3685 = vrot.slane %v3684, 1
        %v3686 = vadd.f32 %v3684, %v3685
        %v3687 = vsel %vm212, %v3678, 0.0
        %v3688 = vrot.slane %v3687, 4
        %v3689 = vadd.f32 %v3687, %v3688
        %v3690 = vrot.slane %v3689, 2
        %v3691 = vadd.f32 %v3689, %v3690
        %v3692 = vrot.slane %v3691, 1
        %v3693 = vadd.f32 %v3691, %v3692
        %v3694 = vsel %vm212, %v3676, 0.0
        %v3695 = vrot.slane %v3694, 4
        %v3696 = vadd.f32 %v3694, %v3695
        %v3697 = vrot.slane %v3696, 2
        %v3698 = vadd.f32 %v3696, %v3697
        %v3699 = vrot.slane %v3698, 1
        %v3700 = vadd.f32 %v3698, %v3699
        %v3704 = vcombine.low %v3686, %v3693
        %v3706 = vunpack.c.l.s4 1966171168
        %v3707 = vunpack.c.0.s8 %v3706
        %v3708 = vlaneseq
        %v3709 = vshrl.u32 %v3708, 7
        %v3710 = vsub.s32 %v3707, %v3709
        %v3711 = vrot.slane %v3704, %v3710
        %v3713 = vunpack.c.l.s4 1966171168
        %v3714 = vunpack.c.0.s8 %v3713
        %v3715 = vlaneseq
        %v3716 = vshrl.u32 %v3715, 7
        %v3717 = vsub.s32 %v3714, %v3716
        %v3718 = vrot.slane %v3700, %v3717
        %v3719 = vcombine.low %v3711, %v3718
        %v3721 = vunpack.c.l.s4 1966171168
        %v3722 = vunpack.c.0.s8 %v3721
        %v3723 = vlaneseq
        %v3724 = vshrl.u32 %v3723, 7
        %v3725 = vsub.s32 %v3722, %v3724
        %v3726 = vrot.slane %v3719, %v3725
        %s3728 = scalar_lea.vmem %s199, 144
        %3729 = vst.msk [vmem:[%s3728] ss:$8 sm:$0x7] %vm264, %v3726
        %3730 = vst.msk [vmem:[%s3728] ss:$8 sm:$0x0] %vm264, %v3726
        %3731 = vrot.lane.b32.xlu0 %v204, 4
        %v3732 = vpop.permute.xlu0 %3731
        %3733 = vrot.lane.b32.xlu0 %v269, 4
        %v3734 = vpop.permute.xlu0 %3733
        %3735 = vrot.lane.b32.xlu0 %v205, 4
        %v3736 = vpop.permute.xlu0 %3735
        %3737 = vrot.lane.b32.xlu0 %v270, 4
        %v3738 = vpop.permute.xlu0 %3737
        %vm3739 = vcmp.lt.s32.totalorder %v282, 4
        %v3740 = vsel %vm3739, %v3736, %v3738
        %v3741 = vsel %vm3739, %v3734, %v3736
        %v3742 = vsel %vm3739, %v3732, %v3734
        %v3745 = vcombine.low %v3742, %v3741
        %v3747 = vmul.f32 %v202, %v3745
        %v3748 = vmul.f32 %v203, %v3740
        %v3750 = vcombine.high %v3747, %v3747
        %v3752 = vsel %vm212, %v3747, 0.0
        %v3753 = vrot.slane %v3752, 4
        %v3754 = vadd.f32 %v3752, %v3753
        %v3755 = vrot.slane %v3754, 2
        %v3756 = vadd.f32 %v3754, %v3755
        %v3757 = vrot.slane %v3756, 1
        %v3758 = vadd.f32 %v3756, %v3757
        %v3759 = vsel %vm212, %v3750, 0.0
        %v3760 = vrot.slane %v3759, 4
        %v3761 = vadd.f32 %v3759, %v3760
        %v3762 = vrot.slane %v3761, 2
        %v3763 = vadd.f32 %v3761, %v3762
        %v3764 = vrot.slane %v3763, 1
        %v3765 = vadd.f32 %v3763, %v3764
        %v3766 = vsel %vm212, %v3748, 0.0
        %v3767 = vrot.slane %v3766, 4
        %v3768 = vadd.f32 %v3766, %v3767
        %v3769 = vrot.slane %v3768, 2
        %v3770 = vadd.f32 %v3768, %v3769
        %v3771 = vrot.slane %v3770, 1
        %v3772 = vadd.f32 %v3770, %v3771
        %v3776 = vcombine.low %v3758, %v3765
        %v3778 = vunpack.c.l.s4 1966171168
        %v3779 = vunpack.c.0.s8 %v3778
        %v3780 = vlaneseq
        %v3781 = vshrl.u32 %v3780, 7
        %v3782 = vsub.s32 %v3779, %v3781
        %v3783 = vrot.slane %v3776, %v3782
        %v3785 = vunpack.c.l.s4 1966171168
        %v3786 = vunpack.c.0.s8 %v3785
        %v3787 = vlaneseq
        %v3788 = vshrl.u32 %v3787, 7
        %v3789 = vsub.s32 %v3786, %v3788
        %v3790 = vrot.slane %v3772, %v3789
        %v3791 = vcombine.low %v3783, %v3790
        %v3793 = vunpack.c.l.s4 1966171168
        %v3794 = vunpack.c.0.s8 %v3793
        %v3795 = vlaneseq
        %v3796 = vshrl.u32 %v3795, 7
        %v3797 = vsub.s32 %v3794, %v3796
        %v3798 = vrot.slane %v3791, %v3797
        %s3800 = scalar_lea.vmem %s199, 145
        %3801 = vst.msk [vmem:[%s3800] ss:$8 sm:$0x7] %vm264, %v3798
        %3802 = vst.msk [vmem:[%s3800] ss:$8 sm:$0x0] %vm264, %v3798
        %3803 = vrot.lane.b32.xlu0 %v204, 3
        %v3804 = vpop.permute.xlu0 %3803
        %3805 = vrot.lane.b32.xlu0 %v269, 3
        %v3806 = vpop.permute.xlu0 %3805
        %3807 = vrot.lane.b32.xlu0 %v205, 3
        %v3808 = vpop.permute.xlu0 %3807
        %3809 = vrot.lane.b32.xlu0 %v270, 3
        %v3810 = vpop.permute.xlu0 %3809
        %vm3811 = vcmp.lt.s32.totalorder %v282, 3
        %v3812 = vsel %vm3811, %v3808, %v3810
        %v3813 = vsel %vm3811, %v3806, %v3808
        %v3814 = vsel %vm3811, %v3804, %v3806
        %v3817 = vcombine.low %v3814, %v3813
        %v3819 = vmul.f32 %v202, %v3817
        %v3820 = vmul.f32 %v203, %v3812
        %v3822 = vcombine.high %v3819, %v3819
        %v3824 = vsel %vm212, %v3819, 0.0
        %v3825 = vrot.slane %v3824, 4
        %v3826 = vadd.f32 %v3824, %v3825
        %v3827 = vrot.slane %v3826, 2
        %v3828 = vadd.f32 %v3826, %v3827
        %v3829 = vrot.slane %v3828, 1
        %v3830 = vadd.f32 %v3828, %v3829
        %v3831 = vsel %vm212, %v3822, 0.0
        %v3832 = vrot.slane %v3831, 4
        %v3833 = vadd.f32 %v3831, %v3832
        %v3834 = vrot.slane %v3833, 2
        %v3835 = vadd.f32 %v3833, %v3834
        %v3836 = vrot.slane %v3835, 1
        %v3837 = vadd.f32 %v3835, %v3836
        %v3838 = vsel %vm212, %v3820, 0.0
        %v3839 = vrot.slane %v3838, 4
        %v3840 = vadd.f32 %v3838, %v3839
        %v3841 = vrot.slane %v3840, 2
        %v3842 = vadd.f32 %v3840, %v3841
        %v3843 = vrot.slane %v3842, 1
        %v3844 = vadd.f32 %v3842, %v3843
        %v3848 = vcombine.low %v3830, %v3837
        %v3850 = vunpack.c.l.s4 1966171168
        %v3851 = vunpack.c.0.s8 %v3850
        %v3852 = vlaneseq
        %v3853 = vshrl.u32 %v3852, 7
        %v3854 = vsub.s32 %v3851, %v3853
        %v3855 = vrot.slane %v3848, %v3854
        %v3857 = vunpack.c.l.s4 1966171168
        %v3858 = vunpack.c.0.s8 %v3857
        %v3859 = vlaneseq
        %v3860 = vshrl.u32 %v3859, 7
        %v3861 = vsub.s32 %v3858, %v3860
        %v3862 = vrot.slane %v3844, %v3861
        %v3863 = vcombine.low %v3855, %v3862
        %v3865 = vunpack.c.l.s4 1966171168
        %v3866 = vunpack.c.0.s8 %v3865
        %v3867 = vlaneseq
        %v3868 = vshrl.u32 %v3867, 7
        %v3869 = vsub.s32 %v3866, %v3868
        %v3870 = vrot.slane %v3863, %v3869
        %s3872 = scalar_lea.vmem %s199, 146
        %3873 = vst.msk [vmem:[%s3872] ss:$8 sm:$0x7] %vm264, %v3870
        %3874 = vst.msk [vmem:[%s3872] ss:$8 sm:$0x0] %vm264, %v3870
        %3875 = vrot.lane.b32.xlu0 %v204, 2
        %v3876 = vpop.permute.xlu0 %3875
        %3877 = vrot.lane.b32.xlu0 %v269, 2
        %v3878 = vpop.permute.xlu0 %3877
        %3879 = vrot.lane.b32.xlu0 %v205, 2
        %v3880 = vpop.permute.xlu0 %3879
        %3881 = vrot.lane.b32.xlu0 %v270, 2
        %v3882 = vpop.permute.xlu0 %3881
        %vm3883 = vcmp.lt.s32.totalorder %v282, 2
        %v3884 = vsel %vm3883, %v3880, %v3882
        %v3885 = vsel %vm3883, %v3878, %v3880
        %v3886 = vsel %vm3883, %v3876, %v3878
        %v3889 = vcombine.low %v3886, %v3885
        %v3891 = vmul.f32 %v202, %v3889
        %v3892 = vmul.f32 %v203, %v3884
        %v3894 = vcombine.high %v3891, %v3891
        %v3896 = vsel %vm212, %v3891, 0.0
        %v3897 = vrot.slane %v3896, 4
        %v3898 = vadd.f32 %v3896, %v3897
        %v3899 = vrot.slane %v3898, 2
        %v3900 = vadd.f32 %v3898, %v3899
        %v3901 = vrot.slane %v3900, 1
        %v3902 = vadd.f32 %v3900, %v3901
        %v3903 = vsel %vm212, %v3894, 0.0
        %v3904 = vrot.slane %v3903, 4
        %v3905 = vadd.f32 %v3903, %v3904
        %v3906 = vrot.slane %v3905, 2
        %v3907 = vadd.f32 %v3905, %v3906
        %v3908 = vrot.slane %v3907, 1
        %v3909 = vadd.f32 %v3907, %v3908
        %v3910 = vsel %vm212, %v3892, 0.0
        %v3911 = vrot.slane %v3910, 4
        %v3912 = vadd.f32 %v3910, %v3911
        %v3913 = vrot.slane %v3912, 2
        %v3914 = vadd.f32 %v3912, %v3913
        %v3915 = vrot.slane %v3914, 1
        %v3916 = vadd.f32 %v3914, %v3915
        %v3920 = vcombine.low %v3902, %v3909
        %v3922 = vunpack.c.l.s4 1966171168
        %v3923 = vunpack.c.0.s8 %v3922
        %v3924 = vlaneseq
        %v3925 = vshrl.u32 %v3924, 7
        %v3926 = vsub.s32 %v3923, %v3925
        %v3927 = vrot.slane %v3920, %v3926
        %v3929 = vunpack.c.l.s4 1966171168
        %v3930 = vunpack.c.0.s8 %v3929
        %v3931 = vlaneseq
        %v3932 = vshrl.u32 %v3931, 7
        %v3933 = vsub.s32 %v3930, %v3932
        %v3934 = vrot.slane %v3916, %v3933
        %v3935 = vcombine.low %v3927, %v3934
        %v3937 = vunpack.c.l.s4 1966171168
        %v3938 = vunpack.c.0.s8 %v3937
        %v3939 = vlaneseq
        %v3940 = vshrl.u32 %v3939, 7
        %v3941 = vsub.s32 %v3938, %v3940
        %v3942 = vrot.slane %v3935, %v3941
        %s3944 = scalar_lea.vmem %s199, 147
        %3945 = vst.msk [vmem:[%s3944] ss:$8 sm:$0x7] %vm264, %v3942
        %3946 = vst.msk [vmem:[%s3944] ss:$8 sm:$0x0] %vm264, %v3942
        %3947 = vrot.lane.b32.xlu0 %v204, 1
        %v3948 = vpop.permute.xlu0 %3947
        %3949 = vrot.lane.b32.xlu0 %v269, 1
        %v3950 = vpop.permute.xlu0 %3949
        %3951 = vrot.lane.b32.xlu0 %v205, 1
        %v3952 = vpop.permute.xlu0 %3951
        %3953 = vrot.lane.b32.xlu0 %v270, 1
        %v3954 = vpop.permute.xlu0 %3953
        %vm3955 = vcmp.lt.s32.totalorder %v282, 1
        %v3956 = vsel %vm3955, %v3952, %v3954
        %v3957 = vsel %vm3955, %v3950, %v3952
        %v3958 = vsel %vm3955, %v3948, %v3950
        %v3961 = vcombine.low %v3958, %v3957
        %v3963 = vmul.f32 %v202, %v3961
        %v3964 = vmul.f32 %v203, %v3956
        %v3966 = vcombine.high %v3963, %v3963
        %v3968 = vsel %vm212, %v3963, 0.0
        %v3969 = vrot.slane %v3968, 4
        %v3970 = vadd.f32 %v3968, %v3969
        %v3971 = vrot.slane %v3970, 2
        %v3972 = vadd.f32 %v3970, %v3971
        %v3973 = vrot.slane %v3972, 1
        %v3974 = vadd.f32 %v3972, %v3973
        %v3975 = vsel %vm212, %v3966, 0.0
        %v3976 = vrot.slane %v3975, 4
        %v3977 = vadd.f32 %v3975, %v3976
        %v3978 = vrot.slane %v3977, 2
        %v3979 = vadd.f32 %v3977, %v3978
        %v3980 = vrot.slane %v3979, 1
        %v3981 = vadd.f32 %v3979, %v3980
        %v3982 = vsel %vm212, %v3964, 0.0
        %v3983 = vrot.slane %v3982, 4
        %v3984 = vadd.f32 %v3982, %v3983
        %v3985 = vrot.slane %v3984, 2
        %v3986 = vadd.f32 %v3984, %v3985
        %v3987 = vrot.slane %v3986, 1
        %v3988 = vadd.f32 %v3986, %v3987
        %v3992 = vcombine.low %v3974, %v3981
        %v3994 = vunpack.c.l.s4 1966171168
        %v3995 = vunpack.c.0.s8 %v3994
        %v3996 = vlaneseq
        %v3997 = vshrl.u32 %v3996, 7
        %v3998 = vsub.s32 %v3995, %v3997
        %v3999 = vrot.slane %v3992, %v3998
        %v4001 = vunpack.c.l.s4 1966171168
        %v4002 = vunpack.c.0.s8 %v4001
        %v4003 = vlaneseq
        %v4004 = vshrl.u32 %v4003, 7
        %v4005 = vsub.s32 %v4002, %v4004
        %v4006 = vrot.slane %v3988, %v4005
        %v4007 = vcombine.low %v3999, %v4006
        %v4009 = vunpack.c.l.s4 1966171168
        %v4010 = vunpack.c.0.s8 %v4009
        %v4011 = vlaneseq
        %v4012 = vshrl.u32 %v4011, 7
        %v4013 = vsub.s32 %v4010, %v4012
        %v4014 = vrot.slane %v4007, %v4013
        %s4016 = scalar_lea.vmem %s199, 148
        %4017 = vst.msk [vmem:[%s4016] ss:$8 sm:$0x7] %vm264, %v4014
        %4018 = vst.msk [vmem:[%s4016] ss:$8 sm:$0x0] %vm264, %v4014
        %v4019 = vcombine.low %v269, %v205
        %v4021 = vmul.f32 %v202, %v4019
        %v4022 = vmul.f32 %v203, %v270
        %v4024 = vcombine.high %v4021, %v4021
        %v4026 = vsel %vm212, %v4021, 0.0
        %v4027 = vrot.slane %v4026, 4
        %v4028 = vadd.f32 %v4026, %v4027
        %v4029 = vrot.slane %v4028, 2
        %v4030 = vadd.f32 %v4028, %v4029
        %v4031 = vrot.slane %v4030, 1
        %v4032 = vadd.f32 %v4030, %v4031
        %v4033 = vsel %vm212, %v4024, 0.0
        %v4034 = vrot.slane %v4033, 4
        %v4035 = vadd.f32 %v4033, %v4034
        %v4036 = vrot.slane %v4035, 2
        %v4037 = vadd.f32 %v4035, %v4036
        %v4038 = vrot.slane %v4037, 1
        %v4039 = vadd.f32 %v4037, %v4038
        %v4040 = vsel %vm212, %v4022, 0.0
        %v4041 = vrot.slane %v4040, 4
        %v4042 = vadd.f32 %v4040, %v4041
        %v4043 = vrot.slane %v4042, 2
        %v4044 = vadd.f32 %v4042, %v4043
        %v4045 = vrot.slane %v4044, 1
        %v4046 = vadd.f32 %v4044, %v4045
        %v4050 = vcombine.low %v4032, %v4039
        %v4052 = vunpack.c.l.s4 1966171168
        %v4053 = vunpack.c.0.s8 %v4052
        %v4054 = vlaneseq
        %v4055 = vshrl.u32 %v4054, 7
        %v4056 = vsub.s32 %v4053, %v4055
        %v4057 = vrot.slane %v4050, %v4056
        %v4059 = vunpack.c.l.s4 1966171168
        %v4060 = vunpack.c.0.s8 %v4059
        %v4061 = vlaneseq
        %v4062 = vshrl.u32 %v4061, 7
        %v4063 = vsub.s32 %v4060, %v4062
        %v4064 = vrot.slane %v4046, %v4063
        %v4065 = vcombine.low %v4057, %v4064
        %v4067 = vunpack.c.l.s4 1966171168
        %v4068 = vunpack.c.0.s8 %v4067
        %v4069 = vlaneseq
        %v4070 = vshrl.u32 %v4069, 7
        %v4071 = vsub.s32 %v4068, %v4070
        %v4072 = vrot.slane %v4065, %v4071
        %s4074 = scalar_lea.vmem %s199, 149
        %4075 = vst.msk [vmem:[%s4074] ss:$8 sm:$0x7] %vm264, %v4072
        %4076 = vst.msk [vmem:[%s4074] ss:$8 sm:$0x0] %vm264, %v4072
        %4077 = vrot.lane.b32.xlu0 %v269, 112
        %v4078 = vpop.permute.xlu0 %4077
        %4079 = vrot.lane.b32.xlu0 %v205, 112
        %v4080 = vpop.permute.xlu0 %4079
        %4081 = vrot.lane.b32.xlu0 %v270, 112
        %v4082 = vpop.permute.xlu0 %4081
        %4083 = vrot.lane.b32.xlu0 %v206, 112
        %v4084 = vpop.permute.xlu0 %4083
        %vm4085 = vcmp.lt.s32.totalorder %v282, 112
        %v4086 = vsel %vm4085, %v4082, %v4084
        %v4087 = vsel %vm4085, %v4080, %v4082
        %v4088 = vsel %vm4085, %v4078, %v4080
        %v4091 = vcombine.low %v4088, %v4087
        %v4093 = vmul.f32 %v202, %v4091
        %v4094 = vmul.f32 %v203, %v4086
        %v4096 = vcombine.high %v4093, %v4093
        %v4098 = vsel %vm212, %v4093, 0.0
        %v4099 = vrot.slane %v4098, 4
        %v4100 = vadd.f32 %v4098, %v4099
        %v4101 = vrot.slane %v4100, 2
        %v4102 = vadd.f32 %v4100, %v4101
        %v4103 = vrot.slane %v4102, 1
        %v4104 = vadd.f32 %v4102, %v4103
        %v4105 = vsel %vm212, %v4096, 0.0
        %v4106 = vrot.slane %v4105, 4
        %v4107 = vadd.f32 %v4105, %v4106
        %v4108 = vrot.slane %v4107, 2
        %v4109 = vadd.f32 %v4107, %v4108
        %v4110 = vrot.slane %v4109, 1
        %v4111 = vadd.f32 %v4109, %v4110
        %v4112 = vsel %vm212, %v4094, 0.0
        %v4113 = vrot.slane %v4112, 4
        %v4114 = vadd.f32 %v4112, %v4113
        %v4115 = vrot.slane %v4114, 2
        %v4116 = vadd.f32 %v4114, %v4115
        %v4117 = vrot.slane %v4116, 1
        %v4118 = vadd.f32 %v4116, %v4117
        %v4122 = vcombine.low %v4104, %v4111
        %v4124 = vunpack.c.l.s4 1966171168
        %v4125 = vunpack.c.0.s8 %v4124
        %v4126 = vlaneseq
        %v4127 = vshrl.u32 %v4126, 7
        %v4128 = vsub.s32 %v4125, %v4127
        %v4129 = vrot.slane %v4122, %v4128
        %v4131 = vunpack.c.l.s4 1966171168
        %v4132 = vunpack.c.0.s8 %v4131
        %v4133 = vlaneseq
        %v4134 = vshrl.u32 %v4133, 7
        %v4135 = vsub.s32 %v4132, %v4134
        %v4136 = vrot.slane %v4118, %v4135
        %v4137 = vcombine.low %v4129, %v4136
        %v4139 = vunpack.c.l.s4 1966171168
        %v4140 = vunpack.c.0.s8 %v4139
        %v4141 = vlaneseq
        %v4142 = vshrl.u32 %v4141, 7
        %v4143 = vsub.s32 %v4140, %v4142
        %v4144 = vrot.slane %v4137, %v4143
        %s4146 = scalar_lea.vmem %s199, 150
        %4147 = vst.msk [vmem:[%s4146] ss:$8 sm:$0x7] %vm264, %v4144
        %4148 = vst.msk [vmem:[%s4146] ss:$8 sm:$0x0] %vm264, %v4144
        %4149 = vrot.lane.b32.xlu0 %v269, 111
        %v4150 = vpop.permute.xlu0 %4149
        %4151 = vrot.lane.b32.xlu0 %v205, 111
        %v4152 = vpop.permute.xlu0 %4151
        %4153 = vrot.lane.b32.xlu0 %v270, 111
        %v4154 = vpop.permute.xlu0 %4153
        %4155 = vrot.lane.b32.xlu0 %v206, 111
        %v4156 = vpop.permute.xlu0 %4155
        %vm4157 = vcmp.lt.s32.totalorder %v282, 111
        %v4158 = vsel %vm4157, %v4154, %v4156
        %v4159 = vsel %vm4157, %v4152, %v4154
        %v4160 = vsel %vm4157, %v4150, %v4152
        %v4163 = vcombine.low %v4160, %v4159
        %v4165 = vmul.f32 %v202, %v4163
        %v4166 = vmul.f32 %v203, %v4158
        %v4168 = vcombine.high %v4165, %v4165
        %v4170 = vsel %vm212, %v4165, 0.0
        %v4171 = vrot.slane %v4170, 4
        %v4172 = vadd.f32 %v4170, %v4171
        %v4173 = vrot.slane %v4172, 2
        %v4174 = vadd.f32 %v4172, %v4173
        %v4175 = vrot.slane %v4174, 1
        %v4176 = vadd.f32 %v4174, %v4175
        %v4177 = vsel %vm212, %v4168, 0.0
        %v4178 = vrot.slane %v4177, 4
        %v4179 = vadd.f32 %v4177, %v4178
        %v4180 = vrot.slane %v4179, 2
        %v4181 = vadd.f32 %v4179, %v4180
        %v4182 = vrot.slane %v4181, 1
        %v4183 = vadd.f32 %v4181, %v4182
        %v4184 = vsel %vm212, %v4166, 0.0
        %v4185 = vrot.slane %v4184, 4
        %v4186 = vadd.f32 %v4184, %v4185
        %v4187 = vrot.slane %v4186, 2
        %v4188 = vadd.f32 %v4186, %v4187
        %v4189 = vrot.slane %v4188, 1
        %v4190 = vadd.f32 %v4188, %v4189
        %v4194 = vcombine.low %v4176, %v4183
        %v4196 = vunpack.c.l.s4 1966171168
        %v4197 = vunpack.c.0.s8 %v4196
        %v4198 = vlaneseq
        %v4199 = vshrl.u32 %v4198, 7
        %v4200 = vsub.s32 %v4197, %v4199
        %v4201 = vrot.slane %v4194, %v4200
        %v4203 = vunpack.c.l.s4 1966171168
        %v4204 = vunpack.c.0.s8 %v4203
        %v4205 = vlaneseq
        %v4206 = vshrl.u32 %v4205, 7
        %v4207 = vsub.s32 %v4204, %v4206
        %v4208 = vrot.slane %v4190, %v4207
        %v4209 = vcombine.low %v4201, %v4208
        %v4211 = vunpack.c.l.s4 1966171168
        %v4212 = vunpack.c.0.s8 %v4211
        %v4213 = vlaneseq
        %v4214 = vshrl.u32 %v4213, 7
        %v4215 = vsub.s32 %v4212, %v4214
        %v4216 = vrot.slane %v4209, %v4215
        %s4218 = scalar_lea.vmem %s199, 151
        %4219 = vst.msk [vmem:[%s4218] ss:$8 sm:$0x7] %vm264, %v4216
        %4220 = vst.msk [vmem:[%s4218] ss:$8 sm:$0x0] %vm264, %v4216
        %4221 = vrot.lane.b32.xlu0 %v269, 110
        %v4222 = vpop.permute.xlu0 %4221
        %4223 = vrot.lane.b32.xlu0 %v205, 110
        %v4224 = vpop.permute.xlu0 %4223
        %4225 = vrot.lane.b32.xlu0 %v270, 110
        %v4226 = vpop.permute.xlu0 %4225
        %4227 = vrot.lane.b32.xlu0 %v206, 110
        %v4228 = vpop.permute.xlu0 %4227
        %vm4229 = vcmp.lt.s32.totalorder %v282, 110
        %v4230 = vsel %vm4229, %v4226, %v4228
        %v4231 = vsel %vm4229, %v4224, %v4226
        %v4232 = vsel %vm4229, %v4222, %v4224
        %v4235 = vcombine.low %v4232, %v4231
        %v4237 = vmul.f32 %v202, %v4235
        %v4238 = vmul.f32 %v203, %v4230
        %v4240 = vcombine.high %v4237, %v4237
        %v4242 = vsel %vm212, %v4237, 0.0
        %v4243 = vrot.slane %v4242, 4
        %v4244 = vadd.f32 %v4242, %v4243
        %v4245 = vrot.slane %v4244, 2
        %v4246 = vadd.f32 %v4244, %v4245
        %v4247 = vrot.slane %v4246, 1
        %v4248 = vadd.f32 %v4246, %v4247
        %v4249 = vsel %vm212, %v4240, 0.0
        %v4250 = vrot.slane %v4249, 4
        %v4251 = vadd.f32 %v4249, %v4250
        %v4252 = vrot.slane %v4251, 2
        %v4253 = vadd.f32 %v4251, %v4252
        %v4254 = vrot.slane %v4253, 1
        %v4255 = vadd.f32 %v4253, %v4254
        %v4256 = vsel %vm212, %v4238, 0.0
        %v4257 = vrot.slane %v4256, 4
        %v4258 = vadd.f32 %v4256, %v4257
        %v4259 = vrot.slane %v4258, 2
        %v4260 = vadd.f32 %v4258, %v4259
        %v4261 = vrot.slane %v4260, 1
        %v4262 = vadd.f32 %v4260, %v4261
        %v4266 = vcombine.low %v4248, %v4255
        %v4268 = vunpack.c.l.s4 1966171168
        %v4269 = vunpack.c.0.s8 %v4268
        %v4270 = vlaneseq
        %v4271 = vshrl.u32 %v4270, 7
        %v4272 = vsub.s32 %v4269, %v4271
        %v4273 = vrot.slane %v4266, %v4272
        %v4275 = vunpack.c.l.s4 1966171168
        %v4276 = vunpack.c.0.s8 %v4275
        %v4277 = vlaneseq
        %v4278 = vshrl.u32 %v4277, 7
        %v4279 = vsub.s32 %v4276, %v4278
        %v4280 = vrot.slane %v4262, %v4279
        %v4281 = vcombine.low %v4273, %v4280
        %v4283 = vunpack.c.l.s4 1966171168
        %v4284 = vunpack.c.0.s8 %v4283
        %v4285 = vlaneseq
        %v4286 = vshrl.u32 %v4285, 7
        %v4287 = vsub.s32 %v4284, %v4286
        %v4288 = vrot.slane %v4281, %v4287
        %s4290 = scalar_lea.vmem %s199, 168
        %4291 = vst.msk [vmem:[%s4290] ss:$8 sm:$0x7] %vm264, %v4288
        %4292 = vst.msk [vmem:[%s4290] ss:$8 sm:$0x0] %vm264, %v4288
        %4293 = vrot.lane.b32.xlu0 %v269, 109
        %v4294 = vpop.permute.xlu0 %4293
        %4295 = vrot.lane.b32.xlu0 %v205, 109
        %v4296 = vpop.permute.xlu0 %4295
        %4297 = vrot.lane.b32.xlu0 %v270, 109
        %v4298 = vpop.permute.xlu0 %4297
        %4299 = vrot.lane.b32.xlu0 %v206, 109
        %v4300 = vpop.permute.xlu0 %4299
        %vm4301 = vcmp.lt.s32.totalorder %v282, 109
        %v4302 = vsel %vm4301, %v4298, %v4300
        %v4303 = vsel %vm4301, %v4296, %v4298
        %v4304 = vsel %vm4301, %v4294, %v4296
        %v4307 = vcombine.low %v4304, %v4303
        %v4309 = vmul.f32 %v202, %v4307
        %v4310 = vmul.f32 %v203, %v4302
        %v4312 = vcombine.high %v4309, %v4309
        %v4314 = vsel %vm212, %v4309, 0.0
        %v4315 = vrot.slane %v4314, 4
        %v4316 = vadd.f32 %v4314, %v4315
        %v4317 = vrot.slane %v4316, 2
        %v4318 = vadd.f32 %v4316, %v4317
        %v4319 = vrot.slane %v4318, 1
        %v4320 = vadd.f32 %v4318, %v4319
        %v4321 = vsel %vm212, %v4312, 0.0
        %v4322 = vrot.slane %v4321, 4
        %v4323 = vadd.f32 %v4321, %v4322
        %v4324 = vrot.slane %v4323, 2
        %v4325 = vadd.f32 %v4323, %v4324
        %v4326 = vrot.slane %v4325, 1
        %v4327 = vadd.f32 %v4325, %v4326
        %v4328 = vsel %vm212, %v4310, 0.0
        %v4329 = vrot.slane %v4328, 4
        %v4330 = vadd.f32 %v4328, %v4329
        %v4331 = vrot.slane %v4330, 2
        %v4332 = vadd.f32 %v4330, %v4331
        %v4333 = vrot.slane %v4332, 1
        %v4334 = vadd.f32 %v4332, %v4333
        %v4338 = vcombine.low %v4320, %v4327
        %v4340 = vunpack.c.l.s4 1966171168
        %v4341 = vunpack.c.0.s8 %v4340
        %v4342 = vlaneseq
        %v4343 = vshrl.u32 %v4342, 7
        %v4344 = vsub.s32 %v4341, %v4343
        %v4345 = vrot.slane %v4338, %v4344
        %v4347 = vunpack.c.l.s4 1966171168
        %v4348 = vunpack.c.0.s8 %v4347
        %v4349 = vlaneseq
        %v4350 = vshrl.u32 %v4349, 7
        %v4351 = vsub.s32 %v4348, %v4350
        %v4352 = vrot.slane %v4334, %v4351
        %v4353 = vcombine.low %v4345, %v4352
        %v4355 = vunpack.c.l.s4 1966171168
        %v4356 = vunpack.c.0.s8 %v4355
        %v4357 = vlaneseq
        %v4358 = vshrl.u32 %v4357, 7
        %v4359 = vsub.s32 %v4356, %v4358
        %v4360 = vrot.slane %v4353, %v4359
        %s4362 = scalar_lea.vmem %s199, 169
        %4363 = vst.msk [vmem:[%s4362] ss:$8 sm:$0x7] %vm264, %v4360
        %4364 = vst.msk [vmem:[%s4362] ss:$8 sm:$0x0] %vm264, %v4360
        %4365 = vrot.lane.b32.xlu0 %v269, 108
        %v4366 = vpop.permute.xlu0 %4365
        %4367 = vrot.lane.b32.xlu0 %v205, 108
        %v4368 = vpop.permute.xlu0 %4367
        %4369 = vrot.lane.b32.xlu0 %v270, 108
        %v4370 = vpop.permute.xlu0 %4369
        %4371 = vrot.lane.b32.xlu0 %v206, 108
        %v4372 = vpop.permute.xlu0 %4371
        %vm4373 = vcmp.lt.s32.totalorder %v282, 108
        %v4374 = vsel %vm4373, %v4370, %v4372
        %v4375 = vsel %vm4373, %v4368, %v4370
        %v4376 = vsel %vm4373, %v4366, %v4368
        %v4379 = vcombine.low %v4376, %v4375
        %v4381 = vmul.f32 %v202, %v4379
        %v4382 = vmul.f32 %v203, %v4374
        %v4384 = vcombine.high %v4381, %v4381
        %v4386 = vsel %vm212, %v4381, 0.0
        %v4387 = vrot.slane %v4386, 4
        %v4388 = vadd.f32 %v4386, %v4387
        %v4389 = vrot.slane %v4388, 2
        %v4390 = vadd.f32 %v4388, %v4389
        %v4391 = vrot.slane %v4390, 1
        %v4392 = vadd.f32 %v4390, %v4391
        %v4393 = vsel %vm212, %v4384, 0.0
        %v4394 = vrot.slane %v4393, 4
        %v4395 = vadd.f32 %v4393, %v4394
        %v4396 = vrot.slane %v4395, 2
        %v4397 = vadd.f32 %v4395, %v4396
        %v4398 = vrot.slane %v4397, 1
        %v4399 = vadd.f32 %v4397, %v4398
        %v4400 = vsel %vm212, %v4382, 0.0
        %v4401 = vrot.slane %v4400, 4
        %v4402 = vadd.f32 %v4400, %v4401
        %v4403 = vrot.slane %v4402, 2
        %v4404 = vadd.f32 %v4402, %v4403
        %v4405 = vrot.slane %v4404, 1
        %v4406 = vadd.f32 %v4404, %v4405
        %v4410 = vcombine.low %v4392, %v4399
        %v4412 = vunpack.c.l.s4 1966171168
        %v4413 = vunpack.c.0.s8 %v4412
        %v4414 = vlaneseq
        %v4415 = vshrl.u32 %v4414, 7
        %v4416 = vsub.s32 %v4413, %v4415
        %v4417 = vrot.slane %v4410, %v4416
        %v4419 = vunpack.c.l.s4 1966171168
        %v4420 = vunpack.c.0.s8 %v4419
        %v4421 = vlaneseq
        %v4422 = vshrl.u32 %v4421, 7
        %v4423 = vsub.s32 %v4420, %v4422
        %v4424 = vrot.slane %v4406, %v4423
        %v4425 = vcombine.low %v4417, %v4424
        %v4427 = vunpack.c.l.s4 1966171168
        %v4428 = vunpack.c.0.s8 %v4427
        %v4429 = vlaneseq
        %v4430 = vshrl.u32 %v4429, 7
        %v4431 = vsub.s32 %v4428, %v4430
        %v4432 = vrot.slane %v4425, %v4431
        %s4434 = scalar_lea.vmem %s199, 170
        %4435 = vst.msk [vmem:[%s4434] ss:$8 sm:$0x7] %vm264, %v4432
        %4436 = vst.msk [vmem:[%s4434] ss:$8 sm:$0x0] %vm264, %v4432
        %4437 = vrot.lane.b32.xlu0 %v269, 107
        %v4438 = vpop.permute.xlu0 %4437
        %4439 = vrot.lane.b32.xlu0 %v205, 107
        %v4440 = vpop.permute.xlu0 %4439
        %4441 = vrot.lane.b32.xlu0 %v270, 107
        %v4442 = vpop.permute.xlu0 %4441
        %4443 = vrot.lane.b32.xlu0 %v206, 107
        %v4444 = vpop.permute.xlu0 %4443
        %vm4445 = vcmp.lt.s32.totalorder %v282, 107
        %v4446 = vsel %vm4445, %v4442, %v4444
        %v4447 = vsel %vm4445, %v4440, %v4442
        %v4448 = vsel %vm4445, %v4438, %v4440
        %v4451 = vcombine.low %v4448, %v4447
        %v4453 = vmul.f32 %v202, %v4451
        %v4454 = vmul.f32 %v203, %v4446
        %v4456 = vcombine.high %v4453, %v4453
        %v4458 = vsel %vm212, %v4453, 0.0
        %v4459 = vrot.slane %v4458, 4
        %v4460 = vadd.f32 %v4458, %v4459
        %v4461 = vrot.slane %v4460, 2
        %v4462 = vadd.f32 %v4460, %v4461
        %v4463 = vrot.slane %v4462, 1
        %v4464 = vadd.f32 %v4462, %v4463
        %v4465 = vsel %vm212, %v4456, 0.0
        %v4466 = vrot.slane %v4465, 4
        %v4467 = vadd.f32 %v4465, %v4466
        %v4468 = vrot.slane %v4467, 2
        %v4469 = vadd.f32 %v4467, %v4468
        %v4470 = vrot.slane %v4469, 1
        %v4471 = vadd.f32 %v4469, %v4470
        %v4472 = vsel %vm212, %v4454, 0.0
        %v4473 = vrot.slane %v4472, 4
        %v4474 = vadd.f32 %v4472, %v4473
        %v4475 = vrot.slane %v4474, 2
        %v4476 = vadd.f32 %v4474, %v4475
        %v4477 = vrot.slane %v4476, 1
        %v4478 = vadd.f32 %v4476, %v4477
        %v4482 = vcombine.low %v4464, %v4471
        %v4484 = vunpack.c.l.s4 1966171168
        %v4485 = vunpack.c.0.s8 %v4484
        %v4486 = vlaneseq
        %v4487 = vshrl.u32 %v4486, 7
        %v4488 = vsub.s32 %v4485, %v4487
        %v4489 = vrot.slane %v4482, %v4488
        %v4491 = vunpack.c.l.s4 1966171168
        %v4492 = vunpack.c.0.s8 %v4491
        %v4493 = vlaneseq
        %v4494 = vshrl.u32 %v4493, 7
        %v4495 = vsub.s32 %v4492, %v4494
        %v4496 = vrot.slane %v4478, %v4495
        %v4497 = vcombine.low %v4489, %v4496
        %v4499 = vunpack.c.l.s4 1966171168
        %v4500 = vunpack.c.0.s8 %v4499
        %v4501 = vlaneseq
        %v4502 = vshrl.u32 %v4501, 7
        %v4503 = vsub.s32 %v4500, %v4502
        %v4504 = vrot.slane %v4497, %v4503
        %s4506 = scalar_lea.vmem %s199, 171
        %4507 = vst.msk [vmem:[%s4506] ss:$8 sm:$0x7] %vm264, %v4504
        %4508 = vst.msk [vmem:[%s4506] ss:$8 sm:$0x0] %vm264, %v4504
        %4509 = vrot.lane.b32.xlu0 %v269, 106
        %v4510 = vpop.permute.xlu0 %4509
        %4511 = vrot.lane.b32.xlu0 %v205, 106
        %v4512 = vpop.permute.xlu0 %4511
        %4513 = vrot.lane.b32.xlu0 %v270, 106
        %v4514 = vpop.permute.xlu0 %4513
        %4515 = vrot.lane.b32.xlu0 %v206, 106
        %v4516 = vpop.permute.xlu0 %4515
        %vm4517 = vcmp.lt.s32.totalorder %v282, 106
        %v4518 = vsel %vm4517, %v4514, %v4516
        %v4519 = vsel %vm4517, %v4512, %v4514
        %v4520 = vsel %vm4517, %v4510, %v4512
        %v4523 = vcombine.low %v4520, %v4519
        %v4525 = vmul.f32 %v202, %v4523
        %v4526 = vmul.f32 %v203, %v4518
        %v4528 = vcombine.high %v4525, %v4525
        %v4530 = vsel %vm212, %v4525, 0.0
        %v4531 = vrot.slane %v4530, 4
        %v4532 = vadd.f32 %v4530, %v4531
        %v4533 = vrot.slane %v4532, 2
        %v4534 = vadd.f32 %v4532, %v4533
        %v4535 = vrot.slane %v4534, 1
        %v4536 = vadd.f32 %v4534, %v4535
        %v4537 = vsel %vm212, %v4528, 0.0
        %v4538 = vrot.slane %v4537, 4
        %v4539 = vadd.f32 %v4537, %v4538
        %v4540 = vrot.slane %v4539, 2
        %v4541 = vadd.f32 %v4539, %v4540
        %v4542 = vrot.slane %v4541, 1
        %v4543 = vadd.f32 %v4541, %v4542
        %v4544 = vsel %vm212, %v4526, 0.0
        %v4545 = vrot.slane %v4544, 4
        %v4546 = vadd.f32 %v4544, %v4545
        %v4547 = vrot.slane %v4546, 2
        %v4548 = vadd.f32 %v4546, %v4547
        %v4549 = vrot.slane %v4548, 1
        %v4550 = vadd.f32 %v4548, %v4549
        %v4554 = vcombine.low %v4536, %v4543
        %v4556 = vunpack.c.l.s4 1966171168
        %v4557 = vunpack.c.0.s8 %v4556
        %v4558 = vlaneseq
        %v4559 = vshrl.u32 %v4558, 7
        %v4560 = vsub.s32 %v4557, %v4559
        %v4561 = vrot.slane %v4554, %v4560
        %v4563 = vunpack.c.l.s4 1966171168
        %v4564 = vunpack.c.0.s8 %v4563
        %v4565 = vlaneseq
        %v4566 = vshrl.u32 %v4565, 7
        %v4567 = vsub.s32 %v4564, %v4566
        %v4568 = vrot.slane %v4550, %v4567
        %v4569 = vcombine.low %v4561, %v4568
        %v4571 = vunpack.c.l.s4 1966171168
        %v4572 = vunpack.c.0.s8 %v4571
        %v4573 = vlaneseq
        %v4574 = vshrl.u32 %v4573, 7
        %v4575 = vsub.s32 %v4572, %v4574
        %v4576 = vrot.slane %v4569, %v4575
        %s4578 = scalar_lea.vmem %s199, 172
        %4579 = vst.msk [vmem:[%s4578] ss:$8 sm:$0x7] %vm264, %v4576
        %4580 = vst.msk [vmem:[%s4578] ss:$8 sm:$0x0] %vm264, %v4576
        %4581 = vrot.lane.b32.xlu0 %v269, 105
        %v4582 = vpop.permute.xlu0 %4581
        %4583 = vrot.lane.b32.xlu0 %v205, 105
        %v4584 = vpop.permute.xlu0 %4583
        %4585 = vrot.lane.b32.xlu0 %v270, 105
        %v4586 = vpop.permute.xlu0 %4585
        %4587 = vrot.lane.b32.xlu0 %v206, 105
        %v4588 = vpop.permute.xlu0 %4587
        %vm4589 = vcmp.lt.s32.totalorder %v282, 105
        %v4590 = vsel %vm4589, %v4586, %v4588
        %v4591 = vsel %vm4589, %v4584, %v4586
        %v4592 = vsel %vm4589, %v4582, %v4584
        %v4595 = vcombine.low %v4592, %v4591
        %v4597 = vmul.f32 %v202, %v4595
        %v4598 = vmul.f32 %v203, %v4590
        %v4600 = vcombine.high %v4597, %v4597
        %v4602 = vsel %vm212, %v4597, 0.0
        %v4603 = vrot.slane %v4602, 4
        %v4604 = vadd.f32 %v4602, %v4603
        %v4605 = vrot.slane %v4604, 2
        %v4606 = vadd.f32 %v4604, %v4605
        %v4607 = vrot.slane %v4606, 1
        %v4608 = vadd.f32 %v4606, %v4607
        %v4609 = vsel %vm212, %v4600, 0.0
        %v4610 = vrot.slane %v4609, 4
        %v4611 = vadd.f32 %v4609, %v4610
        %v4612 = vrot.slane %v4611, 2
        %v4613 = vadd.f32 %v4611, %v4612
        %v4614 = vrot.slane %v4613, 1
        %v4615 = vadd.f32 %v4613, %v4614
        %v4616 = vsel %vm212, %v4598, 0.0
        %v4617 = vrot.slane %v4616, 4
        %v4618 = vadd.f32 %v4616, %v4617
        %v4619 = vrot.slane %v4618, 2
        %v4620 = vadd.f32 %v4618, %v4619
        %v4621 = vrot.slane %v4620, 1
        %v4622 = vadd.f32 %v4620, %v4621
        %v4626 = vcombine.low %v4608, %v4615
        %v4628 = vunpack.c.l.s4 1966171168
        %v4629 = vunpack.c.0.s8 %v4628
        %v4630 = vlaneseq
        %v4631 = vshrl.u32 %v4630, 7
        %v4632 = vsub.s32 %v4629, %v4631
        %v4633 = vrot.slane %v4626, %v4632
        %v4635 = vunpack.c.l.s4 1966171168
        %v4636 = vunpack.c.0.s8 %v4635
        %v4637 = vlaneseq
        %v4638 = vshrl.u32 %v4637, 7
        %v4639 = vsub.s32 %v4636, %v4638
        %v4640 = vrot.slane %v4622, %v4639
        %v4641 = vcombine.low %v4633, %v4640
        %v4643 = vunpack.c.l.s4 1966171168
        %v4644 = vunpack.c.0.s8 %v4643
        %v4645 = vlaneseq
        %v4646 = vshrl.u32 %v4645, 7
        %v4647 = vsub.s32 %v4644, %v4646
        %v4648 = vrot.slane %v4641, %v4647
        %s4650 = scalar_lea.vmem %s199, 173
        %4651 = vst.msk [vmem:[%s4650] ss:$8 sm:$0x7] %vm264, %v4648
        %4652 = vst.msk [vmem:[%s4650] ss:$8 sm:$0x0] %vm264, %v4648
        %4653 = vrot.lane.b32.xlu0 %v206, 104
        %v4654 = vpop.permute.xlu0 %4653
        %v4655 = vsel %vm859, %v858, %v4654
        %v4657 = vcombine.low %v861, %v860
        %v4659 = vmul.f32 %v202, %v4657
        %v4660 = vmul.f32 %v203, %v4655
        %v4662 = vcombine.high %v4659, %v4659
        %v4664 = vsel %vm212, %v4659, 0.0
        %v4665 = vrot.slane %v4664, 4
        %v4666 = vadd.f32 %v4664, %v4665
        %v4667 = vrot.slane %v4666, 2
        %v4668 = vadd.f32 %v4666, %v4667
        %v4669 = vrot.slane %v4668, 1
        %v4670 = vadd.f32 %v4668, %v4669
        %v4671 = vsel %vm212, %v4662, 0.0
        %v4672 = vrot.slane %v4671, 4
        %v4673 = vadd.f32 %v4671, %v4672
        %v4674 = vrot.slane %v4673, 2
        %v4675 = vadd.f32 %v4673, %v4674
        %v4676 = vrot.slane %v4675, 1
        %v4677 = vadd.f32 %v4675, %v4676
        %v4678 = vsel %vm212, %v4660, 0.0
        %v4679 = vrot.slane %v4678, 4
        %v4680 = vadd.f32 %v4678, %v4679
        %v4681 = vrot.slane %v4680, 2
        %v4682 = vadd.f32 %v4680, %v4681
        %v4683 = vrot.slane %v4682, 1
        %v4684 = vadd.f32 %v4682, %v4683
        %v4688 = vcombine.low %v4670, %v4677
        %v4690 = vunpack.c.l.s4 1966171168
        %v4691 = vunpack.c.0.s8 %v4690
        %v4692 = vlaneseq
        %v4693 = vshrl.u32 %v4692, 7
        %v4694 = vsub.s32 %v4691, %v4693
        %v4695 = vrot.slane %v4688, %v4694
        %v4697 = vunpack.c.l.s4 1966171168
        %v4698 = vunpack.c.0.s8 %v4697
        %v4699 = vlaneseq
        %v4700 = vshrl.u32 %v4699, 7
        %v4701 = vsub.s32 %v4698, %v4700
        %v4702 = vrot.slane %v4684, %v4701
        %v4703 = vcombine.low %v4695, %v4702
        %v4705 = vunpack.c.l.s4 1966171168
        %v4706 = vunpack.c.0.s8 %v4705
        %v4707 = vlaneseq
        %v4708 = vshrl.u32 %v4707, 7
        %v4709 = vsub.s32 %v4706, %v4708
        %v4710 = vrot.slane %v4703, %v4709
        %s4712 = scalar_lea.vmem %s199, 174
        %4713 = vst.msk [vmem:[%s4712] ss:$8 sm:$0x7] %vm264, %v4710
        %4714 = vst.msk [vmem:[%s4712] ss:$8 sm:$0x0] %vm264, %v4710
        %4715 = vrot.lane.b32.xlu0 %v269, 88
        %v4716 = vpop.permute.xlu0 %4715
        %4717 = vrot.lane.b32.xlu0 %v205, 88
        %v4718 = vpop.permute.xlu0 %4717
        %4719 = vrot.lane.b32.xlu0 %v270, 88
        %v4720 = vpop.permute.xlu0 %4719
        %4721 = vrot.lane.b32.xlu0 %v206, 88
        %v4722 = vpop.permute.xlu0 %4721
        %vm4723 = vcmp.lt.s32.totalorder %v282, 88
        %v4724 = vsel %vm4723, %v4720, %v4722
        %v4725 = vsel %vm4723, %v4718, %v4720
        %v4726 = vsel %vm4723, %v4716, %v4718
        %v4729 = vcombine.low %v4726, %v4725
        %v4731 = vmul.f32 %v202, %v4729
        %v4732 = vmul.f32 %v203, %v4724
        %v4734 = vcombine.high %v4731, %v4731
        %v4736 = vsel %vm212, %v4731, 0.0
        %v4737 = vrot.slane %v4736, 4
        %v4738 = vadd.f32 %v4736, %v4737
        %v4739 = vrot.slane %v4738, 2
        %v4740 = vadd.f32 %v4738, %v4739
        %v4741 = vrot.slane %v4740, 1
        %v4742 = vadd.f32 %v4740, %v4741
        %v4743 = vsel %vm212, %v4734, 0.0
        %v4744 = vrot.slane %v4743, 4
        %v4745 = vadd.f32 %v4743, %v4744
        %v4746 = vrot.slane %v4745, 2
        %v4747 = vadd.f32 %v4745, %v4746
        %v4748 = vrot.slane %v4747, 1
        %v4749 = vadd.f32 %v4747, %v4748
        %v4750 = vsel %vm212, %v4732, 0.0
        %v4751 = vrot.slane %v4750, 4
        %v4752 = vadd.f32 %v4750, %v4751
        %v4753 = vrot.slane %v4752, 2
        %v4754 = vadd.f32 %v4752, %v4753
        %v4755 = vrot.slane %v4754, 1
        %v4756 = vadd.f32 %v4754, %v4755
        %v4760 = vcombine.low %v4742, %v4749
        %v4762 = vunpack.c.l.s4 1966171168
        %v4763 = vunpack.c.0.s8 %v4762
        %v4764 = vlaneseq
        %v4765 = vshrl.u32 %v4764, 7
        %v4766 = vsub.s32 %v4763, %v4765
        %v4767 = vrot.slane %v4760, %v4766
        %v4769 = vunpack.c.l.s4 1966171168
        %v4770 = vunpack.c.0.s8 %v4769
        %v4771 = vlaneseq
        %v4772 = vshrl.u32 %v4771, 7
        %v4773 = vsub.s32 %v4770, %v4772
        %v4774 = vrot.slane %v4756, %v4773
        %v4775 = vcombine.low %v4767, %v4774
        %v4777 = vunpack.c.l.s4 1966171168
        %v4778 = vunpack.c.0.s8 %v4777
        %v4779 = vlaneseq
        %v4780 = vshrl.u32 %v4779, 7
        %v4781 = vsub.s32 %v4778, %v4780
        %v4782 = vrot.slane %v4775, %v4781
        %s4784 = scalar_lea.vmem %s199, 175
        %4785 = vst.msk [vmem:[%s4784] ss:$8 sm:$0x7] %vm264, %v4782
        %4786 = vst.msk [vmem:[%s4784] ss:$8 sm:$0x0] %vm264, %v4782
        %4787 = vrot.lane.b32.xlu0 %v269, 87
        %v4788 = vpop.permute.xlu0 %4787
        %4789 = vrot.lane.b32.xlu0 %v205, 87
        %v4790 = vpop.permute.xlu0 %4789
        %4791 = vrot.lane.b32.xlu0 %v270, 87
        %v4792 = vpop.permute.xlu0 %4791
        %4793 = vrot.lane.b32.xlu0 %v206, 87
        %v4794 = vpop.permute.xlu0 %4793
        %vm4795 = vcmp.lt.s32.totalorder %v282, 87
        %v4796 = vsel %vm4795, %v4792, %v4794
        %v4797 = vsel %vm4795, %v4790, %v4792
        %v4798 = vsel %vm4795, %v4788, %v4790
        %v4801 = vcombine.low %v4798, %v4797
        %v4803 = vmul.f32 %v202, %v4801
        %v4804 = vmul.f32 %v203, %v4796
        %v4806 = vcombine.high %v4803, %v4803
        %v4808 = vsel %vm212, %v4803, 0.0
        %v4809 = vrot.slane %v4808, 4
        %v4810 = vadd.f32 %v4808, %v4809
        %v4811 = vrot.slane %v4810, 2
        %v4812 = vadd.f32 %v4810, %v4811
        %v4813 = vrot.slane %v4812, 1
        %v4814 = vadd.f32 %v4812, %v4813
        %v4815 = vsel %vm212, %v4806, 0.0
        %v4816 = vrot.slane %v4815, 4
        %v4817 = vadd.f32 %v4815, %v4816
        %v4818 = vrot.slane %v4817, 2
        %v4819 = vadd.f32 %v4817, %v4818
        %v4820 = vrot.slane %v4819, 1
        %v4821 = vadd.f32 %v4819, %v4820
        %v4822 = vsel %vm212, %v4804, 0.0
        %v4823 = vrot.slane %v4822, 4
        %v4824 = vadd.f32 %v4822, %v4823
        %v4825 = vrot.slane %v4824, 2
        %v4826 = vadd.f32 %v4824, %v4825
        %v4827 = vrot.slane %v4826, 1
        %v4828 = vadd.f32 %v4826, %v4827
        %v4832 = vcombine.low %v4814, %v4821
        %v4834 = vunpack.c.l.s4 1966171168
        %v4835 = vunpack.c.0.s8 %v4834
        %v4836 = vlaneseq
        %v4837 = vshrl.u32 %v4836, 7
        %v4838 = vsub.s32 %v4835, %v4837
        %v4839 = vrot.slane %v4832, %v4838
        %v4841 = vunpack.c.l.s4 1966171168
        %v4842 = vunpack.c.0.s8 %v4841
        %v4843 = vlaneseq
        %v4844 = vshrl.u32 %v4843, 7
        %v4845 = vsub.s32 %v4842, %v4844
        %v4846 = vrot.slane %v4828, %v4845
        %v4847 = vcombine.low %v4839, %v4846
        %v4849 = vunpack.c.l.s4 1966171168
        %v4850 = vunpack.c.0.s8 %v4849
        %v4851 = vlaneseq
        %v4852 = vshrl.u32 %v4851, 7
        %v4853 = vsub.s32 %v4850, %v4852
        %v4854 = vrot.slane %v4847, %v4853
        %s4856 = scalar_lea.vmem %s199, 192
        %4857 = vst.msk [vmem:[%s4856] ss:$8 sm:$0x7] %vm264, %v4854
        %4858 = vst.msk [vmem:[%s4856] ss:$8 sm:$0x0] %vm264, %v4854
        %4859 = vrot.lane.b32.xlu0 %v269, 86
        %v4860 = vpop.permute.xlu0 %4859
        %4861 = vrot.lane.b32.xlu0 %v205, 86
        %v4862 = vpop.permute.xlu0 %4861
        %4863 = vrot.lane.b32.xlu0 %v270, 86
        %v4864 = vpop.permute.xlu0 %4863
        %4865 = vrot.lane.b32.xlu0 %v206, 86
        %v4866 = vpop.permute.xlu0 %4865
        %vm4867 = vcmp.lt.s32.totalorder %v282, 86
        %v4868 = vsel %vm4867, %v4864, %v4866
        %v4869 = vsel %vm4867, %v4862, %v4864
        %v4870 = vsel %vm4867, %v4860, %v4862
        %v4873 = vcombine.low %v4870, %v4869
        %v4875 = vmul.f32 %v202, %v4873
        %v4876 = vmul.f32 %v203, %v4868
        %v4878 = vcombine.high %v4875, %v4875
        %v4880 = vsel %vm212, %v4875, 0.0
        %v4881 = vrot.slane %v4880, 4
        %v4882 = vadd.f32 %v4880, %v4881
        %v4883 = vrot.slane %v4882, 2
        %v4884 = vadd.f32 %v4882, %v4883
        %v4885 = vrot.slane %v4884, 1
        %v4886 = vadd.f32 %v4884, %v4885
        %v4887 = vsel %vm212, %v4878, 0.0
        %v4888 = vrot.slane %v4887, 4
        %v4889 = vadd.f32 %v4887, %v4888
        %v4890 = vrot.slane %v4889, 2
        %v4891 = vadd.f32 %v4889, %v4890
        %v4892 = vrot.slane %v4891, 1
        %v4893 = vadd.f32 %v4891, %v4892
        %v4894 = vsel %vm212, %v4876, 0.0
        %v4895 = vrot.slane %v4894, 4
        %v4896 = vadd.f32 %v4894, %v4895
        %v4897 = vrot.slane %v4896, 2
        %v4898 = vadd.f32 %v4896, %v4897
        %v4899 = vrot.slane %v4898, 1
        %v4900 = vadd.f32 %v4898, %v4899
        %v4904 = vcombine.low %v4886, %v4893
        %v4906 = vunpack.c.l.s4 1966171168
        %v4907 = vunpack.c.0.s8 %v4906
        %v4908 = vlaneseq
        %v4909 = vshrl.u32 %v4908, 7
        %v4910 = vsub.s32 %v4907, %v4909
        %v4911 = vrot.slane %v4904, %v4910
        %v4913 = vunpack.c.l.s4 1966171168
        %v4914 = vunpack.c.0.s8 %v4913
        %v4915 = vlaneseq
        %v4916 = vshrl.u32 %v4915, 7
        %v4917 = vsub.s32 %v4914, %v4916
        %v4918 = vrot.slane %v4900, %v4917
        %v4919 = vcombine.low %v4911, %v4918
        %v4921 = vunpack.c.l.s4 1966171168
        %v4922 = vunpack.c.0.s8 %v4921
        %v4923 = vlaneseq
        %v4924 = vshrl.u32 %v4923, 7
        %v4925 = vsub.s32 %v4922, %v4924
        %v4926 = vrot.slane %v4919, %v4925
        %s4928 = scalar_lea.vmem %s199, 193
        %4929 = vst.msk [vmem:[%s4928] ss:$8 sm:$0x7] %vm264, %v4926
        %4930 = vst.msk [vmem:[%s4928] ss:$8 sm:$0x0] %vm264, %v4926
        %4931 = vrot.lane.b32.xlu0 %v269, 85
        %v4932 = vpop.permute.xlu0 %4931
        %4933 = vrot.lane.b32.xlu0 %v205, 85
        %v4934 = vpop.permute.xlu0 %4933
        %4935 = vrot.lane.b32.xlu0 %v270, 85
        %v4936 = vpop.permute.xlu0 %4935
        %4937 = vrot.lane.b32.xlu0 %v206, 85
        %v4938 = vpop.permute.xlu0 %4937
        %vm4939 = vcmp.lt.s32.totalorder %v282, 85
        %v4940 = vsel %vm4939, %v4936, %v4938
        %v4941 = vsel %vm4939, %v4934, %v4936
        %v4942 = vsel %vm4939, %v4932, %v4934
        %v4945 = vcombine.low %v4942, %v4941
        %v4947 = vmul.f32 %v202, %v4945
        %v4948 = vmul.f32 %v203, %v4940
        %v4950 = vcombine.high %v4947, %v4947
        %v4952 = vsel %vm212, %v4947, 0.0
        %v4953 = vrot.slane %v4952, 4
        %v4954 = vadd.f32 %v4952, %v4953
        %v4955 = vrot.slane %v4954, 2
        %v4956 = vadd.f32 %v4954, %v4955
        %v4957 = vrot.slane %v4956, 1
        %v4958 = vadd.f32 %v4956, %v4957
        %v4959 = vsel %vm212, %v4950, 0.0
        %v4960 = vrot.slane %v4959, 4
        %v4961 = vadd.f32 %v4959, %v4960
        %v4962 = vrot.slane %v4961, 2
        %v4963 = vadd.f32 %v4961, %v4962
        %v4964 = vrot.slane %v4963, 1
        %v4965 = vadd.f32 %v4963, %v4964
        %v4966 = vsel %vm212, %v4948, 0.0
        %v4967 = vrot.slane %v4966, 4
        %v4968 = vadd.f32 %v4966, %v4967
        %v4969 = vrot.slane %v4968, 2
        %v4970 = vadd.f32 %v4968, %v4969
        %v4971 = vrot.slane %v4970, 1
        %v4972 = vadd.f32 %v4970, %v4971
        %v4976 = vcombine.low %v4958, %v4965
        %v4978 = vunpack.c.l.s4 1966171168
        %v4979 = vunpack.c.0.s8 %v4978
        %v4980 = vlaneseq
        %v4981 = vshrl.u32 %v4980, 7
        %v4982 = vsub.s32 %v4979, %v4981
        %v4983 = vrot.slane %v4976, %v4982
        %v4985 = vunpack.c.l.s4 1966171168
        %v4986 = vunpack.c.0.s8 %v4985
        %v4987 = vlaneseq
        %v4988 = vshrl.u32 %v4987, 7
        %v4989 = vsub.s32 %v4986, %v4988
        %v4990 = vrot.slane %v4972, %v4989
        %v4991 = vcombine.low %v4983, %v4990
        %v4993 = vunpack.c.l.s4 1966171168
        %v4994 = vunpack.c.0.s8 %v4993
        %v4995 = vlaneseq
        %v4996 = vshrl.u32 %v4995, 7
        %v4997 = vsub.s32 %v4994, %v4996
        %v4998 = vrot.slane %v4991, %v4997
        %s5000 = scalar_lea.vmem %s199, 194
        %5001 = vst.msk [vmem:[%s5000] ss:$8 sm:$0x7] %vm264, %v4998
        %5002 = vst.msk [vmem:[%s5000] ss:$8 sm:$0x0] %vm264, %v4998
        %5003 = vrot.lane.b32.xlu0 %v269, 84
        %v5004 = vpop.permute.xlu0 %5003
        %5005 = vrot.lane.b32.xlu0 %v205, 84
        %v5006 = vpop.permute.xlu0 %5005
        %5007 = vrot.lane.b32.xlu0 %v270, 84
        %v5008 = vpop.permute.xlu0 %5007
        %5009 = vrot.lane.b32.xlu0 %v206, 84
        %v5010 = vpop.permute.xlu0 %5009
        %vm5011 = vcmp.lt.s32.totalorder %v282, 84
        %v5012 = vsel %vm5011, %v5008, %v5010
        %v5013 = vsel %vm5011, %v5006, %v5008
        %v5014 = vsel %vm5011, %v5004, %v5006
        %v5017 = vcombine.low %v5014, %v5013
        %v5019 = vmul.f32 %v202, %v5017
        %v5020 = vmul.f32 %v203, %v5012
        %v5022 = vcombine.high %v5019, %v5019
        %v5024 = vsel %vm212, %v5019, 0.0
        %v5025 = vrot.slane %v5024, 4
        %v5026 = vadd.f32 %v5024, %v5025
        %v5027 = vrot.slane %v5026, 2
        %v5028 = vadd.f32 %v5026, %v5027
        %v5029 = vrot.slane %v5028, 1
        %v5030 = vadd.f32 %v5028, %v5029
        %v5031 = vsel %vm212, %v5022, 0.0
        %v5032 = vrot.slane %v5031, 4
        %v5033 = vadd.f32 %v5031, %v5032
        %v5034 = vrot.slane %v5033, 2
        %v5035 = vadd.f32 %v5033, %v5034
        %v5036 = vrot.slane %v5035, 1
        %v5037 = vadd.f32 %v5035, %v5036
        %v5038 = vsel %vm212, %v5020, 0.0
        %v5039 = vrot.slane %v5038, 4
        %v5040 = vadd.f32 %v5038, %v5039
        %v5041 = vrot.slane %v5040, 2
        %v5042 = vadd.f32 %v5040, %v5041
        %v5043 = vrot.slane %v5042, 1
        %v5044 = vadd.f32 %v5042, %v5043
        %v5048 = vcombine.low %v5030, %v5037
        %v5050 = vunpack.c.l.s4 1966171168
        %v5051 = vunpack.c.0.s8 %v5050
        %v5052 = vlaneseq
        %v5053 = vshrl.u32 %v5052, 7
        %v5054 = vsub.s32 %v5051, %v5053
        %v5055 = vrot.slane %v5048, %v5054
        %v5057 = vunpack.c.l.s4 1966171168
        %v5058 = vunpack.c.0.s8 %v5057
        %v5059 = vlaneseq
        %v5060 = vshrl.u32 %v5059, 7
        %v5061 = vsub.s32 %v5058, %v5060
        %v5062 = vrot.slane %v5044, %v5061
        %v5063 = vcombine.low %v5055, %v5062
        %v5065 = vunpack.c.l.s4 1966171168
        %v5066 = vunpack.c.0.s8 %v5065
        %v5067 = vlaneseq
        %v5068 = vshrl.u32 %v5067, 7
        %v5069 = vsub.s32 %v5066, %v5068
        %v5070 = vrot.slane %v5063, %v5069
        %s5072 = scalar_lea.vmem %s199, 195
        %5073 = vst.msk [vmem:[%s5072] ss:$8 sm:$0x7] %vm264, %v5070
        %5074 = vst.msk [vmem:[%s5072] ss:$8 sm:$0x0] %vm264, %v5070
        %5075 = vrot.lane.b32.xlu0 %v269, 83
        %v5076 = vpop.permute.xlu0 %5075
        %5077 = vrot.lane.b32.xlu0 %v205, 83
        %v5078 = vpop.permute.xlu0 %5077
        %5079 = vrot.lane.b32.xlu0 %v270, 83
        %v5080 = vpop.permute.xlu0 %5079
        %5081 = vrot.lane.b32.xlu0 %v206, 83
        %v5082 = vpop.permute.xlu0 %5081
        %vm5083 = vcmp.lt.s32.totalorder %v282, 83
        %v5084 = vsel %vm5083, %v5080, %v5082
        %v5085 = vsel %vm5083, %v5078, %v5080
        %v5086 = vsel %vm5083, %v5076, %v5078
        %v5089 = vcombine.low %v5086, %v5085
        %v5091 = vmul.f32 %v202, %v5089
        %v5092 = vmul.f32 %v203, %v5084
        %v5094 = vcombine.high %v5091, %v5091
        %v5096 = vsel %vm212, %v5091, 0.0
        %v5097 = vrot.slane %v5096, 4
        %v5098 = vadd.f32 %v5096, %v5097
        %v5099 = vrot.slane %v5098, 2
        %v5100 = vadd.f32 %v5098, %v5099
        %v5101 = vrot.slane %v5100, 1
        %v5102 = vadd.f32 %v5100, %v5101
        %v5103 = vsel %vm212, %v5094, 0.0
        %v5104 = vrot.slane %v5103, 4
        %v5105 = vadd.f32 %v5103, %v5104
        %v5106 = vrot.slane %v5105, 2
        %v5107 = vadd.f32 %v5105, %v5106
        %v5108 = vrot.slane %v5107, 1
        %v5109 = vadd.f32 %v5107, %v5108
        %v5110 = vsel %vm212, %v5092, 0.0
        %v5111 = vrot.slane %v5110, 4
        %v5112 = vadd.f32 %v5110, %v5111
        %v5113 = vrot.slane %v5112, 2
        %v5114 = vadd.f32 %v5112, %v5113
        %v5115 = vrot.slane %v5114, 1
        %v5116 = vadd.f32 %v5114, %v5115
        %v5120 = vcombine.low %v5102, %v5109
        %v5122 = vunpack.c.l.s4 1966171168
        %v5123 = vunpack.c.0.s8 %v5122
        %v5124 = vlaneseq
        %v5125 = vshrl.u32 %v5124, 7
        %v5126 = vsub.s32 %v5123, %v5125
        %v5127 = vrot.slane %v5120, %v5126
        %v5129 = vunpack.c.l.s4 1966171168
        %v5130 = vunpack.c.0.s8 %v5129
        %v5131 = vlaneseq
        %v5132 = vshrl.u32 %v5131, 7
        %v5133 = vsub.s32 %v5130, %v5132
        %v5134 = vrot.slane %v5116, %v5133
        %v5135 = vcombine.low %v5127, %v5134
        %v5137 = vunpack.c.l.s4 1966171168
        %v5138 = vunpack.c.0.s8 %v5137
        %v5139 = vlaneseq
        %v5140 = vshrl.u32 %v5139, 7
        %v5141 = vsub.s32 %v5138, %v5140
        %v5142 = vrot.slane %v5135, %v5141
        %s5144 = scalar_lea.vmem %s199, 196
        %5145 = vst.msk [vmem:[%s5144] ss:$8 sm:$0x7] %vm264, %v5142
        %5146 = vst.msk [vmem:[%s5144] ss:$8 sm:$0x0] %vm264, %v5142
        %5147 = vrot.lane.b32.xlu0 %v269, 82
        %v5148 = vpop.permute.xlu0 %5147
        %5149 = vrot.lane.b32.xlu0 %v205, 82
        %v5150 = vpop.permute.xlu0 %5149
        %5151 = vrot.lane.b32.xlu0 %v270, 82
        %v5152 = vpop.permute.xlu0 %5151
        %5153 = vrot.lane.b32.xlu0 %v206, 82
        %v5154 = vpop.permute.xlu0 %5153
        %vm5155 = vcmp.lt.s32.totalorder %v282, 82
        %v5156 = vsel %vm5155, %v5152, %v5154
        %v5157 = vsel %vm5155, %v5150, %v5152
        %v5158 = vsel %vm5155, %v5148, %v5150
        %v5161 = vcombine.low %v5158, %v5157
        %v5163 = vmul.f32 %v202, %v5161
        %v5164 = vmul.f32 %v203, %v5156
        %v5166 = vcombine.high %v5163, %v5163
        %v5168 = vsel %vm212, %v5163, 0.0
        %v5169 = vrot.slane %v5168, 4
        %v5170 = vadd.f32 %v5168, %v5169
        %v5171 = vrot.slane %v5170, 2
        %v5172 = vadd.f32 %v5170, %v5171
        %v5173 = vrot.slane %v5172, 1
        %v5174 = vadd.f32 %v5172, %v5173
        %v5175 = vsel %vm212, %v5166, 0.0
        %v5176 = vrot.slane %v5175, 4
        %v5177 = vadd.f32 %v5175, %v5176
        %v5178 = vrot.slane %v5177, 2
        %v5179 = vadd.f32 %v5177, %v5178
        %v5180 = vrot.slane %v5179, 1
        %v5181 = vadd.f32 %v5179, %v5180
        %v5182 = vsel %vm212, %v5164, 0.0
        %v5183 = vrot.slane %v5182, 4
        %v5184 = vadd.f32 %v5182, %v5183
        %v5185 = vrot.slane %v5184, 2
        %v5186 = vadd.f32 %v5184, %v5185
        %v5187 = vrot.slane %v5186, 1
        %v5188 = vadd.f32 %v5186, %v5187
        %v5192 = vcombine.low %v5174, %v5181
        %v5194 = vunpack.c.l.s4 1966171168
        %v5195 = vunpack.c.0.s8 %v5194
        %v5196 = vlaneseq
        %v5197 = vshrl.u32 %v5196, 7
        %v5198 = vsub.s32 %v5195, %v5197
        %v5199 = vrot.slane %v5192, %v5198
        %v5201 = vunpack.c.l.s4 1966171168
        %v5202 = vunpack.c.0.s8 %v5201
        %v5203 = vlaneseq
        %v5204 = vshrl.u32 %v5203, 7
        %v5205 = vsub.s32 %v5202, %v5204
        %v5206 = vrot.slane %v5188, %v5205
        %v5207 = vcombine.low %v5199, %v5206
        %v5209 = vunpack.c.l.s4 1966171168
        %v5210 = vunpack.c.0.s8 %v5209
        %v5211 = vlaneseq
        %v5212 = vshrl.u32 %v5211, 7
        %v5213 = vsub.s32 %v5210, %v5212
        %v5214 = vrot.slane %v5207, %v5213
        %s5216 = scalar_lea.vmem %s199, 197
        %5217 = vst.msk [vmem:[%s5216] ss:$8 sm:$0x7] %vm264, %v5214
        %5218 = vst.msk [vmem:[%s5216] ss:$8 sm:$0x0] %vm264, %v5214
        %5219 = vrot.lane.b32.xlu0 %v269, 81
        %v5220 = vpop.permute.xlu0 %5219
        %5221 = vrot.lane.b32.xlu0 %v205, 81
        %v5222 = vpop.permute.xlu0 %5221
        %5223 = vrot.lane.b32.xlu0 %v270, 81
        %v5224 = vpop.permute.xlu0 %5223
        %5225 = vrot.lane.b32.xlu0 %v206, 81
        %v5226 = vpop.permute.xlu0 %5225
        %vm5227 = vcmp.lt.s32.totalorder %v282, 81
        %v5228 = vsel %vm5227, %v5224, %v5226
        %v5229 = vsel %vm5227, %v5222, %v5224
        %v5230 = vsel %vm5227, %v5220, %v5222
        %v5233 = vcombine.low %v5230, %v5229
        %v5235 = vmul.f32 %v202, %v5233
        %v5236 = vmul.f32 %v203, %v5228
        %v5238 = vcombine.high %v5235, %v5235
        %v5240 = vsel %vm212, %v5235, 0.0
        %v5241 = vrot.slane %v5240, 4
        %v5242 = vadd.f32 %v5240, %v5241
        %v5243 = vrot.slane %v5242, 2
        %v5244 = vadd.f32 %v5242, %v5243
        %v5245 = vrot.slane %v5244, 1
        %v5246 = vadd.f32 %v5244, %v5245
        %v5247 = vsel %vm212, %v5238, 0.0
        %v5248 = vrot.slane %v5247, 4
        %v5249 = vadd.f32 %v5247, %v5248
        %v5250 = vrot.slane %v5249, 2
        %v5251 = vadd.f32 %v5249, %v5250
        %v5252 = vrot.slane %v5251, 1
        %v5253 = vadd.f32 %v5251, %v5252
        %v5254 = vsel %vm212, %v5236, 0.0
        %v5255 = vrot.slane %v5254, 4
        %v5256 = vadd.f32 %v5254, %v5255
        %v5257 = vrot.slane %v5256, 2
        %v5258 = vadd.f32 %v5256, %v5257
        %v5259 = vrot.slane %v5258, 1
        %v5260 = vadd.f32 %v5258, %v5259
        %v5264 = vcombine.low %v5246, %v5253
        %v5266 = vunpack.c.l.s4 1966171168
        %v5267 = vunpack.c.0.s8 %v5266
        %v5268 = vlaneseq
        %v5269 = vshrl.u32 %v5268, 7
        %v5270 = vsub.s32 %v5267, %v5269
        %v5271 = vrot.slane %v5264, %v5270
        %v5273 = vunpack.c.l.s4 1966171168
        %v5274 = vunpack.c.0.s8 %v5273
        %v5275 = vlaneseq
        %v5276 = vshrl.u32 %v5275, 7
        %v5277 = vsub.s32 %v5274, %v5276
        %v5278 = vrot.slane %v5260, %v5277
        %v5279 = vcombine.low %v5271, %v5278
        %v5281 = vunpack.c.l.s4 1966171168
        %v5282 = vunpack.c.0.s8 %v5281
        %v5283 = vlaneseq
        %v5284 = vshrl.u32 %v5283, 7
        %v5285 = vsub.s32 %v5282, %v5284
        %v5286 = vrot.slane %v5279, %v5285
        %s5288 = scalar_lea.vmem %s199, 198
        %5289 = vst.msk [vmem:[%s5288] ss:$8 sm:$0x7] %vm264, %v5286
        %5290 = vst.msk [vmem:[%s5288] ss:$8 sm:$0x0] %vm264, %v5286
        %5291 = vrot.lane.b32.xlu0 %v206, 80
        %v5292 = vpop.permute.xlu0 %5291
        %v5293 = vsel %vm1507, %v1506, %v5292
        %v5295 = vcombine.low %v1509, %v1508
        %v5297 = vmul.f32 %v202, %v5295
        %v5298 = vmul.f32 %v203, %v5293
        %v5300 = vcombine.high %v5297, %v5297
        %v5302 = vsel %vm212, %v5297, 0.0
        %v5303 = vrot.slane %v5302, 4
        %v5304 = vadd.f32 %v5302, %v5303
        %v5305 = vrot.slane %v5304, 2
        %v5306 = vadd.f32 %v5304, %v5305
        %v5307 = vrot.slane %v5306, 1
        %v5308 = vadd.f32 %v5306, %v5307
        %v5309 = vsel %vm212, %v5300, 0.0
        %v5310 = vrot.slane %v5309, 4
        %v5311 = vadd.f32 %v5309, %v5310
        %v5312 = vrot.slane %v5311, 2
        %v5313 = vadd.f32 %v5311, %v5312
        %v5314 = vrot.slane %v5313, 1
        %v5315 = vadd.f32 %v5313, %v5314
        %v5316 = vsel %vm212, %v5298, 0.0
        %v5317 = vrot.slane %v5316, 4
        %v5318 = vadd.f32 %v5316, %v5317
        %v5319 = vrot.slane %v5318, 2
        %v5320 = vadd.f32 %v5318, %v5319
        %v5321 = vrot.slane %v5320, 1
        %v5322 = vadd.f32 %v5320, %v5321
        %v5326 = vcombine.low %v5308, %v5315
        %v5328 = vunpack.c.l.s4 1966171168
        %v5329 = vunpack.c.0.s8 %v5328
        %v5330 = vlaneseq
        %v5331 = vshrl.u32 %v5330, 7
        %v5332 = vsub.s32 %v5329, %v5331
        %v5333 = vrot.slane %v5326, %v5332
        %v5335 = vunpack.c.l.s4 1966171168
        %v5336 = vunpack.c.0.s8 %v5335
        %v5337 = vlaneseq
        %v5338 = vshrl.u32 %v5337, 7
        %v5339 = vsub.s32 %v5336, %v5338
        %v5340 = vrot.slane %v5322, %v5339
        %v5341 = vcombine.low %v5333, %v5340
        %v5343 = vunpack.c.l.s4 1966171168
        %v5344 = vunpack.c.0.s8 %v5343
        %v5345 = vlaneseq
        %v5346 = vshrl.u32 %v5345, 7
        %v5347 = vsub.s32 %v5344, %v5346
        %v5348 = vrot.slane %v5341, %v5347
        %s5350 = scalar_lea.vmem %s199, 199
        %5351 = vst.msk [vmem:[%s5350] ss:$8 sm:$0x7] %vm264, %v5348
        %5352 = vst.msk [vmem:[%s5350] ss:$8 sm:$0x0] %vm264, %v5348
        %5353 = vrot.lane.b32.xlu0 %v269, 64
        %v5354 = vpop.permute.xlu0 %5353
        %5355 = vrot.lane.b32.xlu0 %v205, 64
        %v5356 = vpop.permute.xlu0 %5355
        %5357 = vrot.lane.b32.xlu0 %v270, 64
        %v5358 = vpop.permute.xlu0 %5357
        %5359 = vrot.lane.b32.xlu0 %v206, 64
        %v5360 = vpop.permute.xlu0 %5359
        %vm5361 = vcmp.lt.s32.totalorder %v282, 64
        %v5362 = vsel %vm5361, %v5358, %v5360
        %v5363 = vsel %vm5361, %v5356, %v5358
        %v5364 = vsel %vm5361, %v5354, %v5356
        %v5367 = vcombine.low %v5364, %v5363
        %v5369 = vmul.f32 %v202, %v5367
        %v5370 = vmul.f32 %v203, %v5362
        %v5372 = vcombine.high %v5369, %v5369
        %v5374 = vsel %vm212, %v5369, 0.0
        %v5375 = vrot.slane %v5374, 4
        %v5376 = vadd.f32 %v5374, %v5375
        %v5377 = vrot.slane %v5376, 2
        %v5378 = vadd.f32 %v5376, %v5377
        %v5379 = vrot.slane %v5378, 1
        %v5380 = vadd.f32 %v5378, %v5379
        %v5381 = vsel %vm212, %v5372, 0.0
        %v5382 = vrot.slane %v5381, 4
        %v5383 = vadd.f32 %v5381, %v5382
        %v5384 = vrot.slane %v5383, 2
        %v5385 = vadd.f32 %v5383, %v5384
        %v5386 = vrot.slane %v5385, 1
        %v5387 = vadd.f32 %v5385, %v5386
        %v5388 = vsel %vm212, %v5370, 0.0
        %v5389 = vrot.slane %v5388, 4
        %v5390 = vadd.f32 %v5388, %v5389
        %v5391 = vrot.slane %v5390, 2
        %v5392 = vadd.f32 %v5390, %v5391
        %v5393 = vrot.slane %v5392, 1
        %v5394 = vadd.f32 %v5392, %v5393
        %v5398 = vcombine.low %v5380, %v5387
        %v5400 = vunpack.c.l.s4 1966171168
        %v5401 = vunpack.c.0.s8 %v5400
        %v5402 = vlaneseq
        %v5403 = vshrl.u32 %v5402, 7
        %v5404 = vsub.s32 %v5401, %v5403
        %v5405 = vrot.slane %v5398, %v5404
        %v5407 = vunpack.c.l.s4 1966171168
        %v5408 = vunpack.c.0.s8 %v5407
        %v5409 = vlaneseq
        %v5410 = vshrl.u32 %v5409, 7
        %v5411 = vsub.s32 %v5408, %v5410
        %v5412 = vrot.slane %v5394, %v5411
        %v5413 = vcombine.low %v5405, %v5412
        %v5415 = vunpack.c.l.s4 1966171168
        %v5416 = vunpack.c.0.s8 %v5415
        %v5417 = vlaneseq
        %v5418 = vshrl.u32 %v5417, 7
        %v5419 = vsub.s32 %v5416, %v5418
        %v5420 = vrot.slane %v5413, %v5419
        %s5422 = scalar_lea.vmem %s199, 216
        %5423 = vst.msk [vmem:[%s5422] ss:$8 sm:$0x7] %vm264, %v5420
        %5424 = vst.msk [vmem:[%s5422] ss:$8 sm:$0x0] %vm264, %v5420
        %5425 = vrot.lane.b32.xlu0 %v269, 63
        %v5426 = vpop.permute.xlu0 %5425
        %5427 = vrot.lane.b32.xlu0 %v205, 63
        %v5428 = vpop.permute.xlu0 %5427
        %5429 = vrot.lane.b32.xlu0 %v270, 63
        %v5430 = vpop.permute.xlu0 %5429
        %5431 = vrot.lane.b32.xlu0 %v206, 63
        %v5432 = vpop.permute.xlu0 %5431
        %vm5433 = vcmp.lt.s32.totalorder %v282, 63
        %v5434 = vsel %vm5433, %v5430, %v5432
        %v5435 = vsel %vm5433, %v5428, %v5430
        %v5436 = vsel %vm5433, %v5426, %v5428
        %v5439 = vcombine.low %v5436, %v5435
        %v5441 = vmul.f32 %v202, %v5439
        %v5442 = vmul.f32 %v203, %v5434
        %v5444 = vcombine.high %v5441, %v5441
        %v5446 = vsel %vm212, %v5441, 0.0
        %v5447 = vrot.slane %v5446, 4
        %v5448 = vadd.f32 %v5446, %v5447
        %v5449 = vrot.slane %v5448, 2
        %v5450 = vadd.f32 %v5448, %v5449
        %v5451 = vrot.slane %v5450, 1
        %v5452 = vadd.f32 %v5450, %v5451
        %v5453 = vsel %vm212, %v5444, 0.0
        %v5454 = vrot.slane %v5453, 4
        %v5455 = vadd.f32 %v5453, %v5454
        %v5456 = vrot.slane %v5455, 2
        %v5457 = vadd.f32 %v5455, %v5456
        %v5458 = vrot.slane %v5457, 1
        %v5459 = vadd.f32 %v5457, %v5458
        %v5460 = vsel %vm212, %v5442, 0.0
        %v5461 = vrot.slane %v5460, 4
        %v5462 = vadd.f32 %v5460, %v5461
        %v5463 = vrot.slane %v5462, 2
        %v5464 = vadd.f32 %v5462, %v5463
        %v5465 = vrot.slane %v5464, 1
        %v5466 = vadd.f32 %v5464, %v5465
        %v5470 = vcombine.low %v5452, %v5459
        %v5472 = vunpack.c.l.s4 1966171168
        %v5473 = vunpack.c.0.s8 %v5472
        %v5474 = vlaneseq
        %v5475 = vshrl.u32 %v5474, 7
        %v5476 = vsub.s32 %v5473, %v5475
        %v5477 = vrot.slane %v5470, %v5476
        %v5479 = vunpack.c.l.s4 1966171168
        %v5480 = vunpack.c.0.s8 %v5479
        %v5481 = vlaneseq
        %v5482 = vshrl.u32 %v5481, 7
        %v5483 = vsub.s32 %v5480, %v5482
        %v5484 = vrot.slane %v5466, %v5483
        %v5485 = vcombine.low %v5477, %v5484
        %v5487 = vunpack.c.l.s4 1966171168
        %v5488 = vunpack.c.0.s8 %v5487
        %v5489 = vlaneseq
        %v5490 = vshrl.u32 %v5489, 7
        %v5491 = vsub.s32 %v5488, %v5490
        %v5492 = vrot.slane %v5485, %v5491
        %s5494 = scalar_lea.vmem %s199, 217
        %5495 = vst.msk [vmem:[%s5494] ss:$8 sm:$0x7] %vm264, %v5492
        %5496 = vst.msk [vmem:[%s5494] ss:$8 sm:$0x0] %vm264, %v5492
        %5497 = vrot.lane.b32.xlu0 %v269, 62
        %v5498 = vpop.permute.xlu0 %5497
        %5499 = vrot.lane.b32.xlu0 %v205, 62
        %v5500 = vpop.permute.xlu0 %5499
        %5501 = vrot.lane.b32.xlu0 %v270, 62
        %v5502 = vpop.permute.xlu0 %5501
        %5503 = vrot.lane.b32.xlu0 %v206, 62
        %v5504 = vpop.permute.xlu0 %5503
        %vm5505 = vcmp.lt.s32.totalorder %v282, 62
        %v5506 = vsel %vm5505, %v5502, %v5504
        %v5507 = vsel %vm5505, %v5500, %v5502
        %v5508 = vsel %vm5505, %v5498, %v5500
        %v5511 = vcombine.low %v5508, %v5507
        %v5513 = vmul.f32 %v202, %v5511
        %v5514 = vmul.f32 %v203, %v5506
        %v5516 = vcombine.high %v5513, %v5513
        %v5518 = vsel %vm212, %v5513, 0.0
        %v5519 = vrot.slane %v5518, 4
        %v5520 = vadd.f32 %v5518, %v5519
        %v5521 = vrot.slane %v5520, 2
        %v5522 = vadd.f32 %v5520, %v5521
        %v5523 = vrot.slane %v5522, 1
        %v5524 = vadd.f32 %v5522, %v5523
        %v5525 = vsel %vm212, %v5516, 0.0
        %v5526 = vrot.slane %v5525, 4
        %v5527 = vadd.f32 %v5525, %v5526
        %v5528 = vrot.slane %v5527, 2
        %v5529 = vadd.f32 %v5527, %v5528
        %v5530 = vrot.slane %v5529, 1
        %v5531 = vadd.f32 %v5529, %v5530
        %v5532 = vsel %vm212, %v5514, 0.0
        %v5533 = vrot.slane %v5532, 4
        %v5534 = vadd.f32 %v5532, %v5533
        %v5535 = vrot.slane %v5534, 2
        %v5536 = vadd.f32 %v5534, %v5535
        %v5537 = vrot.slane %v5536, 1
        %v5538 = vadd.f32 %v5536, %v5537
        %v5542 = vcombine.low %v5524, %v5531
        %v5544 = vunpack.c.l.s4 1966171168
        %v5545 = vunpack.c.0.s8 %v5544
        %v5546 = vlaneseq
        %v5547 = vshrl.u32 %v5546, 7
        %v5548 = vsub.s32 %v5545, %v5547
        %v5549 = vrot.slane %v5542, %v5548
        %v5551 = vunpack.c.l.s4 1966171168
        %v5552 = vunpack.c.0.s8 %v5551
        %v5553 = vlaneseq
        %v5554 = vshrl.u32 %v5553, 7
        %v5555 = vsub.s32 %v5552, %v5554
        %v5556 = vrot.slane %v5538, %v5555
        %v5557 = vcombine.low %v5549, %v5556
        %v5559 = vunpack.c.l.s4 1966171168
        %v5560 = vunpack.c.0.s8 %v5559
        %v5561 = vlaneseq
        %v5562 = vshrl.u32 %v5561, 7
        %v5563 = vsub.s32 %v5560, %v5562
        %v5564 = vrot.slane %v5557, %v5563
        %s5566 = scalar_lea.vmem %s199, 218
        %5567 = vst.msk [vmem:[%s5566] ss:$8 sm:$0x7] %vm264, %v5564
        %5568 = vst.msk [vmem:[%s5566] ss:$8 sm:$0x0] %vm264, %v5564
        %5569 = vrot.lane.b32.xlu0 %v269, 61
        %v5570 = vpop.permute.xlu0 %5569
        %5571 = vrot.lane.b32.xlu0 %v205, 61
        %v5572 = vpop.permute.xlu0 %5571
        %5573 = vrot.lane.b32.xlu0 %v270, 61
        %v5574 = vpop.permute.xlu0 %5573
        %5575 = vrot.lane.b32.xlu0 %v206, 61
        %v5576 = vpop.permute.xlu0 %5575
        %vm5577 = vcmp.lt.s32.totalorder %v282, 61
        %v5578 = vsel %vm5577, %v5574, %v5576
        %v5579 = vsel %vm5577, %v5572, %v5574
        %v5580 = vsel %vm5577, %v5570, %v5572
        %v5583 = vcombine.low %v5580, %v5579
        %v5585 = vmul.f32 %v202, %v5583
        %v5586 = vmul.f32 %v203, %v5578
        %v5588 = vcombine.high %v5585, %v5585
        %v5590 = vsel %vm212, %v5585, 0.0
        %v5591 = vrot.slane %v5590, 4
        %v5592 = vadd.f32 %v5590, %v5591
        %v5593 = vrot.slane %v5592, 2
        %v5594 = vadd.f32 %v5592, %v5593
        %v5595 = vrot.slane %v5594, 1
        %v5596 = vadd.f32 %v5594, %v5595
        %v5597 = vsel %vm212, %v5588, 0.0
        %v5598 = vrot.slane %v5597, 4
        %v5599 = vadd.f32 %v5597, %v5598
        %v5600 = vrot.slane %v5599, 2
        %v5601 = vadd.f32 %v5599, %v5600
        %v5602 = vrot.slane %v5601, 1
        %v5603 = vadd.f32 %v5601, %v5602
        %v5604 = vsel %vm212, %v5586, 0.0
        %v5605 = vrot.slane %v5604, 4
        %v5606 = vadd.f32 %v5604, %v5605
        %v5607 = vrot.slane %v5606, 2
        %v5608 = vadd.f32 %v5606, %v5607
        %v5609 = vrot.slane %v5608, 1
        %v5610 = vadd.f32 %v5608, %v5609
        %v5614 = vcombine.low %v5596, %v5603
        %v5616 = vunpack.c.l.s4 1966171168
        %v5617 = vunpack.c.0.s8 %v5616
        %v5618 = vlaneseq
        %v5619 = vshrl.u32 %v5618, 7
        %v5620 = vsub.s32 %v5617, %v5619
        %v5621 = vrot.slane %v5614, %v5620
        %v5623 = vunpack.c.l.s4 1966171168
        %v5624 = vunpack.c.0.s8 %v5623
        %v5625 = vlaneseq
        %v5626 = vshrl.u32 %v5625, 7
        %v5627 = vsub.s32 %v5624, %v5626
        %v5628 = vrot.slane %v5610, %v5627
        %v5629 = vcombine.low %v5621, %v5628
        %v5631 = vunpack.c.l.s4 1966171168
        %v5632 = vunpack.c.0.s8 %v5631
        %v5633 = vlaneseq
        %v5634 = vshrl.u32 %v5633, 7
        %v5635 = vsub.s32 %v5632, %v5634
        %v5636 = vrot.slane %v5629, %v5635
        %s5638 = scalar_lea.vmem %s199, 219
        %5639 = vst.msk [vmem:[%s5638] ss:$8 sm:$0x7] %vm264, %v5636
        %5640 = vst.msk [vmem:[%s5638] ss:$8 sm:$0x0] %vm264, %v5636
        %5641 = vrot.lane.b32.xlu0 %v269, 60
        %v5642 = vpop.permute.xlu0 %5641
        %5643 = vrot.lane.b32.xlu0 %v205, 60
        %v5644 = vpop.permute.xlu0 %5643
        %5645 = vrot.lane.b32.xlu0 %v270, 60
        %v5646 = vpop.permute.xlu0 %5645
        %5647 = vrot.lane.b32.xlu0 %v206, 60
        %v5648 = vpop.permute.xlu0 %5647
        %vm5649 = vcmp.lt.s32.totalorder %v282, 60
        %v5650 = vsel %vm5649, %v5646, %v5648
        %v5651 = vsel %vm5649, %v5644, %v5646
        %v5652 = vsel %vm5649, %v5642, %v5644
        %v5655 = vcombine.low %v5652, %v5651
        %v5657 = vmul.f32 %v202, %v5655
        %v5658 = vmul.f32 %v203, %v5650
        %v5660 = vcombine.high %v5657, %v5657
        %v5662 = vsel %vm212, %v5657, 0.0
        %v5663 = vrot.slane %v5662, 4
        %v5664 = vadd.f32 %v5662, %v5663
        %v5665 = vrot.slane %v5664, 2
        %v5666 = vadd.f32 %v5664, %v5665
        %v5667 = vrot.slane %v5666, 1
        %v5668 = vadd.f32 %v5666, %v5667
        %v5669 = vsel %vm212, %v5660, 0.0
        %v5670 = vrot.slane %v5669, 4
        %v5671 = vadd.f32 %v5669, %v5670
        %v5672 = vrot.slane %v5671, 2
        %v5673 = vadd.f32 %v5671, %v5672
        %v5674 = vrot.slane %v5673, 1
        %v5675 = vadd.f32 %v5673, %v5674
        %v5676 = vsel %vm212, %v5658, 0.0
        %v5677 = vrot.slane %v5676, 4
        %v5678 = vadd.f32 %v5676, %v5677
        %v5679 = vrot.slane %v5678, 2
        %v5680 = vadd.f32 %v5678, %v5679
        %v5681 = vrot.slane %v5680, 1
        %v5682 = vadd.f32 %v5680, %v5681
        %v5686 = vcombine.low %v5668, %v5675
        %v5688 = vunpack.c.l.s4 1966171168
        %v5689 = vunpack.c.0.s8 %v5688
        %v5690 = vlaneseq
        %v5691 = vshrl.u32 %v5690, 7
        %v5692 = vsub.s32 %v5689, %v5691
        %v5693 = vrot.slane %v5686, %v5692
        %v5695 = vunpack.c.l.s4 1966171168
        %v5696 = vunpack.c.0.s8 %v5695
        %v5697 = vlaneseq
        %v5698 = vshrl.u32 %v5697, 7
        %v5699 = vsub.s32 %v5696, %v5698
        %v5700 = vrot.slane %v5682, %v5699
        %v5701 = vcombine.low %v5693, %v5700
        %v5703 = vunpack.c.l.s4 1966171168
        %v5704 = vunpack.c.0.s8 %v5703
        %v5705 = vlaneseq
        %v5706 = vshrl.u32 %v5705, 7
        %v5707 = vsub.s32 %v5704, %v5706
        %v5708 = vrot.slane %v5701, %v5707
        %s5710 = scalar_lea.vmem %s199, 220
        %5711 = vst.msk [vmem:[%s5710] ss:$8 sm:$0x7] %vm264, %v5708
        %5712 = vst.msk [vmem:[%s5710] ss:$8 sm:$0x0] %vm264, %v5708
        %5713 = vrot.lane.b32.xlu0 %v269, 59
        %v5714 = vpop.permute.xlu0 %5713
        %5715 = vrot.lane.b32.xlu0 %v205, 59
        %v5716 = vpop.permute.xlu0 %5715
        %5717 = vrot.lane.b32.xlu0 %v270, 59
        %v5718 = vpop.permute.xlu0 %5717
        %5719 = vrot.lane.b32.xlu0 %v206, 59
        %v5720 = vpop.permute.xlu0 %5719
        %vm5721 = vcmp.lt.s32.totalorder %v282, 59
        %v5722 = vsel %vm5721, %v5718, %v5720
        %v5723 = vsel %vm5721, %v5716, %v5718
        %v5724 = vsel %vm5721, %v5714, %v5716
        %v5727 = vcombine.low %v5724, %v5723
        %v5729 = vmul.f32 %v202, %v5727
        %v5730 = vmul.f32 %v203, %v5722
        %v5732 = vcombine.high %v5729, %v5729
        %v5734 = vsel %vm212, %v5729, 0.0
        %v5735 = vrot.slane %v5734, 4
        %v5736 = vadd.f32 %v5734, %v5735
        %v5737 = vrot.slane %v5736, 2
        %v5738 = vadd.f32 %v5736, %v5737
        %v5739 = vrot.slane %v5738, 1
        %v5740 = vadd.f32 %v5738, %v5739
        %v5741 = vsel %vm212, %v5732, 0.0
        %v5742 = vrot.slane %v5741, 4
        %v5743 = vadd.f32 %v5741, %v5742
        %v5744 = vrot.slane %v5743, 2
        %v5745 = vadd.f32 %v5743, %v5744
        %v5746 = vrot.slane %v5745, 1
        %v5747 = vadd.f32 %v5745, %v5746
        %v5748 = vsel %vm212, %v5730, 0.0
        %v5749 = vrot.slane %v5748, 4
        %v5750 = vadd.f32 %v5748, %v5749
        %v5751 = vrot.slane %v5750, 2
        %v5752 = vadd.f32 %v5750, %v5751
        %v5753 = vrot.slane %v5752, 1
        %v5754 = vadd.f32 %v5752, %v5753
        %v5758 = vcombine.low %v5740, %v5747
        %v5760 = vunpack.c.l.s4 1966171168
        %v5761 = vunpack.c.0.s8 %v5760
        %v5762 = vlaneseq
        %v5763 = vshrl.u32 %v5762, 7
        %v5764 = vsub.s32 %v5761, %v5763
        %v5765 = vrot.slane %v5758, %v5764
        %v5767 = vunpack.c.l.s4 1966171168
        %v5768 = vunpack.c.0.s8 %v5767
        %v5769 = vlaneseq
        %v5770 = vshrl.u32 %v5769, 7
        %v5771 = vsub.s32 %v5768, %v5770
        %v5772 = vrot.slane %v5754, %v5771
        %v5773 = vcombine.low %v5765, %v5772
        %v5775 = vunpack.c.l.s4 1966171168
        %v5776 = vunpack.c.0.s8 %v5775
        %v5777 = vlaneseq
        %v5778 = vshrl.u32 %v5777, 7
        %v5779 = vsub.s32 %v5776, %v5778
        %v5780 = vrot.slane %v5773, %v5779
        %s5782 = scalar_lea.vmem %s199, 221
        %5783 = vst.msk [vmem:[%s5782] ss:$8 sm:$0x7] %vm264, %v5780
        %5784 = vst.msk [vmem:[%s5782] ss:$8 sm:$0x0] %vm264, %v5780
        %5785 = vrot.lane.b32.xlu0 %v269, 58
        %v5786 = vpop.permute.xlu0 %5785
        %5787 = vrot.lane.b32.xlu0 %v205, 58
        %v5788 = vpop.permute.xlu0 %5787
        %5789 = vrot.lane.b32.xlu0 %v270, 58
        %v5790 = vpop.permute.xlu0 %5789
        %5791 = vrot.lane.b32.xlu0 %v206, 58
        %v5792 = vpop.permute.xlu0 %5791
        %vm5793 = vcmp.lt.s32.totalorder %v282, 58
        %v5794 = vsel %vm5793, %v5790, %v5792
        %v5795 = vsel %vm5793, %v5788, %v5790
        %v5796 = vsel %vm5793, %v5786, %v5788
        %v5799 = vcombine.low %v5796, %v5795
        %v5801 = vmul.f32 %v202, %v5799
        %v5802 = vmul.f32 %v203, %v5794
        %v5804 = vcombine.high %v5801, %v5801
        %v5806 = vsel %vm212, %v5801, 0.0
        %v5807 = vrot.slane %v5806, 4
        %v5808 = vadd.f32 %v5806, %v5807
        %v5809 = vrot.slane %v5808, 2
        %v5810 = vadd.f32 %v5808, %v5809
        %v5811 = vrot.slane %v5810, 1
        %v5812 = vadd.f32 %v5810, %v5811
        %v5813 = vsel %vm212, %v5804, 0.0
        %v5814 = vrot.slane %v5813, 4
        %v5815 = vadd.f32 %v5813, %v5814
        %v5816 = vrot.slane %v5815, 2
        %v5817 = vadd.f32 %v5815, %v5816
        %v5818 = vrot.slane %v5817, 1
        %v5819 = vadd.f32 %v5817, %v5818
        %v5820 = vsel %vm212, %v5802, 0.0
        %v5821 = vrot.slane %v5820, 4
        %v5822 = vadd.f32 %v5820, %v5821
        %v5823 = vrot.slane %v5822, 2
        %v5824 = vadd.f32 %v5822, %v5823
        %v5825 = vrot.slane %v5824, 1
        %v5826 = vadd.f32 %v5824, %v5825
        %v5830 = vcombine.low %v5812, %v5819
        %v5832 = vunpack.c.l.s4 1966171168
        %v5833 = vunpack.c.0.s8 %v5832
        %v5834 = vlaneseq
        %v5835 = vshrl.u32 %v5834, 7
        %v5836 = vsub.s32 %v5833, %v5835
        %v5837 = vrot.slane %v5830, %v5836
        %v5839 = vunpack.c.l.s4 1966171168
        %v5840 = vunpack.c.0.s8 %v5839
        %v5841 = vlaneseq
        %v5842 = vshrl.u32 %v5841, 7
        %v5843 = vsub.s32 %v5840, %v5842
        %v5844 = vrot.slane %v5826, %v5843
        %v5845 = vcombine.low %v5837, %v5844
        %v5847 = vunpack.c.l.s4 1966171168
        %v5848 = vunpack.c.0.s8 %v5847
        %v5849 = vlaneseq
        %v5850 = vshrl.u32 %v5849, 7
        %v5851 = vsub.s32 %v5848, %v5850
        %v5852 = vrot.slane %v5845, %v5851
        %s5854 = scalar_lea.vmem %s199, 222
        %5855 = vst.msk [vmem:[%s5854] ss:$8 sm:$0x7] %vm264, %v5852
        %5856 = vst.msk [vmem:[%s5854] ss:$8 sm:$0x0] %vm264, %v5852
        %5857 = vrot.lane.b32.xlu0 %v269, 57
        %v5858 = vpop.permute.xlu0 %5857
        %5859 = vrot.lane.b32.xlu0 %v205, 57
        %v5860 = vpop.permute.xlu0 %5859
        %5861 = vrot.lane.b32.xlu0 %v270, 57
        %v5862 = vpop.permute.xlu0 %5861
        %5863 = vrot.lane.b32.xlu0 %v206, 57
        %v5864 = vpop.permute.xlu0 %5863
        %vm5865 = vcmp.lt.s32.totalorder %v282, 57
        %v5866 = vsel %vm5865, %v5862, %v5864
        %v5867 = vsel %vm5865, %v5860, %v5862
        %v5868 = vsel %vm5865, %v5858, %v5860
        %v5871 = vcombine.low %v5868, %v5867
        %v5873 = vmul.f32 %v202, %v5871
        %v5874 = vmul.f32 %v203, %v5866
        %v5876 = vcombine.high %v5873, %v5873
        %v5878 = vsel %vm212, %v5873, 0.0
        %v5879 = vrot.slane %v5878, 4
        %v5880 = vadd.f32 %v5878, %v5879
        %v5881 = vrot.slane %v5880, 2
        %v5882 = vadd.f32 %v5880, %v5881
        %v5883 = vrot.slane %v5882, 1
        %v5884 = vadd.f32 %v5882, %v5883
        %v5885 = vsel %vm212, %v5876, 0.0
        %v5886 = vrot.slane %v5885, 4
        %v5887 = vadd.f32 %v5885, %v5886
        %v5888 = vrot.slane %v5887, 2
        %v5889 = vadd.f32 %v5887, %v5888
        %v5890 = vrot.slane %v5889, 1
        %v5891 = vadd.f32 %v5889, %v5890
        %v5892 = vsel %vm212, %v5874, 0.0
        %v5893 = vrot.slane %v5892, 4
        %v5894 = vadd.f32 %v5892, %v5893
        %v5895 = vrot.slane %v5894, 2
        %v5896 = vadd.f32 %v5894, %v5895
        %v5897 = vrot.slane %v5896, 1
        %v5898 = vadd.f32 %v5896, %v5897
        %v5902 = vcombine.low %v5884, %v5891
        %v5904 = vunpack.c.l.s4 1966171168
        %v5905 = vunpack.c.0.s8 %v5904
        %v5906 = vlaneseq
        %v5907 = vshrl.u32 %v5906, 7
        %v5908 = vsub.s32 %v5905, %v5907
        %v5909 = vrot.slane %v5902, %v5908
        %v5911 = vunpack.c.l.s4 1966171168
        %v5912 = vunpack.c.0.s8 %v5911
        %v5913 = vlaneseq
        %v5914 = vshrl.u32 %v5913, 7
        %v5915 = vsub.s32 %v5912, %v5914
        %v5916 = vrot.slane %v5898, %v5915
        %v5917 = vcombine.low %v5909, %v5916
        %v5919 = vunpack.c.l.s4 1966171168
        %v5920 = vunpack.c.0.s8 %v5919
        %v5921 = vlaneseq
        %v5922 = vshrl.u32 %v5921, 7
        %v5923 = vsub.s32 %v5920, %v5922
        %v5924 = vrot.slane %v5917, %v5923
        %s5926 = scalar_lea.vmem %s199, 223
        %5927 = vst.msk [vmem:[%s5926] ss:$8 sm:$0x7] %vm264, %v5924
        %5928 = vst.msk [vmem:[%s5926] ss:$8 sm:$0x0] %vm264, %v5924
        %5929 = vrot.lane.b32.xlu0 %v206, 56
        %v5930 = vpop.permute.xlu0 %5929
        %v5931 = vsel %vm2155, %v2154, %v5930
        %v5933 = vcombine.low %v2157, %v2156
        %v5935 = vmul.f32 %v202, %v5933
        %v5936 = vmul.f32 %v203, %v5931
        %v5938 = vcombine.high %v5935, %v5935
        %v5940 = vsel %vm212, %v5935, 0.0
        %v5941 = vrot.slane %v5940, 4
        %v5942 = vadd.f32 %v5940, %v5941
        %v5943 = vrot.slane %v5942, 2
        %v5944 = vadd.f32 %v5942, %v5943
        %v5945 = vrot.slane %v5944, 1
        %v5946 = vadd.f32 %v5944, %v5945
        %v5947 = vsel %vm212, %v5938, 0.0
        %v5948 = vrot.slane %v5947, 4
        %v5949 = vadd.f32 %v5947, %v5948
        %v5950 = vrot.slane %v5949, 2
        %v5951 = vadd.f32 %v5949, %v5950
        %v5952 = vrot.slane %v5951, 1
        %v5953 = vadd.f32 %v5951, %v5952
        %v5954 = vsel %vm212, %v5936, 0.0
        %v5955 = vrot.slane %v5954, 4
        %v5956 = vadd.f32 %v5954, %v5955
        %v5957 = vrot.slane %v5956, 2
        %v5958 = vadd.f32 %v5956, %v5957
        %v5959 = vrot.slane %v5958, 1
        %v5960 = vadd.f32 %v5958, %v5959
        %v5964 = vcombine.low %v5946, %v5953
        %v5966 = vunpack.c.l.s4 1966171168
        %v5967 = vunpack.c.0.s8 %v5966
        %v5968 = vlaneseq
        %v5969 = vshrl.u32 %v5968, 7
        %v5970 = vsub.s32 %v5967, %v5969
        %v5971 = vrot.slane %v5964, %v5970
        %v5973 = vunpack.c.l.s4 1966171168
        %v5974 = vunpack.c.0.s8 %v5973
        %v5975 = vlaneseq
        %v5976 = vshrl.u32 %v5975, 7
        %v5977 = vsub.s32 %v5974, %v5976
        %v5978 = vrot.slane %v5960, %v5977
        %v5979 = vcombine.low %v5971, %v5978
        %v5981 = vunpack.c.l.s4 1966171168
        %v5982 = vunpack.c.0.s8 %v5981
        %v5983 = vlaneseq
        %v5984 = vshrl.u32 %v5983, 7
        %v5985 = vsub.s32 %v5982, %v5984
        %v5986 = vrot.slane %v5979, %v5985
        %s5988 = scalar_lea.vmem %s199, 240
        %5989 = vst.msk [vmem:[%s5988] ss:$8 sm:$0x7] %vm264, %v5986
        %5990 = vst.msk [vmem:[%s5988] ss:$8 sm:$0x0] %vm264, %v5986
        %p5991 = scmp.lt.s32.totalorder %s19, 1
        %s5992 = scalar_select %p5991, %s19, 1
        %s5993 = smul.addr %s5992, 33
        %s5994 = smul.addr %s5993, 8
        %s5995 = scalar_lea.vmem %s2, %s5994
        // Predicated region
        $region37: #{tpu_custom_call.1} parent=27 // pred_check
          %p5996 = pneg %p89
        $region38: #{tpu_custom_call.1} parent=27 // pred_check_branch
          %5998 = sbr.rel (%p5996) target = $region40
        $region39: #{tpu_custom_call.1} parent=27 // pred_region
          _
        $region40: #{tpu_custom_call.1} parent=27 // pred_fallthru
          _
      $region28: #{tpu_custom_call.1} parent=5 // pred_fallthru
        _
      %p5999 = scmp.le.s32.totalorder 2, %s14
      // Predicated region
      $region41: #{tpu_custom_call.1} parent=5 // pred_check
        %p6000 = pneg %p5999
      $region42: #{tpu_custom_call.1} parent=5 // pred_check_branch
        %6002 = sbr.rel (%p6000) target = $region44
      $region43: #{tpu_custom_call.1} parent=5 // pred_region
        %s6003 = ssub.s32 %s14, 2
        // Predicated region
        $region45: #{tpu_custom_call.1} parent=43 // pred_check
          %p6004 = pneg %p95
        $region46: #{tpu_custom_call.1} parent=43 // pred_check_branch
          %6006 = sbr.rel (%p6004) target = $region48
        $region47: #{tpu_custom_call.1} parent=43 // pred_region
          %p6007 = scmp.lt.s32.totalorder %s20, 1
          %s6008 = scalar_select %p6007, %s20, 1
          %s6009 = smul.addr %s6008, 33
          %s6010 = smul.addr %s6009, 8
          %s6011 = scalar_lea.vmem %s2, %s6010
        $region48: #{tpu_custom_call.1} parent=43 // pred_fallthru
          _
      $region44: #{tpu_custom_call.1} parent=5 // pred_fallthru
        _
    $region6: #{tpu_custom_call.1} parent=1 // loop_footer
      %s18 = sadd.s32 1, %s14
    $region7: #{tpu_custom_call.1} parent=1 // loop_footer_branch
      %13 = sbr.rel target = $region3
    $region8: #{tpu_custom_call.1} parent=1 // loop_exit
      _
    %6012 = vsyncpa [#allocation3], 1
    %s6013 = scalar_lea.sflag [#allocation3], 1
    %6014 = vsyncpa %s6013, 1
    %6015 = vsyncpa [#allocation5], 1
    %s6016 = scalar_lea.sflag [#allocation5], 1
    %6017 = vsyncpa %s6016, 1

</llo_original>
